<compile_context>
chip_gen: v6e
topology: v6e:2x2x1
jax: 0.10.0
libtpu: 0.0.40
codegen_flags: <defaults>
</compile_context>

<pallas_src>
import numpy as np
import jax
import jax.numpy as jnp
from jax import lax
from jax.experimental import pallas as pl
from jax.experimental.pallas import tpu as pltpu


# ----------------------------------------------------------------------------
# Configuration: Decoder_ARVAE(n_l=14, n_z=8, n_c=4, min_deconv_dim=8,
#                              gru_hidden_size=32, gru_num_layer=1, dropout=0.45)
# ----------------------------------------------------------------------------
REAL_N_L = 14
N_L = int(np.ceil(REAL_N_L / 8) * 8)                       # 16
L0 = N_L // 8                                               # 2   (low-res length)
N_Z = 8
N_C = 4
MIN_DECONV = 8
LOW_F = min(MIN_DECONV * 2 ** 3, 336)                       # 64 low-res features
UP_CIN = [min(MIN_DECONV * 2 ** (3 - i), 336) for i in range(3)]    # 64, 32, 16
UP_COUT = [min(MIN_DECONV * 2 ** (2 - i), 336) for i in range(3)]   # 32, 16, 8
C_H = UP_COUT[-1]                                            # 8
GRU_H = 32
GRU_IN = C_H + N_C                                           # 12
DROP_P = 0.45
BN_EPS = 1e-5
BATCH = 2

COLS = L0 * LOW_F                                            # 128 (constant through all up layers)
STEP_W = 128                                                 # padded per-step gx block width (3H=96 used)
B_TILE = 8                                                   # batch rows per grid step
GIW_B0 = COLS + N_L * N_C                                    # 192: bias row index in giw
GIW_ROWS = 200                                               # padded to a multiple of 8


# ----------------------------------------------------------------------------
# Pallas kernel: full teacher-forcing forward for one batch tile of B_TILE rows.
# ----------------------------------------------------------------------------
def decoder_kernel(z_ref, x_ref, mask_ref, dense_ref, upw_ref, upsa_ref,
                   giw_ref, ghw_ref, ow_ref, out_ref, gx_ref, rnn_ref):
    f32 = jnp.float32

    # ---- Upsampler.dense: (B, n_z) @ (n_z, 128) + bias; columns already come in
    #      (low-res-time, feature) order -> no relayout needed. ----
    h = (jnp.dot(z_ref[...], dense_ref[0:N_Z, :], preferred_element_type=f32)
         + dense_ref[N_Z:N_Z + 1, :])                        # (B_TILE, 128)

    # ---- 3 x [ConvTranspose1d(k=2,s=2, BN scale folded) -> +shift -> PReLU]
    #      Each layer is a single (B,128)@(128,128) matmul with a block-diagonal
    #      weight; columns stay in (time, channel) order, so no interleaves. ----
    for i in range(3):
        y = jnp.dot(h, upw_ref[i], preferred_element_type=f32) + upsa_ref[i:i + 1, :]
        a = upsa_ref[4 + i:5 + i, :]                         # PReLU alpha, broadcast row
        h = jnp.where(y > 0.0, y, a * y)
    # h: (B_TILE, N_L*C_H), col = t*C_H + channel

    # ---- teacher-forcing input (time-major columns) with dropout mask applied.
    #      project_x (1x1 conv) is folded into the GRU input weights. ----
    xm = x_ref[...] * mask_ref[...]                          # (B_TILE, N_L*N_C)

    # ---- All GRU input-gate pre-activations in one shot.  Per-step blocks are
    #      padded to 128 lanes so each per-step read below is one aligned vreg
    #      column block.  Result staged in VMEM scratch to bound live ranges. ----
    gx_ref[...] = (
        jnp.dot(h, giw_ref[0:COLS, :], preferred_element_type=f32)
        + jnp.dot(xm, giw_ref[COLS:GIW_B0, :], preferred_element_type=f32)
        + giw_ref[GIW_B0:GIW_B0 + 1, :])                     # (B_TILE, N_L*128)

    whh = ghw_ref[0:GRU_H, :]                                # (32, 128), 96 valid cols
    bhh = ghw_ref[GRU_H:GRU_H + 1, :]                        # (1, 128)

    # ---- GRU recurrence (unrolled; only the tiny hidden matmul is serial). ----
    hprev = jnp.zeros((B_TILE, GRU_H), f32)
    for t in range(N_L):
        gx = gx_ref[:, t * STEP_W:(t + 1) * STEP_W]          # aligned 128-lane block
        gh = jnp.dot(hprev, whh, preferred_element_type=f32,
                     precision=lax.Precision.HIGHEST) + bhh
        r = jax.nn.sigmoid(gx[:, 0:GRU_H] + gh[:, 0:GRU_H])
        u = jax.nn.sigmoid(gx[:, GRU_H:2 * GRU_H] + gh[:, GRU_H:2 * GRU_H])
        n = jnp.tanh(gx[:, 2 * GRU_H:3 * GRU_H] + r * gh[:, 2 * GRU_H:3 * GRU_H])
        hprev = (1.0 - u) * n + u * hprev
        rnn_ref[t * B_TILE:(t + 1) * B_TILE, :] = hprev      # aligned sublane store

    # ---- output_x 1x1 conv: one matmul over all (t, b) rows, bias as last row. ----
    out_ref[...] = (jnp.dot(rnn_ref[...], ow_ref[0:GRU_H, :], preferred_element_type=f32)
                    + ow_ref[GRU_H:GRU_H + 1, :])


# ----------------------------------------------------------------------------
# Wrapper: input layout, constant folding on parameters, pallas_call with grid.
# ----------------------------------------------------------------------------
@jax.jit
def decoder_arvae_forward(X, z, params, dropout_mask):
    """X: (B, real_n_l, n_c), z: (B, n_z), dropout_mask: (B, n_l) scaled keep mask.
    Returns (B, real_n_l, n_c) logits, matching Decoder_ARVAE.forward(..., True)."""
    f32 = jnp.float32
    B = X.shape[0]
    nb = -(-B // B_TILE)
    B_pad = nb * B_TILE

    # -- activation layout: pad length, shift right one step (teacher forcing),
    #    flatten to (batch, time-major columns); pad batch to the tile size. --
    Xp = jnp.pad(X.astype(f32), ((0, 0), (0, N_L - REAL_N_L), (0, 0)))
    Xs = jnp.concatenate([jnp.zeros((B, 1, N_C), f32), Xp[:, :-1, :]], axis=1)
    x_cols = jnp.pad(Xs.reshape(B, N_L * N_C), ((0, B_pad - B), (0, 0)))
    mask_cols = jnp.pad(jnp.repeat(dropout_mask.astype(f32), N_C, axis=1),
                        ((0, B_pad - B), (0, 0)))
    z_p = jnp.pad(z.astype(f32), ((0, B_pad - B), (0, 0)))

    # -- constant folding on parameters (runs once on weights, not activations) --
    # dense: columns permuted to (low-res-time, feature) order, bias stored as row 8.
    dwt = params['dense_w'].astype(f32).T.reshape(N_Z, LOW_F, L0)
    dwt = jnp.transpose(dwt, (0, 2, 1)).reshape(N_Z, COLS)
    dbt = params['dense_b'].astype(f32).reshape(LOW_F, L0).T.reshape(COLS)
    dense_wb = jnp.zeros((16, COLS), f32).at[0:N_Z].set(dwt).at[N_Z].set(dbt)

    # up layers: fuse both ConvTranspose taps + BN scale into one (Cin, 2*Cout)
    # block, replicate block-diagonally over time positions -> (128,128) per layer.
    upw = jnp.zeros((3, COLS, COLS), f32)
    upsa = jnp.zeros((8, COLS), f32)       # rows 0..2 = BN shift (tiled), rows 4..6 = PReLU alpha
    l_in = L0
    for i in range(3):
        cout = UP_COUT[i]
        w = params[f'up{i}_w'].astype(f32)                             # (cin, cout, 2)
        s = params[f'up{i}_bn_gamma'] / jnp.sqrt(params[f'up{i}_bn_var'] + BN_EPS)
        sh = params[f'up{i}_bn_beta'] - params[f'up{i}_bn_mean'] * s
        wf = jnp.concatenate([w[:, :, 0], w[:, :, 1]], axis=1) * jnp.tile(s, 2)[None, :]
        upw = upw.at[i].set(jnp.kron(jnp.eye(l_in, dtype=f32), wf))
        upsa = upsa.at[i].set(jnp.tile(sh, 2 * l_in))
        upsa = upsa.at[4 + i].set(params[f'up{i}_prelu'].astype(f32)[0])
        l_in *= 2

    # GRU input projection with project_x folded, block-replicated over time steps;
    # per-step blocks padded from 3H=96 to 128 lanes; total bias stored as last row.
    wih = params['gru_wih'].astype(f32)                                # (3H, 12)
    wp = params['proj_w'].astype(f32)[:, :, 0]                         # (n_c, n_c)
    wih_h = wih[:, :C_H]
    wih_x = wih[:, C_H:]
    b_gx = params['gru_bih'].astype(f32) + wih_x @ params['proj_b'].astype(f32)
    pad_g = ((0, 0), (0, STEP_W - 3 * GRU_H))
    wh_blk = jnp.kron(jnp.eye(N_L, dtype=f32), jnp.pad(wih_h.T, pad_g))        # (128, 2048)
    wx_blk = jnp.kron(jnp.eye(N_L, dtype=f32), jnp.pad((wih_x @ wp).T, pad_g))  # (64, 2048)
    b_row = jnp.tile(jnp.pad(b_gx, (0, STEP_W - 3 * GRU_H)), N_L)               # (2048,)
    giw = (jnp.zeros((GIW_ROWS, N_L * STEP_W), f32)
           .at[0:COLS].set(wh_blk).at[COLS:GIW_B0].set(wx_blk).at[GIW_B0].set(b_row))

    # GRU hidden weights (columns padded 96 -> 128), bias as row 32 (b_hn must stay
    # inside the r-gate product, so it is NOT folded into the gx bias).
    ghw = (jnp.zeros((40, STEP_W), f32)
           .at[0:GRU_H, 0:3 * GRU_H].set(params['gru_whh'].astype(f32).T)
           .at[GRU_H, 0:3 * GRU_H].set(params['gru_bhh'].astype(f32)))
    ow = (jnp.zeros((40, N_C), f32)
          .at[0:GRU_H].set(params['out_w'].astype(f32)[:, :, 0].T)
          .at[GRU_H].set(params['out_b'].astype(f32)))

    grid_spec = pltpu.PrefetchScalarGridSpec(
        num_scalar_prefetch=0,
        grid=(nb,),
        in_specs=[
            pl.BlockSpec((B_TILE, N_Z), lambda i: (i, 0)),
            pl.BlockSpec((B_TILE, N_L * N_C), lambda i: (i, 0)),
            pl.BlockSpec((B_TILE, N_L * N_C), lambda i: (i, 0)),
            pl.BlockSpec((16, COLS), lambda i: (0, 0)),
            pl.BlockSpec((3, COLS, COLS), lambda i: (0, 0, 0)),
            pl.BlockSpec((8, COLS), lambda i: (0, 0)),
            pl.BlockSpec((GIW_ROWS, N_L * STEP_W), lambda i: (0, 0)),
            pl.BlockSpec((40, STEP_W), lambda i: (0, 0)),
            pl.BlockSpec((40, N_C), lambda i: (0, 0)),
        ],
        out_specs=pl.BlockSpec((N_L * B_TILE, N_C), lambda i: (i, 0)),
        scratch_shapes=[
            pltpu.VMEM((B_TILE, N_L * STEP_W), jnp.float32),   # staged gx pre-activations
            pltpu.VMEM((N_L * B_TILE, GRU_H), jnp.float32),    # per-step GRU hidden states
        ],
    )

    out = pl.pallas_call(
        decoder_kernel,
        out_shape=jax.ShapeDtypeStruct((nb * N_L * B_TILE, N_C), jnp.float32),
        grid_spec=grid_spec,
        compiler_params=pltpu.CompilerParams(dimension_semantics=("parallel",)),
    )(z_p, x_cols, mask_cols, dense_wb, upw, upsa, giw, ghw, ow)

    out = out.reshape(nb, N_L, B_TILE, N_C).transpose(0, 2, 1, 3).reshape(B_pad, N_L, N_C)
    return out[:B, :REAL_N_L, :]


# ----------------------------------------------------------------------------
# Pure-JAX reference (mirrors the PyTorch forward, training path) for validation.
# ----------------------------------------------------------------------------
def reference_forward(X, z, params, dropout_mask):
    P = lax.Precision.HIGHEST
    B = X.shape[0]
    Xp = jnp.pad(X, ((0, 0), (0, N_L - REAL_N_L), (0, 0)))
    Xc = jnp.transpose(Xp, (0, 2, 1))                                # (B, n_c, n_l)

    # Upsampler
    h = jnp.dot(z, params['dense_w'].T, precision=P) + params['dense_b']
    h = h.reshape(B, LOW_F, L0)
    for i in range(3):
        w = params[f'up{i}_w']                                       # (cin, cout, 2)
        y = jnp.einsum('bcl,cok->bolk', h, w, precision=P)
        y = y.reshape(B, UP_COUT[i], -1)                             # (B, cout, 2L)
        g = params[f'up{i}_bn_gamma'][None, :, None]
        be = params[f'up{i}_bn_beta'][None, :, None]
        m = params[f'up{i}_bn_mean'][None, :, None]
        v = params[f'up{i}_bn_var'][None, :, None]
        y = (y - m) / jnp.sqrt(v + BN_EPS) * g + be
        a = params[f'up{i}_prelu']
        h = jnp.where(y > 0, y, a * y)
    # h: (B, C_H, n_l)

    # teacher forcing path
    Xsh = jnp.concatenate([jnp.zeros((B, N_C, 1), X.dtype), Xc[:, :, :-1]], axis=-1)
    mask = dropout_mask[:, None, :]                                  # (B, 1, n_l)
    px = jnp.einsum('oi,bil->bol', params['proj_w'][:, :, 0], Xsh * mask, precision=P)
    px = px + params['proj_b'][None, :, None]
    rnn_in = jnp.transpose(jnp.concatenate([h, px], axis=1), (0, 2, 1))   # (B, n_l, 12)

    wih, bih = params['gru_wih'], params['gru_bih']
    whh, bhh = params['gru_whh'], params['gru_bhh']

    def cell(hp, xt):
        gi = jnp.dot(xt, wih.T, precision=P) + bih
        gh = jnp.dot(hp, whh.T, precision=P) + bhh
        r = jax.nn.sigmoid(gi[:, :GRU_H] + gh[:, :GRU_H])
        u = jax.nn.sigmoid(gi[:, GRU_H:2 * GRU_H] + gh[:, GRU_H:2 * GRU_H])
        n = jnp.tanh(gi[:, 2 * GRU_H:] + r * gh[:, 2 * GRU_H:])
        hn = (1.0 - u) * n + u * hp
        return hn, hn

    h0 = jnp.zeros((B, GRU_H), jnp.float32)
    _, hs = lax.scan(cell, h0, jnp.transpose(rnn_in, (1, 0, 2)))     # (n_l, B, H)
    rnn_out = jnp.transpose(hs, (1, 0, 2))                           # (B, n_l, H)

    logits = jnp.einsum('oh,bth->bto', params['out_w'][:, :, 0], rnn_out, precision=P)
    logits = logits + params['out_b'][None, None, :]
    return logits[:, :REAL_N_L, :]


# ----------------------------------------------------------------------------
# Deterministic parameter / input construction and test.
# ----------------------------------------------------------------------------
def make_params(key):
    p = {}
    ks = iter(jax.random.split(key, 32))
    p['dense_w'] = jax.random.normal(next(ks), (L0 * LOW_F, N_Z), jnp.float32) / np.sqrt(N_Z)
    p['dense_b'] = 0.02 * jax.random.normal(next(ks), (L0 * LOW_F,), jnp.float32)
    for i in range(3):
        cin, cout = UP_CIN[i], UP_COUT[i]
        p[f'up{i}_w'] = jax.random.normal(next(ks), (cin, cout, 2), jnp.float32) / np.sqrt(cin)
        p[f'up{i}_bn_gamma'] = 1.0 + 0.1 * jax.random.normal(next(ks), (cout,), jnp.float32)
        p[f'up{i}_bn_beta'] = 0.05 * jax.random.normal(next(ks), (cout,), jnp.float32)
        p[f'up{i}_bn_mean'] = 0.02 * jax.random.normal(next(ks), (cout,), jnp.float32)
        p[f'up{i}_bn_var'] = 1.0 + 0.1 * jnp.abs(jax.random.normal(next(ks), (cout,), jnp.float32))
        p[f'up{i}_prelu'] = jnp.full((1,), 0.25, jnp.float32)        # PyTorch PReLU default
    p['proj_w'] = jax.random.normal(next(ks), (N_C, N_C, 1), jnp.float32) / np.sqrt(N_C)
    p['proj_b'] = 0.02 * jax.random.normal(next(ks), (N_C,), jnp.float32)
    p['gru_wih'] = jax.random.normal(next(ks), (3 * GRU_H, GRU_IN), jnp.float32) / np.sqrt(GRU_IN)
    p['gru_whh'] = jax.random.normal(next(ks), (3 * GRU_H, GRU_H), jnp.float32) / np.sqrt(GRU_H)
    p['gru_bih'] = 0.02 * jax.random.normal(next(ks), (3 * GRU_H,), jnp.float32)
    p['gru_bhh'] = 0.02 * jax.random.normal(next(ks), (3 * GRU_H,), jnp.float32)
    p['out_w'] = jax.random.normal(next(ks), (N_C, GRU_H, 1), jnp.float32) / np.sqrt(GRU_H)
    p['out_b'] = 0.02 * jax.random.normal(next(ks), (N_C,), jnp.float32)
    return p


if __name__ == "__main__":
    root = jax.random.PRNGKey(0)
    k_par, k_x, k_z, k_drop = jax.random.split(root, 4)
    params = make_params(k_par)
    X = jax.random.normal(k_x, (BATCH, REAL_N_L, N_C), jnp.float32)
    z = jax.random.normal(k_z, (BATCH, N_Z), jnp.float32)
    keep = jax.random.bernoulli(k_drop, p=1.0 - DROP_P, shape=(BATCH, N_L))
    dropout_mask = keep.astype(jnp.float32) / (1.0 - DROP_P)

    out_k = jax.block_until_ready(decoder_arvae_forward(X, z, params, dropout_mask))
    out_r = reference_forward(X, z, params, dropout_mask)

    # Bulk matmuls run at default (single-pass bf16) MXU precision; the reference
    # uses Precision.HIGHEST, so the tolerance is sized for bf16 matmul rounding.
    np.testing.assert_allclose(np.asarray(out_k), np.asarray(out_r), rtol=5e-2, atol=5e-2)

    print("KERNEL_OK")
</pallas_src>

<mosaic_0001>
module attributes {stable_mosaic.version = 11 : i64} {
  func.func @decoder_kernel(%arg0: i32, %arg1: memref<8x8xf32, #tpu.memory_space<vmem>>, %arg2: memref<8x64xf32, #tpu.memory_space<vmem>>, %arg3: memref<8x64xf32, #tpu.memory_space<vmem>>, %arg4: memref<16x128xf32, #tpu.memory_space<vmem>>, %arg5: memref<3x128x128xf32, #tpu.memory_space<vmem>>, %arg6: memref<8x128xf32, #tpu.memory_space<vmem>>, %arg7: memref<200x2048xf32, #tpu.memory_space<vmem>>, %arg8: memref<40x128xf32, #tpu.memory_space<vmem>>, %arg9: memref<40x4xf32, #tpu.memory_space<vmem>>, %arg10: memref<128x4xf32, #tpu.memory_space<vmem>>, %arg11: memref<8x2048xf32, #tpu.memory_space<vmem>>, %arg12: memref<128x32xf32, #tpu.memory_space<vmem>>) attributes {dimension_semantics = [#tpu.dimension_semantics<parallel>], iteration_bounds = array<i64: 1>, scalar_prefetch = 0 : i64, scratch_operands = 2 : i64, tpu.core_type = #tpu.core_type<tc>, window_params = [{transform_indices = @transform_0, window_bounds = array<i64: 8, 8>}, {transform_indices = @transform_1, window_bounds = array<i64: 8, 64>}, {transform_indices = @transform_2, window_bounds = array<i64: 8, 64>}, {pipeline_mode = #tpu.pipeline_mode<synchronous>, transform_indices = @transform_3, window_bounds = array<i64: 16, 128>}, {pipeline_mode = #tpu.pipeline_mode<synchronous>, transform_indices = @transform_4, window_bounds = array<i64: 3, 128, 128>}, {pipeline_mode = #tpu.pipeline_mode<synchronous>, transform_indices = @transform_5, window_bounds = array<i64: 8, 128>}, {pipeline_mode = #tpu.pipeline_mode<synchronous>, transform_indices = @transform_6, window_bounds = array<i64: 200, 2048>}, {pipeline_mode = #tpu.pipeline_mode<synchronous>, transform_indices = @transform_7, window_bounds = array<i64: 40, 128>}, {pipeline_mode = #tpu.pipeline_mode<synchronous>, transform_indices = @transform_8, window_bounds = array<i64: 40, 4>}, {transform_indices = @transform_9, window_bounds = array<i64: 128, 4>}]} {
    %c0 = arith.constant 0 : index
    %c0_0 = arith.constant 0 : index
    %0 = vector.load %arg1[%c0, %c0_0] : memref<8x8xf32, #tpu.memory_space<vmem>>, vector<8x8xf32>
    %c0_1 = arith.constant 0 : index
    %c0_2 = arith.constant 0 : index
    %1 = vector.load %arg4[%c0_1, %c0_2] : memref<16x128xf32, #tpu.memory_space<vmem>>, vector<8x128xf32>
    %cst = arith.constant dense<0.000000e+00> : vector<8x128xf32>
    %2 = tpu.matmul %0, %1, %cst {dimension_numbers = #tpu.dot_dimension_numbers<[1], [0], [0], [1], [0, 0, 1, 1], [], []>} : vector<8x8xf32>, vector<8x128xf32>, vector<8x128xf32> -> vector<8x128xf32>
    %c8 = arith.constant 8 : index
    %c0_3 = arith.constant 0 : index
    %3 = vector.load %arg4[%c8, %c0_3] : memref<16x128xf32, #tpu.memory_space<vmem>>, vector<1x128xf32>
    %4 = vector.broadcast %3 : vector<1x128xf32> to vector<8x128xf32>
    %5 = arith.addf %2, %4 : vector<8x128xf32>
    %c0_4 = arith.constant 0 : index
    %c0_5 = arith.constant 0 : index
    %c0_6 = arith.constant 0 : index
    %6 = vector.load %arg5[%c0_4, %c0_5, %c0_6] : memref<3x128x128xf32, #tpu.memory_space<vmem>>, vector<1x128x128xf32>
    %7 = vector.shape_cast %6 : vector<1x128x128xf32> to vector<128x128xf32>
    %cst_7 = arith.constant dense<0.000000e+00> : vector<8x128xf32>
    %8 = tpu.matmul %5, %7, %cst_7 {dimension_numbers = #tpu.dot_dimension_numbers<[1], [0], [0], [1], [0, 0, 1, 1], [], []>} : vector<8x128xf32>, vector<128x128xf32>, vector<8x128xf32> -> vector<8x128xf32>
    %c0_8 = arith.constant 0 : index
    %c0_9 = arith.constant 0 : index
    %9 = vector.load %arg6[%c0_8, %c0_9] : memref<8x128xf32, #tpu.memory_space<vmem>>, vector<1x128xf32>
    %10 = vector.broadcast %9 : vector<1x128xf32> to vector<8x128xf32>
    %11 = arith.addf %8, %10 : vector<8x128xf32>
    %c4 = arith.constant 4 : index
    %c0_10 = arith.constant 0 : index
    %12 = vector.load %arg6[%c4, %c0_10] : memref<8x128xf32, #tpu.memory_space<vmem>>, vector<1x128xf32>
    %cst_11 = arith.constant 0.000000e+00 : f32
    %13 = vector.broadcast %cst_11 : f32 to vector<8x128xf32>
    %14 = arith.cmpf ogt, %11, %13 : vector<8x128xf32>
    %15 = vector.broadcast %12 : vector<1x128xf32> to vector<8x128xf32>
    %16 = arith.mulf %15, %11 : vector<8x128xf32>
    %17 = arith.select %14, %11, %16 : vector<8x128xi1>, vector<8x128xf32>
    %c1 = arith.constant 1 : index
    %c0_12 = arith.constant 0 : index
    %c0_13 = arith.constant 0 : index
    %18 = vector.load %arg5[%c1, %c0_12, %c0_13] : memref<3x128x128xf32, #tpu.memory_space<vmem>>, vector<1x128x128xf32>
    %19 = vector.shape_cast %18 : vector<1x128x128xf32> to vector<128x128xf32>
    %cst_14 = arith.constant dense<0.000000e+00> : vector<8x128xf32>
    %20 = tpu.matmul %17, %19, %cst_14 {dimension_numbers = #tpu.dot_dimension_numbers<[1], [0], [0], [1], [0, 0, 1, 1], [], []>} : vector<8x128xf32>, vector<128x128xf32>, vector<8x128xf32> -> vector<8x128xf32>
    %c1_15 = arith.constant 1 : index
    %c0_16 = arith.constant 0 : index
    %21 = vector.load %arg6[%c1_15, %c0_16] : memref<8x128xf32, #tpu.memory_space<vmem>>, vector<1x128xf32>
    %22 = vector.broadcast %21 : vector<1x128xf32> to vector<8x128xf32>
    %23 = arith.addf %20, %22 : vector<8x128xf32>
    %c5 = arith.constant 5 : index
    %c0_17 = arith.constant 0 : index
    %24 = vector.load %arg6[%c5, %c0_17] : memref<8x128xf32, #tpu.memory_space<vmem>>, vector<1x128xf32>
    %cst_18 = arith.constant 0.000000e+00 : f32
    %25 = vector.broadcast %cst_18 : f32 to vector<8x128xf32>
    %26 = arith.cmpf ogt, %23, %25 : vector<8x128xf32>
    %27 = vector.broadcast %24 : vector<1x128xf32> to vector<8x128xf32>
    %28 = arith.mulf %27, %23 : vector<8x128xf32>
    %29 = arith.select %26, %23, %28 : vector<8x128xi1>, vector<8x128xf32>
    %c2 = arith.constant 2 : index
    %c0_19 = arith.constant 0 : index
    %c0_20 = arith.constant 0 : index
    %30 = vector.load %arg5[%c2, %c0_19, %c0_20] : memref<3x128x128xf32, #tpu.memory_space<vmem>>, vector<1x128x128xf32>
    %31 = vector.shape_cast %30 : vector<1x128x128xf32> to vector<128x128xf32>
    %cst_21 = arith.constant dense<0.000000e+00> : vector<8x128xf32>
    %32 = tpu.matmul %29, %31, %cst_21 {dimension_numbers = #tpu.dot_dimension_numbers<[1], [0], [0], [1], [0, 0, 1, 1], [], []>} : vector<8x128xf32>, vector<128x128xf32>, vector<8x128xf32> -> vector<8x128xf32>
    %c2_22 = arith.constant 2 : index
    %c0_23 = arith.constant 0 : index
    %33 = vector.load %arg6[%c2_22, %c0_23] : memref<8x128xf32, #tpu.memory_space<vmem>>, vector<1x128xf32>
    %34 = vector.broadcast %33 : vector<1x128xf32> to vector<8x128xf32>
    %35 = arith.addf %32, %34 : vector<8x128xf32>
    %c6 = arith.constant 6 : index
    %c0_24 = arith.constant 0 : index
    %36 = vector.load %arg6[%c6, %c0_24] : memref<8x128xf32, #tpu.memory_space<vmem>>, vector<1x128xf32>
    %cst_25 = arith.constant 0.000000e+00 : f32
    %37 = vector.broadcast %cst_25 : f32 to vector<8x128xf32>
    %38 = arith.cmpf ogt, %35, %37 : vector<8x128xf32>
    %39 = vector.broadcast %36 : vector<1x128xf32> to vector<8x128xf32>
    %40 = arith.mulf %39, %35 : vector<8x128xf32>
    %41 = arith.select %38, %35, %40 : vector<8x128xi1>, vector<8x128xf32>
    %c0_26 = arith.constant 0 : index
    %c0_27 = arith.constant 0 : index
    %42 = vector.load %arg2[%c0_26, %c0_27] : memref<8x64xf32, #tpu.memory_space<vmem>>, vector<8x64xf32>
    %c0_28 = arith.constant 0 : index
    %c0_29 = arith.constant 0 : index
    %43 = vector.load %arg3[%c0_28, %c0_29] : memref<8x64xf32, #tpu.memory_space<vmem>>, vector<8x64xf32>
    %44 = arith.mulf %42, %43 : vector<8x64xf32>
    %c0_30 = arith.constant 0 : index
    %c0_31 = arith.constant 0 : index
    %45 = vector.load %arg7[%c0_30, %c0_31] : memref<200x2048xf32, #tpu.memory_space<vmem>>, vector<128x2048xf32>
    %cst_32 = arith.constant dense<0.000000e+00> : vector<8x2048xf32>
    %46 = tpu.matmul %41, %45, %cst_32 {dimension_numbers = #tpu.dot_dimension_numbers<[1], [0], [0], [1], [0, 0, 1, 1], [], []>} : vector<8x128xf32>, vector<128x2048xf32>, vector<8x2048xf32> -> vector<8x2048xf32>
    %c128 = arith.constant 128 : index
    %c0_33 = arith.constant 0 : index
    %47 = vector.load %arg7[%c128, %c0_33] : memref<200x2048xf32, #tpu.memory_space<vmem>>, vector<64x2048xf32>
    %cst_34 = arith.constant dense<0.000000e+00> : vector<8x2048xf32>
    %48 = tpu.matmul %44, %47, %cst_34 {dimension_numbers = #tpu.dot_dimension_numbers<[1], [0], [0], [1], [0, 0, 1, 1], [], []>} : vector<8x64xf32>, vector<64x2048xf32>, vector<8x2048xf32> -> vector<8x2048xf32>
    %49 = arith.addf %46, %48 : vector<8x2048xf32>
    %c192 = arith.constant 192 : index
    %c0_35 = arith.constant 0 : index
    %50 = vector.load %arg7[%c192, %c0_35] : memref<200x2048xf32, #tpu.memory_space<vmem>>, vector<1x2048xf32>
    %51 = vector.broadcast %50 : vector<1x2048xf32> to vector<8x2048xf32>
    %52 = arith.addf %49, %51 : vector<8x2048xf32>
    %c0_36 = arith.constant 0 : index
    %c0_37 = arith.constant 0 : index
    %53 = vector.load %arg11[%c0_36, %c0_37] : memref<8x2048xf32, #tpu.memory_space<vmem>>, vector<8x2048xf32>
    tpu.vector_store %arg11[%c0_36, %c0_37], %52 {strides = array<i32>} : memref<8x2048xf32, #tpu.memory_space<vmem>>, vector<8x2048xf32>,
    %c0_38 = arith.constant 0 : index
    %c0_39 = arith.constant 0 : index
    %54 = vector.load %arg8[%c0_38, %c0_39] : memref<40x128xf32, #tpu.memory_space<vmem>>, vector<32x128xf32>
    %c32 = arith.constant 32 : index
    %c0_40 = arith.constant 0 : index
    %55 = vector.load %arg8[%c32, %c0_40] : memref<40x128xf32, #tpu.memory_space<vmem>>, vector<1x128xf32>
    %cst_41 = arith.constant 0.000000e+00 : f32
    %56 = vector.broadcast %cst_41 : f32 to vector<8x32xf32>
    %c0_42 = arith.constant 0 : index
    %c0_43 = arith.constant 0 : index
    %57 = vector.load %arg11[%c0_42, %c0_43] : memref<8x2048xf32, #tpu.memory_space<vmem>>, vector<8x128xf32>
    %cst_44 = arith.constant dense<0.000000e+00> : vector<8x128xf32>
    %58 = tpu.matmul %56, %54, %cst_44 {dimension_numbers = #tpu.dot_dimension_numbers<[1], [0], [0], [1], [0, 0, 1, 1], [], []>, precision = #tpu.contract_precision<fp32>} : vector<8x32xf32>, vector<32x128xf32>, vector<8x128xf32> -> vector<8x128xf32>
    %59 = vector.broadcast %55 : vector<1x128xf32> to vector<8x128xf32>
    %60 = arith.addf %58, %59 : vector<8x128xf32>
    %61 = vector.extract_strided_slice %57 {offsets = [0, 0], sizes = [8, 32], strides = [1, 1]} : vector<8x128xf32> to vector<8x32xf32>
    %62 = vector.extract_strided_slice %60 {offsets = [0, 0], sizes = [8, 32], strides = [1, 1]} : vector<8x128xf32> to vector<8x32xf32>
    %63 = arith.addf %61, %62 : vector<8x32xf32>
    %64 = arith.negf %63 : vector<8x32xf32>
    %65 = math.exp %64 : vector<8x32xf32>
    %cst_45 = arith.constant 1.000000e+00 : f32
    %66 = vector.broadcast %cst_45 : f32 to vector<8x32xf32>
    %67 = arith.addf %66, %65 : vector<8x32xf32>
    %68 = arith.divf %66, %67 : vector<8x32xf32>
    %69 = vector.extract_strided_slice %57 {offsets = [0, 32], sizes = [8, 32], strides = [1, 1]} : vector<8x128xf32> to vector<8x32xf32>
    %70 = vector.extract_strided_slice %60 {offsets = [0, 32], sizes = [8, 32], strides = [1, 1]} : vector<8x128xf32> to vector<8x32xf32>
    %71 = arith.addf %69, %70 : vector<8x32xf32>
    %72 = arith.negf %71 : vector<8x32xf32>
    %73 = math.exp %72 : vector<8x32xf32>
    %cst_46 = arith.constant 1.000000e+00 : f32
    %74 = vector.broadcast %cst_46 : f32 to vector<8x32xf32>
    %75 = arith.addf %74, %73 : vector<8x32xf32>
    %76 = arith.divf %74, %75 : vector<8x32xf32>
    %77 = vector.extract_strided_slice %57 {offsets = [0, 64], sizes = [8, 32], strides = [1, 1]} : vector<8x128xf32> to vector<8x32xf32>
    %78 = vector.extract_strided_slice %60 {offsets = [0, 64], sizes = [8, 32], strides = [1, 1]} : vector<8x128xf32> to vector<8x32xf32>
    %79 = arith.mulf %68, %78 : vector<8x32xf32>
    %80 = arith.addf %77, %79 : vector<8x32xf32>
    %81 = math.tanh %80 : vector<8x32xf32>
    %cst_47 = arith.constant 1.000000e+00 : f32
    %82 = vector.broadcast %cst_47 : f32 to vector<8x32xf32>
    %83 = arith.subf %82, %76 : vector<8x32xf32>
    %84 = arith.mulf %83, %81 : vector<8x32xf32>
    %85 = arith.mulf %76, %56 : vector<8x32xf32>
    %86 = arith.addf %84, %85 : vector<8x32xf32>
    %c0_48 = arith.constant 0 : index
    %c0_49 = arith.constant 0 : index
    %87 = vector.load %arg12[%c0_48, %c0_49] : memref<128x32xf32, #tpu.memory_space<vmem>>, vector<8x32xf32>
    tpu.vector_store %arg12[%c0_48, %c0_49], %86 {strides = array<i32>} : memref<128x32xf32, #tpu.memory_space<vmem>>, vector<8x32xf32>,
    %c0_50 = arith.constant 0 : index
    %c128_51 = arith.constant 128 : index
    %88 = vector.load %arg11[%c0_50, %c128_51] : memref<8x2048xf32, #tpu.memory_space<vmem>>, vector<8x128xf32>
    %cst_52 = arith.constant dense<0.000000e+00> : vector<8x128xf32>
    %89 = tpu.matmul %86, %54, %cst_52 {dimension_numbers = #tpu.dot_dimension_numbers<[1], [0], [0], [1], [0, 0, 1, 1], [], []>, precision = #tpu.contract_precision<fp32>} : vector<8x32xf32>, vector<32x128xf32>, vector<8x128xf32> -> vector<8x128xf32>
    %90 = vector.broadcast %55 : vector<1x128xf32> to vector<8x128xf32>
    %91 = arith.addf %89, %90 : vector<8x128xf32>
    %92 = vector.extract_strided_slice %88 {offsets = [0, 0], sizes = [8, 32], strides = [1, 1]} : vector<8x128xf32> to vector<8x32xf32>
    %93 = vector.extract_strided_slice %91 {offsets = [0, 0], sizes = [8, 32], strides = [1, 1]} : vector<8x128xf32> to vector<8x32xf32>
    %94 = arith.addf %92, %93 : vector<8x32xf32>
    %95 = arith.negf %94 : vector<8x32xf32>
    %96 = math.exp %95 : vector<8x32xf32>
    %cst_53 = arith.constant 1.000000e+00 : f32
    %97 = vector.broadcast %cst_53 : f32 to vector<8x32xf32>
    %98 = arith.addf %97, %96 : vector<8x32xf32>
    %99 = arith.divf %97, %98 : vector<8x32xf32>
    %100 = vector.extract_strided_slice %88 {offsets = [0, 32], sizes = [8, 32], strides = [1, 1]} : vector<8x128xf32> to vector<8x32xf32>
    %101 = vector.extract_strided_slice %91 {offsets = [0, 32], sizes = [8, 32], strides = [1, 1]} : vector<8x128xf32> to vector<8x32xf32>
    %102 = arith.addf %100, %101 : vector<8x32xf32>
    %103 = arith.negf %102 : vector<8x32xf32>
    %104 = math.exp %103 : vector<8x32xf32>
    %cst_54 = arith.constant 1.000000e+00 : f32
    %105 = vector.broadcast %cst_54 : f32 to vector<8x32xf32>
    %106 = arith.addf %105, %104 : vector<8x32xf32>
    %107 = arith.divf %105, %106 : vector<8x32xf32>
    %108 = vector.extract_strided_slice %88 {offsets = [0, 64], sizes = [8, 32], strides = [1, 1]} : vector<8x128xf32> to vector<8x32xf32>
    %109 = vector.extract_strided_slice %91 {offsets = [0, 64], sizes = [8, 32], strides = [1, 1]} : vector<8x128xf32> to vector<8x32xf32>
    %110 = arith.mulf %99, %109 : vector<8x32xf32>
    %111 = arith.addf %108, %110 : vector<8x32xf32>
    %112 = math.tanh %111 : vector<8x32xf32>
    %cst_55 = arith.constant 1.000000e+00 : f32
    %113 = vector.broadcast %cst_55 : f32 to vector<8x32xf32>
    %114 = arith.subf %113, %107 : vector<8x32xf32>
    %115 = arith.mulf %114, %112 : vector<8x32xf32>
    %116 = arith.mulf %107, %86 : vector<8x32xf32>
    %117 = arith.addf %115, %116 : vector<8x32xf32>
    %c8_56 = arith.constant 8 : index
    %c0_57 = arith.constant 0 : index
    %118 = vector.load %arg12[%c8_56, %c0_57] : memref<128x32xf32, #tpu.memory_space<vmem>>, vector<8x32xf32>
    tpu.vector_store %arg12[%c8_56, %c0_57], %117 {strides = array<i32>} : memref<128x32xf32, #tpu.memory_space<vmem>>, vector<8x32xf32>,
    %c0_58 = arith.constant 0 : index
    %c256 = arith.constant 256 : index
    %119 = vector.load %arg11[%c0_58, %c256] : memref<8x2048xf32, #tpu.memory_space<vmem>>, vector<8x128xf32>
    %cst_59 = arith.constant dense<0.000000e+00> : vector<8x128xf32>
    %120 = tpu.matmul %117, %54, %cst_59 {dimension_numbers = #tpu.dot_dimension_numbers<[1], [0], [0], [1], [0, 0, 1, 1], [], []>, precision = #tpu.contract_precision<fp32>} : vector<8x32xf32>, vector<32x128xf32>, vector<8x128xf32> -> vector<8x128xf32>
    %121 = vector.broadcast %55 : vector<1x128xf32> to vector<8x128xf32>
    %122 = arith.addf %120, %121 : vector<8x128xf32>
    %123 = vector.extract_strided_slice %119 {offsets = [0, 0], sizes = [8, 32], strides = [1, 1]} : vector<8x128xf32> to vector<8x32xf32>
    %124 = vector.extract_strided_slice %122 {offsets = [0, 0], sizes = [8, 32], strides = [1, 1]} : vector<8x128xf32> to vector<8x32xf32>
    %125 = arith.addf %123, %124 : vector<8x32xf32>
    %126 = arith.negf %125 : vector<8x32xf32>
    %127 = math.exp %126 : vector<8x32xf32>
    %cst_60 = arith.constant 1.000000e+00 : f32
    %128 = vector.broadcast %cst_60 : f32 to vector<8x32xf32>
    %129 = arith.addf %128, %127 : vector<8x32xf32>
    %130 = arith.divf %128, %129 : vector<8x32xf32>
    %131 = vector.extract_strided_slice %119 {offsets = [0, 32], sizes = [8, 32], strides = [1, 1]} : vector<8x128xf32> to vector<8x32xf32>
    %132 = vector.extract_strided_slice %122 {offsets = [0, 32], sizes = [8, 32], strides = [1, 1]} : vector<8x128xf32> to vector<8x32xf32>
    %133 = arith.addf %131, %132 : vector<8x32xf32>
    %134 = arith.negf %133 : vector<8x32xf32>
    %135 = math.exp %134 : vector<8x32xf32>
    %cst_61 = arith.constant 1.000000e+00 : f32
    %136 = vector.broadcast %cst_61 : f32 to vector<8x32xf32>
    %137 = arith.addf %136, %135 : vector<8x32xf32>
    %138 = arith.divf %136, %137 : vector<8x32xf32>
    %139 = vector.extract_strided_slice %119 {offsets = [0, 64], sizes = [8, 32], strides = [1, 1]} : vector<8x128xf32> to vector<8x32xf32>
    %140 = vector.extract_strided_slice %122 {offsets = [0, 64], sizes = [8, 32], strides = [1, 1]} : vector<8x128xf32> to vector<8x32xf32>
    %141 = arith.mulf %130, %140 : vector<8x32xf32>
    %142 = arith.addf %139, %141 : vector<8x32xf32>
    %143 = math.tanh %142 : vector<8x32xf32>
    %cst_62 = arith.constant 1.000000e+00 : f32
    %144 = vector.broadcast %cst_62 : f32 to vector<8x32xf32>
    %145 = arith.subf %144, %138 : vector<8x32xf32>
    %146 = arith.mulf %145, %143 : vector<8x32xf32>
    %147 = arith.mulf %138, %117 : vector<8x32xf32>
    %148 = arith.addf %146, %147 : vector<8x32xf32>
    %c16 = arith.constant 16 : index
    %c0_63 = arith.constant 0 : index
    %149 = vector.load %arg12[%c16, %c0_63] : memref<128x32xf32, #tpu.memory_space<vmem>>, vector<8x32xf32>
    tpu.vector_store %arg12[%c16, %c0_63], %148 {strides = array<i32>} : memref<128x32xf32, #tpu.memory_space<vmem>>, vector<8x32xf32>,
    %c0_64 = arith.constant 0 : index
    %c384 = arith.constant 384 : index
    %150 = vector.load %arg11[%c0_64, %c384] : memref<8x2048xf32, #tpu.memory_space<vmem>>, vector<8x128xf32>
    %cst_65 = arith.constant dense<0.000000e+00> : vector<8x128xf32>
    %151 = tpu.matmul %148, %54, %cst_65 {dimension_numbers = #tpu.dot_dimension_numbers<[1], [0], [0], [1], [0, 0, 1, 1], [], []>, precision = #tpu.contract_precision<fp32>} : vector<8x32xf32>, vector<32x128xf32>, vector<8x128xf32> -> vector<8x128xf32>
    %152 = vector.broadcast %55 : vector<1x128xf32> to vector<8x128xf32>
    %153 = arith.addf %151, %152 : vector<8x128xf32>
    %154 = vector.extract_strided_slice %150 {offsets = [0, 0], sizes = [8, 32], strides = [1, 1]} : vector<8x128xf32> to vector<8x32xf32>
    %155 = vector.extract_strided_slice %153 {offsets = [0, 0], sizes = [8, 32], strides = [1, 1]} : vector<8x128xf32> to vector<8x32xf32>
    %156 = arith.addf %154, %155 : vector<8x32xf32>
    %157 = arith.negf %156 : vector<8x32xf32>
    %158 = math.exp %157 : vector<8x32xf32>
    %cst_66 = arith.constant 1.000000e+00 : f32
    %159 = vector.broadcast %cst_66 : f32 to vector<8x32xf32>
    %160 = arith.addf %159, %158 : vector<8x32xf32>
    %161 = arith.divf %159, %160 : vector<8x32xf32>
    %162 = vector.extract_strided_slice %150 {offsets = [0, 32], sizes = [8, 32], strides = [1, 1]} : vector<8x128xf32> to vector<8x32xf32>
    %163 = vector.extract_strided_slice %153 {offsets = [0, 32], sizes = [8, 32], strides = [1, 1]} : vector<8x128xf32> to vector<8x32xf32>
    %164 = arith.addf %162, %163 : vector<8x32xf32>
    %165 = arith.negf %164 : vector<8x32xf32>
    %166 = math.exp %165 : vector<8x32xf32>
    %cst_67 = arith.constant 1.000000e+00 : f32
    %167 = vector.broadcast %cst_67 : f32 to vector<8x32xf32>
    %168 = arith.addf %167, %166 : vector<8x32xf32>
    %169 = arith.divf %167, %168 : vector<8x32xf32>
    %170 = vector.extract_strided_slice %150 {offsets = [0, 64], sizes = [8, 32], strides = [1, 1]} : vector<8x128xf32> to vector<8x32xf32>
    %171 = vector.extract_strided_slice %153 {offsets = [0, 64], sizes = [8, 32], strides = [1, 1]} : vector<8x128xf32> to vector<8x32xf32>
    %172 = arith.mulf %161, %171 : vector<8x32xf32>
    %173 = arith.addf %170, %172 : vector<8x32xf32>
    %174 = math.tanh %173 : vector<8x32xf32>
    %cst_68 = arith.constant 1.000000e+00 : f32
    %175 = vector.broadcast %cst_68 : f32 to vector<8x32xf32>
    %176 = arith.subf %175, %169 : vector<8x32xf32>
    %177 = arith.mulf %176, %174 : vector<8x32xf32>
    %178 = arith.mulf %169, %148 : vector<8x32xf32>
    %179 = arith.addf %177, %178 : vector<8x32xf32>
    %c24 = arith.constant 24 : index
    %c0_69 = arith.constant 0 : index
    %180 = vector.load %arg12[%c24, %c0_69] : memref<128x32xf32, #tpu.memory_space<vmem>>, vector<8x32xf32>
    tpu.vector_store %arg12[%c24, %c0_69], %179 {strides = array<i32>} : memref<128x32xf32, #tpu.memory_space<vmem>>, vector<8x32xf32>,
    %c0_70 = arith.constant 0 : index
    %c512 = arith.constant 512 : index
    %181 = vector.load %arg11[%c0_70, %c512] : memref<8x2048xf32, #tpu.memory_space<vmem>>, vector<8x128xf32>
    %cst_71 = arith.constant dense<0.000000e+00> : vector<8x128xf32>
    %182 = tpu.matmul %179, %54, %cst_71 {dimension_numbers = #tpu.dot_dimension_numbers<[1], [0], [0], [1], [0, 0, 1, 1], [], []>, precision = #tpu.contract_precision<fp32>} : vector<8x32xf32>, vector<32x128xf32>, vector<8x128xf32> -> vector<8x128xf32>
    %183 = vector.broadcast %55 : vector<1x128xf32> to vector<8x128xf32>
    %184 = arith.addf %182, %183 : vector<8x128xf32>
    %185 = vector.extract_strided_slice %181 {offsets = [0, 0], sizes = [8, 32], strides = [1, 1]} : vector<8x128xf32> to vector<8x32xf32>
    %186 = vector.extract_strided_slice %184 {offsets = [0, 0], sizes = [8, 32], strides = [1, 1]} : vector<8x128xf32> to vector<8x32xf32>
    %187 = arith.addf %185, %186 : vector<8x32xf32>
    %188 = arith.negf %187 : vector<8x32xf32>
    %189 = math.exp %188 : vector<8x32xf32>
    %cst_72 = arith.constant 1.000000e+00 : f32
    %190 = vector.broadcast %cst_72 : f32 to vector<8x32xf32>
    %191 = arith.addf %190, %189 : vector<8x32xf32>
    %192 = arith.divf %190, %191 : vector<8x32xf32>
    %193 = vector.extract_strided_slice %181 {offsets = [0, 32], sizes = [8, 32], strides = [1, 1]} : vector<8x128xf32> to vector<8x32xf32>
    %194 = vector.extract_strided_slice %184 {offsets = [0, 32], sizes = [8, 32], strides = [1, 1]} : vector<8x128xf32> to vector<8x32xf32>
    %195 = arith.addf %193, %194 : vector<8x32xf32>
    %196 = arith.negf %195 : vector<8x32xf32>
    %197 = math.exp %196 : vector<8x32xf32>
    %cst_73 = arith.constant 1.000000e+00 : f32
    %198 = vector.broadcast %cst_73 : f32 to vector<8x32xf32>
    %199 = arith.addf %198, %197 : vector<8x32xf32>
    %200 = arith.divf %198, %199 : vector<8x32xf32>
    %201 = vector.extract_strided_slice %181 {offsets = [0, 64], sizes = [8, 32], strides = [1, 1]} : vector<8x128xf32> to vector<8x32xf32>
    %202 = vector.extract_strided_slice %184 {offsets = [0, 64], sizes = [8, 32], strides = [1, 1]} : vector<8x128xf32> to vector<8x32xf32>
    %203 = arith.mulf %192, %202 : vector<8x32xf32>
    %204 = arith.addf %201, %203 : vector<8x32xf32>
    %205 = math.tanh %204 : vector<8x32xf32>
    %cst_74 = arith.constant 1.000000e+00 : f32
    %206 = vector.broadcast %cst_74 : f32 to vector<8x32xf32>
    %207 = arith.subf %206, %200 : vector<8x32xf32>
    %208 = arith.mulf %207, %205 : vector<8x32xf32>
    %209 = arith.mulf %200, %179 : vector<8x32xf32>
    %210 = arith.addf %208, %209 : vector<8x32xf32>
    %c32_75 = arith.constant 32 : index
    %c0_76 = arith.constant 0 : index
    %211 = vector.load %arg12[%c32_75, %c0_76] : memref<128x32xf32, #tpu.memory_space<vmem>>, vector<8x32xf32>
    tpu.vector_store %arg12[%c32_75, %c0_76], %210 {strides = array<i32>} : memref<128x32xf32, #tpu.memory_space<vmem>>, vector<8x32xf32>,
    %c0_77 = arith.constant 0 : index
    %c640 = arith.constant 640 : index
    %212 = vector.load %arg11[%c0_77, %c640] : memref<8x2048xf32, #tpu.memory_space<vmem>>, vector<8x128xf32>
    %cst_78 = arith.constant dense<0.000000e+00> : vector<8x128xf32>
    %213 = tpu.matmul %210, %54, %cst_78 {dimension_numbers = #tpu.dot_dimension_numbers<[1], [0], [0], [1], [0, 0, 1, 1], [], []>, precision = #tpu.contract_precision<fp32>} : vector<8x32xf32>, vector<32x128xf32>, vector<8x128xf32> -> vector<8x128xf32>
    %214 = vector.broadcast %55 : vector<1x128xf32> to vector<8x128xf32>
    %215 = arith.addf %213, %214 : vector<8x128xf32>
    %216 = vector.extract_strided_slice %212 {offsets = [0, 0], sizes = [8, 32], strides = [1, 1]} : vector<8x128xf32> to vector<8x32xf32>
    %217 = vector.extract_strided_slice %215 {offsets = [0, 0], sizes = [8, 32], strides = [1, 1]} : vector<8x128xf32> to vector<8x32xf32>
    %218 = arith.addf %216, %217 : vector<8x32xf32>
    %219 = arith.negf %218 : vector<8x32xf32>
    %220 = math.exp %219 : vector<8x32xf32>
    %cst_79 = arith.constant 1.000000e+00 : f32
    %221 = vector.broadcast %cst_79 : f32 to vector<8x32xf32>
    %222 = arith.addf %221, %220 : vector<8x32xf32>
    %223 = arith.divf %221, %222 : vector<8x32xf32>
    %224 = vector.extract_strided_slice %212 {offsets = [0, 32], sizes = [8, 32], strides = [1, 1]} : vector<8x128xf32> to vector<8x32xf32>
    %225 = vector.extract_strided_slice %215 {offsets = [0, 32], sizes = [8, 32], strides = [1, 1]} : vector<8x128xf32> to vector<8x32xf32>
    %226 = arith.addf %224, %225 : vector<8x32xf32>
    %227 = arith.negf %226 : vector<8x32xf32>
    %228 = math.exp %227 : vector<8x32xf32>
    %cst_80 = arith.constant 1.000000e+00 : f32
    %229 = vector.broadcast %cst_80 : f32 to vector<8x32xf32>
    %230 = arith.addf %229, %228 : vector<8x32xf32>
    %231 = arith.divf %229, %230 : vector<8x32xf32>
    %232 = vector.extract_strided_slice %212 {offsets = [0, 64], sizes = [8, 32], strides = [1, 1]} : vector<8x128xf32> to vector<8x32xf32>
    %233 = vector.extract_strided_slice %215 {offsets = [0, 64], sizes = [8, 32], strides = [1, 1]} : vector<8x128xf32> to vector<8x32xf32>
    %234 = arith.mulf %223, %233 : vector<8x32xf32>
    %235 = arith.addf %232, %234 : vector<8x32xf32>
    %236 = math.tanh %235 : vector<8x32xf32>
    %cst_81 = arith.constant 1.000000e+00 : f32
    %237 = vector.broadcast %cst_81 : f32 to vector<8x32xf32>
    %238 = arith.subf %237, %231 : vector<8x32xf32>
    %239 = arith.mulf %238, %236 : vector<8x32xf32>
    %240 = arith.mulf %231, %210 : vector<8x32xf32>
    %241 = arith.addf %239, %240 : vector<8x32xf32>
    %c40 = arith.constant 40 : index
    %c0_82 = arith.constant 0 : index
    %242 = vector.load %arg12[%c40, %c0_82] : memref<128x32xf32, #tpu.memory_space<vmem>>, vector<8x32xf32>
    tpu.vector_store %arg12[%c40, %c0_82], %241 {strides = array<i32>} : memref<128x32xf32, #tpu.memory_space<vmem>>, vector<8x32xf32>,
    %c0_83 = arith.constant 0 : index
    %c768 = arith.constant 768 : index
    %243 = vector.load %arg11[%c0_83, %c768] : memref<8x2048xf32, #tpu.memory_space<vmem>>, vector<8x128xf32>
    %cst_84 = arith.constant dense<0.000000e+00> : vector<8x128xf32>
    %244 = tpu.matmul %241, %54, %cst_84 {dimension_numbers = #tpu.dot_dimension_numbers<[1], [0], [0], [1], [0, 0, 1, 1], [], []>, precision = #tpu.contract_precision<fp32>} : vector<8x32xf32>, vector<32x128xf32>, vector<8x128xf32> -> vector<8x128xf32>
    %245 = vector.broadcast %55 : vector<1x128xf32> to vector<8x128xf32>
    %246 = arith.addf %244, %245 : vector<8x128xf32>
    %247 = vector.extract_strided_slice %243 {offsets = [0, 0], sizes = [8, 32], strides = [1, 1]} : vector<8x128xf32> to vector<8x32xf32>
    %248 = vector.extract_strided_slice %246 {offsets = [0, 0], sizes = [8, 32], strides = [1, 1]} : vector<8x128xf32> to vector<8x32xf32>
    %249 = arith.addf %247, %248 : vector<8x32xf32>
    %250 = arith.negf %249 : vector<8x32xf32>
    %251 = math.exp %250 : vector<8x32xf32>
    %cst_85 = arith.constant 1.000000e+00 : f32
    %252 = vector.broadcast %cst_85 : f32 to vector<8x32xf32>
    %253 = arith.addf %252, %251 : vector<8x32xf32>
    %254 = arith.divf %252, %253 : vector<8x32xf32>
    %255 = vector.extract_strided_slice %243 {offsets = [0, 32], sizes = [8, 32], strides = [1, 1]} : vector<8x128xf32> to vector<8x32xf32>
    %256 = vector.extract_strided_slice %246 {offsets = [0, 32], sizes = [8, 32], strides = [1, 1]} : vector<8x128xf32> to vector<8x32xf32>
    %257 = arith.addf %255, %256 : vector<8x32xf32>
    %258 = arith.negf %257 : vector<8x32xf32>
    %259 = math.exp %258 : vector<8x32xf32>
    %cst_86 = arith.constant 1.000000e+00 : f32
    %260 = vector.broadcast %cst_86 : f32 to vector<8x32xf32>
    %261 = arith.addf %260, %259 : vector<8x32xf32>
    %262 = arith.divf %260, %261 : vector<8x32xf32>
    %263 = vector.extract_strided_slice %243 {offsets = [0, 64], sizes = [8, 32], strides = [1, 1]} : vector<8x128xf32> to vector<8x32xf32>
    %264 = vector.extract_strided_slice %246 {offsets = [0, 64], sizes = [8, 32], strides = [1, 1]} : vector<8x128xf32> to vector<8x32xf32>
    %265 = arith.mulf %254, %264 : vector<8x32xf32>
    %266 = arith.addf %263, %265 : vector<8x32xf32>
    %267 = math.tanh %266 : vector<8x32xf32>
    %cst_87 = arith.constant 1.000000e+00 : f32
    %268 = vector.broadcast %cst_87 : f32 to vector<8x32xf32>
    %269 = arith.subf %268, %262 : vector<8x32xf32>
    %270 = arith.mulf %269, %267 : vector<8x32xf32>
    %271 = arith.mulf %262, %241 : vector<8x32xf32>
    %272 = arith.addf %270, %271 : vector<8x32xf32>
    %c48 = arith.constant 48 : index
    %c0_88 = arith.constant 0 : index
    %273 = vector.load %arg12[%c48, %c0_88] : memref<128x32xf32, #tpu.memory_space<vmem>>, vector<8x32xf32>
    tpu.vector_store %arg12[%c48, %c0_88], %272 {strides = array<i32>} : memref<128x32xf32, #tpu.memory_space<vmem>>, vector<8x32xf32>,
    %c0_89 = arith.constant 0 : index
    %c896 = arith.constant 896 : index
    %274 = vector.load %arg11[%c0_89, %c896] : memref<8x2048xf32, #tpu.memory_space<vmem>>, vector<8x128xf32>
    %cst_90 = arith.constant dense<0.000000e+00> : vector<8x128xf32>
    %275 = tpu.matmul %272, %54, %cst_90 {dimension_numbers = #tpu.dot_dimension_numbers<[1], [0], [0], [1], [0, 0, 1, 1], [], []>, precision = #tpu.contract_precision<fp32>} : vector<8x32xf32>, vector<32x128xf32>, vector<8x128xf32> -> vector<8x128xf32>
    %276 = vector.broadcast %55 : vector<1x128xf32> to vector<8x128xf32>
    %277 = arith.addf %275, %276 : vector<8x128xf32>
    %278 = vector.extract_strided_slice %274 {offsets = [0, 0], sizes = [8, 32], strides = [1, 1]} : vector<8x128xf32> to vector<8x32xf32>
    %279 = vector.extract_strided_slice %277 {offsets = [0, 0], sizes = [8, 32], strides = [1, 1]} : vector<8x128xf32> to vector<8x32xf32>
    %280 = arith.addf %278, %279 : vector<8x32xf32>
    %281 = arith.negf %280 : vector<8x32xf32>
    %282 = math.exp %281 : vector<8x32xf32>
    %cst_91 = arith.constant 1.000000e+00 : f32
    %283 = vector.broadcast %cst_91 : f32 to vector<8x32xf32>
    %284 = arith.addf %283, %282 : vector<8x32xf32>
    %285 = arith.divf %283, %284 : vector<8x32xf32>
    %286 = vector.extract_strided_slice %274 {offsets = [0, 32], sizes = [8, 32], strides = [1, 1]} : vector<8x128xf32> to vector<8x32xf32>
    %287 = vector.extract_strided_slice %277 {offsets = [0, 32], sizes = [8, 32], strides = [1, 1]} : vector<8x128xf32> to vector<8x32xf32>
    %288 = arith.addf %286, %287 : vector<8x32xf32>
    %289 = arith.negf %288 : vector<8x32xf32>
    %290 = math.exp %289 : vector<8x32xf32>
    %cst_92 = arith.constant 1.000000e+00 : f32
    %291 = vector.broadcast %cst_92 : f32 to vector<8x32xf32>
    %292 = arith.addf %291, %290 : vector<8x32xf32>
    %293 = arith.divf %291, %292 : vector<8x32xf32>
    %294 = vector.extract_strided_slice %274 {offsets = [0, 64], sizes = [8, 32], strides = [1, 1]} : vector<8x128xf32> to vector<8x32xf32>
    %295 = vector.extract_strided_slice %277 {offsets = [0, 64], sizes = [8, 32], strides = [1, 1]} : vector<8x128xf32> to vector<8x32xf32>
    %296 = arith.mulf %285, %295 : vector<8x32xf32>
    %297 = arith.addf %294, %296 : vector<8x32xf32>
    %298 = math.tanh %297 : vector<8x32xf32>
    %cst_93 = arith.constant 1.000000e+00 : f32
    %299 = vector.broadcast %cst_93 : f32 to vector<8x32xf32>
    %300 = arith.subf %299, %293 : vector<8x32xf32>
    %301 = arith.mulf %300, %298 : vector<8x32xf32>
    %302 = arith.mulf %293, %272 : vector<8x32xf32>
    %303 = arith.addf %301, %302 : vector<8x32xf32>
    %c56 = arith.constant 56 : index
    %c0_94 = arith.constant 0 : index
    %304 = vector.load %arg12[%c56, %c0_94] : memref<128x32xf32, #tpu.memory_space<vmem>>, vector<8x32xf32>
    tpu.vector_store %arg12[%c56, %c0_94], %303 {strides = array<i32>} : memref<128x32xf32, #tpu.memory_space<vmem>>, vector<8x32xf32>,
    %c0_95 = arith.constant 0 : index
    %c1024 = arith.constant 1024 : index
    %305 = vector.load %arg11[%c0_95, %c1024] : memref<8x2048xf32, #tpu.memory_space<vmem>>, vector<8x128xf32>
    %cst_96 = arith.constant dense<0.000000e+00> : vector<8x128xf32>
    %306 = tpu.matmul %303, %54, %cst_96 {dimension_numbers = #tpu.dot_dimension_numbers<[1], [0], [0], [1], [0, 0, 1, 1], [], []>, precision = #tpu.contract_precision<fp32>} : vector<8x32xf32>, vector<32x128xf32>, vector<8x128xf32> -> vector<8x128xf32>
    %307 = vector.broadcast %55 : vector<1x128xf32> to vector<8x128xf32>
    %308 = arith.addf %306, %307 : vector<8x128xf32>
    %309 = vector.extract_strided_slice %305 {offsets = [0, 0], sizes = [8, 32], strides = [1, 1]} : vector<8x128xf32> to vector<8x32xf32>
    %310 = vector.extract_strided_slice %308 {offsets = [0, 0], sizes = [8, 32], strides = [1, 1]} : vector<8x128xf32> to vector<8x32xf32>
    %311 = arith.addf %309, %310 : vector<8x32xf32>
    %312 = arith.negf %311 : vector<8x32xf32>
    %313 = math.exp %312 : vector<8x32xf32>
    %cst_97 = arith.constant 1.000000e+00 : f32
    %314 = vector.broadcast %cst_97 : f32 to vector<8x32xf32>
    %315 = arith.addf %314, %313 : vector<8x32xf32>
    %316 = arith.divf %314, %315 : vector<8x32xf32>
    %317 = vector.extract_strided_slice %305 {offsets = [0, 32], sizes = [8, 32], strides = [1, 1]} : vector<8x128xf32> to vector<8x32xf32>
    %318 = vector.extract_strided_slice %308 {offsets = [0, 32], sizes = [8, 32], strides = [1, 1]} : vector<8x128xf32> to vector<8x32xf32>
    %319 = arith.addf %317, %318 : vector<8x32xf32>
    %320 = arith.negf %319 : vector<8x32xf32>
    %321 = math.exp %320 : vector<8x32xf32>
    %cst_98 = arith.constant 1.000000e+00 : f32
    %322 = vector.broadcast %cst_98 : f32 to vector<8x32xf32>
    %323 = arith.addf %322, %321 : vector<8x32xf32>
    %324 = arith.divf %322, %323 : vector<8x32xf32>
    %325 = vector.extract_strided_slice %305 {offsets = [0, 64], sizes = [8, 32], strides = [1, 1]} : vector<8x128xf32> to vector<8x32xf32>
    %326 = vector.extract_strided_slice %308 {offsets = [0, 64], sizes = [8, 32], strides = [1, 1]} : vector<8x128xf32> to vector<8x32xf32>
    %327 = arith.mulf %316, %326 : vector<8x32xf32>
    %328 = arith.addf %325, %327 : vector<8x32xf32>
    %329 = math.tanh %328 : vector<8x32xf32>
    %cst_99 = arith.constant 1.000000e+00 : f32
    %330 = vector.broadcast %cst_99 : f32 to vector<8x32xf32>
    %331 = arith.subf %330, %324 : vector<8x32xf32>
    %332 = arith.mulf %331, %329 : vector<8x32xf32>
    %333 = arith.mulf %324, %303 : vector<8x32xf32>
    %334 = arith.addf %332, %333 : vector<8x32xf32>
    %c64 = arith.constant 64 : index
    %c0_100 = arith.constant 0 : index
    %335 = vector.load %arg12[%c64, %c0_100] : memref<128x32xf32, #tpu.memory_space<vmem>>, vector<8x32xf32>
    tpu.vector_store %arg12[%c64, %c0_100], %334 {strides = array<i32>} : memref<128x32xf32, #tpu.memory_space<vmem>>, vector<8x32xf32>,
    %c0_101 = arith.constant 0 : index
    %c1152 = arith.constant 1152 : index
    %336 = vector.load %arg11[%c0_101, %c1152] : memref<8x2048xf32, #tpu.memory_space<vmem>>, vector<8x128xf32>
    %cst_102 = arith.constant dense<0.000000e+00> : vector<8x128xf32>
    %337 = tpu.matmul %334, %54, %cst_102 {dimension_numbers = #tpu.dot_dimension_numbers<[1], [0], [0], [1], [0, 0, 1, 1], [], []>, precision = #tpu.contract_precision<fp32>} : vector<8x32xf32>, vector<32x128xf32>, vector<8x128xf32> -> vector<8x128xf32>
    %338 = vector.broadcast %55 : vector<1x128xf32> to vector<8x128xf32>
    %339 = arith.addf %337, %338 : vector<8x128xf32>
    %340 = vector.extract_strided_slice %336 {offsets = [0, 0], sizes = [8, 32], strides = [1, 1]} : vector<8x128xf32> to vector<8x32xf32>
    %341 = vector.extract_strided_slice %339 {offsets = [0, 0], sizes = [8, 32], strides = [1, 1]} : vector<8x128xf32> to vector<8x32xf32>
    %342 = arith.addf %340, %341 : vector<8x32xf32>
    %343 = arith.negf %342 : vector<8x32xf32>
    %344 = math.exp %343 : vector<8x32xf32>
    %cst_103 = arith.constant 1.000000e+00 : f32
    %345 = vector.broadcast %cst_103 : f32 to vector<8x32xf32>
    %346 = arith.addf %345, %344 : vector<8x32xf32>
    %347 = arith.divf %345, %346 : vector<8x32xf32>
    %348 = vector.extract_strided_slice %336 {offsets = [0, 32], sizes = [8, 32], strides = [1, 1]} : vector<8x128xf32> to vector<8x32xf32>
    %349 = vector.extract_strided_slice %339 {offsets = [0, 32], sizes = [8, 32], strides = [1, 1]} : vector<8x128xf32> to vector<8x32xf32>
    %350 = arith.addf %348, %349 : vector<8x32xf32>
    %351 = arith.negf %350 : vector<8x32xf32>
    %352 = math.exp %351 : vector<8x32xf32>
    %cst_104 = arith.constant 1.000000e+00 : f32
    %353 = vector.broadcast %cst_104 : f32 to vector<8x32xf32>
    %354 = arith.addf %353, %352 : vector<8x32xf32>
    %355 = arith.divf %353, %354 : vector<8x32xf32>
    %356 = vector.extract_strided_slice %336 {offsets = [0, 64], sizes = [8, 32], strides = [1, 1]} : vector<8x128xf32> to vector<8x32xf32>
    %357 = vector.extract_strided_slice %339 {offsets = [0, 64], sizes = [8, 32], strides = [1, 1]} : vector<8x128xf32> to vector<8x32xf32>
    %358 = arith.mulf %347, %357 : vector<8x32xf32>
    %359 = arith.addf %356, %358 : vector<8x32xf32>
    %360 = math.tanh %359 : vector<8x32xf32>
    %cst_105 = arith.constant 1.000000e+00 : f32
    %361 = vector.broadcast %cst_105 : f32 to vector<8x32xf32>
    %362 = arith.subf %361, %355 : vector<8x32xf32>
    %363 = arith.mulf %362, %360 : vector<8x32xf32>
    %364 = arith.mulf %355, %334 : vector<8x32xf32>
    %365 = arith.addf %363, %364 : vector<8x32xf32>
    %c72 = arith.constant 72 : index
    %c0_106 = arith.constant 0 : index
    %366 = vector.load %arg12[%c72, %c0_106] : memref<128x32xf32, #tpu.memory_space<vmem>>, vector<8x32xf32>
    tpu.vector_store %arg12[%c72, %c0_106], %365 {strides = array<i32>} : memref<128x32xf32, #tpu.memory_space<vmem>>, vector<8x32xf32>,
    %c0_107 = arith.constant 0 : index
    %c1280 = arith.constant 1280 : index
    %367 = vector.load %arg11[%c0_107, %c1280] : memref<8x2048xf32, #tpu.memory_space<vmem>>, vector<8x128xf32>
    %cst_108 = arith.constant dense<0.000000e+00> : vector<8x128xf32>
    %368 = tpu.matmul %365, %54, %cst_108 {dimension_numbers = #tpu.dot_dimension_numbers<[1], [0], [0], [1], [0, 0, 1, 1], [], []>, precision = #tpu.contract_precision<fp32>} : vector<8x32xf32>, vector<32x128xf32>, vector<8x128xf32> -> vector<8x128xf32>
    %369 = vector.broadcast %55 : vector<1x128xf32> to vector<8x128xf32>
    %370 = arith.addf %368, %369 : vector<8x128xf32>
    %371 = vector.extract_strided_slice %367 {offsets = [0, 0], sizes = [8, 32], strides = [1, 1]} : vector<8x128xf32> to vector<8x32xf32>
    %372 = vector.extract_strided_slice %370 {offsets = [0, 0], sizes = [8, 32], strides = [1, 1]} : vector<8x128xf32> to vector<8x32xf32>
    %373 = arith.addf %371, %372 : vector<8x32xf32>
    %374 = arith.negf %373 : vector<8x32xf32>
    %375 = math.exp %374 : vector<8x32xf32>
    %cst_109 = arith.constant 1.000000e+00 : f32
    %376 = vector.broadcast %cst_109 : f32 to vector<8x32xf32>
    %377 = arith.addf %376, %375 : vector<8x32xf32>
    %378 = arith.divf %376, %377 : vector<8x32xf32>
    %379 = vector.extract_strided_slice %367 {offsets = [0, 32], sizes = [8, 32], strides = [1, 1]} : vector<8x128xf32> to vector<8x32xf32>
    %380 = vector.extract_strided_slice %370 {offsets = [0, 32], sizes = [8, 32], strides = [1, 1]} : vector<8x128xf32> to vector<8x32xf32>
    %381 = arith.addf %379, %380 : vector<8x32xf32>
    %382 = arith.negf %381 : vector<8x32xf32>
    %383 = math.exp %382 : vector<8x32xf32>
    %cst_110 = arith.constant 1.000000e+00 : f32
    %384 = vector.broadcast %cst_110 : f32 to vector<8x32xf32>
    %385 = arith.addf %384, %383 : vector<8x32xf32>
    %386 = arith.divf %384, %385 : vector<8x32xf32>
    %387 = vector.extract_strided_slice %367 {offsets = [0, 64], sizes = [8, 32], strides = [1, 1]} : vector<8x128xf32> to vector<8x32xf32>
    %388 = vector.extract_strided_slice %370 {offsets = [0, 64], sizes = [8, 32], strides = [1, 1]} : vector<8x128xf32> to vector<8x32xf32>
    %389 = arith.mulf %378, %388 : vector<8x32xf32>
    %390 = arith.addf %387, %389 : vector<8x32xf32>
    %391 = math.tanh %390 : vector<8x32xf32>
    %cst_111 = arith.constant 1.000000e+00 : f32
    %392 = vector.broadcast %cst_111 : f32 to vector<8x32xf32>
    %393 = arith.subf %392, %386 : vector<8x32xf32>
    %394 = arith.mulf %393, %391 : vector<8x32xf32>
    %395 = arith.mulf %386, %365 : vector<8x32xf32>
    %396 = arith.addf %394, %395 : vector<8x32xf32>
    %c80 = arith.constant 80 : index
    %c0_112 = arith.constant 0 : index
    %397 = vector.load %arg12[%c80, %c0_112] : memref<128x32xf32, #tpu.memory_space<vmem>>, vector<8x32xf32>
    tpu.vector_store %arg12[%c80, %c0_112], %396 {strides = array<i32>} : memref<128x32xf32, #tpu.memory_space<vmem>>, vector<8x32xf32>,
    %c0_113 = arith.constant 0 : index
    %c1408 = arith.constant 1408 : index
    %398 = vector.load %arg11[%c0_113, %c1408] : memref<8x2048xf32, #tpu.memory_space<vmem>>, vector<8x128xf32>
    %cst_114 = arith.constant dense<0.000000e+00> : vector<8x128xf32>
    %399 = tpu.matmul %396, %54, %cst_114 {dimension_numbers = #tpu.dot_dimension_numbers<[1], [0], [0], [1], [0, 0, 1, 1], [], []>, precision = #tpu.contract_precision<fp32>} : vector<8x32xf32>, vector<32x128xf32>, vector<8x128xf32> -> vector<8x128xf32>
    %400 = vector.broadcast %55 : vector<1x128xf32> to vector<8x128xf32>
    %401 = arith.addf %399, %400 : vector<8x128xf32>
    %402 = vector.extract_strided_slice %398 {offsets = [0, 0], sizes = [8, 32], strides = [1, 1]} : vector<8x128xf32> to vector<8x32xf32>
    %403 = vector.extract_strided_slice %401 {offsets = [0, 0], sizes = [8, 32], strides = [1, 1]} : vector<8x128xf32> to vector<8x32xf32>
    %404 = arith.addf %402, %403 : vector<8x32xf32>
    %405 = arith.negf %404 : vector<8x32xf32>
    %406 = math.exp %405 : vector<8x32xf32>
    %cst_115 = arith.constant 1.000000e+00 : f32
    %407 = vector.broadcast %cst_115 : f32 to vector<8x32xf32>
    %408 = arith.addf %407, %406 : vector<8x32xf32>
    %409 = arith.divf %407, %408 : vector<8x32xf32>
    %410 = vector.extract_strided_slice %398 {offsets = [0, 32], sizes = [8, 32], strides = [1, 1]} : vector<8x128xf32> to vector<8x32xf32>
    %411 = vector.extract_strided_slice %401 {offsets = [0, 32], sizes = [8, 32], strides = [1, 1]} : vector<8x128xf32> to vector<8x32xf32>
    %412 = arith.addf %410, %411 : vector<8x32xf32>
    %413 = arith.negf %412 : vector<8x32xf32>
    %414 = math.exp %413 : vector<8x32xf32>
    %cst_116 = arith.constant 1.000000e+00 : f32
    %415 = vector.broadcast %cst_116 : f32 to vector<8x32xf32>
    %416 = arith.addf %415, %414 : vector<8x32xf32>
    %417 = arith.divf %415, %416 : vector<8x32xf32>
    %418 = vector.extract_strided_slice %398 {offsets = [0, 64], sizes = [8, 32], strides = [1, 1]} : vector<8x128xf32> to vector<8x32xf32>
    %419 = vector.extract_strided_slice %401 {offsets = [0, 64], sizes = [8, 32], strides = [1, 1]} : vector<8x128xf32> to vector<8x32xf32>
    %420 = arith.mulf %409, %419 : vector<8x32xf32>
    %421 = arith.addf %418, %420 : vector<8x32xf32>
    %422 = math.tanh %421 : vector<8x32xf32>
    %cst_117 = arith.constant 1.000000e+00 : f32
    %423 = vector.broadcast %cst_117 : f32 to vector<8x32xf32>
    %424 = arith.subf %423, %417 : vector<8x32xf32>
    %425 = arith.mulf %424, %422 : vector<8x32xf32>
    %426 = arith.mulf %417, %396 : vector<8x32xf32>
    %427 = arith.addf %425, %426 : vector<8x32xf32>
    %c88 = arith.constant 88 : index
    %c0_118 = arith.constant 0 : index
    %428 = vector.load %arg12[%c88, %c0_118] : memref<128x32xf32, #tpu.memory_space<vmem>>, vector<8x32xf32>
    tpu.vector_store %arg12[%c88, %c0_118], %427 {strides = array<i32>} : memref<128x32xf32, #tpu.memory_space<vmem>>, vector<8x32xf32>,
    %c0_119 = arith.constant 0 : index
    %c1536 = arith.constant 1536 : index
    %429 = vector.load %arg11[%c0_119, %c1536] : memref<8x2048xf32, #tpu.memory_space<vmem>>, vector<8x128xf32>
    %cst_120 = arith.constant dense<0.000000e+00> : vector<8x128xf32>
    %430 = tpu.matmul %427, %54, %cst_120 {dimension_numbers = #tpu.dot_dimension_numbers<[1], [0], [0], [1], [0, 0, 1, 1], [], []>, precision = #tpu.contract_precision<fp32>} : vector<8x32xf32>, vector<32x128xf32>, vector<8x128xf32> -> vector<8x128xf32>
    %431 = vector.broadcast %55 : vector<1x128xf32> to vector<8x128xf32>
    %432 = arith.addf %430, %431 : vector<8x128xf32>
    %433 = vector.extract_strided_slice %429 {offsets = [0, 0], sizes = [8, 32], strides = [1, 1]} : vector<8x128xf32> to vector<8x32xf32>
    %434 = vector.extract_strided_slice %432 {offsets = [0, 0], sizes = [8, 32], strides = [1, 1]} : vector<8x128xf32> to vector<8x32xf32>
    %435 = arith.addf %433, %434 : vector<8x32xf32>
    %436 = arith.negf %435 : vector<8x32xf32>
    %437 = math.exp %436 : vector<8x32xf32>
    %cst_121 = arith.constant 1.000000e+00 : f32
    %438 = vector.broadcast %cst_121 : f32 to vector<8x32xf32>
    %439 = arith.addf %438, %437 : vector<8x32xf32>
    %440 = arith.divf %438, %439 : vector<8x32xf32>
    %441 = vector.extract_strided_slice %429 {offsets = [0, 32], sizes = [8, 32], strides = [1, 1]} : vector<8x128xf32> to vector<8x32xf32>
    %442 = vector.extract_strided_slice %432 {offsets = [0, 32], sizes = [8, 32], strides = [1, 1]} : vector<8x128xf32> to vector<8x32xf32>
    %443 = arith.addf %441, %442 : vector<8x32xf32>
    %444 = arith.negf %443 : vector<8x32xf32>
    %445 = math.exp %444 : vector<8x32xf32>
    %cst_122 = arith.constant 1.000000e+00 : f32
    %446 = vector.broadcast %cst_122 : f32 to vector<8x32xf32>
    %447 = arith.addf %446, %445 : vector<8x32xf32>
    %448 = arith.divf %446, %447 : vector<8x32xf32>
    %449 = vector.extract_strided_slice %429 {offsets = [0, 64], sizes = [8, 32], strides = [1, 1]} : vector<8x128xf32> to vector<8x32xf32>
    %450 = vector.extract_strided_slice %432 {offsets = [0, 64], sizes = [8, 32], strides = [1, 1]} : vector<8x128xf32> to vector<8x32xf32>
    %451 = arith.mulf %440, %450 : vector<8x32xf32>
    %452 = arith.addf %449, %451 : vector<8x32xf32>
    %453 = math.tanh %452 : vector<8x32xf32>
    %cst_123 = arith.constant 1.000000e+00 : f32
    %454 = vector.broadcast %cst_123 : f32 to vector<8x32xf32>
    %455 = arith.subf %454, %448 : vector<8x32xf32>
    %456 = arith.mulf %455, %453 : vector<8x32xf32>
    %457 = arith.mulf %448, %427 : vector<8x32xf32>
    %458 = arith.addf %456, %457 : vector<8x32xf32>
    %c96 = arith.constant 96 : index
    %c0_124 = arith.constant 0 : index
    %459 = vector.load %arg12[%c96, %c0_124] : memref<128x32xf32, #tpu.memory_space<vmem>>, vector<8x32xf32>
    tpu.vector_store %arg12[%c96, %c0_124], %458 {strides = array<i32>} : memref<128x32xf32, #tpu.memory_space<vmem>>, vector<8x32xf32>,
    %c0_125 = arith.constant 0 : index
    %c1664 = arith.constant 1664 : index
    %460 = vector.load %arg11[%c0_125, %c1664] : memref<8x2048xf32, #tpu.memory_space<vmem>>, vector<8x128xf32>
    %cst_126 = arith.constant dense<0.000000e+00> : vector<8x128xf32>
    %461 = tpu.matmul %458, %54, %cst_126 {dimension_numbers = #tpu.dot_dimension_numbers<[1], [0], [0], [1], [0, 0, 1, 1], [], []>, precision = #tpu.contract_precision<fp32>} : vector<8x32xf32>, vector<32x128xf32>, vector<8x128xf32> -> vector<8x128xf32>
    %462 = vector.broadcast %55 : vector<1x128xf32> to vector<8x128xf32>
    %463 = arith.addf %461, %462 : vector<8x128xf32>
    %464 = vector.extract_strided_slice %460 {offsets = [0, 0], sizes = [8, 32], strides = [1, 1]} : vector<8x128xf32> to vector<8x32xf32>
    %465 = vector.extract_strided_slice %463 {offsets = [0, 0], sizes = [8, 32], strides = [1, 1]} : vector<8x128xf32> to vector<8x32xf32>
    %466 = arith.addf %464, %465 : vector<8x32xf32>
    %467 = arith.negf %466 : vector<8x32xf32>
    %468 = math.exp %467 : vector<8x32xf32>
    %cst_127 = arith.constant 1.000000e+00 : f32
    %469 = vector.broadcast %cst_127 : f32 to vector<8x32xf32>
    %470 = arith.addf %469, %468 : vector<8x32xf32>
    %471 = arith.divf %469, %470 : vector<8x32xf32>
    %472 = vector.extract_strided_slice %460 {offsets = [0, 32], sizes = [8, 32], strides = [1, 1]} : vector<8x128xf32> to vector<8x32xf32>
    %473 = vector.extract_strided_slice %463 {offsets = [0, 32], sizes = [8, 32], strides = [1, 1]} : vector<8x128xf32> to vector<8x32xf32>
    %474 = arith.addf %472, %473 : vector<8x32xf32>
    %475 = arith.negf %474 : vector<8x32xf32>
    %476 = math.exp %475 : vector<8x32xf32>
    %cst_128 = arith.constant 1.000000e+00 : f32
    %477 = vector.broadcast %cst_128 : f32 to vector<8x32xf32>
    %478 = arith.addf %477, %476 : vector<8x32xf32>
    %479 = arith.divf %477, %478 : vector<8x32xf32>
    %480 = vector.extract_strided_slice %460 {offsets = [0, 64], sizes = [8, 32], strides = [1, 1]} : vector<8x128xf32> to vector<8x32xf32>
    %481 = vector.extract_strided_slice %463 {offsets = [0, 64], sizes = [8, 32], strides = [1, 1]} : vector<8x128xf32> to vector<8x32xf32>
    %482 = arith.mulf %471, %481 : vector<8x32xf32>
    %483 = arith.addf %480, %482 : vector<8x32xf32>
    %484 = math.tanh %483 : vector<8x32xf32>
    %cst_129 = arith.constant 1.000000e+00 : f32
    %485 = vector.broadcast %cst_129 : f32 to vector<8x32xf32>
    %486 = arith.subf %485, %479 : vector<8x32xf32>
    %487 = arith.mulf %486, %484 : vector<8x32xf32>
    %488 = arith.mulf %479, %458 : vector<8x32xf32>
    %489 = arith.addf %487, %488 : vector<8x32xf32>
    %c104 = arith.constant 104 : index
    %c0_130 = arith.constant 0 : index
    %490 = vector.load %arg12[%c104, %c0_130] : memref<128x32xf32, #tpu.memory_space<vmem>>, vector<8x32xf32>
    tpu.vector_store %arg12[%c104, %c0_130], %489 {strides = array<i32>} : memref<128x32xf32, #tpu.memory_space<vmem>>, vector<8x32xf32>,
    %c0_131 = arith.constant 0 : index
    %c1792 = arith.constant 1792 : index
    %491 = vector.load %arg11[%c0_131, %c1792] : memref<8x2048xf32, #tpu.memory_space<vmem>>, vector<8x128xf32>
    %cst_132 = arith.constant dense<0.000000e+00> : vector<8x128xf32>
    %492 = tpu.matmul %489, %54, %cst_132 {dimension_numbers = #tpu.dot_dimension_numbers<[1], [0], [0], [1], [0, 0, 1, 1], [], []>, precision = #tpu.contract_precision<fp32>} : vector<8x32xf32>, vector<32x128xf32>, vector<8x128xf32> -> vector<8x128xf32>
    %493 = vector.broadcast %55 : vector<1x128xf32> to vector<8x128xf32>
    %494 = arith.addf %492, %493 : vector<8x128xf32>
    %495 = vector.extract_strided_slice %491 {offsets = [0, 0], sizes = [8, 32], strides = [1, 1]} : vector<8x128xf32> to vector<8x32xf32>
    %496 = vector.extract_strided_slice %494 {offsets = [0, 0], sizes = [8, 32], strides = [1, 1]} : vector<8x128xf32> to vector<8x32xf32>
    %497 = arith.addf %495, %496 : vector<8x32xf32>
    %498 = arith.negf %497 : vector<8x32xf32>
    %499 = math.exp %498 : vector<8x32xf32>
    %cst_133 = arith.constant 1.000000e+00 : f32
    %500 = vector.broadcast %cst_133 : f32 to vector<8x32xf32>
    %501 = arith.addf %500, %499 : vector<8x32xf32>
    %502 = arith.divf %500, %501 : vector<8x32xf32>
    %503 = vector.extract_strided_slice %491 {offsets = [0, 32], sizes = [8, 32], strides = [1, 1]} : vector<8x128xf32> to vector<8x32xf32>
    %504 = vector.extract_strided_slice %494 {offsets = [0, 32], sizes = [8, 32], strides = [1, 1]} : vector<8x128xf32> to vector<8x32xf32>
    %505 = arith.addf %503, %504 : vector<8x32xf32>
    %506 = arith.negf %505 : vector<8x32xf32>
    %507 = math.exp %506 : vector<8x32xf32>
    %cst_134 = arith.constant 1.000000e+00 : f32
    %508 = vector.broadcast %cst_134 : f32 to vector<8x32xf32>
    %509 = arith.addf %508, %507 : vector<8x32xf32>
    %510 = arith.divf %508, %509 : vector<8x32xf32>
    %511 = vector.extract_strided_slice %491 {offsets = [0, 64], sizes = [8, 32], strides = [1, 1]} : vector<8x128xf32> to vector<8x32xf32>
    %512 = vector.extract_strided_slice %494 {offsets = [0, 64], sizes = [8, 32], strides = [1, 1]} : vector<8x128xf32> to vector<8x32xf32>
    %513 = arith.mulf %502, %512 : vector<8x32xf32>
    %514 = arith.addf %511, %513 : vector<8x32xf32>
    %515 = math.tanh %514 : vector<8x32xf32>
    %cst_135 = arith.constant 1.000000e+00 : f32
    %516 = vector.broadcast %cst_135 : f32 to vector<8x32xf32>
    %517 = arith.subf %516, %510 : vector<8x32xf32>
    %518 = arith.mulf %517, %515 : vector<8x32xf32>
    %519 = arith.mulf %510, %489 : vector<8x32xf32>
    %520 = arith.addf %518, %519 : vector<8x32xf32>
    %c112 = arith.constant 112 : index
    %c0_136 = arith.constant 0 : index
    %521 = vector.load %arg12[%c112, %c0_136] : memref<128x32xf32, #tpu.memory_space<vmem>>, vector<8x32xf32>
    tpu.vector_store %arg12[%c112, %c0_136], %520 {strides = array<i32>} : memref<128x32xf32, #tpu.memory_space<vmem>>, vector<8x32xf32>,
    %c0_137 = arith.constant 0 : index
    %c1920 = arith.constant 1920 : index
    %522 = vector.load %arg11[%c0_137, %c1920] : memref<8x2048xf32, #tpu.memory_space<vmem>>, vector<8x128xf32>
    %cst_138 = arith.constant dense<0.000000e+00> : vector<8x128xf32>
    %523 = tpu.matmul %520, %54, %cst_138 {dimension_numbers = #tpu.dot_dimension_numbers<[1], [0], [0], [1], [0, 0, 1, 1], [], []>, precision = #tpu.contract_precision<fp32>} : vector<8x32xf32>, vector<32x128xf32>, vector<8x128xf32> -> vector<8x128xf32>
    %524 = vector.broadcast %55 : vector<1x128xf32> to vector<8x128xf32>
    %525 = arith.addf %523, %524 : vector<8x128xf32>
    %526 = vector.extract_strided_slice %522 {offsets = [0, 0], sizes = [8, 32], strides = [1, 1]} : vector<8x128xf32> to vector<8x32xf32>
    %527 = vector.extract_strided_slice %525 {offsets = [0, 0], sizes = [8, 32], strides = [1, 1]} : vector<8x128xf32> to vector<8x32xf32>
    %528 = arith.addf %526, %527 : vector<8x32xf32>
    %529 = arith.negf %528 : vector<8x32xf32>
    %530 = math.exp %529 : vector<8x32xf32>
    %cst_139 = arith.constant 1.000000e+00 : f32
    %531 = vector.broadcast %cst_139 : f32 to vector<8x32xf32>
    %532 = arith.addf %531, %530 : vector<8x32xf32>
    %533 = arith.divf %531, %532 : vector<8x32xf32>
    %534 = vector.extract_strided_slice %522 {offsets = [0, 32], sizes = [8, 32], strides = [1, 1]} : vector<8x128xf32> to vector<8x32xf32>
    %535 = vector.extract_strided_slice %525 {offsets = [0, 32], sizes = [8, 32], strides = [1, 1]} : vector<8x128xf32> to vector<8x32xf32>
    %536 = arith.addf %534, %535 : vector<8x32xf32>
    %537 = arith.negf %536 : vector<8x32xf32>
    %538 = math.exp %537 : vector<8x32xf32>
    %cst_140 = arith.constant 1.000000e+00 : f32
    %539 = vector.broadcast %cst_140 : f32 to vector<8x32xf32>
    %540 = arith.addf %539, %538 : vector<8x32xf32>
    %541 = arith.divf %539, %540 : vector<8x32xf32>
    %542 = vector.extract_strided_slice %522 {offsets = [0, 64], sizes = [8, 32], strides = [1, 1]} : vector<8x128xf32> to vector<8x32xf32>
    %543 = vector.extract_strided_slice %525 {offsets = [0, 64], sizes = [8, 32], strides = [1, 1]} : vector<8x128xf32> to vector<8x32xf32>
    %544 = arith.mulf %533, %543 : vector<8x32xf32>
    %545 = arith.addf %542, %544 : vector<8x32xf32>
    %546 = math.tanh %545 : vector<8x32xf32>
    %cst_141 = arith.constant 1.000000e+00 : f32
    %547 = vector.broadcast %cst_141 : f32 to vector<8x32xf32>
    %548 = arith.subf %547, %541 : vector<8x32xf32>
    %549 = arith.mulf %548, %546 : vector<8x32xf32>
    %550 = arith.mulf %541, %520 : vector<8x32xf32>
    %551 = arith.addf %549, %550 : vector<8x32xf32>
    %c120 = arith.constant 120 : index
    %c0_142 = arith.constant 0 : index
    %552 = vector.load %arg12[%c120, %c0_142] : memref<128x32xf32, #tpu.memory_space<vmem>>, vector<8x32xf32>
    tpu.vector_store %arg12[%c120, %c0_142], %551 {strides = array<i32>} : memref<128x32xf32, #tpu.memory_space<vmem>>, vector<8x32xf32>,
    %c0_143 = arith.constant 0 : index
    %c0_144 = arith.constant 0 : index
    %553 = vector.load %arg12[%c0_143, %c0_144] : memref<128x32xf32, #tpu.memory_space<vmem>>, vector<128x32xf32>
    %c0_145 = arith.constant 0 : index
    %c0_146 = arith.constant 0 : index
    %554 = vector.load %arg9[%c0_145, %c0_146] : memref<40x4xf32, #tpu.memory_space<vmem>>, vector<32x4xf32>
    %cst_147 = arith.constant dense<0.000000e+00> : vector<128x4xf32>
    %555 = tpu.matmul %553, %554, %cst_147 {dimension_numbers = #tpu.dot_dimension_numbers<[1], [0], [0], [1], [0, 0, 1, 1], [], []>} : vector<128x32xf32>, vector<32x4xf32>, vector<128x4xf32> -> vector<128x4xf32>
    %c32_148 = arith.constant 32 : index
    %c0_149 = arith.constant 0 : index
    %556 = vector.load %arg9[%c32_148, %c0_149] : memref<40x4xf32, #tpu.memory_space<vmem>>, vector<1x4xf32>
    %557 = vector.broadcast %556 : vector<1x4xf32> to vector<128x4xf32>
    %558 = arith.addf %555, %557 : vector<128x4xf32>
    %c0_150 = arith.constant 0 : index
    %c0_151 = arith.constant 0 : index
    %559 = vector.load %arg10[%c0_150, %c0_151] : memref<128x4xf32, #tpu.memory_space<vmem>>, vector<128x4xf32>
    tpu.vector_store %arg10[%c0_150, %c0_151], %558 {strides = array<i32>} : memref<128x4xf32, #tpu.memory_space<vmem>>, vector<128x4xf32>,
    return
  }
  func.func @transform_0(%arg0: i32) -> (i32, i32) {
    %c0_i32 = arith.constant 0 : i32
    %c0_i32_0 = arith.constant 0 : i32
    return %arg0, %c0_i32 : i32, i32
  }
  func.func @transform_1(%arg0: i32) -> (i32, i32) {
    %c0_i32 = arith.constant 0 : i32
    %c0_i32_0 = arith.constant 0 : i32
    return %arg0, %c0_i32 : i32, i32
  }
  func.func @transform_2(%arg0: i32) -> (i32, i32) {
    %c0_i32 = arith.constant 0 : i32
    %c0_i32_0 = arith.constant 0 : i32
    return %arg0, %c0_i32 : i32, i32
  }
  func.func @transform_3(%arg0: i32) -> (i32, i32) {
    %c0_i32 = arith.constant 0 : i32
    %c0_i32_0 = arith.constant 0 : i32
    %c0_i32_1 = arith.constant 0 : i32
    return %c0_i32, %c0_i32_0 : i32, i32
  }
  func.func @transform_4(%arg0: i32) -> (i32, i32, i32) {
    %c0_i32 = arith.constant 0 : i32
    %c0_i32_0 = arith.constant 0 : i32
    %c0_i32_1 = arith.constant 0 : i32
    %c0_i32_2 = arith.constant 0 : i32
    return %c0_i32, %c0_i32_0, %c0_i32_1 : i32, i32, i32
  }
  func.func @transform_5(%arg0: i32) -> (i32, i32) {
    %c0_i32 = arith.constant 0 : i32
    %c0_i32_0 = arith.constant 0 : i32
    %c0_i32_1 = arith.constant 0 : i32
    return %c0_i32, %c0_i32_0 : i32, i32
  }
  func.func @transform_6(%arg0: i32) -> (i32, i32) {
    %c0_i32 = arith.constant 0 : i32
    %c0_i32_0 = arith.constant 0 : i32
    %c0_i32_1 = arith.constant 0 : i32
    return %c0_i32, %c0_i32_0 : i32, i32
  }
  func.func @transform_7(%arg0: i32) -> (i32, i32) {
    %c0_i32 = arith.constant 0 : i32
    %c0_i32_0 = arith.constant 0 : i32
    %c0_i32_1 = arith.constant 0 : i32
    return %c0_i32, %c0_i32_0 : i32, i32
  }
  func.func @transform_8(%arg0: i32) -> (i32, i32) {
    %c0_i32 = arith.constant 0 : i32
    %c0_i32_0 = arith.constant 0 : i32
    %c0_i32_1 = arith.constant 0 : i32
    return %c0_i32, %c0_i32_0 : i32, i32
  }
  func.func @transform_9(%arg0: i32) -> (i32, i32) {
    %c0_i32 = arith.constant 0 : i32
    %c0_i32_0 = arith.constant 0 : i32
    return %arg0, %c0_i32 : i32, i32
  }
}

</mosaic_0001>

<llo_original>
// kernel: tile.38
$region0: #{tile.38}
  #allocation0 [shape = 's32[1]{0}', space=sflag, size = 0x4, scoped, tag = 'scoped memory for tile.38']
  %s0 = inlined_call_operand.vmem [shape: f32[32], index: 0, kind: input, shape index: {}]
  %s1 = inlined_call_operand.vmem [shape: f32[2,32], index: 1, kind: output, shape index: {}]
  // Predicated region
  $region2: #{tile.38} parent=0 // pred_check
    _
  $region3: #{tile.38} parent=0 // pred_check_branch
    %3 = sbr.rel (0) target = $region5
  $region4: #{tile.38} parent=0 // pred_region
    _
  $region5: #{tile.38} parent=0 // pred_fallthru
    _
  %v4 = vld [vmem:[%s0] ss:$0 sm:$0xff]
  %5 = vst [vmem:[%s1] sm:$0x3] %v4

// kernel: tile.48
$region0: #{tile.48}
  #allocation0 [shape = 's32[1]{0}', space=sflag, size = 0x4, scoped, tag = 'scoped memory for tile.48']
  %s0 = inlined_call_operand.vmem [shape: f32[16], index: 0, kind: input, shape index: {}]
  %s1 = inlined_call_operand.vmem [shape: f32[2,16], index: 1, kind: output, shape index: {}]
  // Predicated region
  $region2: #{tile.48} parent=0 // pred_check
    _
  $region3: #{tile.48} parent=0 // pred_check_branch
    %3 = sbr.rel (0) target = $region5
  $region4: #{tile.48} parent=0 // pred_region
    _
  $region5: #{tile.48} parent=0 // pred_fallthru
    _
  %v4 = vld [vmem:[%s0] ss:$0 sm:$0xff]
  %5 = vst [vmem:[%s1] sm:$0x3] %v4

// kernel: tile.58
$region0: #{tile.58}
  #allocation0 [shape = 's32[1]{0}', space=sflag, size = 0x4, scoped, tag = 'scoped memory for tile.58']
  %s0 = inlined_call_operand.vmem [shape: f32[8], index: 0, kind: input, shape index: {}]
  %s1 = inlined_call_operand.vmem [shape: f32[2,8], index: 1, kind: output, shape index: {}]
  // Predicated region
  $region2: #{tile.58} parent=0 // pred_check
    _
  $region3: #{tile.58} parent=0 // pred_check_branch
    %3 = sbr.rel (0) target = $region5
  $region4: #{tile.58} parent=0 // pred_region
    _
  $region5: #{tile.58} parent=0 // pred_fallthru
    _
  %v4 = vld [vmem:[%s0] ss:$0 sm:$0xff]
  %5 = vst [vmem:[%s1] sm:$0x3] %v4

// kernel: tile.43
$region0: #{tile.43}
  #allocation0 [shape = 's32[1]{0}', space=sflag, size = 0x4, scoped, tag = 'scoped memory for tile.43']
  %s0 = inlined_call_operand.vmem [shape: f32[32], index: 0, kind: input, shape index: {}]
  %s1 = inlined_call_operand.vmem [shape: f32[4,32], index: 1, kind: output, shape index: {}]
  // Predicated region
  $region2: #{tile.43} parent=0 // pred_check
    _
  $region3: #{tile.43} parent=0 // pred_check_branch
    %3 = sbr.rel (0) target = $region5
  $region4: #{tile.43} parent=0 // pred_region
    _
  $region5: #{tile.43} parent=0 // pred_fallthru
    _
  %v4 = vld [vmem:[%s0] ss:$0 sm:$0xff]
  %5 = vst [vmem:[%s1] sm:$0xf] %v4

// kernel: tile.53
$region0: #{tile.53}
  #allocation0 [shape = 's32[1]{0}', space=sflag, size = 0x4, scoped, tag = 'scoped memory for tile.53']
  %s0 = inlined_call_operand.vmem [shape: f32[16], index: 0, kind: input, shape index: {}]
  %s1 = inlined_call_operand.vmem [shape: f32[8,16], index: 1, kind: output, shape index: {}]
  // Predicated region
  $region2: #{tile.53} parent=0 // pred_check
    _
  $region3: #{tile.53} parent=0 // pred_check_branch
    %3 = sbr.rel (0) target = $region5
  $region4: #{tile.53} parent=0 // pred_region
    _
  $region5: #{tile.53} parent=0 // pred_fallthru
    _
  %v4 = vld [vmem:[%s0] ss:$0 sm:$0xff]
  %5 = vst [vmem:[%s1] sm:$0xff] %v4

// kernel: tile.63
$region0: #{tile.63}
  #allocation0 [shape = 's32[1]{0}', space=sflag, size = 0x4, scoped, tag = 'scoped memory for tile.63']
  %s0 = inlined_call_operand.vmem [shape: f32[8], index: 0, kind: input, shape index: {}]
  %s1 = inlined_call_operand.vmem [shape: f32[16,8], index: 1, kind: output, shape index: {}]
  // Predicated region
  $region2: #{tile.63} parent=0 // pred_check
    _
  $region3: #{tile.63} parent=0 // pred_check_branch
    %3 = sbr.rel (0) target = $region5
  $region4: #{tile.63} parent=0 // pred_region
    _
  $region5: #{tile.63} parent=0 // pred_fallthru
    _
  %v4 = vld [vmem:[%s0] ss:$0 sm:$0xff]
  %5 = vst [vmem:[%s1] sm:$0xff] %v4
  %s6 = scalar_lea.vmem %s1, 8
  %7 = vst [vmem:[%s6] sm:$0xff] %v4

// kernel: tile.68
$region0: #{tile.68}
  #allocation0 [shape = 's32[1]{0}', space=sflag, size = 0x4, scoped, tag = 'scoped memory for tile.68']
  %s0 = inlined_call_operand.vmem [shape: f32[128], index: 0, kind: input, shape index: {}]
  %s1 = inlined_call_operand.vmem [shape: f32[16,128], index: 1, kind: output, shape index: {}]
  // Predicated region
  $region2: #{tile.68} parent=0 // pred_check
    _
  $region3: #{tile.68} parent=0 // pred_check_branch
    %3 = sbr.rel (0) target = $region5
  $region4: #{tile.68} parent=0 // pred_region
    _
  $region5: #{tile.68} parent=0 // pred_fallthru
    _
  %v4 = vld [vmem:[%s0] ss:$0 sm:$0xff]
  %5 = vst [vmem:[%s1] sm:$0xff] %v4
  %s6 = scalar_lea.vmem %s1, 8
  %7 = vst [vmem:[%s6] sm:$0xff] %v4

// kernel: decoder_arvae_forward.1
$region0: #{decoder_arvae_forward.1}
  #allocation0 [shape = 'u32[]', space=smem, size = 0x4, offset = 0x4, fixed_abs, tag = 'smem constant byte address 0x4 - core index']
  #allocation1 [shape = 'u32[144,128]{1,0:T(1,128)}', space=vmem, size = 0x12000, scoped, tag = 'internal scratch']
  #allocation2 [shape = 'f32[8,2048]{1,0:T(8,128)}', space=vmem, size = 0x10000, scoped, tag = 'scratch operand']
  #allocation3 [shape = 'f32[128,32]{1,0:T(8,128)}', space=vmem, size = 0x10000, scoped, tag = 'scratch operand']
  %s0 = inlined_call_operand.vmem [shape: f32[8,8], index: 0, kind: input, shape index: {}]
  %s1 = inlined_call_operand.vmem [shape: f32[8,64], index: 1, kind: input, shape index: {}]
  %s2 = inlined_call_operand.vmem [shape: f32[8,64], index: 2, kind: input, shape index: {}]
  %s3 = inlined_call_operand.vmem [shape: f32[16,128], index: 3, kind: input, shape index: {}]
  %s4 = inlined_call_operand.vmem [shape: f32[3,128,128], index: 4, kind: input, shape index: {}]
  %s5 = inlined_call_operand.vmem [shape: f32[8,128], index: 5, kind: input, shape index: {}]
  %s6 = inlined_call_operand.vmem [shape: f32[200,2048], index: 6, kind: input, shape index: {}]
  %s7 = inlined_call_operand.vmem [shape: f32[40,128], index: 7, kind: input, shape index: {}]
  %s8 = inlined_call_operand.vmem [shape: f32[40,4], index: 8, kind: input, shape index: {}]
  %s9 = inlined_call_operand.vmem [shape: f32[128,4], index: 9, kind: output, shape index: {}]
  %s10 = sld [smem:[#allocation0]]
  $region46: #{decoder_arvae_forward.1} parent=0
    _
  %s12 = ssub.s32 1, %s10
  %s13 = scalar_select 0, %s12, %s10
  // Predicated region
  $region2: #{decoder_arvae_forward.1} parent=0 // pred_check
    _
  $region3: #{decoder_arvae_forward.1} parent=0 // pred_check_branch
    %15 = sbr.rel (0) target = $region5
  $region4: #{decoder_arvae_forward.1} parent=0 // pred_region
    _
  $region5: #{decoder_arvae_forward.1} parent=0 // pred_fallthru
    _
  // Predicated region
  $region6: #{decoder_arvae_forward.1} parent=0 // pred_check
    _
  $region7: #{decoder_arvae_forward.1} parent=0 // pred_check_branch
    %17 = sbr.rel (0) target = $region9
  $region8: #{decoder_arvae_forward.1} parent=0 // pred_region
    _
  $region9: #{decoder_arvae_forward.1} parent=0 // pred_fallthru
    _
  // Predicated region
  $region10: #{decoder_arvae_forward.1} parent=0 // pred_check
    _
  $region11: #{decoder_arvae_forward.1} parent=0 // pred_check_branch
    %19 = sbr.rel (0) target = $region13
  $region12: #{decoder_arvae_forward.1} parent=0 // pred_region
    _
  $region13: #{decoder_arvae_forward.1} parent=0 // pred_fallthru
    _
  // Predicated region
  $region14: #{decoder_arvae_forward.1} parent=0 // pred_check
    _
  $region15: #{decoder_arvae_forward.1} parent=0 // pred_check_branch
    %21 = sbr.rel (0) target = $region17
  $region16: #{decoder_arvae_forward.1} parent=0 // pred_region
    _
  $region17: #{decoder_arvae_forward.1} parent=0 // pred_fallthru
    _
  // Predicated region
  $region18: #{decoder_arvae_forward.1} parent=0 // pred_check
    _
  $region19: #{decoder_arvae_forward.1} parent=0 // pred_check_branch
    %23 = sbr.rel (0) target = $region21
  $region20: #{decoder_arvae_forward.1} parent=0 // pred_region
    _
  $region21: #{decoder_arvae_forward.1} parent=0 // pred_fallthru
    _
  // Predicated region
  $region22: #{decoder_arvae_forward.1} parent=0 // pred_check
    _
  $region23: #{decoder_arvae_forward.1} parent=0 // pred_check_branch
    %25 = sbr.rel (0) target = $region25
  $region24: #{decoder_arvae_forward.1} parent=0 // pred_region
    _
  $region25: #{decoder_arvae_forward.1} parent=0 // pred_fallthru
    _
  // Predicated region
  $region26: #{decoder_arvae_forward.1} parent=0 // pred_check
    _
  $region27: #{decoder_arvae_forward.1} parent=0 // pred_check_branch
    %27 = sbr.rel (0) target = $region29
  $region28: #{decoder_arvae_forward.1} parent=0 // pred_region
    _
  $region29: #{decoder_arvae_forward.1} parent=0 // pred_fallthru
    _
  // Predicated region
  $region30: #{decoder_arvae_forward.1} parent=0 // pred_check
    _
  $region31: #{decoder_arvae_forward.1} parent=0 // pred_check_branch
    %29 = sbr.rel (0) target = $region33
  $region32: #{decoder_arvae_forward.1} parent=0 // pred_region
    _
  $region33: #{decoder_arvae_forward.1} parent=0 // pred_fallthru
    _
  // Predicated region
  $region34: #{decoder_arvae_forward.1} parent=0 // pred_check
    _
  $region35: #{decoder_arvae_forward.1} parent=0 // pred_check_branch
    %31 = sbr.rel (0) target = $region37
  $region36: #{decoder_arvae_forward.1} parent=0 // pred_region
    _
  $region37: #{decoder_arvae_forward.1} parent=0 // pred_fallthru
    _
  %v32 = vld [vmem:[%s0] sm:$0xff]
  %v33 = vld [vmem:[%s3] sm:$0xff]
  %v34 = vld [vmem:[%s3 + $0x8] sm:$0x1]
  %v35 = vlaneseq
  %v36 = vshrl.u32 %v35, 7
  %v37 = vsub.s32 0, %v36
  %v38 = vrot.slane %v34, %v37
  %vm39 = vcmask 64512
  %v41 = vsel %vm39, %v32, 0
  %43 = vmatprep.subr.mxu0 0.0
  %44 = vmatpush1.msra.mxu0 0.0
  %45 = vmatprep.subr.mxu0 0.0
  %46 = vmatpush1.msra.mxu0 0.0
  %47 = vmatprep.subr.mxu0 0.0
  %48 = vmatpush1.msra.mxu0 0.0
  %49 = vmatprep.subr.mxu0 0.0
  %50 = vmatpush1.msra.mxu0 0.0
  %51 = vmatprep.subr.mxu0 0.0
  %52 = vmatpush1.msra.mxu0 0.0
  %53 = vmatprep.subr.mxu0 0.0
  %54 = vmatpush1.msra.mxu0 0.0
  %55 = vmatprep.subr.mxu0 0.0
  %56 = vmatpush1.msra.mxu0 0.0
  %57 = vmatprep.subr.mxu0 0.0
  %58 = vmatpush1.msra.mxu0 0.0
  %59 = vmatprep.subr.mxu0 0.0
  %60 = vmatpush1.msra.mxu0 0.0
  %61 = vmatprep.subr.mxu0 0.0
  %62 = vmatpush1.msra.mxu0 0.0
  %63 = vmatprep.subr.mxu0 0.0
  %64 = vmatpush1.msra.mxu0 0.0
  %65 = vmatprep.subr.mxu0 0.0
  %66 = vmatpush1.msra.mxu0 0.0
  %67 = vmatprep.subr.mxu0 0.0
  %68 = vmatpush1.msra.mxu0 0.0
  %69 = vmatprep.subr.mxu0 0.0
  %70 = vmatpush1.msra.mxu0 0.0
  %71 = vmatprep.subr.mxu0 0.0
  %72 = vmatpush1.msra.mxu0 0.0
  %73 = vmatprep.subr.mxu0 0.0
  %74 = vmatpush1.msra.mxu0 %v33
  %75 = vmatprep.subr.mxu0 0.0
  %76 = vmatpush2.msra.mxu0 0.0
  %77 = vmatprep.subr.mxu0 0.0
  %78 = vmatpush2.msra.mxu0 0.0
  %79 = vmatprep.subr.mxu0 0.0
  %80 = vmatpush2.msra.mxu0 0.0
  %81 = vmatprep.subr.mxu0 0.0
  %82 = vmatpush2.msra.mxu0 0.0
  %83 = vmatprep.subr.mxu0 0.0
  %84 = vmatpush2.msra.mxu0 0.0
  %85 = vmatprep.subr.mxu0 0.0
  %86 = vmatpush2.msra.mxu0 0.0
  %87 = vmatprep.subr.mxu0 0.0
  %88 = vmatpush2.msra.mxu0 0.0
  %89 = vmatprep.subr.mxu0 0.0
  %90 = vmatpush2.msra.mxu0 0.0
  %91 = vmatprep.subr.mxu0 0.0
  %92 = vmatpush2.msra.mxu0 0.0
  %93 = vmatprep.subr.mxu0 0.0
  %94 = vmatpush2.msra.mxu0 0.0
  %95 = vmatprep.subr.mxu0 0.0
  %96 = vmatpush2.msra.mxu0 0.0
  %97 = vmatprep.subr.mxu0 0.0
  %98 = vmatpush2.msra.mxu0 0.0
  %99 = vmatprep.subr.mxu0 0.0
  %100 = vmatpush2.msra.mxu0 0.0
  %101 = vmatprep.subr.mxu0 0.0
  %102 = vmatpush2.msra.mxu0 0.0
  %103 = vmatprep.subr.mxu0 0.0
  %104 = vmatpush2.msra.mxu0 0.0
  %105 = vmatprep.subr.mxu0 0.0
  %106 = vmatpush2.msra.mxu0 0.0
  %107 = vmatprep.mubr.f32.mxu0 0.0
  %108 = vmatmul.mubr.f32.gmra.mxu0 %v41
  %v109 = vpop.f32.mrf.mxu0
  %v110 = vadd.f32 %v38, %v109
  %v111 = vpop.f32.mrf.mxu0
  %112 = vdwg.mxu0
  %v113 = vld [vmem:[%s4] sm:$0xff]
  %v114 = vld [vmem:[%s4 + $0x8] sm:$0xff]
  %v115 = vld [vmem:[%s4 + $0x10] sm:$0xff]
  %v116 = vld [vmem:[%s4 + $0x18] sm:$0xff]
  %v117 = vld [vmem:[%s4 + $0x20] sm:$0xff]
  %v118 = vld [vmem:[%s4 + $0x28] sm:$0xff]
  %v119 = vld [vmem:[%s4 + $0x30] sm:$0xff]
  %v120 = vld [vmem:[%s4 + $0x38] sm:$0xff]
  %v121 = vld [vmem:[%s4 + $0x40] sm:$0xff]
  %v122 = vld [vmem:[%s4 + $0x48] sm:$0xff]
  %v123 = vld [vmem:[%s4 + $0x50] sm:$0xff]
  %v124 = vld [vmem:[%s4 + $0x58] sm:$0xff]
  %v125 = vld [vmem:[%s4 + $0x60] sm:$0xff]
  %v126 = vld [vmem:[%s4 + $0x68] sm:$0xff]
  %v127 = vld [vmem:[%s4 + $0x70] sm:$0xff]
  %v128 = vld [vmem:[%s4 + $0x78] sm:$0xff]
  %v129 = vld [vmem:[%s5] sm:$0x1]
  %v130 = vlaneseq
  %v131 = vshrl.u32 %v130, 7
  %v132 = vsub.s32 0, %v131
  %v133 = vrot.slane %v129, %v132
  %134 = vmatprep.subr.mxu0 0.0
  %135 = vmatpush1.msra.mxu0 %v128
  %136 = vmatprep.subr.mxu0 0.0
  %137 = vmatpush1.msra.mxu0 %v127
  %138 = vmatprep.subr.mxu0 0.0
  %139 = vmatpush1.msra.mxu0 %v126
  %140 = vmatprep.subr.mxu0 0.0
  %141 = vmatpush1.msra.mxu0 %v125
  %142 = vmatprep.subr.mxu0 0.0
  %143 = vmatpush1.msra.mxu0 %v124
  %144 = vmatprep.subr.mxu0 0.0
  %145 = vmatpush1.msra.mxu0 %v123
  %146 = vmatprep.subr.mxu0 0.0
  %147 = vmatpush1.msra.mxu0 %v122
  %148 = vmatprep.subr.mxu0 0.0
  %149 = vmatpush1.msra.mxu0 %v121
  %150 = vmatprep.subr.mxu0 0.0
  %151 = vmatpush1.msra.mxu0 %v120
  %152 = vmatprep.subr.mxu0 0.0
  %153 = vmatpush1.msra.mxu0 %v119
  %154 = vmatprep.subr.mxu0 0.0
  %155 = vmatpush1.msra.mxu0 %v118
  %156 = vmatprep.subr.mxu0 0.0
  %157 = vmatpush1.msra.mxu0 %v117
  %158 = vmatprep.subr.mxu0 0.0
  %159 = vmatpush1.msra.mxu0 %v116
  %160 = vmatprep.subr.mxu0 0.0
  %161 = vmatpush1.msra.mxu0 %v115
  %162 = vmatprep.subr.mxu0 0.0
  %163 = vmatpush1.msra.mxu0 %v114
  %164 = vmatprep.subr.mxu0 0.0
  %165 = vmatpush1.msra.mxu0 %v113
  %166 = vmatprep.subr.mxu0 0.0
  %167 = vmatpush2.msra.mxu0 0.0
  %168 = vmatprep.subr.mxu0 0.0
  %169 = vmatpush2.msra.mxu0 0.0
  %170 = vmatprep.subr.mxu0 0.0
  %171 = vmatpush2.msra.mxu0 0.0
  %172 = vmatprep.subr.mxu0 0.0
  %173 = vmatpush2.msra.mxu0 0.0
  %174 = vmatprep.subr.mxu0 0.0
  %175 = vmatpush2.msra.mxu0 0.0
  %176 = vmatprep.subr.mxu0 0.0
  %177 = vmatpush2.msra.mxu0 0.0
  %178 = vmatprep.subr.mxu0 0.0
  %179 = vmatpush2.msra.mxu0 0.0
  %180 = vmatprep.subr.mxu0 0.0
  %181 = vmatpush2.msra.mxu0 0.0
  %182 = vmatprep.subr.mxu0 0.0
  %183 = vmatpush2.msra.mxu0 0.0
  %184 = vmatprep.subr.mxu0 0.0
  %185 = vmatpush2.msra.mxu0 0.0
  %186 = vmatprep.subr.mxu0 0.0
  %187 = vmatpush2.msra.mxu0 0.0
  %188 = vmatprep.subr.mxu0 0.0
  %189 = vmatpush2.msra.mxu0 0.0
  %190 = vmatprep.subr.mxu0 0.0
  %191 = vmatpush2.msra.mxu0 0.0
  %192 = vmatprep.subr.mxu0 0.0
  %193 = vmatpush2.msra.mxu0 0.0
  %194 = vmatprep.subr.mxu0 0.0
  %195 = vmatpush2.msra.mxu0 0.0
  %196 = vmatprep.subr.mxu0 0.0
  %197 = vmatpush2.msra.mxu0 0.0
  %198 = vmatprep.mubr.f32.mxu0 0.0
  %199 = vmatmul.mubr.f32.gmra.mxu0 %v110
  %v200 = vpop.f32.mrf.mxu0
  %v201 = vadd.f32 %v133, %v200
  %v202 = vpop.f32.mrf.mxu0
  %203 = vdwg.mxu0
  %v204 = vld [vmem:[%s5 + $0x4] sm:$0x1]
  %vm205 = vcmp.gt.f32.partialorder %v201, 0.0
  %v206 = vlaneseq
  %v207 = vshrl.u32 %v206, 7
  %v208 = vsub.s32 0, %v207
  %v209 = vrot.slane %v204, %v208
  %v210 = vmul.f32 %v209, %v201
  %v211 = vsel %vm205, %v201, %v210
  %s212 = scalar_lea.vmem %s4, 128
  %v213 = vld [vmem:[%s212] sm:$0xff]
  %v214 = vld [vmem:[%s212 + $0x8] sm:$0xff]
  %v215 = vld [vmem:[%s212 + $0x10] sm:$0xff]
  %v216 = vld [vmem:[%s212 + $0x18] sm:$0xff]
  %v217 = vld [vmem:[%s212 + $0x20] sm:$0xff]
  %v218 = vld [vmem:[%s212 + $0x28] sm:$0xff]
  %v219 = vld [vmem:[%s212 + $0x30] sm:$0xff]
  %v220 = vld [vmem:[%s212 + $0x38] sm:$0xff]
  %v221 = vld [vmem:[%s212 + $0x40] sm:$0xff]
  %v222 = vld [vmem:[%s212 + $0x48] sm:$0xff]
  %v223 = vld [vmem:[%s212 + $0x50] sm:$0xff]
  %v224 = vld [vmem:[%s212 + $0x58] sm:$0xff]
  %v225 = vld [vmem:[%s212 + $0x60] sm:$0xff]
  %v226 = vld [vmem:[%s212 + $0x68] sm:$0xff]
  %v227 = vld [vmem:[%s212 + $0x70] sm:$0xff]
  %v228 = vld [vmem:[%s212 + $0x78] sm:$0xff]
  %v229 = vld [vmem:[%s5 + $0x1] sm:$0x1]
  %v230 = vlaneseq
  %v231 = vshrl.u32 %v230, 7
  %v232 = vsub.s32 0, %v231
  %v233 = vrot.slane %v229, %v232
  %234 = vmatprep.subr.mxu0 0.0
  %235 = vmatpush1.msra.mxu0 %v228
  %236 = vmatprep.subr.mxu0 0.0
  %237 = vmatpush1.msra.mxu0 %v227
  %238 = vmatprep.subr.mxu0 0.0
  %239 = vmatpush1.msra.mxu0 %v226
  %240 = vmatprep.subr.mxu0 0.0
  %241 = vmatpush1.msra.mxu0 %v225
  %242 = vmatprep.subr.mxu0 0.0
  %243 = vmatpush1.msra.mxu0 %v224
  %244 = vmatprep.subr.mxu0 0.0
  %245 = vmatpush1.msra.mxu0 %v223
  %246 = vmatprep.subr.mxu0 0.0
  %247 = vmatpush1.msra.mxu0 %v222
  %248 = vmatprep.subr.mxu0 0.0
  %249 = vmatpush1.msra.mxu0 %v221
  %250 = vmatprep.subr.mxu0 0.0
  %251 = vmatpush1.msra.mxu0 %v220
  %252 = vmatprep.subr.mxu0 0.0
  %253 = vmatpush1.msra.mxu0 %v219
  %254 = vmatprep.subr.mxu0 0.0
  %255 = vmatpush1.msra.mxu0 %v218
  %256 = vmatprep.subr.mxu0 0.0
  %257 = vmatpush1.msra.mxu0 %v217
  %258 = vmatprep.subr.mxu0 0.0
  %259 = vmatpush1.msra.mxu0 %v216
  %260 = vmatprep.subr.mxu0 0.0
  %261 = vmatpush1.msra.mxu0 %v215
  %262 = vmatprep.subr.mxu0 0.0
  %263 = vmatpush1.msra.mxu0 %v214
  %264 = vmatprep.subr.mxu0 0.0
  %265 = vmatpush1.msra.mxu0 %v213
  %266 = vmatprep.subr.mxu0 0.0
  %267 = vmatpush2.msra.mxu0 0.0
  %268 = vmatprep.subr.mxu0 0.0
  %269 = vmatpush2.msra.mxu0 0.0
  %270 = vmatprep.subr.mxu0 0.0
  %271 = vmatpush2.msra.mxu0 0.0
  %272 = vmatprep.subr.mxu0 0.0
  %273 = vmatpush2.msra.mxu0 0.0
  %274 = vmatprep.subr.mxu0 0.0
  %275 = vmatpush2.msra.mxu0 0.0
  %276 = vmatprep.subr.mxu0 0.0
  %277 = vmatpush2.msra.mxu0 0.0
  %278 = vmatprep.subr.mxu0 0.0
  %279 = vmatpush2.msra.mxu0 0.0
  %280 = vmatprep.subr.mxu0 0.0
  %281 = vmatpush2.msra.mxu0 0.0
  %282 = vmatprep.subr.mxu0 0.0
  %283 = vmatpush2.msra.mxu0 0.0
  %284 = vmatprep.subr.mxu0 0.0
  %285 = vmatpush2.msra.mxu0 0.0
  %286 = vmatprep.subr.mxu0 0.0
  %287 = vmatpush2.msra.mxu0 0.0
  %288 = vmatprep.subr.mxu0 0.0
  %289 = vmatpush2.msra.mxu0 0.0
  %290 = vmatprep.subr.mxu0 0.0
  %291 = vmatpush2.msra.mxu0 0.0
  %292 = vmatprep.subr.mxu0 0.0
  %293 = vmatpush2.msra.mxu0 0.0
  %294 = vmatprep.subr.mxu0 0.0
  %295 = vmatpush2.msra.mxu0 0.0
  %296 = vmatprep.subr.mxu0 0.0
  %297 = vmatpush2.msra.mxu0 0.0
  %298 = vmatprep.mubr.f32.mxu0 0.0
  %299 = vmatmul.mubr.f32.gmra.mxu0 %v211
  %v300 = vpop.f32.mrf.mxu0
  %v301 = vadd.f32 %v233, %v300
  %v302 = vpop.f32.mrf.mxu0
  %303 = vdwg.mxu0
  %v304 = vld [vmem:[%s5 + $0x5] sm:$0x1]
  %vm305 = vcmp.gt.f32.partialorder %v301, 0.0
  %v306 = vlaneseq
  %v307 = vshrl.u32 %v306, 7
  %v308 = vsub.s32 0, %v307
  %v309 = vrot.slane %v304, %v308
  %v310 = vmul.f32 %v309, %v301
  %v311 = vsel %vm305, %v301, %v310
  %s312 = scalar_lea.vmem %s4, 256
  %v313 = vld [vmem:[%s312] sm:$0xff]
  %v314 = vld [vmem:[%s312 + $0x8] sm:$0xff]
  %v315 = vld [vmem:[%s312 + $0x10] sm:$0xff]
  %v316 = vld [vmem:[%s312 + $0x18] sm:$0xff]
  %v317 = vld [vmem:[%s312 + $0x20] sm:$0xff]
  %v318 = vld [vmem:[%s312 + $0x28] sm:$0xff]
  %v319 = vld [vmem:[%s312 + $0x30] sm:$0xff]
  %v320 = vld [vmem:[%s312 + $0x38] sm:$0xff]
  %v321 = vld [vmem:[%s312 + $0x40] sm:$0xff]
  %v322 = vld [vmem:[%s312 + $0x48] sm:$0xff]
  %v323 = vld [vmem:[%s312 + $0x50] sm:$0xff]
  %v324 = vld [vmem:[%s312 + $0x58] sm:$0xff]
  %v325 = vld [vmem:[%s312 + $0x60] sm:$0xff]
  %v326 = vld [vmem:[%s312 + $0x68] sm:$0xff]
  %v327 = vld [vmem:[%s312 + $0x70] sm:$0xff]
  %v328 = vld [vmem:[%s312 + $0x78] sm:$0xff]
  %v329 = vld [vmem:[%s5 + $0x2] sm:$0x1]
  %v330 = vlaneseq
  %v331 = vshrl.u32 %v330, 7
  %v332 = vsub.s32 0, %v331
  %v333 = vrot.slane %v329, %v332
  %334 = vmatprep.subr.mxu0 0.0
  %335 = vmatpush1.msra.mxu0 %v328
  %336 = vmatprep.subr.mxu0 0.0
  %337 = vmatpush1.msra.mxu0 %v327
  %338 = vmatprep.subr.mxu0 0.0
  %339 = vmatpush1.msra.mxu0 %v326
  %340 = vmatprep.subr.mxu0 0.0
  %341 = vmatpush1.msra.mxu0 %v325
  %342 = vmatprep.subr.mxu0 0.0
  %343 = vmatpush1.msra.mxu0 %v324
  %344 = vmatprep.subr.mxu0 0.0
  %345 = vmatpush1.msra.mxu0 %v323
  %346 = vmatprep.subr.mxu0 0.0
  %347 = vmatpush1.msra.mxu0 %v322
  %348 = vmatprep.subr.mxu0 0.0
  %349 = vmatpush1.msra.mxu0 %v321
  %350 = vmatprep.subr.mxu0 0.0
  %351 = vmatpush1.msra.mxu0 %v320
  %352 = vmatprep.subr.mxu0 0.0
  %353 = vmatpush1.msra.mxu0 %v319
  %354 = vmatprep.subr.mxu0 0.0
  %355 = vmatpush1.msra.mxu0 %v318
  %356 = vmatprep.subr.mxu0 0.0
  %357 = vmatpush1.msra.mxu0 %v317
  %358 = vmatprep.subr.mxu0 0.0
  %359 = vmatpush1.msra.mxu0 %v316
  %360 = vmatprep.subr.mxu0 0.0
  %361 = vmatpush1.msra.mxu0 %v315
  %362 = vmatprep.subr.mxu0 0.0
  %363 = vmatpush1.msra.mxu0 %v314
  %364 = vmatprep.subr.mxu0 0.0
  %365 = vmatpush1.msra.mxu0 %v313
  %366 = vmatprep.subr.mxu0 0.0
  %367 = vmatpush2.msra.mxu0 0.0
  %368 = vmatprep.subr.mxu0 0.0
  %369 = vmatpush2.msra.mxu0 0.0
  %370 = vmatprep.subr.mxu0 0.0
  %371 = vmatpush2.msra.mxu0 0.0
  %372 = vmatprep.subr.mxu0 0.0
  %373 = vmatpush2.msra.mxu0 0.0
  %374 = vmatprep.subr.mxu0 0.0
  %375 = vmatpush2.msra.mxu0 0.0
  %376 = vmatprep.subr.mxu0 0.0
  %377 = vmatpush2.msra.mxu0 0.0
  %378 = vmatprep.subr.mxu0 0.0
  %379 = vmatpush2.msra.mxu0 0.0
  %380 = vmatprep.subr.mxu0 0.0
  %381 = vmatpush2.msra.mxu0 0.0
  %382 = vmatprep.subr.mxu0 0.0
  %383 = vmatpush2.msra.mxu0 0.0
  %384 = vmatprep.subr.mxu0 0.0
  %385 = vmatpush2.msra.mxu0 0.0
  %386 = vmatprep.subr.mxu0 0.0
  %387 = vmatpush2.msra.mxu0 0.0
  %388 = vmatprep.subr.mxu0 0.0
  %389 = vmatpush2.msra.mxu0 0.0
  %390 = vmatprep.subr.mxu0 0.0
  %391 = vmatpush2.msra.mxu0 0.0
  %392 = vmatprep.subr.mxu0 0.0
  %393 = vmatpush2.msra.mxu0 0.0
  %394 = vmatprep.subr.mxu0 0.0
  %395 = vmatpush2.msra.mxu0 0.0
  %396 = vmatprep.subr.mxu0 0.0
  %397 = vmatpush2.msra.mxu0 0.0
  %398 = vmatprep.mubr.f32.mxu0 0.0
  %399 = vmatmul.mubr.f32.gmra.mxu0 %v311
  %v400 = vpop.f32.mrf.mxu0
  %v401 = vadd.f32 %v333, %v400
  %v402 = vpop.f32.mrf.mxu0
  %403 = vdwg.mxu0
  %v404 = vld [vmem:[%s5 + $0x6] sm:$0x1]
  %vm405 = vcmp.gt.f32.partialorder %v401, 0.0
  %v406 = vlaneseq
  %v407 = vshrl.u32 %v406, 7
  %v408 = vsub.s32 0, %v407
  %v409 = vrot.slane %v404, %v408
  %v410 = vmul.f32 %v409, %v401
  %v411 = vsel %vm405, %v401, %v410
  %v412 = vld [vmem:[%s1] sm:$0xff]
  %v413 = vld [vmem:[%s2] sm:$0xff]
  %v414 = vmul.f32 %v412, %v413
  %v415 = vld [vmem:[%s6] sm:$0xff]
  %v416 = vld [vmem:[%s6 + $0x8] sm:$0xff]
  %v417 = vld [vmem:[%s6 + $0x10] sm:$0xff]
  %v418 = vld [vmem:[%s6 + $0x18] sm:$0xff]
  %v419 = vld [vmem:[%s6 + $0x20] sm:$0xff]
  %v420 = vld [vmem:[%s6 + $0x28] sm:$0xff]
  %v421 = vld [vmem:[%s6 + $0x30] sm:$0xff]
  %v422 = vld [vmem:[%s6 + $0x38] sm:$0xff]
  %v423 = vld [vmem:[%s6 + $0x40] sm:$0xff]
  %v424 = vld [vmem:[%s6 + $0x48] sm:$0xff]
  %v425 = vld [vmem:[%s6 + $0x50] sm:$0xff]
  %v426 = vld [vmem:[%s6 + $0x58] sm:$0xff]
  %v427 = vld [vmem:[%s6 + $0x60] sm:$0xff]
  %v428 = vld [vmem:[%s6 + $0x68] sm:$0xff]
  %v429 = vld [vmem:[%s6 + $0x70] sm:$0xff]
  %v430 = vld [vmem:[%s6 + $0x78] sm:$0xff]
  %v431 = vld [vmem:[%s6 + $0x80] sm:$0xff]
  %v432 = vld [vmem:[%s6 + $0x88] sm:$0xff]
  %v433 = vld [vmem:[%s6 + $0x90] sm:$0xff]
  %v434 = vld [vmem:[%s6 + $0x98] sm:$0xff]
  %v435 = vld [vmem:[%s6 + $0xa0] sm:$0xff]
  %v436 = vld [vmem:[%s6 + $0xa8] sm:$0xff]
  %v437 = vld [vmem:[%s6 + $0xb0] sm:$0xff]
  %v438 = vld [vmem:[%s6 + $0xb8] sm:$0xff]
  %v439 = vld [vmem:[%s6 + $0xc0] sm:$0xff]
  %v440 = vld [vmem:[%s6 + $0xc8] sm:$0xff]
  %v441 = vld [vmem:[%s6 + $0xd0] sm:$0xff]
  %v442 = vld [vmem:[%s6 + $0xd8] sm:$0xff]
  %v443 = vld [vmem:[%s6 + $0xe0] sm:$0xff]
  %v444 = vld [vmem:[%s6 + $0xe8] sm:$0xff]
  %v445 = vld [vmem:[%s6 + $0xf0] sm:$0xff]
  %v446 = vld [vmem:[%s6 + $0xf8] sm:$0xff]
  %v447 = vld [vmem:[%s6 + $0x100] sm:$0xff]
  %v448 = vld [vmem:[%s6 + $0x108] sm:$0xff]
  %v449 = vld [vmem:[%s6 + $0x110] sm:$0xff]
  %v450 = vld [vmem:[%s6 + $0x118] sm:$0xff]
  %v451 = vld [vmem:[%s6 + $0x120] sm:$0xff]
  %v452 = vld [vmem:[%s6 + $0x128] sm:$0xff]
  %v453 = vld [vmem:[%s6 + $0x130] sm:$0xff]
  %v454 = vld [vmem:[%s6 + $0x138] sm:$0xff]
  %v455 = vld [vmem:[%s6 + $0x140] sm:$0xff]
  %v456 = vld [vmem:[%s6 + $0x148] sm:$0xff]
  %v457 = vld [vmem:[%s6 + $0x150] sm:$0xff]
  %v458 = vld [vmem:[%s6 + $0x158] sm:$0xff]
  %v459 = vld [vmem:[%s6 + $0x160] sm:$0xff]
  %v460 = vld [vmem:[%s6 + $0x168] sm:$0xff]
  %v461 = vld [vmem:[%s6 + $0x170] sm:$0xff]
  %v462 = vld [vmem:[%s6 + $0x178] sm:$0xff]
  %v463 = vld [vmem:[%s6 + $0x180] sm:$0xff]
  %v464 = vld [vmem:[%s6 + $0x188] sm:$0xff]
  %v465 = vld [vmem:[%s6 + $0x190] sm:$0xff]
  %v466 = vld [vmem:[%s6 + $0x198] sm:$0xff]
  %v467 = vld [vmem:[%s6 + $0x1a0] sm:$0xff]
  %v468 = vld [vmem:[%s6 + $0x1a8] sm:$0xff]
  %v469 = vld [vmem:[%s6 + $0x1b0] sm:$0xff]
  %v470 = vld [vmem:[%s6 + $0x1b8] sm:$0xff]
  %v471 = vld [vmem:[%s6 + $0x1c0] sm:$0xff]
  %v472 = vld [vmem:[%s6 + $0x1c8] sm:$0xff]
  %v473 = vld [vmem:[%s6 + $0x1d0] sm:$0xff]
  %v474 = vld [vmem:[%s6 + $0x1d8] sm:$0xff]
  %v475 = vld [vmem:[%s6 + $0x1e0] sm:$0xff]
  %v476 = vld [vmem:[%s6 + $0x1e8] sm:$0xff]
  %v477 = vld [vmem:[%s6 + $0x1f0] sm:$0xff]
  %v478 = vld [vmem:[%s6 + $0x1f8] sm:$0xff]
  %v479 = vld [vmem:[%s6 + $0x200] sm:$0xff]
  %v480 = vld [vmem:[%s6 + $0x208] sm:$0xff]
  %v481 = vld [vmem:[%s6 + $0x210] sm:$0xff]
  %v482 = vld [vmem:[%s6 + $0x218] sm:$0xff]
  %v483 = vld [vmem:[%s6 + $0x220] sm:$0xff]
  %v484 = vld [vmem:[%s6 + $0x228] sm:$0xff]
  %v485 = vld [vmem:[%s6 + $0x230] sm:$0xff]
  %v486 = vld [vmem:[%s6 + $0x238] sm:$0xff]
  %v487 = vld [vmem:[%s6 + $0x240] sm:$0xff]
  %v488 = vld [vmem:[%s6 + $0x248] sm:$0xff]
  %v489 = vld [vmem:[%s6 + $0x250] sm:$0xff]
  %v490 = vld [vmem:[%s6 + $0x258] sm:$0xff]
  %v491 = vld [vmem:[%s6 + $0x260] sm:$0xff]
  %v492 = vld [vmem:[%s6 + $0x268] sm:$0xff]
  %v493 = vld [vmem:[%s6 + $0x270] sm:$0xff]
  %v494 = vld [vmem:[%s6 + $0x278] sm:$0xff]
  %v495 = vld [vmem:[%s6 + $0x280] sm:$0xff]
  %v496 = vld [vmem:[%s6 + $0x288] sm:$0xff]
  %v497 = vld [vmem:[%s6 + $0x290] sm:$0xff]
  %v498 = vld [vmem:[%s6 + $0x298] sm:$0xff]
  %v499 = vld [vmem:[%s6 + $0x2a0] sm:$0xff]
  %v500 = vld [vmem:[%s6 + $0x2a8] sm:$0xff]
  %v501 = vld [vmem:[%s6 + $0x2b0] sm:$0xff]
  %v502 = vld [vmem:[%s6 + $0x2b8] sm:$0xff]
  %v503 = vld [vmem:[%s6 + $0x2c0] sm:$0xff]
  %v504 = vld [vmem:[%s6 + $0x2c8] sm:$0xff]
  %v505 = vld [vmem:[%s6 + $0x2d0] sm:$0xff]
  %v506 = vld [vmem:[%s6 + $0x2d8] sm:$0xff]
  %v507 = vld [vmem:[%s6 + $0x2e0] sm:$0xff]
  %v508 = vld [vmem:[%s6 + $0x2e8] sm:$0xff]
  %v509 = vld [vmem:[%s6 + $0x2f0] sm:$0xff]
  %v510 = vld [vmem:[%s6 + $0x2f8] sm:$0xff]
  %v511 = vld [vmem:[%s6 + $0x300] sm:$0xff]
  %v512 = vld [vmem:[%s6 + $0x308] sm:$0xff]
  %v513 = vld [vmem:[%s6 + $0x310] sm:$0xff]
  %v514 = vld [vmem:[%s6 + $0x318] sm:$0xff]
  %v515 = vld [vmem:[%s6 + $0x320] sm:$0xff]
  %v516 = vld [vmem:[%s6 + $0x328] sm:$0xff]
  %v517 = vld [vmem:[%s6 + $0x330] sm:$0xff]
  %v518 = vld [vmem:[%s6 + $0x338] sm:$0xff]
  %v519 = vld [vmem:[%s6 + $0x340] sm:$0xff]
  %v520 = vld [vmem:[%s6 + $0x348] sm:$0xff]
  %v521 = vld [vmem:[%s6 + $0x350] sm:$0xff]
  %v522 = vld [vmem:[%s6 + $0x358] sm:$0xff]
  %v523 = vld [vmem:[%s6 + $0x360] sm:$0xff]
  %v524 = vld [vmem:[%s6 + $0x368] sm:$0xff]
  %v525 = vld [vmem:[%s6 + $0x370] sm:$0xff]
  %v526 = vld [vmem:[%s6 + $0x378] sm:$0xff]
  %v527 = vld [vmem:[%s6 + $0x380] sm:$0xff]
  %v528 = vld [vmem:[%s6 + $0x388] sm:$0xff]
  %v529 = vld [vmem:[%s6 + $0x390] sm:$0xff]
  %v530 = vld [vmem:[%s6 + $0x398] sm:$0xff]
  %v531 = vld [vmem:[%s6 + $0x3a0] sm:$0xff]
  %v532 = vld [vmem:[%s6 + $0x3a8] sm:$0xff]
  %v533 = vld [vmem:[%s6 + $0x3b0] sm:$0xff]
  %v534 = vld [vmem:[%s6 + $0x3b8] sm:$0xff]
  %v535 = vld [vmem:[%s6 + $0x3c0] sm:$0xff]
  %v536 = vld [vmem:[%s6 + $0x3c8] sm:$0xff]
  %v537 = vld [vmem:[%s6 + $0x3d0] sm:$0xff]
  %v538 = vld [vmem:[%s6 + $0x3d8] sm:$0xff]
  %v539 = vld [vmem:[%s6 + $0x3e0] sm:$0xff]
  %v540 = vld [vmem:[%s6 + $0x3e8] sm:$0xff]
  %v541 = vld [vmem:[%s6 + $0x3f0] sm:$0xff]
  %v542 = vld [vmem:[%s6 + $0x3f8] sm:$0xff]
  %v543 = vld [vmem:[%s6 + $0x400] sm:$0xff]
  %v544 = vld [vmem:[%s6 + $0x408] sm:$0xff]
  %v545 = vld [vmem:[%s6 + $0x410] sm:$0xff]
  %v546 = vld [vmem:[%s6 + $0x418] sm:$0xff]
  %v547 = vld [vmem:[%s6 + $0x420] sm:$0xff]
  %v548 = vld [vmem:[%s6 + $0x428] sm:$0xff]
  %v549 = vld [vmem:[%s6 + $0x430] sm:$0xff]
  %v550 = vld [vmem:[%s6 + $0x438] sm:$0xff]
  %v551 = vld [vmem:[%s6 + $0x440] sm:$0xff]
  %v552 = vld [vmem:[%s6 + $0x448] sm:$0xff]
  %v553 = vld [vmem:[%s6 + $0x450] sm:$0xff]
  %v554 = vld [vmem:[%s6 + $0x458] sm:$0xff]
  %v555 = vld [vmem:[%s6 + $0x460] sm:$0xff]
  %v556 = vld [vmem:[%s6 + $0x468] sm:$0xff]
  %v557 = vld [vmem:[%s6 + $0x470] sm:$0xff]
  %v558 = vld [vmem:[%s6 + $0x478] sm:$0xff]
  %v559 = vld [vmem:[%s6 + $0x480] sm:$0xff]
  %v560 = vld [vmem:[%s6 + $0x488] sm:$0xff]
  %v561 = vld [vmem:[%s6 + $0x490] sm:$0xff]
  %v562 = vld [vmem:[%s6 + $0x498] sm:$0xff]
  %v563 = vld [vmem:[%s6 + $0x4a0] sm:$0xff]
  %v564 = vld [vmem:[%s6 + $0x4a8] sm:$0xff]
  %v565 = vld [vmem:[%s6 + $0x4b0] sm:$0xff]
  %v566 = vld [vmem:[%s6 + $0x4b8] sm:$0xff]
  %v567 = vld [vmem:[%s6 + $0x4c0] sm:$0xff]
  %v568 = vld [vmem:[%s6 + $0x4c8] sm:$0xff]
  %v569 = vld [vmem:[%s6 + $0x4d0] sm:$0xff]
  %v570 = vld [vmem:[%s6 + $0x4d8] sm:$0xff]
  %v571 = vld [vmem:[%s6 + $0x4e0] sm:$0xff]
  %v572 = vld [vmem:[%s6 + $0x4e8] sm:$0xff]
  %v573 = vld [vmem:[%s6 + $0x4f0] sm:$0xff]
  %v574 = vld [vmem:[%s6 + $0x4f8] sm:$0xff]
  %v575 = vld [vmem:[%s6 + $0x500] sm:$0xff]
  %v576 = vld [vmem:[%s6 + $0x508] sm:$0xff]
  %v577 = vld [vmem:[%s6 + $0x510] sm:$0xff]
  %v578 = vld [vmem:[%s6 + $0x518] sm:$0xff]
  %v579 = vld [vmem:[%s6 + $0x520] sm:$0xff]
  %v580 = vld [vmem:[%s6 + $0x528] sm:$0xff]
  %v581 = vld [vmem:[%s6 + $0x530] sm:$0xff]
  %v582 = vld [vmem:[%s6 + $0x538] sm:$0xff]
  %v583 = vld [vmem:[%s6 + $0x540] sm:$0xff]
  %v584 = vld [vmem:[%s6 + $0x548] sm:$0xff]
  %v585 = vld [vmem:[%s6 + $0x550] sm:$0xff]
  %v586 = vld [vmem:[%s6 + $0x558] sm:$0xff]
  %v587 = vld [vmem:[%s6 + $0x560] sm:$0xff]
  %v588 = vld [vmem:[%s6 + $0x568] sm:$0xff]
  %v589 = vld [vmem:[%s6 + $0x570] sm:$0xff]
  %v590 = vld [vmem:[%s6 + $0x578] sm:$0xff]
  %v591 = vld [vmem:[%s6 + $0x580] sm:$0xff]
  %v592 = vld [vmem:[%s6 + $0x588] sm:$0xff]
  %v593 = vld [vmem:[%s6 + $0x590] sm:$0xff]
  %v594 = vld [vmem:[%s6 + $0x598] sm:$0xff]
  %v595 = vld [vmem:[%s6 + $0x5a0] sm:$0xff]
  %v596 = vld [vmem:[%s6 + $0x5a8] sm:$0xff]
  %v597 = vld [vmem:[%s6 + $0x5b0] sm:$0xff]
  %v598 = vld [vmem:[%s6 + $0x5b8] sm:$0xff]
  %v599 = vld [vmem:[%s6 + $0x5c0] sm:$0xff]
  %v600 = vld [vmem:[%s6 + $0x5c8] sm:$0xff]
  %v601 = vld [vmem:[%s6 + $0x5d0] sm:$0xff]
  %v602 = vld [vmem:[%s6 + $0x5d8] sm:$0xff]
  %v603 = vld [vmem:[%s6 + $0x5e0] sm:$0xff]
  %v604 = vld [vmem:[%s6 + $0x5e8] sm:$0xff]
  %v605 = vld [vmem:[%s6 + $0x5f0] sm:$0xff]
  %v606 = vld [vmem:[%s6 + $0x5f8] sm:$0xff]
  %v607 = vld [vmem:[%s6 + $0x600] sm:$0xff]
  %v608 = vld [vmem:[%s6 + $0x608] sm:$0xff]
  %v609 = vld [vmem:[%s6 + $0x610] sm:$0xff]
  %v610 = vld [vmem:[%s6 + $0x618] sm:$0xff]
  %v611 = vld [vmem:[%s6 + $0x620] sm:$0xff]
  %v612 = vld [vmem:[%s6 + $0x628] sm:$0xff]
  %v613 = vld [vmem:[%s6 + $0x630] sm:$0xff]
  %v614 = vld [vmem:[%s6 + $0x638] sm:$0xff]
  %v615 = vld [vmem:[%s6 + $0x640] sm:$0xff]
  %v616 = vld [vmem:[%s6 + $0x648] sm:$0xff]
  %v617 = vld [vmem:[%s6 + $0x650] sm:$0xff]
  %v618 = vld [vmem:[%s6 + $0x658] sm:$0xff]
  %v619 = vld [vmem:[%s6 + $0x660] sm:$0xff]
  %v620 = vld [vmem:[%s6 + $0x668] sm:$0xff]
  %v621 = vld [vmem:[%s6 + $0x670] sm:$0xff]
  %v622 = vld [vmem:[%s6 + $0x678] sm:$0xff]
  %v623 = vld [vmem:[%s6 + $0x680] sm:$0xff]
  %v624 = vld [vmem:[%s6 + $0x688] sm:$0xff]
  %v625 = vld [vmem:[%s6 + $0x690] sm:$0xff]
  %v626 = vld [vmem:[%s6 + $0x698] sm:$0xff]
  %v627 = vld [vmem:[%s6 + $0x6a0] sm:$0xff]
  %v628 = vld [vmem:[%s6 + $0x6a8] sm:$0xff]
  %v629 = vld [vmem:[%s6 + $0x6b0] sm:$0xff]
  %v630 = vld [vmem:[%s6 + $0x6b8] sm:$0xff]
  %v631 = vld [vmem:[%s6 + $0x6c0] sm:$0xff]
  %v632 = vld [vmem:[%s6 + $0x6c8] sm:$0xff]
  %v633 = vld [vmem:[%s6 + $0x6d0] sm:$0xff]
  %v634 = vld [vmem:[%s6 + $0x6d8] sm:$0xff]
  %v635 = vld [vmem:[%s6 + $0x6e0] sm:$0xff]
  %v636 = vld [vmem:[%s6 + $0x6e8] sm:$0xff]
  %v637 = vld [vmem:[%s6 + $0x6f0] sm:$0xff]
  %v638 = vld [vmem:[%s6 + $0x6f8] sm:$0xff]
  %v639 = vld [vmem:[%s6 + $0x700] sm:$0xff]
  %v640 = vld [vmem:[%s6 + $0x708] sm:$0xff]
  %v641 = vld [vmem:[%s6 + $0x710] sm:$0xff]
  %v642 = vld [vmem:[%s6 + $0x718] sm:$0xff]
  %v643 = vld [vmem:[%s6 + $0x720] sm:$0xff]
  %v644 = vld [vmem:[%s6 + $0x728] sm:$0xff]
  %v645 = vld [vmem:[%s6 + $0x730] sm:$0xff]
  %v646 = vld [vmem:[%s6 + $0x738] sm:$0xff]
  %v647 = vld [vmem:[%s6 + $0x740] sm:$0xff]
  %v648 = vld [vmem:[%s6 + $0x748] sm:$0xff]
  %v649 = vld [vmem:[%s6 + $0x750] sm:$0xff]
  %v650 = vld [vmem:[%s6 + $0x758] sm:$0xff]
  %v651 = vld [vmem:[%s6 + $0x760] sm:$0xff]
  %v652 = vld [vmem:[%s6 + $0x768] sm:$0xff]
  %v653 = vld [vmem:[%s6 + $0x770] sm:$0xff]
  %v654 = vld [vmem:[%s6 + $0x778] sm:$0xff]
  %v655 = vld [vmem:[%s6 + $0x780] sm:$0xff]
  %v656 = vld [vmem:[%s6 + $0x788] sm:$0xff]
  %v657 = vld [vmem:[%s6 + $0x790] sm:$0xff]
  %v658 = vld [vmem:[%s6 + $0x798] sm:$0xff]
  %v659 = vld [vmem:[%s6 + $0x7a0] sm:$0xff]
  %v660 = vld [vmem:[%s6 + $0x7a8] sm:$0xff]
  %v661 = vld [vmem:[%s6 + $0x7b0] sm:$0xff]
  %v662 = vld [vmem:[%s6 + $0x7b8] sm:$0xff]
  %v663 = vld [vmem:[%s6 + $0x7c0] sm:$0xff]
  %v664 = vld [vmem:[%s6 + $0x7c8] sm:$0xff]
  %v665 = vld [vmem:[%s6 + $0x7d0] sm:$0xff]
  %v666 = vld [vmem:[%s6 + $0x7d8] sm:$0xff]
  %v667 = vld [vmem:[%s6 + $0x7e0] sm:$0xff]
  %v668 = vld [vmem:[%s6 + $0x7e8] sm:$0xff]
  %v669 = vld [vmem:[%s6 + $0x7f0] sm:$0xff]
  %v670 = vld [vmem:[%s6 + $0x7f8] sm:$0xff]
  %v671 = vld [vmem:[%s6 + $0x800] sm:$0xff]
  %v672 = vld [vmem:[%s6 + $0x808] sm:$0xff]
  %v673 = vld [vmem:[%s6 + $0x810] sm:$0xff]
  %v674 = vld [vmem:[%s6 + $0x818] sm:$0xff]
  %v675 = vld [vmem:[%s6 + $0x820] sm:$0xff]
  %v676 = vld [vmem:[%s6 + $0x828] sm:$0xff]
  %v677 = vld [vmem:[%s6 + $0x830] sm:$0xff]
  %v678 = vld [vmem:[%s6 + $0x838] sm:$0xff]
  %v679 = vld [vmem:[%s6 + $0x840] sm:$0xff]
  %v680 = vld [vmem:[%s6 + $0x848] sm:$0xff]
  %v681 = vld [vmem:[%s6 + $0x850] sm:$0xff]
  %v682 = vld [vmem:[%s6 + $0x858] sm:$0xff]
  %v683 = vld [vmem:[%s6 + $0x860] sm:$0xff]
  %v684 = vld [vmem:[%s6 + $0x868] sm:$0xff]
  %v685 = vld [vmem:[%s6 + $0x870] sm:$0xff]
  %v686 = vld [vmem:[%s6 + $0x878] sm:$0xff]
  %v687 = vld [vmem:[%s6 + $0x880] sm:$0xff]
  %v688 = vld [vmem:[%s6 + $0x888] sm:$0xff]
  %v689 = vld [vmem:[%s6 + $0x890] sm:$0xff]
  %v690 = vld [vmem:[%s6 + $0x898] sm:$0xff]
  %v691 = vld [vmem:[%s6 + $0x8a0] sm:$0xff]
  %v692 = vld [vmem:[%s6 + $0x8a8] sm:$0xff]
  %v693 = vld [vmem:[%s6 + $0x8b0] sm:$0xff]
  %v694 = vld [vmem:[%s6 + $0x8b8] sm:$0xff]
  %v695 = vld [vmem:[%s6 + $0x8c0] sm:$0xff]
  %v696 = vld [vmem:[%s6 + $0x8c8] sm:$0xff]
  %v697 = vld [vmem:[%s6 + $0x8d0] sm:$0xff]
  %v698 = vld [vmem:[%s6 + $0x8d8] sm:$0xff]
  %v699 = vld [vmem:[%s6 + $0x8e0] sm:$0xff]
  %v700 = vld [vmem:[%s6 + $0x8e8] sm:$0xff]
  %v701 = vld [vmem:[%s6 + $0x8f0] sm:$0xff]
  %v702 = vld [vmem:[%s6 + $0x8f8] sm:$0xff]
  %v703 = vld [vmem:[%s6 + $0x900] sm:$0xff]
  %v704 = vld [vmem:[%s6 + $0x908] sm:$0xff]
  %v705 = vld [vmem:[%s6 + $0x910] sm:$0xff]
  %v706 = vld [vmem:[%s6 + $0x918] sm:$0xff]
  %v707 = vld [vmem:[%s6 + $0x920] sm:$0xff]
  %v708 = vld [vmem:[%s6 + $0x928] sm:$0xff]
  %v709 = vld [vmem:[%s6 + $0x930] sm:$0xff]
  %v710 = vld [vmem:[%s6 + $0x938] sm:$0xff]
  %v711 = vld [vmem:[%s6 + $0x940] sm:$0xff]
  %v712 = vld [vmem:[%s6 + $0x948] sm:$0xff]
  %v713 = vld [vmem:[%s6 + $0x950] sm:$0xff]
  %v714 = vld [vmem:[%s6 + $0x958] sm:$0xff]
  %v715 = vld [vmem:[%s6 + $0x960] sm:$0xff]
  %v716 = vld [vmem:[%s6 + $0x968] sm:$0xff]
  %v717 = vld [vmem:[%s6 + $0x970] sm:$0xff]
  %v718 = vld [vmem:[%s6 + $0x978] sm:$0xff]
  %v719 = vld [vmem:[%s6 + $0x980] sm:$0xff]
  %v720 = vld [vmem:[%s6 + $0x988] sm:$0xff]
  %v721 = vld [vmem:[%s6 + $0x990] sm:$0xff]
  %v722 = vld [vmem:[%s6 + $0x998] sm:$0xff]
  %v723 = vld [vmem:[%s6 + $0x9a0] sm:$0xff]
  %v724 = vld [vmem:[%s6 + $0x9a8] sm:$0xff]
  %v725 = vld [vmem:[%s6 + $0x9b0] sm:$0xff]
  %v726 = vld [vmem:[%s6 + $0x9b8] sm:$0xff]
  %v727 = vld [vmem:[%s6 + $0x9c0] sm:$0xff]
  %v728 = vld [vmem:[%s6 + $0x9c8] sm:$0xff]
  %v729 = vld [vmem:[%s6 + $0x9d0] sm:$0xff]
  %v730 = vld [vmem:[%s6 + $0x9d8] sm:$0xff]
  %v731 = vld [vmem:[%s6 + $0x9e0] sm:$0xff]
  %v732 = vld [vmem:[%s6 + $0x9e8] sm:$0xff]
  %v733 = vld [vmem:[%s6 + $0x9f0] sm:$0xff]
  %v734 = vld [vmem:[%s6 + $0x9f8] sm:$0xff]
  %v735 = vld [vmem:[%s6 + $0xa00] sm:$0xff]
  %v736 = vld [vmem:[%s6 + $0xa08] sm:$0xff]
  %v737 = vld [vmem:[%s6 + $0xa10] sm:$0xff]
  %v738 = vld [vmem:[%s6 + $0xa18] sm:$0xff]
  %v739 = vld [vmem:[%s6 + $0xa20] sm:$0xff]
  %v740 = vld [vmem:[%s6 + $0xa28] sm:$0xff]
  %v741 = vld [vmem:[%s6 + $0xa30] sm:$0xff]
  %v742 = vld [vmem:[%s6 + $0xa38] sm:$0xff]
  %v743 = vld [vmem:[%s6 + $0xa40] sm:$0xff]
  %v744 = vld [vmem:[%s6 + $0xa48] sm:$0xff]
  %v745 = vld [vmem:[%s6 + $0xa50] sm:$0xff]
  %v746 = vld [vmem:[%s6 + $0xa58] sm:$0xff]
  %v747 = vld [vmem:[%s6 + $0xa60] sm:$0xff]
  %v748 = vld [vmem:[%s6 + $0xa68] sm:$0xff]
  %v749 = vld [vmem:[%s6 + $0xa70] sm:$0xff]
  %v750 = vld [vmem:[%s6 + $0xa78] sm:$0xff]
  %v751 = vld [vmem:[%s6 + $0xa80] sm:$0xff]
  %v752 = vld [vmem:[%s6 + $0xa88] sm:$0xff]
  %v753 = vld [vmem:[%s6 + $0xa90] sm:$0xff]
  %v754 = vld [vmem:[%s6 + $0xa98] sm:$0xff]
  %v755 = vld [vmem:[%s6 + $0xaa0] sm:$0xff]
  %v756 = vld [vmem:[%s6 + $0xaa8] sm:$0xff]
  %v757 = vld [vmem:[%s6 + $0xab0] sm:$0xff]
  %v758 = vld [vmem:[%s6 + $0xab8] sm:$0xff]
  %v759 = vld [vmem:[%s6 + $0xac0] sm:$0xff]
  %v760 = vld [vmem:[%s6 + $0xac8] sm:$0xff]
  %v761 = vld [vmem:[%s6 + $0xad0] sm:$0xff]
  %v762 = vld [vmem:[%s6 + $0xad8] sm:$0xff]
  %v763 = vld [vmem:[%s6 + $0xae0] sm:$0xff]
  %v764 = vld [vmem:[%s6 + $0xae8] sm:$0xff]
  %v765 = vld [vmem:[%s6 + $0xaf0] sm:$0xff]
  %v766 = vld [vmem:[%s6 + $0xaf8] sm:$0xff]
  %v767 = vld [vmem:[%s6 + $0xb00] sm:$0xff]
  %v768 = vld [vmem:[%s6 + $0xb08] sm:$0xff]
  %v769 = vld [vmem:[%s6 + $0xb10] sm:$0xff]
  %v770 = vld [vmem:[%s6 + $0xb18] sm:$0xff]
  %v771 = vld [vmem:[%s6 + $0xb20] sm:$0xff]
  %v772 = vld [vmem:[%s6 + $0xb28] sm:$0xff]
  %v773 = vld [vmem:[%s6 + $0xb30] sm:$0xff]
  %v774 = vld [vmem:[%s6 + $0xb38] sm:$0xff]
  %v775 = vld [vmem:[%s6 + $0xb40] sm:$0xff]
  %v776 = vld [vmem:[%s6 + $0xb48] sm:$0xff]
  %v777 = vld [vmem:[%s6 + $0xb50] sm:$0xff]
  %v778 = vld [vmem:[%s6 + $0xb58] sm:$0xff]
  %v779 = vld [vmem:[%s6 + $0xb60] sm:$0xff]
  %v780 = vld [vmem:[%s6 + $0xb68] sm:$0xff]
  %v781 = vld [vmem:[%s6 + $0xb70] sm:$0xff]
  %v782 = vld [vmem:[%s6 + $0xb78] sm:$0xff]
  %v783 = vld [vmem:[%s6 + $0xb80] sm:$0xff]
  %v784 = vld [vmem:[%s6 + $0xb88] sm:$0xff]
  %v785 = vld [vmem:[%s6 + $0xb90] sm:$0xff]
  %v786 = vld [vmem:[%s6 + $0xb98] sm:$0xff]
  %v787 = vld [vmem:[%s6 + $0xba0] sm:$0xff]
  %v788 = vld [vmem:[%s6 + $0xba8] sm:$0xff]
  %v789 = vld [vmem:[%s6 + $0xbb0] sm:$0xff]
  %v790 = vld [vmem:[%s6 + $0xbb8] sm:$0xff]
  %v791 = vld [vmem:[%s6 + $0xbc0] sm:$0xff]
  %v792 = vld [vmem:[%s6 + $0xbc8] sm:$0xff]
  %v793 = vld [vmem:[%s6 + $0xbd0] sm:$0xff]
  %v794 = vld [vmem:[%s6 + $0xbd8] sm:$0xff]
  %v795 = vld [vmem:[%s6 + $0xbe0] sm:$0xff]
  %v796 = vld [vmem:[%s6 + $0xbe8] sm:$0xff]
  %v797 = vld [vmem:[%s6 + $0xbf0] sm:$0xff]
  %v798 = vld [vmem:[%s6 + $0xbf8] sm:$0xff]
  %vm799 = vcmask 523264
  %v801 = vsel %vm799, %v414, 0
  %803 = vmatprep.subr.mxu0 0.0
  %804 = vmatpush1.msra.mxu0 0.0
  %805 = vmatprep.subr.mxu0 0.0
  %806 = vmatpush1.msra.mxu0 0.0
  %807 = vmatprep.subr.mxu0 0.0
  %808 = vmatpush1.msra.mxu0 0.0
  %809 = vmatprep.subr.mxu0 0.0
  %810 = vmatpush1.msra.mxu0 0.0
  %811 = vmatprep.subr.mxu0 0.0
  %812 = vmatpush1.msra.mxu0 0.0
  %813 = vmatprep.subr.mxu0 0.0
  %814 = vmatpush1.msra.mxu0 0.0
  %815 = vmatprep.subr.mxu0 0.0
  %816 = vmatpush1.msra.mxu0 0.0
  %817 = vmatprep.subr.mxu0 0.0
  %818 = vmatpush1.msra.mxu0 0.0
  %819 = vmatprep.subr.mxu0 %v784
  %820 = vmatpush1.msra.mxu0 %v783
  %821 = vmatprep.subr.mxu0 %v768
  %822 = vmatpush1.msra.mxu0 %v767
  %823 = vmatprep.subr.mxu0 %v752
  %824 = vmatpush1.msra.mxu0 %v751
  %825 = vmatprep.subr.mxu0 %v736
  %826 = vmatpush1.msra.mxu0 %v735
  %827 = vmatprep.subr.mxu0 %v720
  %828 = vmatpush1.msra.mxu0 %v719
  %829 = vmatprep.subr.mxu0 %v704
  %830 = vmatpush1.msra.mxu0 %v703
  %831 = vmatprep.subr.mxu0 %v688
  %832 = vmatpush1.msra.mxu0 %v687
  %833 = vmatprep.subr.mxu0 %v672
  %834 = vmatpush1.msra.mxu0 %v671
  %835 = vmatprep.subr.mxu0 0.0
  %836 = vmatpush2.msra.mxu0 0.0
  %837 = vmatprep.subr.mxu0 0.0
  %838 = vmatpush2.msra.mxu0 0.0
  %839 = vmatprep.subr.mxu0 0.0
  %840 = vmatpush2.msra.mxu0 0.0
  %841 = vmatprep.subr.mxu0 0.0
  %842 = vmatpush2.msra.mxu0 0.0
  %843 = vmatprep.subr.mxu0 0.0
  %844 = vmatpush2.msra.mxu0 0.0
  %845 = vmatprep.subr.mxu0 0.0
  %846 = vmatpush2.msra.mxu0 0.0
  %847 = vmatprep.subr.mxu0 0.0
  %848 = vmatpush2.msra.mxu0 0.0
  %849 = vmatprep.subr.mxu0 0.0
  %850 = vmatpush2.msra.mxu0 0.0
  %851 = vmatprep.subr.mxu0 0.0
  %852 = vmatpush2.msra.mxu0 0.0
  %853 = vmatprep.subr.mxu0 0.0
  %854 = vmatpush2.msra.mxu0 0.0
  %855 = vmatprep.subr.mxu0 0.0
  %856 = vmatpush2.msra.mxu0 0.0
  %857 = vmatprep.subr.mxu0 0.0
  %858 = vmatpush2.msra.mxu0 0.0
  %859 = vmatprep.subr.mxu0 0.0
  %860 = vmatpush2.msra.mxu0 0.0
  %861 = vmatprep.subr.mxu0 0.0
  %862 = vmatpush2.msra.mxu0 0.0
  %863 = vmatprep.subr.mxu0 0.0
  %864 = vmatpush2.msra.mxu0 0.0
  %865 = vmatprep.subr.mxu0 0.0
  %866 = vmatpush2.msra.mxu0 0.0
  %867 = vmatprep.mubr.f32.mxu0 0.0
  %868 = vmatmul.mubr.f32.gmra.mxu0 %v801
  %v869 = vpop.f32.mrf.mxu0
  %v870 = vadd.f32 0.0, %v869
  %v871 = vpop.f32.mrf.mxu0
  %v872 = vadd.f32 0.0, %v871
  %873 = vdwg.mxu0
  %874 = vmatprep.subr.mxu0 0.0
  %875 = vmatpush1.msra.mxu0 0.0
  %876 = vmatprep.subr.mxu0 0.0
  %877 = vmatpush1.msra.mxu0 0.0
  %878 = vmatprep.subr.mxu0 0.0
  %879 = vmatpush1.msra.mxu0 0.0
  %880 = vmatprep.subr.mxu0 0.0
  %881 = vmatpush1.msra.mxu0 0.0
  %882 = vmatprep.subr.mxu0 0.0
  %883 = vmatpush1.msra.mxu0 0.0
  %884 = vmatprep.subr.mxu0 0.0
  %885 = vmatpush1.msra.mxu0 0.0
  %886 = vmatprep.subr.mxu0 0.0
  %887 = vmatpush1.msra.mxu0 0.0
  %888 = vmatprep.subr.mxu0 0.0
  %889 = vmatpush1.msra.mxu0 0.0
  %890 = vmatprep.subr.mxu0 %v786
  %891 = vmatpush1.msra.mxu0 %v785
  %892 = vmatprep.subr.mxu0 %v770
  %893 = vmatpush1.msra.mxu0 %v769
  %894 = vmatprep.subr.mxu0 %v754
  %895 = vmatpush1.msra.mxu0 %v753
  %896 = vmatprep.subr.mxu0 %v738
  %897 = vmatpush1.msra.mxu0 %v737
  %898 = vmatprep.subr.mxu0 %v722
  %899 = vmatpush1.msra.mxu0 %v721
  %900 = vmatprep.subr.mxu0 %v706
  %901 = vmatpush1.msra.mxu0 %v705
  %902 = vmatprep.subr.mxu0 %v690
  %903 = vmatpush1.msra.mxu0 %v689
  %904 = vmatprep.subr.mxu0 %v674
  %905 = vmatpush1.msra.mxu0 %v673
  %906 = vmatprep.subr.mxu0 0.0
  %907 = vmatpush2.msra.mxu0 0.0
  %908 = vmatprep.subr.mxu0 0.0
  %909 = vmatpush2.msra.mxu0 0.0
  %910 = vmatprep.subr.mxu0 0.0
  %911 = vmatpush2.msra.mxu0 0.0
  %912 = vmatprep.subr.mxu0 0.0
  %913 = vmatpush2.msra.mxu0 0.0
  %914 = vmatprep.subr.mxu0 0.0
  %915 = vmatpush2.msra.mxu0 0.0
  %916 = vmatprep.subr.mxu0 0.0
  %917 = vmatpush2.msra.mxu0 0.0
  %918 = vmatprep.subr.mxu0 0.0
  %919 = vmatpush2.msra.mxu0 0.0
  %920 = vmatprep.subr.mxu0 0.0
  %921 = vmatpush2.msra.mxu0 0.0
  %922 = vmatprep.subr.mxu0 0.0
  %923 = vmatpush2.msra.mxu0 0.0
  %924 = vmatprep.subr.mxu0 0.0
  %925 = vmatpush2.msra.mxu0 0.0
  %926 = vmatprep.subr.mxu0 0.0
  %927 = vmatpush2.msra.mxu0 0.0
  %928 = vmatprep.subr.mxu0 0.0
  %929 = vmatpush2.msra.mxu0 0.0
  %930 = vmatprep.subr.mxu0 0.0
  %931 = vmatpush2.msra.mxu0 0.0
  %932 = vmatprep.subr.mxu0 0.0
  %933 = vmatpush2.msra.mxu0 0.0
  %934 = vmatprep.subr.mxu0 0.0
  %935 = vmatpush2.msra.mxu0 0.0
  %936 = vmatprep.subr.mxu0 0.0
  %937 = vmatpush2.msra.mxu0 0.0
  %938 = vmatprep.mubr.f32.mxu0 0.0
  %939 = vmatmul.mubr.f32.gmra.mxu0 %v801
  %v940 = vpop.f32.mrf.mxu0
  %v941 = vadd.f32 0.0, %v940
  %v942 = vpop.f32.mrf.mxu0
  %v943 = vadd.f32 0.0, %v942
  %944 = vdwg.mxu0
  %945 = vmatprep.subr.mxu0 0.0
  %946 = vmatpush1.msra.mxu0 0.0
  %947 = vmatprep.subr.mxu0 0.0
  %948 = vmatpush1.msra.mxu0 0.0
  %949 = vmatprep.subr.mxu0 0.0
  %950 = vmatpush1.msra.mxu0 0.0
  %951 = vmatprep.subr.mxu0 0.0
  %952 = vmatpush1.msra.mxu0 0.0
  %953 = vmatprep.subr.mxu0 0.0
  %954 = vmatpush1.msra.mxu0 0.0
  %955 = vmatprep.subr.mxu0 0.0
  %956 = vmatpush1.msra.mxu0 0.0
  %957 = vmatprep.subr.mxu0 0.0
  %958 = vmatpush1.msra.mxu0 0.0
  %959 = vmatprep.subr.mxu0 0.0
  %960 = vmatpush1.msra.mxu0 0.0
  %961 = vmatprep.subr.mxu0 %v788
  %962 = vmatpush1.msra.mxu0 %v787
  %963 = vmatprep.subr.mxu0 %v772
  %964 = vmatpush1.msra.mxu0 %v771
  %965 = vmatprep.subr.mxu0 %v756
  %966 = vmatpush1.msra.mxu0 %v755
  %967 = vmatprep.subr.mxu0 %v740
  %968 = vmatpush1.msra.mxu0 %v739
  %969 = vmatprep.subr.mxu0 %v724
  %970 = vmatpush1.msra.mxu0 %v723
  %971 = vmatprep.subr.mxu0 %v708
  %972 = vmatpush1.msra.mxu0 %v707
  %973 = vmatprep.subr.mxu0 %v692
  %974 = vmatpush1.msra.mxu0 %v691
  %975 = vmatprep.subr.mxu0 %v676
  %976 = vmatpush1.msra.mxu0 %v675
  %977 = vmatprep.subr.mxu0 0.0
  %978 = vmatpush2.msra.mxu0 0.0
  %979 = vmatprep.subr.mxu0 0.0
  %980 = vmatpush2.msra.mxu0 0.0
  %981 = vmatprep.subr.mxu0 0.0
  %982 = vmatpush2.msra.mxu0 0.0
  %983 = vmatprep.subr.mxu0 0.0
  %984 = vmatpush2.msra.mxu0 0.0
  %985 = vmatprep.subr.mxu0 0.0
  %986 = vmatpush2.msra.mxu0 0.0
  %987 = vmatprep.subr.mxu0 0.0
  %988 = vmatpush2.msra.mxu0 0.0
  %989 = vmatprep.subr.mxu0 0.0
  %990 = vmatpush2.msra.mxu0 0.0
  %991 = vmatprep.subr.mxu0 0.0
  %992 = vmatpush2.msra.mxu0 0.0
  %993 = vmatprep.subr.mxu0 0.0
  %994 = vmatpush2.msra.mxu0 0.0
  %995 = vmatprep.subr.mxu0 0.0
  %996 = vmatpush2.msra.mxu0 0.0
  %997 = vmatprep.subr.mxu0 0.0
  %998 = vmatpush2.msra.mxu0 0.0
  %999 = vmatprep.subr.mxu0 0.0
  %1000 = vmatpush2.msra.mxu0 0.0
  %1001 = vmatprep.subr.mxu0 0.0
  %1002 = vmatpush2.msra.mxu0 0.0
  %1003 = vmatprep.subr.mxu0 0.0
  %1004 = vmatpush2.msra.mxu0 0.0
  %1005 = vmatprep.subr.mxu0 0.0
  %1006 = vmatpush2.msra.mxu0 0.0
  %1007 = vmatprep.subr.mxu0 0.0
  %1008 = vmatpush2.msra.mxu0 0.0
  %1009 = vmatprep.mubr.f32.mxu0 0.0
  %1010 = vmatmul.mubr.f32.gmra.mxu0 %v801
  %v1011 = vpop.f32.mrf.mxu0
  %v1012 = vadd.f32 0.0, %v1011
  %v1013 = vpop.f32.mrf.mxu0
  %v1014 = vadd.f32 0.0, %v1013
  %1015 = vdwg.mxu0
  %1016 = vmatprep.subr.mxu0 0.0
  %1017 = vmatpush1.msra.mxu0 0.0
  %1018 = vmatprep.subr.mxu0 0.0
  %1019 = vmatpush1.msra.mxu0 0.0
  %1020 = vmatprep.subr.mxu0 0.0
  %1021 = vmatpush1.msra.mxu0 0.0
  %1022 = vmatprep.subr.mxu0 0.0
  %1023 = vmatpush1.msra.mxu0 0.0
  %1024 = vmatprep.subr.mxu0 0.0
  %1025 = vmatpush1.msra.mxu0 0.0
  %1026 = vmatprep.subr.mxu0 0.0
  %1027 = vmatpush1.msra.mxu0 0.0
  %1028 = vmatprep.subr.mxu0 0.0
  %1029 = vmatpush1.msra.mxu0 0.0
  %1030 = vmatprep.subr.mxu0 0.0
  %1031 = vmatpush1.msra.mxu0 0.0
  %1032 = vmatprep.subr.mxu0 %v790
  %1033 = vmatpush1.msra.mxu0 %v789
  %1034 = vmatprep.subr.mxu0 %v774
  %1035 = vmatpush1.msra.mxu0 %v773
  %1036 = vmatprep.subr.mxu0 %v758
  %1037 = vmatpush1.msra.mxu0 %v757
  %1038 = vmatprep.subr.mxu0 %v742
  %1039 = vmatpush1.msra.mxu0 %v741
  %1040 = vmatprep.subr.mxu0 %v726
  %1041 = vmatpush1.msra.mxu0 %v725
  %1042 = vmatprep.subr.mxu0 %v710
  %1043 = vmatpush1.msra.mxu0 %v709
  %1044 = vmatprep.subr.mxu0 %v694
  %1045 = vmatpush1.msra.mxu0 %v693
  %1046 = vmatprep.subr.mxu0 %v678
  %1047 = vmatpush1.msra.mxu0 %v677
  %1048 = vmatprep.subr.mxu0 0.0
  %1049 = vmatpush2.msra.mxu0 0.0
  %1050 = vmatprep.subr.mxu0 0.0
  %1051 = vmatpush2.msra.mxu0 0.0
  %1052 = vmatprep.subr.mxu0 0.0
  %1053 = vmatpush2.msra.mxu0 0.0
  %1054 = vmatprep.subr.mxu0 0.0
  %1055 = vmatpush2.msra.mxu0 0.0
  %1056 = vmatprep.subr.mxu0 0.0
  %1057 = vmatpush2.msra.mxu0 0.0
  %1058 = vmatprep.subr.mxu0 0.0
  %1059 = vmatpush2.msra.mxu0 0.0
  %1060 = vmatprep.subr.mxu0 0.0
  %1061 = vmatpush2.msra.mxu0 0.0
  %1062 = vmatprep.subr.mxu0 0.0
  %1063 = vmatpush2.msra.mxu0 0.0
  %1064 = vmatprep.subr.mxu0 0.0
  %1065 = vmatpush2.msra.mxu0 0.0
  %1066 = vmatprep.subr.mxu0 0.0
  %1067 = vmatpush2.msra.mxu0 0.0
  %1068 = vmatprep.subr.mxu0 0.0
  %1069 = vmatpush2.msra.mxu0 0.0
  %1070 = vmatprep.subr.mxu0 0.0
  %1071 = vmatpush2.msra.mxu0 0.0
  %1072 = vmatprep.subr.mxu0 0.0
  %1073 = vmatpush2.msra.mxu0 0.0
  %1074 = vmatprep.subr.mxu0 0.0
  %1075 = vmatpush2.msra.mxu0 0.0
  %1076 = vmatprep.subr.mxu0 0.0
  %1077 = vmatpush2.msra.mxu0 0.0
  %1078 = vmatprep.subr.mxu0 0.0
  %1079 = vmatpush2.msra.mxu0 0.0
  %1080 = vmatprep.mubr.f32.mxu0 0.0
  %1081 = vmatmul.mubr.f32.gmra.mxu0 %v801
  %v1082 = vpop.f32.mrf.mxu0
  %v1083 = vadd.f32 0.0, %v1082
  %v1084 = vpop.f32.mrf.mxu0
  %v1085 = vadd.f32 0.0, %v1084
  %1086 = vdwg.mxu0
  %1087 = vmatprep.subr.mxu0 0.0
  %1088 = vmatpush1.msra.mxu0 0.0
  %1089 = vmatprep.subr.mxu0 0.0
  %1090 = vmatpush1.msra.mxu0 0.0
  %1091 = vmatprep.subr.mxu0 0.0
  %1092 = vmatpush1.msra.mxu0 0.0
  %1093 = vmatprep.subr.mxu0 0.0
  %1094 = vmatpush1.msra.mxu0 0.0
  %1095 = vmatprep.subr.mxu0 0.0
  %1096 = vmatpush1.msra.mxu0 0.0
  %1097 = vmatprep.subr.mxu0 0.0
  %1098 = vmatpush1.msra.mxu0 0.0
  %1099 = vmatprep.subr.mxu0 0.0
  %1100 = vmatpush1.msra.mxu0 0.0
  %1101 = vmatprep.subr.mxu0 0.0
  %1102 = vmatpush1.msra.mxu0 0.0
  %1103 = vmatprep.subr.mxu0 %v792
  %1104 = vmatpush1.msra.mxu0 %v791
  %1105 = vmatprep.subr.mxu0 %v776
  %1106 = vmatpush1.msra.mxu0 %v775
  %1107 = vmatprep.subr.mxu0 %v760
  %1108 = vmatpush1.msra.mxu0 %v759
  %1109 = vmatprep.subr.mxu0 %v744
  %1110 = vmatpush1.msra.mxu0 %v743
  %1111 = vmatprep.subr.mxu0 %v728
  %1112 = vmatpush1.msra.mxu0 %v727
  %1113 = vmatprep.subr.mxu0 %v712
  %1114 = vmatpush1.msra.mxu0 %v711
  %1115 = vmatprep.subr.mxu0 %v696
  %1116 = vmatpush1.msra.mxu0 %v695
  %1117 = vmatprep.subr.mxu0 %v680
  %1118 = vmatpush1.msra.mxu0 %v679
  %1119 = vmatprep.subr.mxu0 0.0
  %1120 = vmatpush2.msra.mxu0 0.0
  %1121 = vmatprep.subr.mxu0 0.0
  %1122 = vmatpush2.msra.mxu0 0.0
  %1123 = vmatprep.subr.mxu0 0.0
  %1124 = vmatpush2.msra.mxu0 0.0
  %1125 = vmatprep.subr.mxu0 0.0
  %1126 = vmatpush2.msra.mxu0 0.0
  %1127 = vmatprep.subr.mxu0 0.0
  %1128 = vmatpush2.msra.mxu0 0.0
  %1129 = vmatprep.subr.mxu0 0.0
  %1130 = vmatpush2.msra.mxu0 0.0
  %1131 = vmatprep.subr.mxu0 0.0
  %1132 = vmatpush2.msra.mxu0 0.0
  %1133 = vmatprep.subr.mxu0 0.0
  %1134 = vmatpush2.msra.mxu0 0.0
  %1135 = vmatprep.subr.mxu0 0.0
  %1136 = vmatpush2.msra.mxu0 0.0
  %1137 = vmatprep.subr.mxu0 0.0
  %1138 = vmatpush2.msra.mxu0 0.0
  %1139 = vmatprep.subr.mxu0 0.0
  %1140 = vmatpush2.msra.mxu0 0.0
  %1141 = vmatprep.subr.mxu0 0.0
  %1142 = vmatpush2.msra.mxu0 0.0
  %1143 = vmatprep.subr.mxu0 0.0
  %1144 = vmatpush2.msra.mxu0 0.0
  %1145 = vmatprep.subr.mxu0 0.0
  %1146 = vmatpush2.msra.mxu0 0.0
  %1147 = vmatprep.subr.mxu0 0.0
  %1148 = vmatpush2.msra.mxu0 0.0
  %1149 = vmatprep.subr.mxu0 0.0
  %1150 = vmatpush2.msra.mxu0 0.0
  %1151 = vmatprep.mubr.f32.mxu0 0.0
  %1152 = vmatmul.mubr.f32.gmra.mxu0 %v801
  %v1153 = vpop.f32.mrf.mxu0
  %v1154 = vadd.f32 0.0, %v1153
  %v1155 = vpop.f32.mrf.mxu0
  %v1156 = vadd.f32 0.0, %v1155
  %1157 = vdwg.mxu0
  %1158 = vmatprep.subr.mxu0 0.0
  %1159 = vmatpush1.msra.mxu0 0.0
  %1160 = vmatprep.subr.mxu0 0.0
  %1161 = vmatpush1.msra.mxu0 0.0
  %1162 = vmatprep.subr.mxu0 0.0
  %1163 = vmatpush1.msra.mxu0 0.0
  %1164 = vmatprep.subr.mxu0 0.0
  %1165 = vmatpush1.msra.mxu0 0.0
  %1166 = vmatprep.subr.mxu0 0.0
  %1167 = vmatpush1.msra.mxu0 0.0
  %1168 = vmatprep.subr.mxu0 0.0
  %1169 = vmatpush1.msra.mxu0 0.0
  %1170 = vmatprep.subr.mxu0 0.0
  %1171 = vmatpush1.msra.mxu0 0.0
  %1172 = vmatprep.subr.mxu0 0.0
  %1173 = vmatpush1.msra.mxu0 0.0
  %1174 = vmatprep.subr.mxu0 %v794
  %1175 = vmatpush1.msra.mxu0 %v793
  %1176 = vmatprep.subr.mxu0 %v778
  %1177 = vmatpush1.msra.mxu0 %v777
  %1178 = vmatprep.subr.mxu0 %v762
  %1179 = vmatpush1.msra.mxu0 %v761
  %1180 = vmatprep.subr.mxu0 %v746
  %1181 = vmatpush1.msra.mxu0 %v745
  %1182 = vmatprep.subr.mxu0 %v730
  %1183 = vmatpush1.msra.mxu0 %v729
  %1184 = vmatprep.subr.mxu0 %v714
  %1185 = vmatpush1.msra.mxu0 %v713
  %1186 = vmatprep.subr.mxu0 %v698
  %1187 = vmatpush1.msra.mxu0 %v697
  %1188 = vmatprep.subr.mxu0 %v682
  %1189 = vmatpush1.msra.mxu0 %v681
  %1190 = vmatprep.subr.mxu0 0.0
  %1191 = vmatpush2.msra.mxu0 0.0
  %1192 = vmatprep.subr.mxu0 0.0
  %1193 = vmatpush2.msra.mxu0 0.0
  %1194 = vmatprep.subr.mxu0 0.0
  %1195 = vmatpush2.msra.mxu0 0.0
  %1196 = vmatprep.subr.mxu0 0.0
  %1197 = vmatpush2.msra.mxu0 0.0
  %1198 = vmatprep.subr.mxu0 0.0
  %1199 = vmatpush2.msra.mxu0 0.0
  %1200 = vmatprep.subr.mxu0 0.0
  %1201 = vmatpush2.msra.mxu0 0.0
  %1202 = vmatprep.subr.mxu0 0.0
  %1203 = vmatpush2.msra.mxu0 0.0
  %1204 = vmatprep.subr.mxu0 0.0
  %1205 = vmatpush2.msra.mxu0 0.0
  %1206 = vmatprep.subr.mxu0 0.0
  %1207 = vmatpush2.msra.mxu0 0.0
  %1208 = vmatprep.subr.mxu0 0.0
  %1209 = vmatpush2.msra.mxu0 0.0
  %1210 = vmatprep.subr.mxu0 0.0
  %1211 = vmatpush2.msra.mxu0 0.0
  %1212 = vmatprep.subr.mxu0 0.0
  %1213 = vmatpush2.msra.mxu0 0.0
  %1214 = vmatprep.subr.mxu0 0.0
  %1215 = vmatpush2.msra.mxu0 0.0
  %1216 = vmatprep.subr.mxu0 0.0
  %1217 = vmatpush2.msra.mxu0 0.0
  %1218 = vmatprep.subr.mxu0 0.0
  %1219 = vmatpush2.msra.mxu0 0.0
  %1220 = vmatprep.subr.mxu0 0.0
  %1221 = vmatpush2.msra.mxu0 0.0
  %1222 = vmatprep.mubr.f32.mxu0 0.0
  %1223 = vmatmul.mubr.f32.gmra.mxu0 %v801
  %v1224 = vpop.f32.mrf.mxu0
  %v1225 = vadd.f32 0.0, %v1224
  %v1226 = vpop.f32.mrf.mxu0
  %v1227 = vadd.f32 0.0, %v1226
  %1228 = vdwg.mxu0
  %1229 = vmatprep.subr.mxu0 0.0
  %1230 = vmatpush1.msra.mxu0 0.0
  %1231 = vmatprep.subr.mxu0 0.0
  %1232 = vmatpush1.msra.mxu0 0.0
  %1233 = vmatprep.subr.mxu0 0.0
  %1234 = vmatpush1.msra.mxu0 0.0
  %1235 = vmatprep.subr.mxu0 0.0
  %1236 = vmatpush1.msra.mxu0 0.0
  %1237 = vmatprep.subr.mxu0 0.0
  %1238 = vmatpush1.msra.mxu0 0.0
  %1239 = vmatprep.subr.mxu0 0.0
  %1240 = vmatpush1.msra.mxu0 0.0
  %1241 = vmatprep.subr.mxu0 0.0
  %1242 = vmatpush1.msra.mxu0 0.0
  %1243 = vmatprep.subr.mxu0 0.0
  %1244 = vmatpush1.msra.mxu0 0.0
  %1245 = vmatprep.subr.mxu0 %v796
  %1246 = vmatpush1.msra.mxu0 %v795
  %1247 = vmatprep.subr.mxu0 %v780
  %1248 = vmatpush1.msra.mxu0 %v779
  %1249 = vmatprep.subr.mxu0 %v764
  %1250 = vmatpush1.msra.mxu0 %v763
  %1251 = vmatprep.subr.mxu0 %v748
  %1252 = vmatpush1.msra.mxu0 %v747
  %1253 = vmatprep.subr.mxu0 %v732
  %1254 = vmatpush1.msra.mxu0 %v731
  %1255 = vmatprep.subr.mxu0 %v716
  %1256 = vmatpush1.msra.mxu0 %v715
  %1257 = vmatprep.subr.mxu0 %v700
  %1258 = vmatpush1.msra.mxu0 %v699
  %1259 = vmatprep.subr.mxu0 %v684
  %1260 = vmatpush1.msra.mxu0 %v683
  %1261 = vmatprep.subr.mxu0 0.0
  %1262 = vmatpush2.msra.mxu0 0.0
  %1263 = vmatprep.subr.mxu0 0.0
  %1264 = vmatpush2.msra.mxu0 0.0
  %1265 = vmatprep.subr.mxu0 0.0
  %1266 = vmatpush2.msra.mxu0 0.0
  %1267 = vmatprep.subr.mxu0 0.0
  %1268 = vmatpush2.msra.mxu0 0.0
  %1269 = vmatprep.subr.mxu0 0.0
  %1270 = vmatpush2.msra.mxu0 0.0
  %1271 = vmatprep.subr.mxu0 0.0
  %1272 = vmatpush2.msra.mxu0 0.0
  %1273 = vmatprep.subr.mxu0 0.0
  %1274 = vmatpush2.msra.mxu0 0.0
  %1275 = vmatprep.subr.mxu0 0.0
  %1276 = vmatpush2.msra.mxu0 0.0
  %1277 = vmatprep.subr.mxu0 0.0
  %1278 = vmatpush2.msra.mxu0 0.0
  %1279 = vmatprep.subr.mxu0 0.0
  %1280 = vmatpush2.msra.mxu0 0.0
  %1281 = vmatprep.subr.mxu0 0.0
  %1282 = vmatpush2.msra.mxu0 0.0
  %1283 = vmatprep.subr.mxu0 0.0
  %1284 = vmatpush2.msra.mxu0 0.0
  %1285 = vmatprep.subr.mxu0 0.0
  %1286 = vmatpush2.msra.mxu0 0.0
  %1287 = vmatprep.subr.mxu0 0.0
  %1288 = vmatpush2.msra.mxu0 0.0
  %1289 = vmatprep.subr.mxu0 0.0
  %1290 = vmatpush2.msra.mxu0 0.0
  %1291 = vmatprep.subr.mxu0 0.0
  %1292 = vmatpush2.msra.mxu0 0.0
  %1293 = vmatprep.mubr.f32.mxu0 0.0
  %1294 = vmatmul.mubr.f32.gmra.mxu0 %v801
  %v1295 = vpop.f32.mrf.mxu0
  %v1296 = vadd.f32 0.0, %v1295
  %v1297 = vpop.f32.mrf.mxu0
  %v1298 = vadd.f32 0.0, %v1297
  %1299 = vdwg.mxu0
  %1300 = vmatprep.subr.mxu0 0.0
  %1301 = vmatpush1.msra.mxu0 0.0
  %1302 = vmatprep.subr.mxu0 0.0
  %1303 = vmatpush1.msra.mxu0 0.0
  %1304 = vmatprep.subr.mxu0 0.0
  %1305 = vmatpush1.msra.mxu0 0.0
  %1306 = vmatprep.subr.mxu0 0.0
  %1307 = vmatpush1.msra.mxu0 0.0
  %1308 = vmatprep.subr.mxu0 0.0
  %1309 = vmatpush1.msra.mxu0 0.0
  %1310 = vmatprep.subr.mxu0 0.0
  %1311 = vmatpush1.msra.mxu0 0.0
  %1312 = vmatprep.subr.mxu0 0.0
  %1313 = vmatpush1.msra.mxu0 0.0
  %1314 = vmatprep.subr.mxu0 0.0
  %1315 = vmatpush1.msra.mxu0 0.0
  %1316 = vmatprep.subr.mxu0 %v798
  %1317 = vmatpush1.msra.mxu0 %v797
  %1318 = vmatprep.subr.mxu0 %v782
  %1319 = vmatpush1.msra.mxu0 %v781
  %1320 = vmatprep.subr.mxu0 %v766
  %1321 = vmatpush1.msra.mxu0 %v765
  %1322 = vmatprep.subr.mxu0 %v750
  %1323 = vmatpush1.msra.mxu0 %v749
  %1324 = vmatprep.subr.mxu0 %v734
  %1325 = vmatpush1.msra.mxu0 %v733
  %1326 = vmatprep.subr.mxu0 %v718
  %1327 = vmatpush1.msra.mxu0 %v717
  %1328 = vmatprep.subr.mxu0 %v702
  %1329 = vmatpush1.msra.mxu0 %v701
  %1330 = vmatprep.subr.mxu0 %v686
  %1331 = vmatpush1.msra.mxu0 %v685
  %1332 = vmatprep.subr.mxu0 0.0
  %1333 = vmatpush2.msra.mxu0 0.0
  %1334 = vmatprep.subr.mxu0 0.0
  %1335 = vmatpush2.msra.mxu0 0.0
  %1336 = vmatprep.subr.mxu0 0.0
  %1337 = vmatpush2.msra.mxu0 0.0
  %1338 = vmatprep.subr.mxu0 0.0
  %1339 = vmatpush2.msra.mxu0 0.0
  %1340 = vmatprep.subr.mxu0 0.0
  %1341 = vmatpush2.msra.mxu0 0.0
  %1342 = vmatprep.subr.mxu0 0.0
  %1343 = vmatpush2.msra.mxu0 0.0
  %1344 = vmatprep.subr.mxu0 0.0
  %1345 = vmatpush2.msra.mxu0 0.0
  %1346 = vmatprep.subr.mxu0 0.0
  %1347 = vmatpush2.msra.mxu0 0.0
  %1348 = vmatprep.subr.mxu0 0.0
  %1349 = vmatpush2.msra.mxu0 0.0
  %1350 = vmatprep.subr.mxu0 0.0
  %1351 = vmatpush2.msra.mxu0 0.0
  %1352 = vmatprep.subr.mxu0 0.0
  %1353 = vmatpush2.msra.mxu0 0.0
  %1354 = vmatprep.subr.mxu0 0.0
  %1355 = vmatpush2.msra.mxu0 0.0
  %1356 = vmatprep.subr.mxu0 0.0
  %1357 = vmatpush2.msra.mxu0 0.0
  %1358 = vmatprep.subr.mxu0 0.0
  %1359 = vmatpush2.msra.mxu0 0.0
  %1360 = vmatprep.subr.mxu0 0.0
  %1361 = vmatpush2.msra.mxu0 0.0
  %1362 = vmatprep.subr.mxu0 0.0
  %1363 = vmatpush2.msra.mxu0 0.0
  %1364 = vmatprep.mubr.f32.mxu0 0.0
  %1365 = vmatmul.mubr.f32.gmra.mxu0 %v801
  %v1366 = vpop.f32.mrf.mxu0
  %v1367 = vadd.f32 0.0, %v1366
  %v1368 = vpop.f32.mrf.mxu0
  %v1369 = vadd.f32 0.0, %v1368
  %1370 = vdwg.mxu0
  %1371 = vmatprep.subr.mxu0 %v656
  %1372 = vmatpush1.msra.mxu0 %v655
  %1373 = vmatprep.subr.mxu0 %v640
  %1374 = vmatpush1.msra.mxu0 %v639
  %1375 = vmatprep.subr.mxu0 %v624
  %1376 = vmatpush1.msra.mxu0 %v623
  %1377 = vmatprep.subr.mxu0 %v608
  %1378 = vmatpush1.msra.mxu0 %v607
  %1379 = vmatprep.subr.mxu0 %v592
  %1380 = vmatpush1.msra.mxu0 %v591
  %1381 = vmatprep.subr.mxu0 %v576
  %1382 = vmatpush1.msra.mxu0 %v575
  %1383 = vmatprep.subr.mxu0 %v560
  %1384 = vmatpush1.msra.mxu0 %v559
  %1385 = vmatprep.subr.mxu0 %v544
  %1386 = vmatpush1.msra.mxu0 %v543
  %1387 = vmatprep.subr.mxu0 %v528
  %1388 = vmatpush1.msra.mxu0 %v527
  %1389 = vmatprep.subr.mxu0 %v512
  %1390 = vmatpush1.msra.mxu0 %v511
  %1391 = vmatprep.subr.mxu0 %v496
  %1392 = vmatpush1.msra.mxu0 %v495
  %1393 = vmatprep.subr.mxu0 %v480
  %1394 = vmatpush1.msra.mxu0 %v479
  %1395 = vmatprep.subr.mxu0 %v464
  %1396 = vmatpush1.msra.mxu0 %v463
  %1397 = vmatprep.subr.mxu0 %v448
  %1398 = vmatpush1.msra.mxu0 %v447
  %1399 = vmatprep.subr.mxu0 %v432
  %1400 = vmatpush1.msra.mxu0 %v431
  %1401 = vmatprep.subr.mxu0 %v416
  %1402 = vmatpush1.msra.mxu0 %v415
  %1403 = vmatprep.subr.mxu0 0.0
  %1404 = vmatpush2.msra.mxu0 0.0
  %1405 = vmatprep.subr.mxu0 0.0
  %1406 = vmatpush2.msra.mxu0 0.0
  %1407 = vmatprep.subr.mxu0 0.0
  %1408 = vmatpush2.msra.mxu0 0.0
  %1409 = vmatprep.subr.mxu0 0.0
  %1410 = vmatpush2.msra.mxu0 0.0
  %1411 = vmatprep.subr.mxu0 0.0
  %1412 = vmatpush2.msra.mxu0 0.0
  %1413 = vmatprep.subr.mxu0 0.0
  %1414 = vmatpush2.msra.mxu0 0.0
  %1415 = vmatprep.subr.mxu0 0.0
  %1416 = vmatpush2.msra.mxu0 0.0
  %1417 = vmatprep.subr.mxu0 0.0
  %1418 = vmatpush2.msra.mxu0 0.0
  %1419 = vmatprep.subr.mxu0 0.0
  %1420 = vmatpush2.msra.mxu0 0.0
  %1421 = vmatprep.subr.mxu0 0.0
  %1422 = vmatpush2.msra.mxu0 0.0
  %1423 = vmatprep.subr.mxu0 0.0
  %1424 = vmatpush2.msra.mxu0 0.0
  %1425 = vmatprep.subr.mxu0 0.0
  %1426 = vmatpush2.msra.mxu0 0.0
  %1427 = vmatprep.subr.mxu0 0.0
  %1428 = vmatpush2.msra.mxu0 0.0
  %1429 = vmatprep.subr.mxu0 0.0
  %1430 = vmatpush2.msra.mxu0 0.0
  %1431 = vmatprep.subr.mxu0 0.0
  %1432 = vmatpush2.msra.mxu0 0.0
  %1433 = vmatprep.subr.mxu0 0.0
  %1434 = vmatpush2.msra.mxu0 0.0
  %1435 = vmatprep.mubr.f32.mxu0 0.0
  %1436 = vmatmul.mubr.f32.gmra.mxu0 %v411
  %v1437 = vpop.f32.mrf.mxu0
  %v1438 = vadd.f32 %v870, %v1437
  %v1439 = vpop.f32.mrf.mxu0
  %v1440 = vadd.f32 %v872, %v1439
  %1441 = vdwg.mxu0
  %1442 = vmatprep.subr.mxu0 %v658
  %1443 = vmatpush1.msra.mxu0 %v657
  %1444 = vmatprep.subr.mxu0 %v642
  %1445 = vmatpush1.msra.mxu0 %v641
  %1446 = vmatprep.subr.mxu0 %v626
  %1447 = vmatpush1.msra.mxu0 %v625
  %1448 = vmatprep.subr.mxu0 %v610
  %1449 = vmatpush1.msra.mxu0 %v609
  %1450 = vmatprep.subr.mxu0 %v594
  %1451 = vmatpush1.msra.mxu0 %v593
  %1452 = vmatprep.subr.mxu0 %v578
  %1453 = vmatpush1.msra.mxu0 %v577
  %1454 = vmatprep.subr.mxu0 %v562
  %1455 = vmatpush1.msra.mxu0 %v561
  %1456 = vmatprep.subr.mxu0 %v546
  %1457 = vmatpush1.msra.mxu0 %v545
  %1458 = vmatprep.subr.mxu0 %v530
  %1459 = vmatpush1.msra.mxu0 %v529
  %1460 = vmatprep.subr.mxu0 %v514
  %1461 = vmatpush1.msra.mxu0 %v513
  %1462 = vmatprep.subr.mxu0 %v498
  %1463 = vmatpush1.msra.mxu0 %v497
  %1464 = vmatprep.subr.mxu0 %v482
  %1465 = vmatpush1.msra.mxu0 %v481
  %1466 = vmatprep.subr.mxu0 %v466
  %1467 = vmatpush1.msra.mxu0 %v465
  %1468 = vmatprep.subr.mxu0 %v450
  %1469 = vmatpush1.msra.mxu0 %v449
  %1470 = vmatprep.subr.mxu0 %v434
  %1471 = vmatpush1.msra.mxu0 %v433
  %1472 = vmatprep.subr.mxu0 %v418
  %1473 = vmatpush1.msra.mxu0 %v417
  %1474 = vmatprep.subr.mxu0 0.0
  %1475 = vmatpush2.msra.mxu0 0.0
  %1476 = vmatprep.subr.mxu0 0.0
  %1477 = vmatpush2.msra.mxu0 0.0
  %1478 = vmatprep.subr.mxu0 0.0
  %1479 = vmatpush2.msra.mxu0 0.0
  %1480 = vmatprep.subr.mxu0 0.0
  %1481 = vmatpush2.msra.mxu0 0.0
  %1482 = vmatprep.subr.mxu0 0.0
  %1483 = vmatpush2.msra.mxu0 0.0
  %1484 = vmatprep.subr.mxu0 0.0
  %1485 = vmatpush2.msra.mxu0 0.0
  %1486 = vmatprep.subr.mxu0 0.0
  %1487 = vmatpush2.msra.mxu0 0.0
  %1488 = vmatprep.subr.mxu0 0.0
  %1489 = vmatpush2.msra.mxu0 0.0
  %1490 = vmatprep.subr.mxu0 0.0
  %1491 = vmatpush2.msra.mxu0 0.0
  %1492 = vmatprep.subr.mxu0 0.0
  %1493 = vmatpush2.msra.mxu0 0.0
  %1494 = vmatprep.subr.mxu0 0.0
  %1495 = vmatpush2.msra.mxu0 0.0
  %1496 = vmatprep.subr.mxu0 0.0
  %1497 = vmatpush2.msra.mxu0 0.0
  %1498 = vmatprep.subr.mxu0 0.0
  %1499 = vmatpush2.msra.mxu0 0.0
  %1500 = vmatprep.subr.mxu0 0.0
  %1501 = vmatpush2.msra.mxu0 0.0
  %1502 = vmatprep.subr.mxu0 0.0
  %1503 = vmatpush2.msra.mxu0 0.0
  %1504 = vmatprep.subr.mxu0 0.0
  %1505 = vmatpush2.msra.mxu0 0.0
  %1506 = vmatprep.mubr.f32.mxu0 0.0
  %1507 = vmatmul.mubr.f32.gmra.mxu0 %v411
  %v1508 = vpop.f32.mrf.mxu0
  %v1509 = vadd.f32 %v941, %v1508
  %v1510 = vpop.f32.mrf.mxu0
  %v1511 = vadd.f32 %v943, %v1510
  %1512 = vdwg.mxu0
  %1513 = vmatprep.subr.mxu0 %v660
  %1514 = vmatpush1.msra.mxu0 %v659
  %1515 = vmatprep.subr.mxu0 %v644
  %1516 = vmatpush1.msra.mxu0 %v643
  %1517 = vmatprep.subr.mxu0 %v628
  %1518 = vmatpush1.msra.mxu0 %v627
  %1519 = vmatprep.subr.mxu0 %v612
  %1520 = vmatpush1.msra.mxu0 %v611
  %1521 = vmatprep.subr.mxu0 %v596
  %1522 = vmatpush1.msra.mxu0 %v595
  %1523 = vmatprep.subr.mxu0 %v580
  %1524 = vmatpush1.msra.mxu0 %v579
  %1525 = vmatprep.subr.mxu0 %v564
  %1526 = vmatpush1.msra.mxu0 %v563
  %1527 = vmatprep.subr.mxu0 %v548
  %1528 = vmatpush1.msra.mxu0 %v547
  %1529 = vmatprep.subr.mxu0 %v532
  %1530 = vmatpush1.msra.mxu0 %v531
  %1531 = vmatprep.subr.mxu0 %v516
  %1532 = vmatpush1.msra.mxu0 %v515
  %1533 = vmatprep.subr.mxu0 %v500
  %1534 = vmatpush1.msra.mxu0 %v499
  %1535 = vmatprep.subr.mxu0 %v484
  %1536 = vmatpush1.msra.mxu0 %v483
  %1537 = vmatprep.subr.mxu0 %v468
  %1538 = vmatpush1.msra.mxu0 %v467
  %1539 = vmatprep.subr.mxu0 %v452
  %1540 = vmatpush1.msra.mxu0 %v451
  %1541 = vmatprep.subr.mxu0 %v436
  %1542 = vmatpush1.msra.mxu0 %v435
  %1543 = vmatprep.subr.mxu0 %v420
  %1544 = vmatpush1.msra.mxu0 %v419
  %1545 = vmatprep.subr.mxu0 0.0
  %1546 = vmatpush2.msra.mxu0 0.0
  %1547 = vmatprep.subr.mxu0 0.0
  %1548 = vmatpush2.msra.mxu0 0.0
  %1549 = vmatprep.subr.mxu0 0.0
  %1550 = vmatpush2.msra.mxu0 0.0
  %1551 = vmatprep.subr.mxu0 0.0
  %1552 = vmatpush2.msra.mxu0 0.0
  %1553 = vmatprep.subr.mxu0 0.0
  %1554 = vmatpush2.msra.mxu0 0.0
  %1555 = vmatprep.subr.mxu0 0.0
  %1556 = vmatpush2.msra.mxu0 0.0
  %1557 = vmatprep.subr.mxu0 0.0
  %1558 = vmatpush2.msra.mxu0 0.0
  %1559 = vmatprep.subr.mxu0 0.0
  %1560 = vmatpush2.msra.mxu0 0.0
  %1561 = vmatprep.subr.mxu0 0.0
  %1562 = vmatpush2.msra.mxu0 0.0
  %1563 = vmatprep.subr.mxu0 0.0
  %1564 = vmatpush2.msra.mxu0 0.0
  %1565 = vmatprep.subr.mxu0 0.0
  %1566 = vmatpush2.msra.mxu0 0.0
  %1567 = vmatprep.subr.mxu0 0.0
  %1568 = vmatpush2.msra.mxu0 0.0
  %1569 = vmatprep.subr.mxu0 0.0
  %1570 = vmatpush2.msra.mxu0 0.0
  %1571 = vmatprep.subr.mxu0 0.0
  %1572 = vmatpush2.msra.mxu0 0.0
  %1573 = vmatprep.subr.mxu0 0.0
  %1574 = vmatpush2.msra.mxu0 0.0
  %1575 = vmatprep.subr.mxu0 0.0
  %1576 = vmatpush2.msra.mxu0 0.0
  %1577 = vmatprep.mubr.f32.mxu0 0.0
  %1578 = vmatmul.mubr.f32.gmra.mxu0 %v411
  %v1579 = vpop.f32.mrf.mxu0
  %v1580 = vadd.f32 %v1012, %v1579
  %v1581 = vpop.f32.mrf.mxu0
  %v1582 = vadd.f32 %v1014, %v1581
  %1583 = vdwg.mxu0
  %1584 = vmatprep.subr.mxu0 %v662
  %1585 = vmatpush1.msra.mxu0 %v661
  %1586 = vmatprep.subr.mxu0 %v646
  %1587 = vmatpush1.msra.mxu0 %v645
  %1588 = vmatprep.subr.mxu0 %v630
  %1589 = vmatpush1.msra.mxu0 %v629
  %1590 = vmatprep.subr.mxu0 %v614
  %1591 = vmatpush1.msra.mxu0 %v613
  %1592 = vmatprep.subr.mxu0 %v598
  %1593 = vmatpush1.msra.mxu0 %v597
  %1594 = vmatprep.subr.mxu0 %v582
  %1595 = vmatpush1.msra.mxu0 %v581
  %1596 = vmatprep.subr.mxu0 %v566
  %1597 = vmatpush1.msra.mxu0 %v565
  %1598 = vmatprep.subr.mxu0 %v550
  %1599 = vmatpush1.msra.mxu0 %v549
  %1600 = vmatprep.subr.mxu0 %v534
  %1601 = vmatpush1.msra.mxu0 %v533
  %1602 = vmatprep.subr.mxu0 %v518
  %1603 = vmatpush1.msra.mxu0 %v517
  %1604 = vmatprep.subr.mxu0 %v502
  %1605 = vmatpush1.msra.mxu0 %v501
  %1606 = vmatprep.subr.mxu0 %v486
  %1607 = vmatpush1.msra.mxu0 %v485
  %1608 = vmatprep.subr.mxu0 %v470
  %1609 = vmatpush1.msra.mxu0 %v469
  %1610 = vmatprep.subr.mxu0 %v454
  %1611 = vmatpush1.msra.mxu0 %v453
  %1612 = vmatprep.subr.mxu0 %v438
  %1613 = vmatpush1.msra.mxu0 %v437
  %1614 = vmatprep.subr.mxu0 %v422
  %1615 = vmatpush1.msra.mxu0 %v421
  %1616 = vmatprep.subr.mxu0 0.0
  %1617 = vmatpush2.msra.mxu0 0.0
  %1618 = vmatprep.subr.mxu0 0.0
  %1619 = vmatpush2.msra.mxu0 0.0
  %1620 = vmatprep.subr.mxu0 0.0
  %1621 = vmatpush2.msra.mxu0 0.0
  %1622 = vmatprep.subr.mxu0 0.0
  %1623 = vmatpush2.msra.mxu0 0.0
  %1624 = vmatprep.subr.mxu0 0.0
  %1625 = vmatpush2.msra.mxu0 0.0
  %1626 = vmatprep.subr.mxu0 0.0
  %1627 = vmatpush2.msra.mxu0 0.0
  %1628 = vmatprep.subr.mxu0 0.0
  %1629 = vmatpush2.msra.mxu0 0.0
  %1630 = vmatprep.subr.mxu0 0.0
  %1631 = vmatpush2.msra.mxu0 0.0
  %1632 = vmatprep.subr.mxu0 0.0
  %1633 = vmatpush2.msra.mxu0 0.0
  %1634 = vmatprep.subr.mxu0 0.0
  %1635 = vmatpush2.msra.mxu0 0.0
  %1636 = vmatprep.subr.mxu0 0.0
  %1637 = vmatpush2.msra.mxu0 0.0
  %1638 = vmatprep.subr.mxu0 0.0
  %1639 = vmatpush2.msra.mxu0 0.0
  %1640 = vmatprep.subr.mxu0 0.0
  %1641 = vmatpush2.msra.mxu0 0.0
  %1642 = vmatprep.subr.mxu0 0.0
  %1643 = vmatpush2.msra.mxu0 0.0
  %1644 = vmatprep.subr.mxu0 0.0
  %1645 = vmatpush2.msra.mxu0 0.0
  %1646 = vmatprep.subr.mxu0 0.0
  %1647 = vmatpush2.msra.mxu0 0.0
  %1648 = vmatprep.mubr.f32.mxu0 0.0
  %1649 = vmatmul.mubr.f32.gmra.mxu0 %v411
  %v1650 = vpop.f32.mrf.mxu0
  %v1651 = vadd.f32 %v1083, %v1650
  %v1652 = vpop.f32.mrf.mxu0
  %v1653 = vadd.f32 %v1085, %v1652
  %1654 = vdwg.mxu0
  %1655 = vmatprep.subr.mxu0 %v664
  %1656 = vmatpush1.msra.mxu0 %v663
  %1657 = vmatprep.subr.mxu0 %v648
  %1658 = vmatpush1.msra.mxu0 %v647
  %1659 = vmatprep.subr.mxu0 %v632
  %1660 = vmatpush1.msra.mxu0 %v631
  %1661 = vmatprep.subr.mxu0 %v616
  %1662 = vmatpush1.msra.mxu0 %v615
  %1663 = vmatprep.subr.mxu0 %v600
  %1664 = vmatpush1.msra.mxu0 %v599
  %1665 = vmatprep.subr.mxu0 %v584
  %1666 = vmatpush1.msra.mxu0 %v583
  %1667 = vmatprep.subr.mxu0 %v568
  %1668 = vmatpush1.msra.mxu0 %v567
  %1669 = vmatprep.subr.mxu0 %v552
  %1670 = vmatpush1.msra.mxu0 %v551
  %1671 = vmatprep.subr.mxu0 %v536
  %1672 = vmatpush1.msra.mxu0 %v535
  %1673 = vmatprep.subr.mxu0 %v520
  %1674 = vmatpush1.msra.mxu0 %v519
  %1675 = vmatprep.subr.mxu0 %v504
  %1676 = vmatpush1.msra.mxu0 %v503
  %1677 = vmatprep.subr.mxu0 %v488
  %1678 = vmatpush1.msra.mxu0 %v487
  %1679 = vmatprep.subr.mxu0 %v472
  %1680 = vmatpush1.msra.mxu0 %v471
  %1681 = vmatprep.subr.mxu0 %v456
  %1682 = vmatpush1.msra.mxu0 %v455
  %1683 = vmatprep.subr.mxu0 %v440
  %1684 = vmatpush1.msra.mxu0 %v439
  %1685 = vmatprep.subr.mxu0 %v424
  %1686 = vmatpush1.msra.mxu0 %v423
  %1687 = vmatprep.subr.mxu0 0.0
  %1688 = vmatpush2.msra.mxu0 0.0
  %1689 = vmatprep.subr.mxu0 0.0
  %1690 = vmatpush2.msra.mxu0 0.0
  %1691 = vmatprep.subr.mxu0 0.0
  %1692 = vmatpush2.msra.mxu0 0.0
  %1693 = vmatprep.subr.mxu0 0.0
  %1694 = vmatpush2.msra.mxu0 0.0
  %1695 = vmatprep.subr.mxu0 0.0
  %1696 = vmatpush2.msra.mxu0 0.0
  %1697 = vmatprep.subr.mxu0 0.0
  %1698 = vmatpush2.msra.mxu0 0.0
  %1699 = vmatprep.subr.mxu0 0.0
  %1700 = vmatpush2.msra.mxu0 0.0
  %1701 = vmatprep.subr.mxu0 0.0
  %1702 = vmatpush2.msra.mxu0 0.0
  %1703 = vmatprep.subr.mxu0 0.0
  %1704 = vmatpush2.msra.mxu0 0.0
  %1705 = vmatprep.subr.mxu0 0.0
  %1706 = vmatpush2.msra.mxu0 0.0
  %1707 = vmatprep.subr.mxu0 0.0
  %1708 = vmatpush2.msra.mxu0 0.0
  %1709 = vmatprep.subr.mxu0 0.0
  %1710 = vmatpush2.msra.mxu0 0.0
  %1711 = vmatprep.subr.mxu0 0.0
  %1712 = vmatpush2.msra.mxu0 0.0
  %1713 = vmatprep.subr.mxu0 0.0
  %1714 = vmatpush2.msra.mxu0 0.0
  %1715 = vmatprep.subr.mxu0 0.0
  %1716 = vmatpush2.msra.mxu0 0.0
  %1717 = vmatprep.subr.mxu0 0.0
  %1718 = vmatpush2.msra.mxu0 0.0
  %1719 = vmatprep.mubr.f32.mxu0 0.0
  %1720 = vmatmul.mubr.f32.gmra.mxu0 %v411
  %v1721 = vpop.f32.mrf.mxu0
  %v1722 = vadd.f32 %v1154, %v1721
  %v1723 = vpop.f32.mrf.mxu0
  %v1724 = vadd.f32 %v1156, %v1723
  %1725 = vdwg.mxu0
  %1726 = vmatprep.subr.mxu0 %v666
  %1727 = vmatpush1.msra.mxu0 %v665
  %1728 = vmatprep.subr.mxu0 %v650
  %1729 = vmatpush1.msra.mxu0 %v649
  %1730 = vmatprep.subr.mxu0 %v634
  %1731 = vmatpush1.msra.mxu0 %v633
  %1732 = vmatprep.subr.mxu0 %v618
  %1733 = vmatpush1.msra.mxu0 %v617
  %1734 = vmatprep.subr.mxu0 %v602
  %1735 = vmatpush1.msra.mxu0 %v601
  %1736 = vmatprep.subr.mxu0 %v586
  %1737 = vmatpush1.msra.mxu0 %v585
  %1738 = vmatprep.subr.mxu0 %v570
  %1739 = vmatpush1.msra.mxu0 %v569
  %1740 = vmatprep.subr.mxu0 %v554
  %1741 = vmatpush1.msra.mxu0 %v553
  %1742 = vmatprep.subr.mxu0 %v538
  %1743 = vmatpush1.msra.mxu0 %v537
  %1744 = vmatprep.subr.mxu0 %v522
  %1745 = vmatpush1.msra.mxu0 %v521
  %1746 = vmatprep.subr.mxu0 %v506
  %1747 = vmatpush1.msra.mxu0 %v505
  %1748 = vmatprep.subr.mxu0 %v490
  %1749 = vmatpush1.msra.mxu0 %v489
  %1750 = vmatprep.subr.mxu0 %v474
  %1751 = vmatpush1.msra.mxu0 %v473
  %1752 = vmatprep.subr.mxu0 %v458
  %1753 = vmatpush1.msra.mxu0 %v457
  %1754 = vmatprep.subr.mxu0 %v442
  %1755 = vmatpush1.msra.mxu0 %v441
  %1756 = vmatprep.subr.mxu0 %v426
  %1757 = vmatpush1.msra.mxu0 %v425
  %1758 = vmatprep.subr.mxu0 0.0
  %1759 = vmatpush2.msra.mxu0 0.0
  %1760 = vmatprep.subr.mxu0 0.0
  %1761 = vmatpush2.msra.mxu0 0.0
  %1762 = vmatprep.subr.mxu0 0.0
  %1763 = vmatpush2.msra.mxu0 0.0
  %1764 = vmatprep.subr.mxu0 0.0
  %1765 = vmatpush2.msra.mxu0 0.0
  %1766 = vmatprep.subr.mxu0 0.0
  %1767 = vmatpush2.msra.mxu0 0.0
  %1768 = vmatprep.subr.mxu0 0.0
  %1769 = vmatpush2.msra.mxu0 0.0
  %1770 = vmatprep.subr.mxu0 0.0
  %1771 = vmatpush2.msra.mxu0 0.0
  %1772 = vmatprep.subr.mxu0 0.0
  %1773 = vmatpush2.msra.mxu0 0.0
  %1774 = vmatprep.subr.mxu0 0.0
  %1775 = vmatpush2.msra.mxu0 0.0
  %1776 = vmatprep.subr.mxu0 0.0
  %1777 = vmatpush2.msra.mxu0 0.0
  %1778 = vmatprep.subr.mxu0 0.0
  %1779 = vmatpush2.msra.mxu0 0.0
  %1780 = vmatprep.subr.mxu0 0.0
  %1781 = vmatpush2.msra.mxu0 0.0
  %1782 = vmatprep.subr.mxu0 0.0
  %1783 = vmatpush2.msra.mxu0 0.0
  %1784 = vmatprep.subr.mxu0 0.0
  %1785 = vmatpush2.msra.mxu0 0.0
  %1786 = vmatprep.subr.mxu0 0.0
  %1787 = vmatpush2.msra.mxu0 0.0
  %1788 = vmatprep.subr.mxu0 0.0
  %1789 = vmatpush2.msra.mxu0 0.0
  %1790 = vmatprep.mubr.f32.mxu0 0.0
  %1791 = vmatmul.mubr.f32.gmra.mxu0 %v411
  %v1792 = vpop.f32.mrf.mxu0
  %v1793 = vadd.f32 %v1225, %v1792
  %v1794 = vpop.f32.mrf.mxu0
  %v1795 = vadd.f32 %v1227, %v1794
  %1796 = vdwg.mxu0
  %1797 = vmatprep.subr.mxu0 %v668
  %1798 = vmatpush1.msra.mxu0 %v667
  %1799 = vmatprep.subr.mxu0 %v652
  %1800 = vmatpush1.msra.mxu0 %v651
  %1801 = vmatprep.subr.mxu0 %v636
  %1802 = vmatpush1.msra.mxu0 %v635
  %1803 = vmatprep.subr.mxu0 %v620
  %1804 = vmatpush1.msra.mxu0 %v619
  %1805 = vmatprep.subr.mxu0 %v604
  %1806 = vmatpush1.msra.mxu0 %v603
  %1807 = vmatprep.subr.mxu0 %v588
  %1808 = vmatpush1.msra.mxu0 %v587
  %1809 = vmatprep.subr.mxu0 %v572
  %1810 = vmatpush1.msra.mxu0 %v571
  %1811 = vmatprep.subr.mxu0 %v556
  %1812 = vmatpush1.msra.mxu0 %v555
  %1813 = vmatprep.subr.mxu0 %v540
  %1814 = vmatpush1.msra.mxu0 %v539
  %1815 = vmatprep.subr.mxu0 %v524
  %1816 = vmatpush1.msra.mxu0 %v523
  %1817 = vmatprep.subr.mxu0 %v508
  %1818 = vmatpush1.msra.mxu0 %v507
  %1819 = vmatprep.subr.mxu0 %v492
  %1820 = vmatpush1.msra.mxu0 %v491
  %1821 = vmatprep.subr.mxu0 %v476
  %1822 = vmatpush1.msra.mxu0 %v475
  %1823 = vmatprep.subr.mxu0 %v460
  %1824 = vmatpush1.msra.mxu0 %v459
  %1825 = vmatprep.subr.mxu0 %v444
  %1826 = vmatpush1.msra.mxu0 %v443
  %1827 = vmatprep.subr.mxu0 %v428
  %1828 = vmatpush1.msra.mxu0 %v427
  %1829 = vmatprep.subr.mxu0 0.0
  %1830 = vmatpush2.msra.mxu0 0.0
  %1831 = vmatprep.subr.mxu0 0.0
  %1832 = vmatpush2.msra.mxu0 0.0
  %1833 = vmatprep.subr.mxu0 0.0
  %1834 = vmatpush2.msra.mxu0 0.0
  %1835 = vmatprep.subr.mxu0 0.0
  %1836 = vmatpush2.msra.mxu0 0.0
  %1837 = vmatprep.subr.mxu0 0.0
  %1838 = vmatpush2.msra.mxu0 0.0
  %1839 = vmatprep.subr.mxu0 0.0
  %1840 = vmatpush2.msra.mxu0 0.0
  %1841 = vmatprep.subr.mxu0 0.0
  %1842 = vmatpush2.msra.mxu0 0.0
  %1843 = vmatprep.subr.mxu0 0.0
  %1844 = vmatpush2.msra.mxu0 0.0
  %1845 = vmatprep.subr.mxu0 0.0
  %1846 = vmatpush2.msra.mxu0 0.0
  %1847 = vmatprep.subr.mxu0 0.0
  %1848 = vmatpush2.msra.mxu0 0.0
  %1849 = vmatprep.subr.mxu0 0.0
  %1850 = vmatpush2.msra.mxu0 0.0
  %1851 = vmatprep.subr.mxu0 0.0
  %1852 = vmatpush2.msra.mxu0 0.0
  %1853 = vmatprep.subr.mxu0 0.0
  %1854 = vmatpush2.msra.mxu0 0.0
  %1855 = vmatprep.subr.mxu0 0.0
  %1856 = vmatpush2.msra.mxu0 0.0
  %1857 = vmatprep.subr.mxu0 0.0
  %1858 = vmatpush2.msra.mxu0 0.0
  %1859 = vmatprep.subr.mxu0 0.0
  %1860 = vmatpush2.msra.mxu0 0.0
  %1861 = vmatprep.mubr.f32.mxu0 0.0
  %1862 = vmatmul.mubr.f32.gmra.mxu0 %v411
  %v1863 = vpop.f32.mrf.mxu0
  %v1864 = vadd.f32 %v1296, %v1863
  %v1865 = vpop.f32.mrf.mxu0
  %v1866 = vadd.f32 %v1298, %v1865
  %1867 = vdwg.mxu0
  %1868 = vmatprep.subr.mxu0 %v670
  %1869 = vmatpush1.msra.mxu0 %v669
  %1870 = vmatprep.subr.mxu0 %v654
  %1871 = vmatpush1.msra.mxu0 %v653
  %1872 = vmatprep.subr.mxu0 %v638
  %1873 = vmatpush1.msra.mxu0 %v637
  %1874 = vmatprep.subr.mxu0 %v622
  %1875 = vmatpush1.msra.mxu0 %v621
  %1876 = vmatprep.subr.mxu0 %v606
  %1877 = vmatpush1.msra.mxu0 %v605
  %1878 = vmatprep.subr.mxu0 %v590
  %1879 = vmatpush1.msra.mxu0 %v589
  %1880 = vmatprep.subr.mxu0 %v574
  %1881 = vmatpush1.msra.mxu0 %v573
  %1882 = vmatprep.subr.mxu0 %v558
  %1883 = vmatpush1.msra.mxu0 %v557
  %1884 = vmatprep.subr.mxu0 %v542
  %1885 = vmatpush1.msra.mxu0 %v541
  %1886 = vmatprep.subr.mxu0 %v526
  %1887 = vmatpush1.msra.mxu0 %v525
  %1888 = vmatprep.subr.mxu0 %v510
  %1889 = vmatpush1.msra.mxu0 %v509
  %1890 = vmatprep.subr.mxu0 %v494
  %1891 = vmatpush1.msra.mxu0 %v493
  %1892 = vmatprep.subr.mxu0 %v478
  %1893 = vmatpush1.msra.mxu0 %v477
  %1894 = vmatprep.subr.mxu0 %v462
  %1895 = vmatpush1.msra.mxu0 %v461
  %1896 = vmatprep.subr.mxu0 %v446
  %1897 = vmatpush1.msra.mxu0 %v445
  %1898 = vmatprep.subr.mxu0 %v430
  %1899 = vmatpush1.msra.mxu0 %v429
  %1900 = vmatprep.subr.mxu0 0.0
  %1901 = vmatpush2.msra.mxu0 0.0
  %1902 = vmatprep.subr.mxu0 0.0
  %1903 = vmatpush2.msra.mxu0 0.0
  %1904 = vmatprep.subr.mxu0 0.0
  %1905 = vmatpush2.msra.mxu0 0.0
  %1906 = vmatprep.subr.mxu0 0.0
  %1907 = vmatpush2.msra.mxu0 0.0
  %1908 = vmatprep.subr.mxu0 0.0
  %1909 = vmatpush2.msra.mxu0 0.0
  %1910 = vmatprep.subr.mxu0 0.0
  %1911 = vmatpush2.msra.mxu0 0.0
  %1912 = vmatprep.subr.mxu0 0.0
  %1913 = vmatpush2.msra.mxu0 0.0
  %1914 = vmatprep.subr.mxu0 0.0
  %1915 = vmatpush2.msra.mxu0 0.0
  %1916 = vmatprep.subr.mxu0 0.0
  %1917 = vmatpush2.msra.mxu0 0.0
  %1918 = vmatprep.subr.mxu0 0.0
  %1919 = vmatpush2.msra.mxu0 0.0
  %1920 = vmatprep.subr.mxu0 0.0
  %1921 = vmatpush2.msra.mxu0 0.0
  %1922 = vmatprep.subr.mxu0 0.0
  %1923 = vmatpush2.msra.mxu0 0.0
  %1924 = vmatprep.subr.mxu0 0.0
  %1925 = vmatpush2.msra.mxu0 0.0
  %1926 = vmatprep.subr.mxu0 0.0
  %1927 = vmatpush2.msra.mxu0 0.0
  %1928 = vmatprep.subr.mxu0 0.0
  %1929 = vmatpush2.msra.mxu0 0.0
  %1930 = vmatprep.subr.mxu0 0.0
  %1931 = vmatpush2.msra.mxu0 0.0
  %1932 = vmatprep.mubr.f32.mxu0 0.0
  %1933 = vmatmul.mubr.f32.gmra.mxu0 %v411
  %v1934 = vpop.f32.mrf.mxu0
  %v1935 = vadd.f32 %v1367, %v1934
  %v1936 = vpop.f32.mrf.mxu0
  %v1937 = vadd.f32 %v1369, %v1936
  %1938 = vdwg.mxu0
  %s1939 = scalar_lea.vmem %s6, 3072
  %v1940 = vld [vmem:[%s1939] ss:$8 sm:$0xf]
  %v1941 = vld [vmem:[%s1939] ss:$8 sm:$0xf0]
  %v1942 = vor.u32 %v1940, %v1941
  %s1943 = scalar_lea.vmem %s6, 3136
  %v1944 = vld [vmem:[%s1943] ss:$8 sm:$0xf]
  %v1945 = vld [vmem:[%s1943] ss:$8 sm:$0xf0]
  %v1946 = vor.u32 %v1944, %v1945
  %v1949 = vlaneseq
  %v1950 = vshrl.u32 %v1949, 7
  %v1951 = vsub.s32 0, %v1950
  %v1952 = vrot.slane %v1942, %v1951
  %v1953 = vlaneseq
  %v1954 = vshrl.u32 %v1953, 7
  %v1955 = vsub.s32 1, %v1954
  %v1956 = vrot.slane %v1942, %v1955
  %v1957 = vlaneseq
  %v1958 = vshrl.u32 %v1957, 7
  %v1959 = vsub.s32 2, %v1958
  %v1960 = vrot.slane %v1942, %v1959
  %v1961 = vlaneseq
  %v1962 = vshrl.u32 %v1961, 7
  %v1963 = vsub.s32 3, %v1962
  %v1964 = vrot.slane %v1942, %v1963
  %v1965 = vlaneseq
  %v1966 = vshrl.u32 %v1965, 7
  %v1967 = vsub.s32 4, %v1966
  %v1968 = vrot.slane %v1942, %v1967
  %v1969 = vlaneseq
  %v1970 = vshrl.u32 %v1969, 7
  %v1971 = vsub.s32 5, %v1970
  %v1972 = vrot.slane %v1942, %v1971
  %v1973 = vlaneseq
  %v1974 = vshrl.u32 %v1973, 7
  %v1975 = vsub.s32 6, %v1974
  %v1976 = vrot.slane %v1942, %v1975
  %v1977 = vlaneseq
  %v1978 = vshrl.u32 %v1977, 7
  %v1979 = vsub.s32 7, %v1978
  %v1980 = vrot.slane %v1942, %v1979
  %v1981 = vlaneseq
  %v1982 = vshrl.u32 %v1981, 7
  %v1983 = vsub.s32 0, %v1982
  %v1984 = vrot.slane %v1946, %v1983
  %v1985 = vlaneseq
  %v1986 = vshrl.u32 %v1985, 7
  %v1987 = vsub.s32 1, %v1986
  %v1988 = vrot.slane %v1946, %v1987
  %v1989 = vlaneseq
  %v1990 = vshrl.u32 %v1989, 7
  %v1991 = vsub.s32 2, %v1990
  %v1992 = vrot.slane %v1946, %v1991
  %v1993 = vlaneseq
  %v1994 = vshrl.u32 %v1993, 7
  %v1995 = vsub.s32 3, %v1994
  %v1996 = vrot.slane %v1946, %v1995
  %v1997 = vlaneseq
  %v1998 = vshrl.u32 %v1997, 7
  %v1999 = vsub.s32 4, %v1998
  %v2000 = vrot.slane %v1946, %v1999
  %v2001 = vlaneseq
  %v2002 = vshrl.u32 %v2001, 7
  %v2003 = vsub.s32 5, %v2002
  %v2004 = vrot.slane %v1946, %v2003
  %v2005 = vlaneseq
  %v2006 = vshrl.u32 %v2005, 7
  %v2007 = vsub.s32 6, %v2006
  %v2008 = vrot.slane %v1946, %v2007
  %v2009 = vlaneseq
  %v2010 = vshrl.u32 %v2009, 7
  %v2011 = vsub.s32 7, %v2010
  %v2012 = vrot.slane %v1946, %v2011
  %v2029 = vadd.f32 %v1438, %v1952
  %v2030 = vadd.f32 %v1440, %v1956
  %v2031 = vadd.f32 %v1509, %v1960
  %v2032 = vadd.f32 %v1511, %v1964
  %v2033 = vadd.f32 %v1580, %v1968
  %v2034 = vadd.f32 %v1582, %v1972
  %v2035 = vadd.f32 %v1651, %v1976
  %v2036 = vadd.f32 %v1653, %v1980
  %v2037 = vadd.f32 %v1722, %v1984
  %v2038 = vadd.f32 %v1724, %v1988
  %v2039 = vadd.f32 %v1793, %v1992
  %v2040 = vadd.f32 %v1795, %v1996
  %v2041 = vadd.f32 %v1864, %v2000
  %v2042 = vadd.f32 %v1866, %v2004
  %v2043 = vadd.f32 %v1935, %v2008
  %v2044 = vadd.f32 %v1937, %v2012
  %2045 = vst [vmem:[#allocation2] sm:$0xff] %v2029
  %2046 = vst [vmem:[#allocation2 + $0x8] sm:$0xff] %v2030
  %2047 = vst [vmem:[#allocation2 + $0x10] sm:$0xff] %v2031
  %2048 = vst [vmem:[#allocation2 + $0x18] sm:$0xff] %v2032
  %2049 = vst [vmem:[#allocation2 + $0x20] sm:$0xff] %v2033
  %2050 = vst [vmem:[#allocation2 + $0x28] sm:$0xff] %v2034
  %2051 = vst [vmem:[#allocation2 + $0x30] sm:$0xff] %v2035
  %2052 = vst [vmem:[#allocation2 + $0x38] sm:$0xff] %v2036
  %2053 = vst [vmem:[#allocation2 + $0x40] sm:$0xff] %v2037
  %2054 = vst [vmem:[#allocation2 + $0x48] sm:$0xff] %v2038
  %2055 = vst [vmem:[#allocation2 + $0x50] sm:$0xff] %v2039
  %2056 = vst [vmem:[#allocation2 + $0x58] sm:$0xff] %v2040
  %2057 = vst [vmem:[#allocation2 + $0x60] sm:$0xff] %v2041
  %2058 = vst [vmem:[#allocation2 + $0x68] sm:$0xff] %v2042
  %2059 = vst [vmem:[#allocation2 + $0x70] sm:$0xff] %v2043
  %2060 = vst [vmem:[#allocation2 + $0x78] sm:$0xff] %v2044
  %v2061 = vld [vmem:[%s7] sm:$0xff]
  %v2062 = vld [vmem:[%s7 + $0x8] sm:$0xff]
  %v2063 = vld [vmem:[%s7 + $0x10] sm:$0xff]
  %v2064 = vld [vmem:[%s7 + $0x18] sm:$0xff]
  %v2065 = vld [vmem:[%s7 + $0x20] sm:$0x1]
  %v2066 = vld [vmem:[#allocation2] sm:$0xff]
  %v2067 = vlaneseq
  %v2068 = vshrl.u32 %v2067, 7
  %v2069 = vsub.s32 0, %v2068
  %v2070 = vrot.slane %v2065, %v2069
  %vm2071 = vcmask 261120
  %v2073 = vsel %vm2071, 0.0, 0
  %2075 = vmatprep.subr.mxu0 0.0
  %2076 = vmatpush1.msra.mxu0 0.0
  %2077 = vmatprep.subr.mxu0 0.0
  %2078 = vmatpush1.msra.mxu0 0.0
  %2079 = vmatprep.subr.mxu0 0.0
  %2080 = vmatpush1.msra.mxu0 0.0
  %2081 = vmatprep.subr.mxu0 0.0
  %2082 = vmatpush1.msra.mxu0 0.0
  %2083 = vmatprep.subr.mxu0 0.0
  %2084 = vmatpush1.msra.mxu0 0.0
  %2085 = vmatprep.subr.mxu0 0.0
  %2086 = vmatpush1.msra.mxu0 0.0
  %2087 = vmatprep.subr.mxu0 0.0
  %2088 = vmatpush1.msra.mxu0 0.0
  %2089 = vmatprep.subr.mxu0 0.0
  %2090 = vmatpush1.msra.mxu0 0.0
  %2091 = vmatprep.subr.mxu0 0.0
  %2092 = vmatpush1.msra.mxu0 0.0
  %2093 = vmatprep.subr.mxu0 0.0
  %2094 = vmatpush1.msra.mxu0 0.0
  %2095 = vmatprep.subr.mxu0 0.0
  %2096 = vmatpush1.msra.mxu0 0.0
  %2097 = vmatprep.subr.mxu0 0.0
  %2098 = vmatpush1.msra.mxu0 0.0
  %2099 = vmatprep.subr.mxu0 0.0
  %v2100 = vand.u32 %v2064, 4294901760
  %2101 = vmatpush1.msra.mxu0 %v2100
  %2102 = vmatprep.subr.mxu0 0.0
  %v2103 = vand.u32 %v2063, 4294901760
  %2104 = vmatpush1.msra.mxu0 %v2103
  %2105 = vmatprep.subr.mxu0 0.0
  %v2106 = vand.u32 %v2062, 4294901760
  %2107 = vmatpush1.msra.mxu0 %v2106
  %2108 = vmatprep.subr.mxu0 0.0
  %v2109 = vand.u32 %v2061, 4294901760
  %2110 = vmatpush1.msra.mxu0 %v2109
  %2111 = vmatprep.subr.mxu0 0.0
  %2112 = vmatpush2.msra.mxu0 0.0
  %2113 = vmatprep.subr.mxu0 0.0
  %2114 = vmatpush2.msra.mxu0 0.0
  %2115 = vmatprep.subr.mxu0 0.0
  %2116 = vmatpush2.msra.mxu0 0.0
  %2117 = vmatprep.subr.mxu0 0.0
  %2118 = vmatpush2.msra.mxu0 0.0
  %2119 = vmatprep.subr.mxu0 0.0
  %2120 = vmatpush2.msra.mxu0 0.0
  %2121 = vmatprep.subr.mxu0 0.0
  %2122 = vmatpush2.msra.mxu0 0.0
  %2123 = vmatprep.subr.mxu0 0.0
  %2124 = vmatpush2.msra.mxu0 0.0
  %2125 = vmatprep.subr.mxu0 0.0
  %2126 = vmatpush2.msra.mxu0 0.0
  %2127 = vmatprep.subr.mxu0 0.0
  %2128 = vmatpush2.msra.mxu0 0.0
  %2129 = vmatprep.subr.mxu0 0.0
  %2130 = vmatpush2.msra.mxu0 0.0
  %2131 = vmatprep.subr.mxu0 0.0
  %2132 = vmatpush2.msra.mxu0 0.0
  %2133 = vmatprep.subr.mxu0 0.0
  %2134 = vmatpush2.msra.mxu0 0.0
  %2135 = vmatprep.subr.mxu0 0.0
  %2136 = vmatpush2.msra.mxu0 0.0
  %2137 = vmatprep.subr.mxu0 0.0
  %2138 = vmatpush2.msra.mxu0 0.0
  %2139 = vmatprep.subr.mxu0 0.0
  %2140 = vmatpush2.msra.mxu0 0.0
  %2141 = vmatprep.subr.mxu0 0.0
  %2142 = vmatpush2.msra.mxu0 0.0
  %2143 = vmatprep.mubr.f32.mxu0 0.0
  %v2144 = vand.u32 %v2073, 4294901760
  %v2145 = vsub.f32 %v2073, %v2144
  %v2146 = vand.u32 %v2145, 4294901760
  %v2147 = vsub.f32 %v2145, %v2146
  %v2148 = vand.u32 %v2147, 4294901760
  %2149 = vmatmul.mubr.f32.gmra.mxu0 %v2148
  %v2150 = vpop.f32.mrf.mxu0
  %v2151 = vadd.f32 %v2070, %v2150
  %v2152 = vpop.f32.mrf.mxu0
  %2153 = vdwg.mxu0
  %2154 = vmatprep.subr.mxu0 0.0
  %2155 = vmatpush1.msra.mxu0 0.0
  %2156 = vmatprep.subr.mxu0 0.0
  %2157 = vmatpush1.msra.mxu0 0.0
  %2158 = vmatprep.subr.mxu0 0.0
  %2159 = vmatpush1.msra.mxu0 0.0
  %2160 = vmatprep.subr.mxu0 0.0
  %2161 = vmatpush1.msra.mxu0 0.0
  %2162 = vmatprep.subr.mxu0 0.0
  %2163 = vmatpush1.msra.mxu0 0.0
  %2164 = vmatprep.subr.mxu0 0.0
  %2165 = vmatpush1.msra.mxu0 0.0
  %2166 = vmatprep.subr.mxu0 0.0
  %2167 = vmatpush1.msra.mxu0 0.0
  %2168 = vmatprep.subr.mxu0 0.0
  %2169 = vmatpush1.msra.mxu0 0.0
  %2170 = vmatprep.subr.mxu0 0.0
  %2171 = vmatpush1.msra.mxu0 0.0
  %2172 = vmatprep.subr.mxu0 0.0
  %2173 = vmatpush1.msra.mxu0 0.0
  %2174 = vmatprep.subr.mxu0 0.0
  %2175 = vmatpush1.msra.mxu0 0.0
  %2176 = vmatprep.subr.mxu0 0.0
  %2177 = vmatpush1.msra.mxu0 0.0
  %2178 = vmatprep.subr.mxu0 0.0
  %v2179 = vand.u32 %v2064, 4294901760
  %v2180 = vsub.f32 %v2064, %v2179
  %v2181 = vand.u32 %v2180, 4294901760
  %v2182 = vsub.f32 %v2180, %v2181
  %v2183 = vand.u32 %v2182, 4294901760
  %2184 = vmatpush1.msra.mxu0 %v2183
  %2185 = vmatprep.subr.mxu0 0.0
  %v2186 = vand.u32 %v2063, 4294901760
  %v2187 = vsub.f32 %v2063, %v2186
  %v2188 = vand.u32 %v2187, 4294901760
  %v2189 = vsub.f32 %v2187, %v2188
  %v2190 = vand.u32 %v2189, 4294901760
  %2191 = vmatpush1.msra.mxu0 %v2190
  %2192 = vmatprep.subr.mxu0 0.0
  %v2193 = vand.u32 %v2062, 4294901760
  %v2194 = vsub.f32 %v2062, %v2193
  %v2195 = vand.u32 %v2194, 4294901760
  %v2196 = vsub.f32 %v2194, %v2195
  %v2197 = vand.u32 %v2196, 4294901760
  %2198 = vmatpush1.msra.mxu0 %v2197
  %2199 = vmatprep.subr.mxu0 0.0
  %v2200 = vand.u32 %v2061, 4294901760
  %v2201 = vsub.f32 %v2061, %v2200
  %v2202 = vand.u32 %v2201, 4294901760
  %v2203 = vsub.f32 %v2201, %v2202
  %v2204 = vand.u32 %v2203, 4294901760
  %2205 = vmatpush1.msra.mxu0 %v2204
  %2206 = vmatprep.subr.mxu0 0.0
  %2207 = vmatpush2.msra.mxu0 0.0
  %2208 = vmatprep.subr.mxu0 0.0
  %2209 = vmatpush2.msra.mxu0 0.0
  %2210 = vmatprep.subr.mxu0 0.0
  %2211 = vmatpush2.msra.mxu0 0.0
  %2212 = vmatprep.subr.mxu0 0.0
  %2213 = vmatpush2.msra.mxu0 0.0
  %2214 = vmatprep.subr.mxu0 0.0
  %2215 = vmatpush2.msra.mxu0 0.0
  %2216 = vmatprep.subr.mxu0 0.0
  %2217 = vmatpush2.msra.mxu0 0.0
  %2218 = vmatprep.subr.mxu0 0.0
  %2219 = vmatpush2.msra.mxu0 0.0
  %2220 = vmatprep.subr.mxu0 0.0
  %2221 = vmatpush2.msra.mxu0 0.0
  %2222 = vmatprep.subr.mxu0 0.0
  %2223 = vmatpush2.msra.mxu0 0.0
  %2224 = vmatprep.subr.mxu0 0.0
  %2225 = vmatpush2.msra.mxu0 0.0
  %2226 = vmatprep.subr.mxu0 0.0
  %2227 = vmatpush2.msra.mxu0 0.0
  %2228 = vmatprep.subr.mxu0 0.0
  %2229 = vmatpush2.msra.mxu0 0.0
  %2230 = vmatprep.subr.mxu0 0.0
  %2231 = vmatpush2.msra.mxu0 0.0
  %2232 = vmatprep.subr.mxu0 0.0
  %2233 = vmatpush2.msra.mxu0 0.0
  %2234 = vmatprep.subr.mxu0 0.0
  %2235 = vmatpush2.msra.mxu0 0.0
  %2236 = vmatprep.subr.mxu0 0.0
  %2237 = vmatpush2.msra.mxu0 0.0
  %2238 = vmatprep.mubr.f32.mxu0 0.0
  %v2239 = vand.u32 %v2073, 4294901760
  %2240 = vmatmul.mubr.f32.gmra.mxu0 %v2239
  %v2241 = vpop.f32.mrf.mxu0
  %v2242 = vadd.f32 %v2151, %v2241
  %v2243 = vpop.f32.mrf.mxu0
  %2244 = vdwg.mxu0
  %2245 = vmatprep.subr.mxu0 0.0
  %2246 = vmatpush1.msra.mxu0 0.0
  %2247 = vmatprep.subr.mxu0 0.0
  %2248 = vmatpush1.msra.mxu0 0.0
  %2249 = vmatprep.subr.mxu0 0.0
  %2250 = vmatpush1.msra.mxu0 0.0
  %2251 = vmatprep.subr.mxu0 0.0
  %2252 = vmatpush1.msra.mxu0 0.0
  %2253 = vmatprep.subr.mxu0 0.0
  %2254 = vmatpush1.msra.mxu0 0.0
  %2255 = vmatprep.subr.mxu0 0.0
  %2256 = vmatpush1.msra.mxu0 0.0
  %2257 = vmatprep.subr.mxu0 0.0
  %2258 = vmatpush1.msra.mxu0 0.0
  %2259 = vmatprep.subr.mxu0 0.0
  %2260 = vmatpush1.msra.mxu0 0.0
  %2261 = vmatprep.subr.mxu0 0.0
  %2262 = vmatpush1.msra.mxu0 0.0
  %2263 = vmatprep.subr.mxu0 0.0
  %2264 = vmatpush1.msra.mxu0 0.0
  %2265 = vmatprep.subr.mxu0 0.0
  %2266 = vmatpush1.msra.mxu0 0.0
  %2267 = vmatprep.subr.mxu0 0.0
  %2268 = vmatpush1.msra.mxu0 0.0
  %2269 = vmatprep.subr.mxu0 0.0
  %v2270 = vand.u32 %v2064, 4294901760
  %v2271 = vsub.f32 %v2064, %v2270
  %2272 = vmatpush1.msra.mxu0 %v2271
  %2273 = vmatprep.subr.mxu0 0.0
  %v2274 = vand.u32 %v2063, 4294901760
  %v2275 = vsub.f32 %v2063, %v2274
  %2276 = vmatpush1.msra.mxu0 %v2275
  %2277 = vmatprep.subr.mxu0 0.0
  %v2278 = vand.u32 %v2062, 4294901760
  %v2279 = vsub.f32 %v2062, %v2278
  %2280 = vmatpush1.msra.mxu0 %v2279
  %2281 = vmatprep.subr.mxu0 0.0
  %v2282 = vand.u32 %v2061, 4294901760
  %v2283 = vsub.f32 %v2061, %v2282
  %2284 = vmatpush1.msra.mxu0 %v2283
  %2285 = vmatprep.subr.mxu0 0.0
  %2286 = vmatpush2.msra.mxu0 0.0
  %2287 = vmatprep.subr.mxu0 0.0
  %2288 = vmatpush2.msra.mxu0 0.0
  %2289 = vmatprep.subr.mxu0 0.0
  %2290 = vmatpush2.msra.mxu0 0.0
  %2291 = vmatprep.subr.mxu0 0.0
  %2292 = vmatpush2.msra.mxu0 0.0
  %2293 = vmatprep.subr.mxu0 0.0
  %2294 = vmatpush2.msra.mxu0 0.0
  %2295 = vmatprep.subr.mxu0 0.0
  %2296 = vmatpush2.msra.mxu0 0.0
  %2297 = vmatprep.subr.mxu0 0.0
  %2298 = vmatpush2.msra.mxu0 0.0
  %2299 = vmatprep.subr.mxu0 0.0
  %2300 = vmatpush2.msra.mxu0 0.0
  %2301 = vmatprep.subr.mxu0 0.0
  %2302 = vmatpush2.msra.mxu0 0.0
  %2303 = vmatprep.subr.mxu0 0.0
  %2304 = vmatpush2.msra.mxu0 0.0
  %2305 = vmatprep.subr.mxu0 0.0
  %2306 = vmatpush2.msra.mxu0 0.0
  %2307 = vmatprep.subr.mxu0 0.0
  %2308 = vmatpush2.msra.mxu0 0.0
  %2309 = vmatprep.subr.mxu0 0.0
  %2310 = vmatpush2.msra.mxu0 0.0
  %2311 = vmatprep.subr.mxu0 0.0
  %2312 = vmatpush2.msra.mxu0 0.0
  %2313 = vmatprep.subr.mxu0 0.0
  %2314 = vmatpush2.msra.mxu0 0.0
  %2315 = vmatprep.subr.mxu0 0.0
  %2316 = vmatpush2.msra.mxu0 0.0
  %2317 = vmatprep.mubr.f32.mxu0 0.0
  %v2318 = vand.u32 %v2073, 4294901760
  %v2319 = vsub.f32 %v2073, %v2318
  %2320 = vmatmul.mubr.f32.gmra.mxu0 %v2319
  %v2321 = vpop.f32.mrf.mxu0
  %v2322 = vadd.f32 %v2242, %v2321
  %v2323 = vpop.f32.mrf.mxu0
  %2324 = vdwg.mxu0
  %2325 = vmatprep.subr.mxu0 0.0
  %2326 = vmatpush1.msra.mxu0 0.0
  %2327 = vmatprep.subr.mxu0 0.0
  %2328 = vmatpush1.msra.mxu0 0.0
  %2329 = vmatprep.subr.mxu0 0.0
  %2330 = vmatpush1.msra.mxu0 0.0
  %2331 = vmatprep.subr.mxu0 0.0
  %2332 = vmatpush1.msra.mxu0 0.0
  %2333 = vmatprep.subr.mxu0 0.0
  %2334 = vmatpush1.msra.mxu0 0.0
  %2335 = vmatprep.subr.mxu0 0.0
  %2336 = vmatpush1.msra.mxu0 0.0
  %2337 = vmatprep.subr.mxu0 0.0
  %2338 = vmatpush1.msra.mxu0 0.0
  %2339 = vmatprep.subr.mxu0 0.0
  %2340 = vmatpush1.msra.mxu0 0.0
  %2341 = vmatprep.subr.mxu0 0.0
  %2342 = vmatpush1.msra.mxu0 0.0
  %2343 = vmatprep.subr.mxu0 0.0
  %2344 = vmatpush1.msra.mxu0 0.0
  %2345 = vmatprep.subr.mxu0 0.0
  %2346 = vmatpush1.msra.mxu0 0.0
  %2347 = vmatprep.subr.mxu0 0.0
  %2348 = vmatpush1.msra.mxu0 0.0
  %2349 = vmatprep.subr.mxu0 0.0
  %v2350 = vand.u32 %v2064, 4294901760
  %2351 = vmatpush1.msra.mxu0 %v2350
  %2352 = vmatprep.subr.mxu0 0.0
  %v2353 = vand.u32 %v2063, 4294901760
  %2354 = vmatpush1.msra.mxu0 %v2353
  %2355 = vmatprep.subr.mxu0 0.0
  %v2356 = vand.u32 %v2062, 4294901760
  %2357 = vmatpush1.msra.mxu0 %v2356
  %2358 = vmatprep.subr.mxu0 0.0
  %v2359 = vand.u32 %v2061, 4294901760
  %2360 = vmatpush1.msra.mxu0 %v2359
  %2361 = vmatprep.subr.mxu0 0.0
  %2362 = vmatpush2.msra.mxu0 0.0
  %2363 = vmatprep.subr.mxu0 0.0
  %2364 = vmatpush2.msra.mxu0 0.0
  %2365 = vmatprep.subr.mxu0 0.0
  %2366 = vmatpush2.msra.mxu0 0.0
  %2367 = vmatprep.subr.mxu0 0.0
  %2368 = vmatpush2.msra.mxu0 0.0
  %2369 = vmatprep.subr.mxu0 0.0
  %2370 = vmatpush2.msra.mxu0 0.0
  %2371 = vmatprep.subr.mxu0 0.0
  %2372 = vmatpush2.msra.mxu0 0.0
  %2373 = vmatprep.subr.mxu0 0.0
  %2374 = vmatpush2.msra.mxu0 0.0
  %2375 = vmatprep.subr.mxu0 0.0
  %2376 = vmatpush2.msra.mxu0 0.0
  %2377 = vmatprep.subr.mxu0 0.0
  %2378 = vmatpush2.msra.mxu0 0.0
  %2379 = vmatprep.subr.mxu0 0.0
  %2380 = vmatpush2.msra.mxu0 0.0
  %2381 = vmatprep.subr.mxu0 0.0
  %2382 = vmatpush2.msra.mxu0 0.0
  %2383 = vmatprep.subr.mxu0 0.0
  %2384 = vmatpush2.msra.mxu0 0.0
  %2385 = vmatprep.subr.mxu0 0.0
  %2386 = vmatpush2.msra.mxu0 0.0
  %2387 = vmatprep.subr.mxu0 0.0
  %2388 = vmatpush2.msra.mxu0 0.0
  %2389 = vmatprep.subr.mxu0 0.0
  %2390 = vmatpush2.msra.mxu0 0.0
  %2391 = vmatprep.subr.mxu0 0.0
  %2392 = vmatpush2.msra.mxu0 0.0
  %2393 = vmatprep.mubr.f32.mxu0 0.0
  %v2394 = vand.u32 %v2073, 4294901760
  %v2395 = vsub.f32 %v2073, %v2394
  %v2396 = vand.u32 %v2395, 4294901760
  %2397 = vmatmul.mubr.f32.gmra.mxu0 %v2396
  %v2398 = vpop.f32.mrf.mxu0
  %v2399 = vadd.f32 %v2322, %v2398
  %v2400 = vpop.f32.mrf.mxu0
  %2401 = vdwg.mxu0
  %2402 = vmatprep.subr.mxu0 0.0
  %2403 = vmatpush1.msra.mxu0 0.0
  %2404 = vmatprep.subr.mxu0 0.0
  %2405 = vmatpush1.msra.mxu0 0.0
  %2406 = vmatprep.subr.mxu0 0.0
  %2407 = vmatpush1.msra.mxu0 0.0
  %2408 = vmatprep.subr.mxu0 0.0
  %2409 = vmatpush1.msra.mxu0 0.0
  %2410 = vmatprep.subr.mxu0 0.0
  %2411 = vmatpush1.msra.mxu0 0.0
  %2412 = vmatprep.subr.mxu0 0.0
  %2413 = vmatpush1.msra.mxu0 0.0
  %2414 = vmatprep.subr.mxu0 0.0
  %2415 = vmatpush1.msra.mxu0 0.0
  %2416 = vmatprep.subr.mxu0 0.0
  %2417 = vmatpush1.msra.mxu0 0.0
  %2418 = vmatprep.subr.mxu0 0.0
  %2419 = vmatpush1.msra.mxu0 0.0
  %2420 = vmatprep.subr.mxu0 0.0
  %2421 = vmatpush1.msra.mxu0 0.0
  %2422 = vmatprep.subr.mxu0 0.0
  %2423 = vmatpush1.msra.mxu0 0.0
  %2424 = vmatprep.subr.mxu0 0.0
  %2425 = vmatpush1.msra.mxu0 0.0
  %2426 = vmatprep.subr.mxu0 0.0
  %v2427 = vand.u32 %v2064, 4294901760
  %v2428 = vsub.f32 %v2064, %v2427
  %v2429 = vand.u32 %v2428, 4294901760
  %2430 = vmatpush1.msra.mxu0 %v2429
  %2431 = vmatprep.subr.mxu0 0.0
  %v2432 = vand.u32 %v2063, 4294901760
  %v2433 = vsub.f32 %v2063, %v2432
  %v2434 = vand.u32 %v2433, 4294901760
  %2435 = vmatpush1.msra.mxu0 %v2434
  %2436 = vmatprep.subr.mxu0 0.0
  %v2437 = vand.u32 %v2062, 4294901760
  %v2438 = vsub.f32 %v2062, %v2437
  %v2439 = vand.u32 %v2438, 4294901760
  %2440 = vmatpush1.msra.mxu0 %v2439
  %2441 = vmatprep.subr.mxu0 0.0
  %v2442 = vand.u32 %v2061, 4294901760
  %v2443 = vsub.f32 %v2061, %v2442
  %v2444 = vand.u32 %v2443, 4294901760
  %2445 = vmatpush1.msra.mxu0 %v2444
  %2446 = vmatprep.subr.mxu0 0.0
  %2447 = vmatpush2.msra.mxu0 0.0
  %2448 = vmatprep.subr.mxu0 0.0
  %2449 = vmatpush2.msra.mxu0 0.0
  %2450 = vmatprep.subr.mxu0 0.0
  %2451 = vmatpush2.msra.mxu0 0.0
  %2452 = vmatprep.subr.mxu0 0.0
  %2453 = vmatpush2.msra.mxu0 0.0
  %2454 = vmatprep.subr.mxu0 0.0
  %2455 = vmatpush2.msra.mxu0 0.0
  %2456 = vmatprep.subr.mxu0 0.0
  %2457 = vmatpush2.msra.mxu0 0.0
  %2458 = vmatprep.subr.mxu0 0.0
  %2459 = vmatpush2.msra.mxu0 0.0
  %2460 = vmatprep.subr.mxu0 0.0
  %2461 = vmatpush2.msra.mxu0 0.0
  %2462 = vmatprep.subr.mxu0 0.0
  %2463 = vmatpush2.msra.mxu0 0.0
  %2464 = vmatprep.subr.mxu0 0.0
  %2465 = vmatpush2.msra.mxu0 0.0
  %2466 = vmatprep.subr.mxu0 0.0
  %2467 = vmatpush2.msra.mxu0 0.0
  %2468 = vmatprep.subr.mxu0 0.0
  %2469 = vmatpush2.msra.mxu0 0.0
  %2470 = vmatprep.subr.mxu0 0.0
  %2471 = vmatpush2.msra.mxu0 0.0
  %2472 = vmatprep.subr.mxu0 0.0
  %2473 = vmatpush2.msra.mxu0 0.0
  %2474 = vmatprep.subr.mxu0 0.0
  %2475 = vmatpush2.msra.mxu0 0.0
  %2476 = vmatprep.subr.mxu0 0.0
  %2477 = vmatpush2.msra.mxu0 0.0
  %2478 = vmatprep.mubr.f32.mxu0 0.0
  %v2479 = vand.u32 %v2073, 4294901760
  %2480 = vmatmul.mubr.f32.gmra.mxu0 %v2479
  %v2481 = vpop.f32.mrf.mxu0
  %v2482 = vadd.f32 %v2399, %v2481
  %v2483 = vpop.f32.mrf.mxu0
  %2484 = vdwg.mxu0
  %2485 = vmatprep.subr.mxu0 0.0
  %2486 = vmatpush1.msra.mxu0 0.0
  %2487 = vmatprep.subr.mxu0 0.0
  %2488 = vmatpush1.msra.mxu0 0.0
  %2489 = vmatprep.subr.mxu0 0.0
  %2490 = vmatpush1.msra.mxu0 0.0
  %2491 = vmatprep.subr.mxu0 0.0
  %2492 = vmatpush1.msra.mxu0 0.0
  %2493 = vmatprep.subr.mxu0 0.0
  %2494 = vmatpush1.msra.mxu0 0.0
  %2495 = vmatprep.subr.mxu0 0.0
  %2496 = vmatpush1.msra.mxu0 0.0
  %2497 = vmatprep.subr.mxu0 0.0
  %2498 = vmatpush1.msra.mxu0 0.0
  %2499 = vmatprep.subr.mxu0 0.0
  %2500 = vmatpush1.msra.mxu0 0.0
  %2501 = vmatprep.subr.mxu0 0.0
  %2502 = vmatpush1.msra.mxu0 0.0
  %2503 = vmatprep.subr.mxu0 0.0
  %2504 = vmatpush1.msra.mxu0 0.0
  %2505 = vmatprep.subr.mxu0 0.0
  %2506 = vmatpush1.msra.mxu0 0.0
  %2507 = vmatprep.subr.mxu0 0.0
  %2508 = vmatpush1.msra.mxu0 0.0
  %2509 = vmatprep.subr.mxu0 0.0
  %v2510 = vand.u32 %v2064, 4294901760
  %2511 = vmatpush1.msra.mxu0 %v2510
  %2512 = vmatprep.subr.mxu0 0.0
  %v2513 = vand.u32 %v2063, 4294901760
  %2514 = vmatpush1.msra.mxu0 %v2513
  %2515 = vmatprep.subr.mxu0 0.0
  %v2516 = vand.u32 %v2062, 4294901760
  %2517 = vmatpush1.msra.mxu0 %v2516
  %2518 = vmatprep.subr.mxu0 0.0
  %v2519 = vand.u32 %v2061, 4294901760
  %2520 = vmatpush1.msra.mxu0 %v2519
  %2521 = vmatprep.subr.mxu0 0.0
  %2522 = vmatpush2.msra.mxu0 0.0
  %2523 = vmatprep.subr.mxu0 0.0
  %2524 = vmatpush2.msra.mxu0 0.0
  %2525 = vmatprep.subr.mxu0 0.0
  %2526 = vmatpush2.msra.mxu0 0.0
  %2527 = vmatprep.subr.mxu0 0.0
  %2528 = vmatpush2.msra.mxu0 0.0
  %2529 = vmatprep.subr.mxu0 0.0
  %2530 = vmatpush2.msra.mxu0 0.0
  %2531 = vmatprep.subr.mxu0 0.0
  %2532 = vmatpush2.msra.mxu0 0.0
  %2533 = vmatprep.subr.mxu0 0.0
  %2534 = vmatpush2.msra.mxu0 0.0
  %2535 = vmatprep.subr.mxu0 0.0
  %2536 = vmatpush2.msra.mxu0 0.0
  %2537 = vmatprep.subr.mxu0 0.0
  %2538 = vmatpush2.msra.mxu0 0.0
  %2539 = vmatprep.subr.mxu0 0.0
  %2540 = vmatpush2.msra.mxu0 0.0
  %2541 = vmatprep.subr.mxu0 0.0
  %2542 = vmatpush2.msra.mxu0 0.0
  %2543 = vmatprep.subr.mxu0 0.0
  %2544 = vmatpush2.msra.mxu0 0.0
  %2545 = vmatprep.subr.mxu0 0.0
  %2546 = vmatpush2.msra.mxu0 0.0
  %2547 = vmatprep.subr.mxu0 0.0
  %2548 = vmatpush2.msra.mxu0 0.0
  %2549 = vmatprep.subr.mxu0 0.0
  %2550 = vmatpush2.msra.mxu0 0.0
  %2551 = vmatprep.subr.mxu0 0.0
  %2552 = vmatpush2.msra.mxu0 0.0
  %2553 = vmatprep.mubr.f32.mxu0 0.0
  %v2554 = vand.u32 %v2073, 4294901760
  %2555 = vmatmul.mubr.f32.gmra.mxu0 %v2554
  %v2556 = vpop.f32.mrf.mxu0
  %v2557 = vadd.f32 %v2482, %v2556
  %v2558 = vpop.f32.mrf.mxu0
  %2559 = vdwg.mxu0
  %v2560 = vadd.f32 %v2066, %v2557
  %v2561 = vxor.u32 %v2560, 2147483648
  %v2562 = vmul.f32 %v2561, 1.442695
  %v2563 = vpow.pop %v2562
  %v2564 = vadd.f32 %v2563, 1.0
  %v2565 = vrcp.pop %v2564
  %v2566 = vmul.f32 1.0, %v2565
  %2568 = vrot.lane.b32.xlu0 %v2557, 64
  %v2569 = vpop.permute.xlu0 %2568
  %v2571 = vmul.f32 %v2566, %v2569
  %2573 = vrot.lane.b32.xlu0 %v2571, 64
  %v2574 = vpop.permute.xlu0 %2573
  %v2576 = vadd.f32 %v2066, %v2574
  %v2577 = vtanh.pop %v2576
  %v2578 = vsub.f32 1.0, %v2566
  %2580 = vrot.lane.b32.xlu0 %v2577, 96
  %v2581 = vpop.permute.xlu0 %2580
  %v2583 = vmul.f32 %v2578, %v2581
  %v2584 = vmul.f32 %v2566, 0.0
  %v2585 = vadd.f32 %v2583, %v2584
  %2587 = vrot.lane.b32.xlu0 %v2585, 96
  %v2588 = vpop.permute.xlu0 %2587
  %2590 = vst.msk [vmem:[#allocation3] sm:$0xff] %vm2071, %v2588
  %v2591 = vld [vmem:[#allocation2 + $0x8] sm:$0xff]
  %v2592 = vsel %vm2071, %v2588, 0
  %2594 = vmatprep.subr.mxu0 0.0
  %2595 = vmatpush1.msra.mxu0 0.0
  %2596 = vmatprep.subr.mxu0 0.0
  %2597 = vmatpush1.msra.mxu0 0.0
  %2598 = vmatprep.subr.mxu0 0.0
  %2599 = vmatpush1.msra.mxu0 0.0
  %2600 = vmatprep.subr.mxu0 0.0
  %2601 = vmatpush1.msra.mxu0 0.0
  %2602 = vmatprep.subr.mxu0 0.0
  %2603 = vmatpush1.msra.mxu0 0.0
  %2604 = vmatprep.subr.mxu0 0.0
  %2605 = vmatpush1.msra.mxu0 0.0
  %2606 = vmatprep.subr.mxu0 0.0
  %2607 = vmatpush1.msra.mxu0 0.0
  %2608 = vmatprep.subr.mxu0 0.0
  %2609 = vmatpush1.msra.mxu0 0.0
  %2610 = vmatprep.subr.mxu0 0.0
  %2611 = vmatpush1.msra.mxu0 0.0
  %2612 = vmatprep.subr.mxu0 0.0
  %2613 = vmatpush1.msra.mxu0 0.0
  %2614 = vmatprep.subr.mxu0 0.0
  %2615 = vmatpush1.msra.mxu0 0.0
  %2616 = vmatprep.subr.mxu0 0.0
  %2617 = vmatpush1.msra.mxu0 0.0
  %2618 = vmatprep.subr.mxu0 0.0
  %v2619 = vand.u32 %v2064, 4294901760
  %2620 = vmatpush1.msra.mxu0 %v2619
  %2621 = vmatprep.subr.mxu0 0.0
  %v2622 = vand.u32 %v2063, 4294901760
  %2623 = vmatpush1.msra.mxu0 %v2622
  %2624 = vmatprep.subr.mxu0 0.0
  %v2625 = vand.u32 %v2062, 4294901760
  %2626 = vmatpush1.msra.mxu0 %v2625
  %2627 = vmatprep.subr.mxu0 0.0
  %v2628 = vand.u32 %v2061, 4294901760
  %2629 = vmatpush1.msra.mxu0 %v2628
  %2630 = vmatprep.subr.mxu0 0.0
  %2631 = vmatpush2.msra.mxu0 0.0
  %2632 = vmatprep.subr.mxu0 0.0
  %2633 = vmatpush2.msra.mxu0 0.0
  %2634 = vmatprep.subr.mxu0 0.0
  %2635 = vmatpush2.msra.mxu0 0.0
  %2636 = vmatprep.subr.mxu0 0.0
  %2637 = vmatpush2.msra.mxu0 0.0
  %2638 = vmatprep.subr.mxu0 0.0
  %2639 = vmatpush2.msra.mxu0 0.0
  %2640 = vmatprep.subr.mxu0 0.0
  %2641 = vmatpush2.msra.mxu0 0.0
  %2642 = vmatprep.subr.mxu0 0.0
  %2643 = vmatpush2.msra.mxu0 0.0
  %2644 = vmatprep.subr.mxu0 0.0
  %2645 = vmatpush2.msra.mxu0 0.0
  %2646 = vmatprep.subr.mxu0 0.0
  %2647 = vmatpush2.msra.mxu0 0.0
  %2648 = vmatprep.subr.mxu0 0.0
  %2649 = vmatpush2.msra.mxu0 0.0
  %2650 = vmatprep.subr.mxu0 0.0
  %2651 = vmatpush2.msra.mxu0 0.0
  %2652 = vmatprep.subr.mxu0 0.0
  %2653 = vmatpush2.msra.mxu0 0.0
  %2654 = vmatprep.subr.mxu0 0.0
  %2655 = vmatpush2.msra.mxu0 0.0
  %2656 = vmatprep.subr.mxu0 0.0
  %2657 = vmatpush2.msra.mxu0 0.0
  %2658 = vmatprep.subr.mxu0 0.0
  %2659 = vmatpush2.msra.mxu0 0.0
  %2660 = vmatprep.subr.mxu0 0.0
  %2661 = vmatpush2.msra.mxu0 0.0
  %2662 = vmatprep.mubr.f32.mxu0 0.0
  %v2663 = vand.u32 %v2592, 4294901760
  %v2664 = vsub.f32 %v2592, %v2663
  %v2665 = vand.u32 %v2664, 4294901760
  %v2666 = vsub.f32 %v2664, %v2665
  %v2667 = vand.u32 %v2666, 4294901760
  %2668 = vmatmul.mubr.f32.gmra.mxu0 %v2667
  %v2669 = vpop.f32.mrf.mxu0
  %v2670 = vadd.f32 %v2070, %v2669
  %v2671 = vpop.f32.mrf.mxu0
  %2672 = vdwg.mxu0
  %2673 = vmatprep.subr.mxu0 0.0
  %2674 = vmatpush1.msra.mxu0 0.0
  %2675 = vmatprep.subr.mxu0 0.0
  %2676 = vmatpush1.msra.mxu0 0.0
  %2677 = vmatprep.subr.mxu0 0.0
  %2678 = vmatpush1.msra.mxu0 0.0
  %2679 = vmatprep.subr.mxu0 0.0
  %2680 = vmatpush1.msra.mxu0 0.0
  %2681 = vmatprep.subr.mxu0 0.0
  %2682 = vmatpush1.msra.mxu0 0.0
  %2683 = vmatprep.subr.mxu0 0.0
  %2684 = vmatpush1.msra.mxu0 0.0
  %2685 = vmatprep.subr.mxu0 0.0
  %2686 = vmatpush1.msra.mxu0 0.0
  %2687 = vmatprep.subr.mxu0 0.0
  %2688 = vmatpush1.msra.mxu0 0.0
  %2689 = vmatprep.subr.mxu0 0.0
  %2690 = vmatpush1.msra.mxu0 0.0
  %2691 = vmatprep.subr.mxu0 0.0
  %2692 = vmatpush1.msra.mxu0 0.0
  %2693 = vmatprep.subr.mxu0 0.0
  %2694 = vmatpush1.msra.mxu0 0.0
  %2695 = vmatprep.subr.mxu0 0.0
  %2696 = vmatpush1.msra.mxu0 0.0
  %2697 = vmatprep.subr.mxu0 0.0
  %v2698 = vand.u32 %v2064, 4294901760
  %v2699 = vsub.f32 %v2064, %v2698
  %v2700 = vand.u32 %v2699, 4294901760
  %v2701 = vsub.f32 %v2699, %v2700
  %v2702 = vand.u32 %v2701, 4294901760
  %2703 = vmatpush1.msra.mxu0 %v2702
  %2704 = vmatprep.subr.mxu0 0.0
  %v2705 = vand.u32 %v2063, 4294901760
  %v2706 = vsub.f32 %v2063, %v2705
  %v2707 = vand.u32 %v2706, 4294901760
  %v2708 = vsub.f32 %v2706, %v2707
  %v2709 = vand.u32 %v2708, 4294901760
  %2710 = vmatpush1.msra.mxu0 %v2709
  %2711 = vmatprep.subr.mxu0 0.0
  %v2712 = vand.u32 %v2062, 4294901760
  %v2713 = vsub.f32 %v2062, %v2712
  %v2714 = vand.u32 %v2713, 4294901760
  %v2715 = vsub.f32 %v2713, %v2714
  %v2716 = vand.u32 %v2715, 4294901760
  %2717 = vmatpush1.msra.mxu0 %v2716
  %2718 = vmatprep.subr.mxu0 0.0
  %v2719 = vand.u32 %v2061, 4294901760
  %v2720 = vsub.f32 %v2061, %v2719
  %v2721 = vand.u32 %v2720, 4294901760
  %v2722 = vsub.f32 %v2720, %v2721
  %v2723 = vand.u32 %v2722, 4294901760
  %2724 = vmatpush1.msra.mxu0 %v2723
  %2725 = vmatprep.subr.mxu0 0.0
  %2726 = vmatpush2.msra.mxu0 0.0
  %2727 = vmatprep.subr.mxu0 0.0
  %2728 = vmatpush2.msra.mxu0 0.0
  %2729 = vmatprep.subr.mxu0 0.0
  %2730 = vmatpush2.msra.mxu0 0.0
  %2731 = vmatprep.subr.mxu0 0.0
  %2732 = vmatpush2.msra.mxu0 0.0
  %2733 = vmatprep.subr.mxu0 0.0
  %2734 = vmatpush2.msra.mxu0 0.0
  %2735 = vmatprep.subr.mxu0 0.0
  %2736 = vmatpush2.msra.mxu0 0.0
  %2737 = vmatprep.subr.mxu0 0.0
  %2738 = vmatpush2.msra.mxu0 0.0
  %2739 = vmatprep.subr.mxu0 0.0
  %2740 = vmatpush2.msra.mxu0 0.0
  %2741 = vmatprep.subr.mxu0 0.0
  %2742 = vmatpush2.msra.mxu0 0.0
  %2743 = vmatprep.subr.mxu0 0.0
  %2744 = vmatpush2.msra.mxu0 0.0
  %2745 = vmatprep.subr.mxu0 0.0
  %2746 = vmatpush2.msra.mxu0 0.0
  %2747 = vmatprep.subr.mxu0 0.0
  %2748 = vmatpush2.msra.mxu0 0.0
  %2749 = vmatprep.subr.mxu0 0.0
  %2750 = vmatpush2.msra.mxu0 0.0
  %2751 = vmatprep.subr.mxu0 0.0
  %2752 = vmatpush2.msra.mxu0 0.0
  %2753 = vmatprep.subr.mxu0 0.0
  %2754 = vmatpush2.msra.mxu0 0.0
  %2755 = vmatprep.subr.mxu0 0.0
  %2756 = vmatpush2.msra.mxu0 0.0
  %2757 = vmatprep.mubr.f32.mxu0 0.0
  %v2758 = vand.u32 %v2592, 4294901760
  %2759 = vmatmul.mubr.f32.gmra.mxu0 %v2758
  %v2760 = vpop.f32.mrf.mxu0
  %v2761 = vadd.f32 %v2670, %v2760
  %v2762 = vpop.f32.mrf.mxu0
  %2763 = vdwg.mxu0
  %2764 = vmatprep.subr.mxu0 0.0
  %2765 = vmatpush1.msra.mxu0 0.0
  %2766 = vmatprep.subr.mxu0 0.0
  %2767 = vmatpush1.msra.mxu0 0.0
  %2768 = vmatprep.subr.mxu0 0.0
  %2769 = vmatpush1.msra.mxu0 0.0
  %2770 = vmatprep.subr.mxu0 0.0
  %2771 = vmatpush1.msra.mxu0 0.0
  %2772 = vmatprep.subr.mxu0 0.0
  %2773 = vmatpush1.msra.mxu0 0.0
  %2774 = vmatprep.subr.mxu0 0.0
  %2775 = vmatpush1.msra.mxu0 0.0
  %2776 = vmatprep.subr.mxu0 0.0
  %2777 = vmatpush1.msra.mxu0 0.0
  %2778 = vmatprep.subr.mxu0 0.0
  %2779 = vmatpush1.msra.mxu0 0.0
  %2780 = vmatprep.subr.mxu0 0.0
  %2781 = vmatpush1.msra.mxu0 0.0
  %2782 = vmatprep.subr.mxu0 0.0
  %2783 = vmatpush1.msra.mxu0 0.0
  %2784 = vmatprep.subr.mxu0 0.0
  %2785 = vmatpush1.msra.mxu0 0.0
  %2786 = vmatprep.subr.mxu0 0.0
  %2787 = vmatpush1.msra.mxu0 0.0
  %2788 = vmatprep.subr.mxu0 0.0
  %v2789 = vand.u32 %v2064, 4294901760
  %v2790 = vsub.f32 %v2064, %v2789
  %2791 = vmatpush1.msra.mxu0 %v2790
  %2792 = vmatprep.subr.mxu0 0.0
  %v2793 = vand.u32 %v2063, 4294901760
  %v2794 = vsub.f32 %v2063, %v2793
  %2795 = vmatpush1.msra.mxu0 %v2794
  %2796 = vmatprep.subr.mxu0 0.0
  %v2797 = vand.u32 %v2062, 4294901760
  %v2798 = vsub.f32 %v2062, %v2797
  %2799 = vmatpush1.msra.mxu0 %v2798
  %2800 = vmatprep.subr.mxu0 0.0
  %v2801 = vand.u32 %v2061, 4294901760
  %v2802 = vsub.f32 %v2061, %v2801
  %2803 = vmatpush1.msra.mxu0 %v2802
  %2804 = vmatprep.subr.mxu0 0.0
  %2805 = vmatpush2.msra.mxu0 0.0
  %2806 = vmatprep.subr.mxu0 0.0
  %2807 = vmatpush2.msra.mxu0 0.0
  %2808 = vmatprep.subr.mxu0 0.0
  %2809 = vmatpush2.msra.mxu0 0.0
  %2810 = vmatprep.subr.mxu0 0.0
  %2811 = vmatpush2.msra.mxu0 0.0
  %2812 = vmatprep.subr.mxu0 0.0
  %2813 = vmatpush2.msra.mxu0 0.0
  %2814 = vmatprep.subr.mxu0 0.0
  %2815 = vmatpush2.msra.mxu0 0.0
  %2816 = vmatprep.subr.mxu0 0.0
  %2817 = vmatpush2.msra.mxu0 0.0
  %2818 = vmatprep.subr.mxu0 0.0
  %2819 = vmatpush2.msra.mxu0 0.0
  %2820 = vmatprep.subr.mxu0 0.0
  %2821 = vmatpush2.msra.mxu0 0.0
  %2822 = vmatprep.subr.mxu0 0.0
  %2823 = vmatpush2.msra.mxu0 0.0
  %2824 = vmatprep.subr.mxu0 0.0
  %2825 = vmatpush2.msra.mxu0 0.0
  %2826 = vmatprep.subr.mxu0 0.0
  %2827 = vmatpush2.msra.mxu0 0.0
  %2828 = vmatprep.subr.mxu0 0.0
  %2829 = vmatpush2.msra.mxu0 0.0
  %2830 = vmatprep.subr.mxu0 0.0
  %2831 = vmatpush2.msra.mxu0 0.0
  %2832 = vmatprep.subr.mxu0 0.0
  %2833 = vmatpush2.msra.mxu0 0.0
  %2834 = vmatprep.subr.mxu0 0.0
  %2835 = vmatpush2.msra.mxu0 0.0
  %2836 = vmatprep.mubr.f32.mxu0 0.0
  %v2837 = vand.u32 %v2592, 4294901760
  %v2838 = vsub.f32 %v2592, %v2837
  %2839 = vmatmul.mubr.f32.gmra.mxu0 %v2838
  %v2840 = vpop.f32.mrf.mxu0
  %v2841 = vadd.f32 %v2761, %v2840
  %v2842 = vpop.f32.mrf.mxu0
  %2843 = vdwg.mxu0
  %2844 = vmatprep.subr.mxu0 0.0
  %2845 = vmatpush1.msra.mxu0 0.0
  %2846 = vmatprep.subr.mxu0 0.0
  %2847 = vmatpush1.msra.mxu0 0.0
  %2848 = vmatprep.subr.mxu0 0.0
  %2849 = vmatpush1.msra.mxu0 0.0
  %2850 = vmatprep.subr.mxu0 0.0
  %2851 = vmatpush1.msra.mxu0 0.0
  %2852 = vmatprep.subr.mxu0 0.0
  %2853 = vmatpush1.msra.mxu0 0.0
  %2854 = vmatprep.subr.mxu0 0.0
  %2855 = vmatpush1.msra.mxu0 0.0
  %2856 = vmatprep.subr.mxu0 0.0
  %2857 = vmatpush1.msra.mxu0 0.0
  %2858 = vmatprep.subr.mxu0 0.0
  %2859 = vmatpush1.msra.mxu0 0.0
  %2860 = vmatprep.subr.mxu0 0.0
  %2861 = vmatpush1.msra.mxu0 0.0
  %2862 = vmatprep.subr.mxu0 0.0
  %2863 = vmatpush1.msra.mxu0 0.0
  %2864 = vmatprep.subr.mxu0 0.0
  %2865 = vmatpush1.msra.mxu0 0.0
  %2866 = vmatprep.subr.mxu0 0.0
  %2867 = vmatpush1.msra.mxu0 0.0
  %2868 = vmatprep.subr.mxu0 0.0
  %v2869 = vand.u32 %v2064, 4294901760
  %2870 = vmatpush1.msra.mxu0 %v2869
  %2871 = vmatprep.subr.mxu0 0.0
  %v2872 = vand.u32 %v2063, 4294901760
  %2873 = vmatpush1.msra.mxu0 %v2872
  %2874 = vmatprep.subr.mxu0 0.0
  %v2875 = vand.u32 %v2062, 4294901760
  %2876 = vmatpush1.msra.mxu0 %v2875
  %2877 = vmatprep.subr.mxu0 0.0
  %v2878 = vand.u32 %v2061, 4294901760
  %2879 = vmatpush1.msra.mxu0 %v2878
  %2880 = vmatprep.subr.mxu0 0.0
  %2881 = vmatpush2.msra.mxu0 0.0
  %2882 = vmatprep.subr.mxu0 0.0
  %2883 = vmatpush2.msra.mxu0 0.0
  %2884 = vmatprep.subr.mxu0 0.0
  %2885 = vmatpush2.msra.mxu0 0.0
  %2886 = vmatprep.subr.mxu0 0.0
  %2887 = vmatpush2.msra.mxu0 0.0
  %2888 = vmatprep.subr.mxu0 0.0
  %2889 = vmatpush2.msra.mxu0 0.0
  %2890 = vmatprep.subr.mxu0 0.0
  %2891 = vmatpush2.msra.mxu0 0.0
  %2892 = vmatprep.subr.mxu0 0.0
  %2893 = vmatpush2.msra.mxu0 0.0
  %2894 = vmatprep.subr.mxu0 0.0
  %2895 = vmatpush2.msra.mxu0 0.0
  %2896 = vmatprep.subr.mxu0 0.0
  %2897 = vmatpush2.msra.mxu0 0.0
  %2898 = vmatprep.subr.mxu0 0.0
  %2899 = vmatpush2.msra.mxu0 0.0
  %2900 = vmatprep.subr.mxu0 0.0
  %2901 = vmatpush2.msra.mxu0 0.0
  %2902 = vmatprep.subr.mxu0 0.0
  %2903 = vmatpush2.msra.mxu0 0.0
  %2904 = vmatprep.subr.mxu0 0.0
  %2905 = vmatpush2.msra.mxu0 0.0
  %2906 = vmatprep.subr.mxu0 0.0
  %2907 = vmatpush2.msra.mxu0 0.0
  %2908 = vmatprep.subr.mxu0 0.0
  %2909 = vmatpush2.msra.mxu0 0.0
  %2910 = vmatprep.subr.mxu0 0.0
  %2911 = vmatpush2.msra.mxu0 0.0
  %2912 = vmatprep.mubr.f32.mxu0 0.0
  %v2913 = vand.u32 %v2592, 4294901760
  %v2914 = vsub.f32 %v2592, %v2913
  %v2915 = vand.u32 %v2914, 4294901760
  %2916 = vmatmul.mubr.f32.gmra.mxu0 %v2915
  %v2917 = vpop.f32.mrf.mxu0
  %v2918 = vadd.f32 %v2841, %v2917
  %v2919 = vpop.f32.mrf.mxu0
  %2920 = vdwg.mxu0
  %2921 = vmatprep.subr.mxu0 0.0
  %2922 = vmatpush1.msra.mxu0 0.0
  %2923 = vmatprep.subr.mxu0 0.0
  %2924 = vmatpush1.msra.mxu0 0.0
  %2925 = vmatprep.subr.mxu0 0.0
  %2926 = vmatpush1.msra.mxu0 0.0
  %2927 = vmatprep.subr.mxu0 0.0
  %2928 = vmatpush1.msra.mxu0 0.0
  %2929 = vmatprep.subr.mxu0 0.0
  %2930 = vmatpush1.msra.mxu0 0.0
  %2931 = vmatprep.subr.mxu0 0.0
  %2932 = vmatpush1.msra.mxu0 0.0
  %2933 = vmatprep.subr.mxu0 0.0
  %2934 = vmatpush1.msra.mxu0 0.0
  %2935 = vmatprep.subr.mxu0 0.0
  %2936 = vmatpush1.msra.mxu0 0.0
  %2937 = vmatprep.subr.mxu0 0.0
  %2938 = vmatpush1.msra.mxu0 0.0
  %2939 = vmatprep.subr.mxu0 0.0
  %2940 = vmatpush1.msra.mxu0 0.0
  %2941 = vmatprep.subr.mxu0 0.0
  %2942 = vmatpush1.msra.mxu0 0.0
  %2943 = vmatprep.subr.mxu0 0.0
  %2944 = vmatpush1.msra.mxu0 0.0
  %2945 = vmatprep.subr.mxu0 0.0
  %v2946 = vand.u32 %v2064, 4294901760
  %v2947 = vsub.f32 %v2064, %v2946
  %v2948 = vand.u32 %v2947, 4294901760
  %2949 = vmatpush1.msra.mxu0 %v2948
  %2950 = vmatprep.subr.mxu0 0.0
  %v2951 = vand.u32 %v2063, 4294901760
  %v2952 = vsub.f32 %v2063, %v2951
  %v2953 = vand.u32 %v2952, 4294901760
  %2954 = vmatpush1.msra.mxu0 %v2953
  %2955 = vmatprep.subr.mxu0 0.0
  %v2956 = vand.u32 %v2062, 4294901760
  %v2957 = vsub.f32 %v2062, %v2956
  %v2958 = vand.u32 %v2957, 4294901760
  %2959 = vmatpush1.msra.mxu0 %v2958
  %2960 = vmatprep.subr.mxu0 0.0
  %v2961 = vand.u32 %v2061, 4294901760
  %v2962 = vsub.f32 %v2061, %v2961
  %v2963 = vand.u32 %v2962, 4294901760
  %2964 = vmatpush1.msra.mxu0 %v2963
  %2965 = vmatprep.subr.mxu0 0.0
  %2966 = vmatpush2.msra.mxu0 0.0
  %2967 = vmatprep.subr.mxu0 0.0
  %2968 = vmatpush2.msra.mxu0 0.0
  %2969 = vmatprep.subr.mxu0 0.0
  %2970 = vmatpush2.msra.mxu0 0.0
  %2971 = vmatprep.subr.mxu0 0.0
  %2972 = vmatpush2.msra.mxu0 0.0
  %2973 = vmatprep.subr.mxu0 0.0
  %2974 = vmatpush2.msra.mxu0 0.0
  %2975 = vmatprep.subr.mxu0 0.0
  %2976 = vmatpush2.msra.mxu0 0.0
  %2977 = vmatprep.subr.mxu0 0.0
  %2978 = vmatpush2.msra.mxu0 0.0
  %2979 = vmatprep.subr.mxu0 0.0
  %2980 = vmatpush2.msra.mxu0 0.0
  %2981 = vmatprep.subr.mxu0 0.0
  %2982 = vmatpush2.msra.mxu0 0.0
  %2983 = vmatprep.subr.mxu0 0.0
  %2984 = vmatpush2.msra.mxu0 0.0
  %2985 = vmatprep.subr.mxu0 0.0
  %2986 = vmatpush2.msra.mxu0 0.0
  %2987 = vmatprep.subr.mxu0 0.0
  %2988 = vmatpush2.msra.mxu0 0.0
  %2989 = vmatprep.subr.mxu0 0.0
  %2990 = vmatpush2.msra.mxu0 0.0
  %2991 = vmatprep.subr.mxu0 0.0
  %2992 = vmatpush2.msra.mxu0 0.0
  %2993 = vmatprep.subr.mxu0 0.0
  %2994 = vmatpush2.msra.mxu0 0.0
  %2995 = vmatprep.subr.mxu0 0.0
  %2996 = vmatpush2.msra.mxu0 0.0
  %2997 = vmatprep.mubr.f32.mxu0 0.0
  %v2998 = vand.u32 %v2592, 4294901760
  %2999 = vmatmul.mubr.f32.gmra.mxu0 %v2998
  %v3000 = vpop.f32.mrf.mxu0
  %v3001 = vadd.f32 %v2918, %v3000
  %v3002 = vpop.f32.mrf.mxu0
  %3003 = vdwg.mxu0
  %3004 = vmatprep.subr.mxu0 0.0
  %3005 = vmatpush1.msra.mxu0 0.0
  %3006 = vmatprep.subr.mxu0 0.0
  %3007 = vmatpush1.msra.mxu0 0.0
  %3008 = vmatprep.subr.mxu0 0.0
  %3009 = vmatpush1.msra.mxu0 0.0
  %3010 = vmatprep.subr.mxu0 0.0
  %3011 = vmatpush1.msra.mxu0 0.0
  %3012 = vmatprep.subr.mxu0 0.0
  %3013 = vmatpush1.msra.mxu0 0.0
  %3014 = vmatprep.subr.mxu0 0.0
  %3015 = vmatpush1.msra.mxu0 0.0
  %3016 = vmatprep.subr.mxu0 0.0
  %3017 = vmatpush1.msra.mxu0 0.0
  %3018 = vmatprep.subr.mxu0 0.0
  %3019 = vmatpush1.msra.mxu0 0.0
  %3020 = vmatprep.subr.mxu0 0.0
  %3021 = vmatpush1.msra.mxu0 0.0
  %3022 = vmatprep.subr.mxu0 0.0
  %3023 = vmatpush1.msra.mxu0 0.0
  %3024 = vmatprep.subr.mxu0 0.0
  %3025 = vmatpush1.msra.mxu0 0.0
  %3026 = vmatprep.subr.mxu0 0.0
  %3027 = vmatpush1.msra.mxu0 0.0
  %3028 = vmatprep.subr.mxu0 0.0
  %v3029 = vand.u32 %v2064, 4294901760
  %3030 = vmatpush1.msra.mxu0 %v3029
  %3031 = vmatprep.subr.mxu0 0.0
  %v3032 = vand.u32 %v2063, 4294901760
  %3033 = vmatpush1.msra.mxu0 %v3032
  %3034 = vmatprep.subr.mxu0 0.0
  %v3035 = vand.u32 %v2062, 4294901760
  %3036 = vmatpush1.msra.mxu0 %v3035
  %3037 = vmatprep.subr.mxu0 0.0
  %v3038 = vand.u32 %v2061, 4294901760
  %3039 = vmatpush1.msra.mxu0 %v3038
  %3040 = vmatprep.subr.mxu0 0.0
  %3041 = vmatpush2.msra.mxu0 0.0
  %3042 = vmatprep.subr.mxu0 0.0
  %3043 = vmatpush2.msra.mxu0 0.0
  %3044 = vmatprep.subr.mxu0 0.0
  %3045 = vmatpush2.msra.mxu0 0.0
  %3046 = vmatprep.subr.mxu0 0.0
  %3047 = vmatpush2.msra.mxu0 0.0
  %3048 = vmatprep.subr.mxu0 0.0
  %3049 = vmatpush2.msra.mxu0 0.0
  %3050 = vmatprep.subr.mxu0 0.0
  %3051 = vmatpush2.msra.mxu0 0.0
  %3052 = vmatprep.subr.mxu0 0.0
  %3053 = vmatpush2.msra.mxu0 0.0
  %3054 = vmatprep.subr.mxu0 0.0
  %3055 = vmatpush2.msra.mxu0 0.0
  %3056 = vmatprep.subr.mxu0 0.0
  %3057 = vmatpush2.msra.mxu0 0.0
  %3058 = vmatprep.subr.mxu0 0.0
  %3059 = vmatpush2.msra.mxu0 0.0
  %3060 = vmatprep.subr.mxu0 0.0
  %3061 = vmatpush2.msra.mxu0 0.0
  %3062 = vmatprep.subr.mxu0 0.0
  %3063 = vmatpush2.msra.mxu0 0.0
  %3064 = vmatprep.subr.mxu0 0.0
  %3065 = vmatpush2.msra.mxu0 0.0
  %3066 = vmatprep.subr.mxu0 0.0
  %3067 = vmatpush2.msra.mxu0 0.0
  %3068 = vmatprep.subr.mxu0 0.0
  %3069 = vmatpush2.msra.mxu0 0.0
  %3070 = vmatprep.subr.mxu0 0.0
  %3071 = vmatpush2.msra.mxu0 0.0
  %3072 = vmatprep.mubr.f32.mxu0 0.0
  %v3073 = vand.u32 %v2592, 4294901760
  %3074 = vmatmul.mubr.f32.gmra.mxu0 %v3073
  %v3075 = vpop.f32.mrf.mxu0
  %v3076 = vadd.f32 %v3001, %v3075
  %v3077 = vpop.f32.mrf.mxu0
  %3078 = vdwg.mxu0
  %v3079 = vadd.f32 %v2591, %v3076
  %v3080 = vxor.u32 %v3079, 2147483648
  %v3081 = vmul.f32 %v3080, 1.442695
  %v3082 = vpow.pop %v3081
  %v3083 = vadd.f32 %v3082, 1.0
  %v3084 = vrcp.pop %v3083
  %v3085 = vmul.f32 1.0, %v3084
  %3087 = vrot.lane.b32.xlu0 %v3076, 64
  %v3088 = vpop.permute.xlu0 %3087
  %v3090 = vmul.f32 %v3085, %v3088
  %3092 = vrot.lane.b32.xlu0 %v3090, 64
  %v3093 = vpop.permute.xlu0 %3092
  %v3095 = vadd.f32 %v2591, %v3093
  %v3096 = vtanh.pop %v3095
  %v3097 = vsub.f32 1.0, %v3085
  %3099 = vrot.lane.b32.xlu0 %v3096, 96
  %v3100 = vpop.permute.xlu0 %3099
  %v3102 = vmul.f32 %v3097, %v3100
  %v3103 = vmul.f32 %v3085, %v2585
  %v3104 = vadd.f32 %v3102, %v3103
  %3106 = vrot.lane.b32.xlu0 %v3104, 96
  %v3107 = vpop.permute.xlu0 %3106
  %3109 = vst.msk [vmem:[#allocation3 + $0x8] sm:$0xff] %vm2071, %v3107
  %v3110 = vld [vmem:[#allocation2 + $0x10] sm:$0xff]
  %v3111 = vsel %vm2071, %v3107, 0
  %3113 = vmatprep.subr.mxu0 0.0
  %3114 = vmatpush1.msra.mxu0 0.0
  %3115 = vmatprep.subr.mxu0 0.0
  %3116 = vmatpush1.msra.mxu0 0.0
  %3117 = vmatprep.subr.mxu0 0.0
  %3118 = vmatpush1.msra.mxu0 0.0
  %3119 = vmatprep.subr.mxu0 0.0
  %3120 = vmatpush1.msra.mxu0 0.0
  %3121 = vmatprep.subr.mxu0 0.0
  %3122 = vmatpush1.msra.mxu0 0.0
  %3123 = vmatprep.subr.mxu0 0.0
  %3124 = vmatpush1.msra.mxu0 0.0
  %3125 = vmatprep.subr.mxu0 0.0
  %3126 = vmatpush1.msra.mxu0 0.0
  %3127 = vmatprep.subr.mxu0 0.0
  %3128 = vmatpush1.msra.mxu0 0.0
  %3129 = vmatprep.subr.mxu0 0.0
  %3130 = vmatpush1.msra.mxu0 0.0
  %3131 = vmatprep.subr.mxu0 0.0
  %3132 = vmatpush1.msra.mxu0 0.0
  %3133 = vmatprep.subr.mxu0 0.0
  %3134 = vmatpush1.msra.mxu0 0.0
  %3135 = vmatprep.subr.mxu0 0.0
  %3136 = vmatpush1.msra.mxu0 0.0
  %3137 = vmatprep.subr.mxu0 0.0
  %v3138 = vand.u32 %v2064, 4294901760
  %3139 = vmatpush1.msra.mxu0 %v3138
  %3140 = vmatprep.subr.mxu0 0.0
  %v3141 = vand.u32 %v2063, 4294901760
  %3142 = vmatpush1.msra.mxu0 %v3141
  %3143 = vmatprep.subr.mxu0 0.0
  %v3144 = vand.u32 %v2062, 4294901760
  %3145 = vmatpush1.msra.mxu0 %v3144
  %3146 = vmatprep.subr.mxu0 0.0
  %v3147 = vand.u32 %v2061, 4294901760
  %3148 = vmatpush1.msra.mxu0 %v3147
  %3149 = vmatprep.subr.mxu0 0.0
  %3150 = vmatpush2.msra.mxu0 0.0
  %3151 = vmatprep.subr.mxu0 0.0
  %3152 = vmatpush2.msra.mxu0 0.0
  %3153 = vmatprep.subr.mxu0 0.0
  %3154 = vmatpush2.msra.mxu0 0.0
  %3155 = vmatprep.subr.mxu0 0.0
  %3156 = vmatpush2.msra.mxu0 0.0
  %3157 = vmatprep.subr.mxu0 0.0
  %3158 = vmatpush2.msra.mxu0 0.0
  %3159 = vmatprep.subr.mxu0 0.0
  %3160 = vmatpush2.msra.mxu0 0.0
  %3161 = vmatprep.subr.mxu0 0.0
  %3162 = vmatpush2.msra.mxu0 0.0
  %3163 = vmatprep.subr.mxu0 0.0
  %3164 = vmatpush2.msra.mxu0 0.0
  %3165 = vmatprep.subr.mxu0 0.0
  %3166 = vmatpush2.msra.mxu0 0.0
  %3167 = vmatprep.subr.mxu0 0.0
  %3168 = vmatpush2.msra.mxu0 0.0
  %3169 = vmatprep.subr.mxu0 0.0
  %3170 = vmatpush2.msra.mxu0 0.0
  %3171 = vmatprep.subr.mxu0 0.0
  %3172 = vmatpush2.msra.mxu0 0.0
  %3173 = vmatprep.subr.mxu0 0.0
  %3174 = vmatpush2.msra.mxu0 0.0
  %3175 = vmatprep.subr.mxu0 0.0
  %3176 = vmatpush2.msra.mxu0 0.0
  %3177 = vmatprep.subr.mxu0 0.0
  %3178 = vmatpush2.msra.mxu0 0.0
  %3179 = vmatprep.subr.mxu0 0.0
  %3180 = vmatpush2.msra.mxu0 0.0
  %3181 = vmatprep.mubr.f32.mxu0 0.0
  %v3182 = vand.u32 %v3111, 4294901760
  %v3183 = vsub.f32 %v3111, %v3182
  %v3184 = vand.u32 %v3183, 4294901760
  %v3185 = vsub.f32 %v3183, %v3184
  %v3186 = vand.u32 %v3185, 4294901760
  %3187 = vmatmul.mubr.f32.gmra.mxu0 %v3186
  %v3188 = vpop.f32.mrf.mxu0
  %v3189 = vadd.f32 %v2070, %v3188
  %v3190 = vpop.f32.mrf.mxu0
  %3191 = vdwg.mxu0
  %3192 = vmatprep.subr.mxu0 0.0
  %3193 = vmatpush1.msra.mxu0 0.0
  %3194 = vmatprep.subr.mxu0 0.0
  %3195 = vmatpush1.msra.mxu0 0.0
  %3196 = vmatprep.subr.mxu0 0.0
  %3197 = vmatpush1.msra.mxu0 0.0
  %3198 = vmatprep.subr.mxu0 0.0
  %3199 = vmatpush1.msra.mxu0 0.0
  %3200 = vmatprep.subr.mxu0 0.0
  %3201 = vmatpush1.msra.mxu0 0.0
  %3202 = vmatprep.subr.mxu0 0.0
  %3203 = vmatpush1.msra.mxu0 0.0
  %3204 = vmatprep.subr.mxu0 0.0
  %3205 = vmatpush1.msra.mxu0 0.0
  %3206 = vmatprep.subr.mxu0 0.0
  %3207 = vmatpush1.msra.mxu0 0.0
  %3208 = vmatprep.subr.mxu0 0.0
  %3209 = vmatpush1.msra.mxu0 0.0
  %3210 = vmatprep.subr.mxu0 0.0
  %3211 = vmatpush1.msra.mxu0 0.0
  %3212 = vmatprep.subr.mxu0 0.0
  %3213 = vmatpush1.msra.mxu0 0.0
  %3214 = vmatprep.subr.mxu0 0.0
  %3215 = vmatpush1.msra.mxu0 0.0
  %3216 = vmatprep.subr.mxu0 0.0
  %v3217 = vand.u32 %v2064, 4294901760
  %v3218 = vsub.f32 %v2064, %v3217
  %v3219 = vand.u32 %v3218, 4294901760
  %v3220 = vsub.f32 %v3218, %v3219
  %v3221 = vand.u32 %v3220, 4294901760
  %3222 = vmatpush1.msra.mxu0 %v3221
  %3223 = vmatprep.subr.mxu0 0.0
  %v3224 = vand.u32 %v2063, 4294901760
  %v3225 = vsub.f32 %v2063, %v3224
  %v3226 = vand.u32 %v3225, 4294901760
  %v3227 = vsub.f32 %v3225, %v3226
  %v3228 = vand.u32 %v3227, 4294901760
  %3229 = vmatpush1.msra.mxu0 %v3228
  %3230 = vmatprep.subr.mxu0 0.0
  %v3231 = vand.u32 %v2062, 4294901760
  %v3232 = vsub.f32 %v2062, %v3231
  %v3233 = vand.u32 %v3232, 4294901760
  %v3234 = vsub.f32 %v3232, %v3233
  %v3235 = vand.u32 %v3234, 4294901760
  %3236 = vmatpush1.msra.mxu0 %v3235
  %3237 = vmatprep.subr.mxu0 0.0
  %v3238 = vand.u32 %v2061, 4294901760
  %v3239 = vsub.f32 %v2061, %v3238
  %v3240 = vand.u32 %v3239, 4294901760
  %v3241 = vsub.f32 %v3239, %v3240
  %v3242 = vand.u32 %v3241, 4294901760
  %3243 = vmatpush1.msra.mxu0 %v3242
  %3244 = vmatprep.subr.mxu0 0.0
  %3245 = vmatpush2.msra.mxu0 0.0
  %3246 = vmatprep.subr.mxu0 0.0
  %3247 = vmatpush2.msra.mxu0 0.0
  %3248 = vmatprep.subr.mxu0 0.0
  %3249 = vmatpush2.msra.mxu0 0.0
  %3250 = vmatprep.subr.mxu0 0.0
  %3251 = vmatpush2.msra.mxu0 0.0
  %3252 = vmatprep.subr.mxu0 0.0
  %3253 = vmatpush2.msra.mxu0 0.0
  %3254 = vmatprep.subr.mxu0 0.0
  %3255 = vmatpush2.msra.mxu0 0.0
  %3256 = vmatprep.subr.mxu0 0.0
  %3257 = vmatpush2.msra.mxu0 0.0
  %3258 = vmatprep.subr.mxu0 0.0
  %3259 = vmatpush2.msra.mxu0 0.0
  %3260 = vmatprep.subr.mxu0 0.0
  %3261 = vmatpush2.msra.mxu0 0.0
  %3262 = vmatprep.subr.mxu0 0.0
  %3263 = vmatpush2.msra.mxu0 0.0
  %3264 = vmatprep.subr.mxu0 0.0
  %3265 = vmatpush2.msra.mxu0 0.0
  %3266 = vmatprep.subr.mxu0 0.0
  %3267 = vmatpush2.msra.mxu0 0.0
  %3268 = vmatprep.subr.mxu0 0.0
  %3269 = vmatpush2.msra.mxu0 0.0
  %3270 = vmatprep.subr.mxu0 0.0
  %3271 = vmatpush2.msra.mxu0 0.0
  %3272 = vmatprep.subr.mxu0 0.0
  %3273 = vmatpush2.msra.mxu0 0.0
  %3274 = vmatprep.subr.mxu0 0.0
  %3275 = vmatpush2.msra.mxu0 0.0
  %3276 = vmatprep.mubr.f32.mxu0 0.0
  %v3277 = vand.u32 %v3111, 4294901760
  %3278 = vmatmul.mubr.f32.gmra.mxu0 %v3277
  %v3279 = vpop.f32.mrf.mxu0
  %v3280 = vadd.f32 %v3189, %v3279
  %v3281 = vpop.f32.mrf.mxu0
  %3282 = vdwg.mxu0
  %3283 = vmatprep.subr.mxu0 0.0
  %3284 = vmatpush1.msra.mxu0 0.0
  %3285 = vmatprep.subr.mxu0 0.0
  %3286 = vmatpush1.msra.mxu0 0.0
  %3287 = vmatprep.subr.mxu0 0.0
  %3288 = vmatpush1.msra.mxu0 0.0
  %3289 = vmatprep.subr.mxu0 0.0
  %3290 = vmatpush1.msra.mxu0 0.0
  %3291 = vmatprep.subr.mxu0 0.0
  %3292 = vmatpush1.msra.mxu0 0.0
  %3293 = vmatprep.subr.mxu0 0.0
  %3294 = vmatpush1.msra.mxu0 0.0
  %3295 = vmatprep.subr.mxu0 0.0
  %3296 = vmatpush1.msra.mxu0 0.0
  %3297 = vmatprep.subr.mxu0 0.0
  %3298 = vmatpush1.msra.mxu0 0.0
  %3299 = vmatprep.subr.mxu0 0.0
  %3300 = vmatpush1.msra.mxu0 0.0
  %3301 = vmatprep.subr.mxu0 0.0
  %3302 = vmatpush1.msra.mxu0 0.0
  %3303 = vmatprep.subr.mxu0 0.0
  %3304 = vmatpush1.msra.mxu0 0.0
  %3305 = vmatprep.subr.mxu0 0.0
  %3306 = vmatpush1.msra.mxu0 0.0
  %3307 = vmatprep.subr.mxu0 0.0
  %v3308 = vand.u32 %v2064, 4294901760
  %v3309 = vsub.f32 %v2064, %v3308
  %3310 = vmatpush1.msra.mxu0 %v3309
  %3311 = vmatprep.subr.mxu0 0.0
  %v3312 = vand.u32 %v2063, 4294901760
  %v3313 = vsub.f32 %v2063, %v3312
  %3314 = vmatpush1.msra.mxu0 %v3313
  %3315 = vmatprep.subr.mxu0 0.0
  %v3316 = vand.u32 %v2062, 4294901760
  %v3317 = vsub.f32 %v2062, %v3316
  %3318 = vmatpush1.msra.mxu0 %v3317
  %3319 = vmatprep.subr.mxu0 0.0
  %v3320 = vand.u32 %v2061, 4294901760
  %v3321 = vsub.f32 %v2061, %v3320
  %3322 = vmatpush1.msra.mxu0 %v3321
  %3323 = vmatprep.subr.mxu0 0.0
  %3324 = vmatpush2.msra.mxu0 0.0
  %3325 = vmatprep.subr.mxu0 0.0
  %3326 = vmatpush2.msra.mxu0 0.0
  %3327 = vmatprep.subr.mxu0 0.0
  %3328 = vmatpush2.msra.mxu0 0.0
  %3329 = vmatprep.subr.mxu0 0.0
  %3330 = vmatpush2.msra.mxu0 0.0
  %3331 = vmatprep.subr.mxu0 0.0
  %3332 = vmatpush2.msra.mxu0 0.0
  %3333 = vmatprep.subr.mxu0 0.0
  %3334 = vmatpush2.msra.mxu0 0.0
  %3335 = vmatprep.subr.mxu0 0.0
  %3336 = vmatpush2.msra.mxu0 0.0
  %3337 = vmatprep.subr.mxu0 0.0
  %3338 = vmatpush2.msra.mxu0 0.0
  %3339 = vmatprep.subr.mxu0 0.0
  %3340 = vmatpush2.msra.mxu0 0.0
  %3341 = vmatprep.subr.mxu0 0.0
  %3342 = vmatpush2.msra.mxu0 0.0
  %3343 = vmatprep.subr.mxu0 0.0
  %3344 = vmatpush2.msra.mxu0 0.0
  %3345 = vmatprep.subr.mxu0 0.0
  %3346 = vmatpush2.msra.mxu0 0.0
  %3347 = vmatprep.subr.mxu0 0.0
  %3348 = vmatpush2.msra.mxu0 0.0
  %3349 = vmatprep.subr.mxu0 0.0
  %3350 = vmatpush2.msra.mxu0 0.0
  %3351 = vmatprep.subr.mxu0 0.0
  %3352 = vmatpush2.msra.mxu0 0.0
  %3353 = vmatprep.subr.mxu0 0.0
  %3354 = vmatpush2.msra.mxu0 0.0
  %3355 = vmatprep.mubr.f32.mxu0 0.0
  %v3356 = vand.u32 %v3111, 4294901760
  %v3357 = vsub.f32 %v3111, %v3356
  %3358 = vmatmul.mubr.f32.gmra.mxu0 %v3357
  %v3359 = vpop.f32.mrf.mxu0
  %v3360 = vadd.f32 %v3280, %v3359
  %v3361 = vpop.f32.mrf.mxu0
  %3362 = vdwg.mxu0
  %3363 = vmatprep.subr.mxu0 0.0
  %3364 = vmatpush1.msra.mxu0 0.0
  %3365 = vmatprep.subr.mxu0 0.0
  %3366 = vmatpush1.msra.mxu0 0.0
  %3367 = vmatprep.subr.mxu0 0.0
  %3368 = vmatpush1.msra.mxu0 0.0
  %3369 = vmatprep.subr.mxu0 0.0
  %3370 = vmatpush1.msra.mxu0 0.0
  %3371 = vmatprep.subr.mxu0 0.0
  %3372 = vmatpush1.msra.mxu0 0.0
  %3373 = vmatprep.subr.mxu0 0.0
  %3374 = vmatpush1.msra.mxu0 0.0
  %3375 = vmatprep.subr.mxu0 0.0
  %3376 = vmatpush1.msra.mxu0 0.0
  %3377 = vmatprep.subr.mxu0 0.0
  %3378 = vmatpush1.msra.mxu0 0.0
  %3379 = vmatprep.subr.mxu0 0.0
  %3380 = vmatpush1.msra.mxu0 0.0
  %3381 = vmatprep.subr.mxu0 0.0
  %3382 = vmatpush1.msra.mxu0 0.0
  %3383 = vmatprep.subr.mxu0 0.0
  %3384 = vmatpush1.msra.mxu0 0.0
  %3385 = vmatprep.subr.mxu0 0.0
  %3386 = vmatpush1.msra.mxu0 0.0
  %3387 = vmatprep.subr.mxu0 0.0
  %v3388 = vand.u32 %v2064, 4294901760
  %3389 = vmatpush1.msra.mxu0 %v3388
  %3390 = vmatprep.subr.mxu0 0.0
  %v3391 = vand.u32 %v2063, 4294901760
  %3392 = vmatpush1.msra.mxu0 %v3391
  %3393 = vmatprep.subr.mxu0 0.0
  %v3394 = vand.u32 %v2062, 4294901760
  %3395 = vmatpush1.msra.mxu0 %v3394
  %3396 = vmatprep.subr.mxu0 0.0
  %v3397 = vand.u32 %v2061, 4294901760
  %3398 = vmatpush1.msra.mxu0 %v3397
  %3399 = vmatprep.subr.mxu0 0.0
  %3400 = vmatpush2.msra.mxu0 0.0
  %3401 = vmatprep.subr.mxu0 0.0
  %3402 = vmatpush2.msra.mxu0 0.0
  %3403 = vmatprep.subr.mxu0 0.0
  %3404 = vmatpush2.msra.mxu0 0.0
  %3405 = vmatprep.subr.mxu0 0.0
  %3406 = vmatpush2.msra.mxu0 0.0
  %3407 = vmatprep.subr.mxu0 0.0
  %3408 = vmatpush2.msra.mxu0 0.0
  %3409 = vmatprep.subr.mxu0 0.0
  %3410 = vmatpush2.msra.mxu0 0.0
  %3411 = vmatprep.subr.mxu0 0.0
  %3412 = vmatpush2.msra.mxu0 0.0
  %3413 = vmatprep.subr.mxu0 0.0
  %3414 = vmatpush2.msra.mxu0 0.0
  %3415 = vmatprep.subr.mxu0 0.0
  %3416 = vmatpush2.msra.mxu0 0.0
  %3417 = vmatprep.subr.mxu0 0.0
  %3418 = vmatpush2.msra.mxu0 0.0
  %3419 = vmatprep.subr.mxu0 0.0
  %3420 = vmatpush2.msra.mxu0 0.0
  %3421 = vmatprep.subr.mxu0 0.0
  %3422 = vmatpush2.msra.mxu0 0.0
  %3423 = vmatprep.subr.mxu0 0.0
  %3424 = vmatpush2.msra.mxu0 0.0
  %3425 = vmatprep.subr.mxu0 0.0
  %3426 = vmatpush2.msra.mxu0 0.0
  %3427 = vmatprep.subr.mxu0 0.0
  %3428 = vmatpush2.msra.mxu0 0.0
  %3429 = vmatprep.subr.mxu0 0.0
  %3430 = vmatpush2.msra.mxu0 0.0
  %3431 = vmatprep.mubr.f32.mxu0 0.0
  %v3432 = vand.u32 %v3111, 4294901760
  %v3433 = vsub.f32 %v3111, %v3432
  %v3434 = vand.u32 %v3433, 4294901760
  %3435 = vmatmul.mubr.f32.gmra.mxu0 %v3434
  %v3436 = vpop.f32.mrf.mxu0
  %v3437 = vadd.f32 %v3360, %v3436
  %v3438 = vpop.f32.mrf.mxu0
  %3439 = vdwg.mxu0
  %3440 = vmatprep.subr.mxu0 0.0
  %3441 = vmatpush1.msra.mxu0 0.0
  %3442 = vmatprep.subr.mxu0 0.0
  %3443 = vmatpush1.msra.mxu0 0.0
  %3444 = vmatprep.subr.mxu0 0.0
  %3445 = vmatpush1.msra.mxu0 0.0
  %3446 = vmatprep.subr.mxu0 0.0
  %3447 = vmatpush1.msra.mxu0 0.0
  %3448 = vmatprep.subr.mxu0 0.0
  %3449 = vmatpush1.msra.mxu0 0.0
  %3450 = vmatprep.subr.mxu0 0.0
  %3451 = vmatpush1.msra.mxu0 0.0
  %3452 = vmatprep.subr.mxu0 0.0
  %3453 = vmatpush1.msra.mxu0 0.0
  %3454 = vmatprep.subr.mxu0 0.0
  %3455 = vmatpush1.msra.mxu0 0.0
  %3456 = vmatprep.subr.mxu0 0.0
  %3457 = vmatpush1.msra.mxu0 0.0
  %3458 = vmatprep.subr.mxu0 0.0
  %3459 = vmatpush1.msra.mxu0 0.0
  %3460 = vmatprep.subr.mxu0 0.0
  %3461 = vmatpush1.msra.mxu0 0.0
  %3462 = vmatprep.subr.mxu0 0.0
  %3463 = vmatpush1.msra.mxu0 0.0
  %3464 = vmatprep.subr.mxu0 0.0
  %v3465 = vand.u32 %v2064, 4294901760
  %v3466 = vsub.f32 %v2064, %v3465
  %v3467 = vand.u32 %v3466, 4294901760
  %3468 = vmatpush1.msra.mxu0 %v3467
  %3469 = vmatprep.subr.mxu0 0.0
  %v3470 = vand.u32 %v2063, 4294901760
  %v3471 = vsub.f32 %v2063, %v3470
  %v3472 = vand.u32 %v3471, 4294901760
  %3473 = vmatpush1.msra.mxu0 %v3472
  %3474 = vmatprep.subr.mxu0 0.0
  %v3475 = vand.u32 %v2062, 4294901760
  %v3476 = vsub.f32 %v2062, %v3475
  %v3477 = vand.u32 %v3476, 4294901760
  %3478 = vmatpush1.msra.mxu0 %v3477
  %3479 = vmatprep.subr.mxu0 0.0
  %v3480 = vand.u32 %v2061, 4294901760
  %v3481 = vsub.f32 %v2061, %v3480
  %v3482 = vand.u32 %v3481, 4294901760
  %3483 = vmatpush1.msra.mxu0 %v3482
  %3484 = vmatprep.subr.mxu0 0.0
  %3485 = vmatpush2.msra.mxu0 0.0
  %3486 = vmatprep.subr.mxu0 0.0
  %3487 = vmatpush2.msra.mxu0 0.0
  %3488 = vmatprep.subr.mxu0 0.0
  %3489 = vmatpush2.msra.mxu0 0.0
  %3490 = vmatprep.subr.mxu0 0.0
  %3491 = vmatpush2.msra.mxu0 0.0
  %3492 = vmatprep.subr.mxu0 0.0
  %3493 = vmatpush2.msra.mxu0 0.0
  %3494 = vmatprep.subr.mxu0 0.0
  %3495 = vmatpush2.msra.mxu0 0.0
  %3496 = vmatprep.subr.mxu0 0.0
  %3497 = vmatpush2.msra.mxu0 0.0
  %3498 = vmatprep.subr.mxu0 0.0
  %3499 = vmatpush2.msra.mxu0 0.0
  %3500 = vmatprep.subr.mxu0 0.0
  %3501 = vmatpush2.msra.mxu0 0.0
  %3502 = vmatprep.subr.mxu0 0.0
  %3503 = vmatpush2.msra.mxu0 0.0
  %3504 = vmatprep.subr.mxu0 0.0
  %3505 = vmatpush2.msra.mxu0 0.0
  %3506 = vmatprep.subr.mxu0 0.0
  %3507 = vmatpush2.msra.mxu0 0.0
  %3508 = vmatprep.subr.mxu0 0.0
  %3509 = vmatpush2.msra.mxu0 0.0
  %3510 = vmatprep.subr.mxu0 0.0
  %3511 = vmatpush2.msra.mxu0 0.0
  %3512 = vmatprep.subr.mxu0 0.0
  %3513 = vmatpush2.msra.mxu0 0.0
  %3514 = vmatprep.subr.mxu0 0.0
  %3515 = vmatpush2.msra.mxu0 0.0
  %3516 = vmatprep.mubr.f32.mxu0 0.0
  %v3517 = vand.u32 %v3111, 4294901760
  %3518 = vmatmul.mubr.f32.gmra.mxu0 %v3517
  %v3519 = vpop.f32.mrf.mxu0
  %v3520 = vadd.f32 %v3437, %v3519
  %v3521 = vpop.f32.mrf.mxu0
  %3522 = vdwg.mxu0
  %3523 = vmatprep.subr.mxu0 0.0
  %3524 = vmatpush1.msra.mxu0 0.0
  %3525 = vmatprep.subr.mxu0 0.0
  %3526 = vmatpush1.msra.mxu0 0.0
  %3527 = vmatprep.subr.mxu0 0.0
  %3528 = vmatpush1.msra.mxu0 0.0
  %3529 = vmatprep.subr.mxu0 0.0
  %3530 = vmatpush1.msra.mxu0 0.0
  %3531 = vmatprep.subr.mxu0 0.0
  %3532 = vmatpush1.msra.mxu0 0.0
  %3533 = vmatprep.subr.mxu0 0.0
  %3534 = vmatpush1.msra.mxu0 0.0
  %3535 = vmatprep.subr.mxu0 0.0
  %3536 = vmatpush1.msra.mxu0 0.0
  %3537 = vmatprep.subr.mxu0 0.0
  %3538 = vmatpush1.msra.mxu0 0.0
  %3539 = vmatprep.subr.mxu0 0.0
  %3540 = vmatpush1.msra.mxu0 0.0
  %3541 = vmatprep.subr.mxu0 0.0
  %3542 = vmatpush1.msra.mxu0 0.0
  %3543 = vmatprep.subr.mxu0 0.0
  %3544 = vmatpush1.msra.mxu0 0.0
  %3545 = vmatprep.subr.mxu0 0.0
  %3546 = vmatpush1.msra.mxu0 0.0
  %3547 = vmatprep.subr.mxu0 0.0
  %v3548 = vand.u32 %v2064, 4294901760
  %3549 = vmatpush1.msra.mxu0 %v3548
  %3550 = vmatprep.subr.mxu0 0.0
  %v3551 = vand.u32 %v2063, 4294901760
  %3552 = vmatpush1.msra.mxu0 %v3551
  %3553 = vmatprep.subr.mxu0 0.0
  %v3554 = vand.u32 %v2062, 4294901760
  %3555 = vmatpush1.msra.mxu0 %v3554
  %3556 = vmatprep.subr.mxu0 0.0
  %v3557 = vand.u32 %v2061, 4294901760
  %3558 = vmatpush1.msra.mxu0 %v3557
  %3559 = vmatprep.subr.mxu0 0.0
  %3560 = vmatpush2.msra.mxu0 0.0
  %3561 = vmatprep.subr.mxu0 0.0
  %3562 = vmatpush2.msra.mxu0 0.0
  %3563 = vmatprep.subr.mxu0 0.0
  %3564 = vmatpush2.msra.mxu0 0.0
  %3565 = vmatprep.subr.mxu0 0.0
  %3566 = vmatpush2.msra.mxu0 0.0
  %3567 = vmatprep.subr.mxu0 0.0
  %3568 = vmatpush2.msra.mxu0 0.0
  %3569 = vmatprep.subr.mxu0 0.0
  %3570 = vmatpush2.msra.mxu0 0.0
  %3571 = vmatprep.subr.mxu0 0.0
  %3572 = vmatpush2.msra.mxu0 0.0
  %3573 = vmatprep.subr.mxu0 0.0
  %3574 = vmatpush2.msra.mxu0 0.0
  %3575 = vmatprep.subr.mxu0 0.0
  %3576 = vmatpush2.msra.mxu0 0.0
  %3577 = vmatprep.subr.mxu0 0.0
  %3578 = vmatpush2.msra.mxu0 0.0
  %3579 = vmatprep.subr.mxu0 0.0
  %3580 = vmatpush2.msra.mxu0 0.0
  %3581 = vmatprep.subr.mxu0 0.0
  %3582 = vmatpush2.msra.mxu0 0.0
  %3583 = vmatprep.subr.mxu0 0.0
  %3584 = vmatpush2.msra.mxu0 0.0
  %3585 = vmatprep.subr.mxu0 0.0
  %3586 = vmatpush2.msra.mxu0 0.0
  %3587 = vmatprep.subr.mxu0 0.0
  %3588 = vmatpush2.msra.mxu0 0.0
  %3589 = vmatprep.subr.mxu0 0.0
  %3590 = vmatpush2.msra.mxu0 0.0
  %3591 = vmatprep.mubr.f32.mxu0 0.0
  %v3592 = vand.u32 %v3111, 4294901760
  %3593 = vmatmul.mubr.f32.gmra.mxu0 %v3592
  %v3594 = vpop.f32.mrf.mxu0
  %v3595 = vadd.f32 %v3520, %v3594
  %v3596 = vpop.f32.mrf.mxu0
  %3597 = vdwg.mxu0
  %v3598 = vadd.f32 %v3110, %v3595
  %v3599 = vxor.u32 %v3598, 2147483648
  %v3600 = vmul.f32 %v3599, 1.442695
  %v3601 = vpow.pop %v3600
  %v3602 = vadd.f32 %v3601, 1.0
  %v3603 = vrcp.pop %v3602
  %v3604 = vmul.f32 1.0, %v3603
  %3606 = vrot.lane.b32.xlu0 %v3595, 64
  %v3607 = vpop.permute.xlu0 %3606
  %v3609 = vmul.f32 %v3604, %v3607
  %3611 = vrot.lane.b32.xlu0 %v3609, 64
  %v3612 = vpop.permute.xlu0 %3611
  %v3614 = vadd.f32 %v3110, %v3612
  %v3615 = vtanh.pop %v3614
  %v3616 = vsub.f32 1.0, %v3604
  %3618 = vrot.lane.b32.xlu0 %v3615, 96
  %v3619 = vpop.permute.xlu0 %3618
  %v3621 = vmul.f32 %v3616, %v3619
  %v3622 = vmul.f32 %v3604, %v3104
  %v3623 = vadd.f32 %v3621, %v3622
  %3625 = vrot.lane.b32.xlu0 %v3623, 96
  %v3626 = vpop.permute.xlu0 %3625
  %3628 = vst.msk [vmem:[#allocation3 + $0x10] sm:$0xff] %vm2071, %v3626
  %v3629 = vld [vmem:[#allocation2 + $0x18] sm:$0xff]
  %v3630 = vsel %vm2071, %v3626, 0
  %3632 = vmatprep.subr.mxu0 0.0
  %3633 = vmatpush1.msra.mxu0 0.0
  %3634 = vmatprep.subr.mxu0 0.0
  %3635 = vmatpush1.msra.mxu0 0.0
  %3636 = vmatprep.subr.mxu0 0.0
  %3637 = vmatpush1.msra.mxu0 0.0
  %3638 = vmatprep.subr.mxu0 0.0
  %3639 = vmatpush1.msra.mxu0 0.0
  %3640 = vmatprep.subr.mxu0 0.0
  %3641 = vmatpush1.msra.mxu0 0.0
  %3642 = vmatprep.subr.mxu0 0.0
  %3643 = vmatpush1.msra.mxu0 0.0
  %3644 = vmatprep.subr.mxu0 0.0
  %3645 = vmatpush1.msra.mxu0 0.0
  %3646 = vmatprep.subr.mxu0 0.0
  %3647 = vmatpush1.msra.mxu0 0.0
  %3648 = vmatprep.subr.mxu0 0.0
  %3649 = vmatpush1.msra.mxu0 0.0
  %3650 = vmatprep.subr.mxu0 0.0
  %3651 = vmatpush1.msra.mxu0 0.0
  %3652 = vmatprep.subr.mxu0 0.0
  %3653 = vmatpush1.msra.mxu0 0.0
  %3654 = vmatprep.subr.mxu0 0.0
  %3655 = vmatpush1.msra.mxu0 0.0
  %3656 = vmatprep.subr.mxu0 0.0
  %v3657 = vand.u32 %v2064, 4294901760
  %3658 = vmatpush1.msra.mxu0 %v3657
  %3659 = vmatprep.subr.mxu0 0.0
  %v3660 = vand.u32 %v2063, 4294901760
  %3661 = vmatpush1.msra.mxu0 %v3660
  %3662 = vmatprep.subr.mxu0 0.0
  %v3663 = vand.u32 %v2062, 4294901760
  %3664 = vmatpush1.msra.mxu0 %v3663
  %3665 = vmatprep.subr.mxu0 0.0
  %v3666 = vand.u32 %v2061, 4294901760
  %3667 = vmatpush1.msra.mxu0 %v3666
  %3668 = vmatprep.subr.mxu0 0.0
  %3669 = vmatpush2.msra.mxu0 0.0
  %3670 = vmatprep.subr.mxu0 0.0
  %3671 = vmatpush2.msra.mxu0 0.0
  %3672 = vmatprep.subr.mxu0 0.0
  %3673 = vmatpush2.msra.mxu0 0.0
  %3674 = vmatprep.subr.mxu0 0.0
  %3675 = vmatpush2.msra.mxu0 0.0
  %3676 = vmatprep.subr.mxu0 0.0
  %3677 = vmatpush2.msra.mxu0 0.0
  %3678 = vmatprep.subr.mxu0 0.0
  %3679 = vmatpush2.msra.mxu0 0.0
  %3680 = vmatprep.subr.mxu0 0.0
  %3681 = vmatpush2.msra.mxu0 0.0
  %3682 = vmatprep.subr.mxu0 0.0
  %3683 = vmatpush2.msra.mxu0 0.0
  %3684 = vmatprep.subr.mxu0 0.0
  %3685 = vmatpush2.msra.mxu0 0.0
  %3686 = vmatprep.subr.mxu0 0.0
  %3687 = vmatpush2.msra.mxu0 0.0
  %3688 = vmatprep.subr.mxu0 0.0
  %3689 = vmatpush2.msra.mxu0 0.0
  %3690 = vmatprep.subr.mxu0 0.0
  %3691 = vmatpush2.msra.mxu0 0.0
  %3692 = vmatprep.subr.mxu0 0.0
  %3693 = vmatpush2.msra.mxu0 0.0
  %3694 = vmatprep.subr.mxu0 0.0
  %3695 = vmatpush2.msra.mxu0 0.0
  %3696 = vmatprep.subr.mxu0 0.0
  %3697 = vmatpush2.msra.mxu0 0.0
  %3698 = vmatprep.subr.mxu0 0.0
  %3699 = vmatpush2.msra.mxu0 0.0
  %3700 = vmatprep.mubr.f32.mxu0 0.0
  %v3701 = vand.u32 %v3630, 4294901760
  %v3702 = vsub.f32 %v3630, %v3701
  %v3703 = vand.u32 %v3702, 4294901760
  %v3704 = vsub.f32 %v3702, %v3703
  %v3705 = vand.u32 %v3704, 4294901760
  %3706 = vmatmul.mubr.f32.gmra.mxu0 %v3705
  %v3707 = vpop.f32.mrf.mxu0
  %v3708 = vadd.f32 %v2070, %v3707
  %v3709 = vpop.f32.mrf.mxu0
  %3710 = vdwg.mxu0
  %3711 = vmatprep.subr.mxu0 0.0
  %3712 = vmatpush1.msra.mxu0 0.0
  %3713 = vmatprep.subr.mxu0 0.0
  %3714 = vmatpush1.msra.mxu0 0.0
  %3715 = vmatprep.subr.mxu0 0.0
  %3716 = vmatpush1.msra.mxu0 0.0
  %3717 = vmatprep.subr.mxu0 0.0
  %3718 = vmatpush1.msra.mxu0 0.0
  %3719 = vmatprep.subr.mxu0 0.0
  %3720 = vmatpush1.msra.mxu0 0.0
  %3721 = vmatprep.subr.mxu0 0.0
  %3722 = vmatpush1.msra.mxu0 0.0
  %3723 = vmatprep.subr.mxu0 0.0
  %3724 = vmatpush1.msra.mxu0 0.0
  %3725 = vmatprep.subr.mxu0 0.0
  %3726 = vmatpush1.msra.mxu0 0.0
  %3727 = vmatprep.subr.mxu0 0.0
  %3728 = vmatpush1.msra.mxu0 0.0
  %3729 = vmatprep.subr.mxu0 0.0
  %3730 = vmatpush1.msra.mxu0 0.0
  %3731 = vmatprep.subr.mxu0 0.0
  %3732 = vmatpush1.msra.mxu0 0.0
  %3733 = vmatprep.subr.mxu0 0.0
  %3734 = vmatpush1.msra.mxu0 0.0
  %3735 = vmatprep.subr.mxu0 0.0
  %v3736 = vand.u32 %v2064, 4294901760
  %v3737 = vsub.f32 %v2064, %v3736
  %v3738 = vand.u32 %v3737, 4294901760
  %v3739 = vsub.f32 %v3737, %v3738
  %v3740 = vand.u32 %v3739, 4294901760
  %3741 = vmatpush1.msra.mxu0 %v3740
  %3742 = vmatprep.subr.mxu0 0.0
  %v3743 = vand.u32 %v2063, 4294901760
  %v3744 = vsub.f32 %v2063, %v3743
  %v3745 = vand.u32 %v3744, 4294901760
  %v3746 = vsub.f32 %v3744, %v3745
  %v3747 = vand.u32 %v3746, 4294901760
  %3748 = vmatpush1.msra.mxu0 %v3747
  %3749 = vmatprep.subr.mxu0 0.0
  %v3750 = vand.u32 %v2062, 4294901760
  %v3751 = vsub.f32 %v2062, %v3750
  %v3752 = vand.u32 %v3751, 4294901760
  %v3753 = vsub.f32 %v3751, %v3752
  %v3754 = vand.u32 %v3753, 4294901760
  %3755 = vmatpush1.msra.mxu0 %v3754
  %3756 = vmatprep.subr.mxu0 0.0
  %v3757 = vand.u32 %v2061, 4294901760
  %v3758 = vsub.f32 %v2061, %v3757
  %v3759 = vand.u32 %v3758, 4294901760
  %v3760 = vsub.f32 %v3758, %v3759
  %v3761 = vand.u32 %v3760, 4294901760
  %3762 = vmatpush1.msra.mxu0 %v3761
  %3763 = vmatprep.subr.mxu0 0.0
  %3764 = vmatpush2.msra.mxu0 0.0
  %3765 = vmatprep.subr.mxu0 0.0
  %3766 = vmatpush2.msra.mxu0 0.0
  %3767 = vmatprep.subr.mxu0 0.0
  %3768 = vmatpush2.msra.mxu0 0.0
  %3769 = vmatprep.subr.mxu0 0.0
  %3770 = vmatpush2.msra.mxu0 0.0
  %3771 = vmatprep.subr.mxu0 0.0
  %3772 = vmatpush2.msra.mxu0 0.0
  %3773 = vmatprep.subr.mxu0 0.0
  %3774 = vmatpush2.msra.mxu0 0.0
  %3775 = vmatprep.subr.mxu0 0.0
  %3776 = vmatpush2.msra.mxu0 0.0
  %3777 = vmatprep.subr.mxu0 0.0
  %3778 = vmatpush2.msra.mxu0 0.0
  %3779 = vmatprep.subr.mxu0 0.0
  %3780 = vmatpush2.msra.mxu0 0.0
  %3781 = vmatprep.subr.mxu0 0.0
  %3782 = vmatpush2.msra.mxu0 0.0
  %3783 = vmatprep.subr.mxu0 0.0
  %3784 = vmatpush2.msra.mxu0 0.0
  %3785 = vmatprep.subr.mxu0 0.0
  %3786 = vmatpush2.msra.mxu0 0.0
  %3787 = vmatprep.subr.mxu0 0.0
  %3788 = vmatpush2.msra.mxu0 0.0
  %3789 = vmatprep.subr.mxu0 0.0
  %3790 = vmatpush2.msra.mxu0 0.0
  %3791 = vmatprep.subr.mxu0 0.0
  %3792 = vmatpush2.msra.mxu0 0.0
  %3793 = vmatprep.subr.mxu0 0.0
  %3794 = vmatpush2.msra.mxu0 0.0
  %3795 = vmatprep.mubr.f32.mxu0 0.0
  %v3796 = vand.u32 %v3630, 4294901760
  %3797 = vmatmul.mubr.f32.gmra.mxu0 %v3796
  %v3798 = vpop.f32.mrf.mxu0
  %v3799 = vadd.f32 %v3708, %v3798
  %v3800 = vpop.f32.mrf.mxu0
  %3801 = vdwg.mxu0
  %3802 = vmatprep.subr.mxu0 0.0
  %3803 = vmatpush1.msra.mxu0 0.0
  %3804 = vmatprep.subr.mxu0 0.0
  %3805 = vmatpush1.msra.mxu0 0.0
  %3806 = vmatprep.subr.mxu0 0.0
  %3807 = vmatpush1.msra.mxu0 0.0
  %3808 = vmatprep.subr.mxu0 0.0
  %3809 = vmatpush1.msra.mxu0 0.0
  %3810 = vmatprep.subr.mxu0 0.0
  %3811 = vmatpush1.msra.mxu0 0.0
  %3812 = vmatprep.subr.mxu0 0.0
  %3813 = vmatpush1.msra.mxu0 0.0
  %3814 = vmatprep.subr.mxu0 0.0
  %3815 = vmatpush1.msra.mxu0 0.0
  %3816 = vmatprep.subr.mxu0 0.0
  %3817 = vmatpush1.msra.mxu0 0.0
  %3818 = vmatprep.subr.mxu0 0.0
  %3819 = vmatpush1.msra.mxu0 0.0
  %3820 = vmatprep.subr.mxu0 0.0
  %3821 = vmatpush1.msra.mxu0 0.0
  %3822 = vmatprep.subr.mxu0 0.0
  %3823 = vmatpush1.msra.mxu0 0.0
  %3824 = vmatprep.subr.mxu0 0.0
  %3825 = vmatpush1.msra.mxu0 0.0
  %3826 = vmatprep.subr.mxu0 0.0
  %v3827 = vand.u32 %v2064, 4294901760
  %v3828 = vsub.f32 %v2064, %v3827
  %3829 = vmatpush1.msra.mxu0 %v3828
  %3830 = vmatprep.subr.mxu0 0.0
  %v3831 = vand.u32 %v2063, 4294901760
  %v3832 = vsub.f32 %v2063, %v3831
  %3833 = vmatpush1.msra.mxu0 %v3832
  %3834 = vmatprep.subr.mxu0 0.0
  %v3835 = vand.u32 %v2062, 4294901760
  %v3836 = vsub.f32 %v2062, %v3835
  %3837 = vmatpush1.msra.mxu0 %v3836
  %3838 = vmatprep.subr.mxu0 0.0
  %v3839 = vand.u32 %v2061, 4294901760
  %v3840 = vsub.f32 %v2061, %v3839
  %3841 = vmatpush1.msra.mxu0 %v3840
  %3842 = vmatprep.subr.mxu0 0.0
  %3843 = vmatpush2.msra.mxu0 0.0
  %3844 = vmatprep.subr.mxu0 0.0
  %3845 = vmatpush2.msra.mxu0 0.0
  %3846 = vmatprep.subr.mxu0 0.0
  %3847 = vmatpush2.msra.mxu0 0.0
  %3848 = vmatprep.subr.mxu0 0.0
  %3849 = vmatpush2.msra.mxu0 0.0
  %3850 = vmatprep.subr.mxu0 0.0
  %3851 = vmatpush2.msra.mxu0 0.0
  %3852 = vmatprep.subr.mxu0 0.0
  %3853 = vmatpush2.msra.mxu0 0.0
  %3854 = vmatprep.subr.mxu0 0.0
  %3855 = vmatpush2.msra.mxu0 0.0
  %3856 = vmatprep.subr.mxu0 0.0
  %3857 = vmatpush2.msra.mxu0 0.0
  %3858 = vmatprep.subr.mxu0 0.0
  %3859 = vmatpush2.msra.mxu0 0.0
  %3860 = vmatprep.subr.mxu0 0.0
  %3861 = vmatpush2.msra.mxu0 0.0
  %3862 = vmatprep.subr.mxu0 0.0
  %3863 = vmatpush2.msra.mxu0 0.0
  %3864 = vmatprep.subr.mxu0 0.0
  %3865 = vmatpush2.msra.mxu0 0.0
  %3866 = vmatprep.subr.mxu0 0.0
  %3867 = vmatpush2.msra.mxu0 0.0
  %3868 = vmatprep.subr.mxu0 0.0
  %3869 = vmatpush2.msra.mxu0 0.0
  %3870 = vmatprep.subr.mxu0 0.0
  %3871 = vmatpush2.msra.mxu0 0.0
  %3872 = vmatprep.subr.mxu0 0.0
  %3873 = vmatpush2.msra.mxu0 0.0
  %3874 = vmatprep.mubr.f32.mxu0 0.0
  %v3875 = vand.u32 %v3630, 4294901760
  %v3876 = vsub.f32 %v3630, %v3875
  %3877 = vmatmul.mubr.f32.gmra.mxu0 %v3876
  %v3878 = vpop.f32.mrf.mxu0
  %v3879 = vadd.f32 %v3799, %v3878
  %v3880 = vpop.f32.mrf.mxu0
  %3881 = vdwg.mxu0
  %3882 = vmatprep.subr.mxu0 0.0
  %3883 = vmatpush1.msra.mxu0 0.0
  %3884 = vmatprep.subr.mxu0 0.0
  %3885 = vmatpush1.msra.mxu0 0.0
  %3886 = vmatprep.subr.mxu0 0.0
  %3887 = vmatpush1.msra.mxu0 0.0
  %3888 = vmatprep.subr.mxu0 0.0
  %3889 = vmatpush1.msra.mxu0 0.0
  %3890 = vmatprep.subr.mxu0 0.0
  %3891 = vmatpush1.msra.mxu0 0.0
  %3892 = vmatprep.subr.mxu0 0.0
  %3893 = vmatpush1.msra.mxu0 0.0
  %3894 = vmatprep.subr.mxu0 0.0
  %3895 = vmatpush1.msra.mxu0 0.0
  %3896 = vmatprep.subr.mxu0 0.0
  %3897 = vmatpush1.msra.mxu0 0.0
  %3898 = vmatprep.subr.mxu0 0.0
  %3899 = vmatpush1.msra.mxu0 0.0
  %3900 = vmatprep.subr.mxu0 0.0
  %3901 = vmatpush1.msra.mxu0 0.0
  %3902 = vmatprep.subr.mxu0 0.0
  %3903 = vmatpush1.msra.mxu0 0.0
  %3904 = vmatprep.subr.mxu0 0.0
  %3905 = vmatpush1.msra.mxu0 0.0
  %3906 = vmatprep.subr.mxu0 0.0
  %v3907 = vand.u32 %v2064, 4294901760
  %3908 = vmatpush1.msra.mxu0 %v3907
  %3909 = vmatprep.subr.mxu0 0.0
  %v3910 = vand.u32 %v2063, 4294901760
  %3911 = vmatpush1.msra.mxu0 %v3910
  %3912 = vmatprep.subr.mxu0 0.0
  %v3913 = vand.u32 %v2062, 4294901760
  %3914 = vmatpush1.msra.mxu0 %v3913
  %3915 = vmatprep.subr.mxu0 0.0
  %v3916 = vand.u32 %v2061, 4294901760
  %3917 = vmatpush1.msra.mxu0 %v3916
  %3918 = vmatprep.subr.mxu0 0.0
  %3919 = vmatpush2.msra.mxu0 0.0
  %3920 = vmatprep.subr.mxu0 0.0
  %3921 = vmatpush2.msra.mxu0 0.0
  %3922 = vmatprep.subr.mxu0 0.0
  %3923 = vmatpush2.msra.mxu0 0.0
  %3924 = vmatprep.subr.mxu0 0.0
  %3925 = vmatpush2.msra.mxu0 0.0
  %3926 = vmatprep.subr.mxu0 0.0
  %3927 = vmatpush2.msra.mxu0 0.0
  %3928 = vmatprep.subr.mxu0 0.0
  %3929 = vmatpush2.msra.mxu0 0.0
  %3930 = vmatprep.subr.mxu0 0.0
  %3931 = vmatpush2.msra.mxu0 0.0
  %3932 = vmatprep.subr.mxu0 0.0
  %3933 = vmatpush2.msra.mxu0 0.0
  %3934 = vmatprep.subr.mxu0 0.0
  %3935 = vmatpush2.msra.mxu0 0.0
  %3936 = vmatprep.subr.mxu0 0.0
  %3937 = vmatpush2.msra.mxu0 0.0
  %3938 = vmatprep.subr.mxu0 0.0
  %3939 = vmatpush2.msra.mxu0 0.0
  %3940 = vmatprep.subr.mxu0 0.0
  %3941 = vmatpush2.msra.mxu0 0.0
  %3942 = vmatprep.subr.mxu0 0.0
  %3943 = vmatpush2.msra.mxu0 0.0
  %3944 = vmatprep.subr.mxu0 0.0
  %3945 = vmatpush2.msra.mxu0 0.0
  %3946 = vmatprep.subr.mxu0 0.0
  %3947 = vmatpush2.msra.mxu0 0.0
  %3948 = vmatprep.subr.mxu0 0.0
  %3949 = vmatpush2.msra.mxu0 0.0
  %3950 = vmatprep.mubr.f32.mxu0 0.0
  %v3951 = vand.u32 %v3630, 4294901760
  %v3952 = vsub.f32 %v3630, %v3951
  %v3953 = vand.u32 %v3952, 4294901760
  %3954 = vmatmul.mubr.f32.gmra.mxu0 %v3953
  %v3955 = vpop.f32.mrf.mxu0
  %v3956 = vadd.f32 %v3879, %v3955
  %v3957 = vpop.f32.mrf.mxu0
  %3958 = vdwg.mxu0
  %3959 = vmatprep.subr.mxu0 0.0
  %3960 = vmatpush1.msra.mxu0 0.0
  %3961 = vmatprep.subr.mxu0 0.0
  %3962 = vmatpush1.msra.mxu0 0.0
  %3963 = vmatprep.subr.mxu0 0.0
  %3964 = vmatpush1.msra.mxu0 0.0
  %3965 = vmatprep.subr.mxu0 0.0
  %3966 = vmatpush1.msra.mxu0 0.0
  %3967 = vmatprep.subr.mxu0 0.0
  %3968 = vmatpush1.msra.mxu0 0.0
  %3969 = vmatprep.subr.mxu0 0.0
  %3970 = vmatpush1.msra.mxu0 0.0
  %3971 = vmatprep.subr.mxu0 0.0
  %3972 = vmatpush1.msra.mxu0 0.0
  %3973 = vmatprep.subr.mxu0 0.0
  %3974 = vmatpush1.msra.mxu0 0.0
  %3975 = vmatprep.subr.mxu0 0.0
  %3976 = vmatpush1.msra.mxu0 0.0
  %3977 = vmatprep.subr.mxu0 0.0
  %3978 = vmatpush1.msra.mxu0 0.0
  %3979 = vmatprep.subr.mxu0 0.0
  %3980 = vmatpush1.msra.mxu0 0.0
  %3981 = vmatprep.subr.mxu0 0.0
  %3982 = vmatpush1.msra.mxu0 0.0
  %3983 = vmatprep.subr.mxu0 0.0
  %v3984 = vand.u32 %v2064, 4294901760
  %v3985 = vsub.f32 %v2064, %v3984
  %v3986 = vand.u32 %v3985, 4294901760
  %3987 = vmatpush1.msra.mxu0 %v3986
  %3988 = vmatprep.subr.mxu0 0.0
  %v3989 = vand.u32 %v2063, 4294901760
  %v3990 = vsub.f32 %v2063, %v3989
  %v3991 = vand.u32 %v3990, 4294901760
  %3992 = vmatpush1.msra.mxu0 %v3991
  %3993 = vmatprep.subr.mxu0 0.0
  %v3994 = vand.u32 %v2062, 4294901760
  %v3995 = vsub.f32 %v2062, %v3994
  %v3996 = vand.u32 %v3995, 4294901760
  %3997 = vmatpush1.msra.mxu0 %v3996
  %3998 = vmatprep.subr.mxu0 0.0
  %v3999 = vand.u32 %v2061, 4294901760
  %v4000 = vsub.f32 %v2061, %v3999
  %v4001 = vand.u32 %v4000, 4294901760
  %4002 = vmatpush1.msra.mxu0 %v4001
  %4003 = vmatprep.subr.mxu0 0.0
  %4004 = vmatpush2.msra.mxu0 0.0
  %4005 = vmatprep.subr.mxu0 0.0
  %4006 = vmatpush2.msra.mxu0 0.0
  %4007 = vmatprep.subr.mxu0 0.0
  %4008 = vmatpush2.msra.mxu0 0.0
  %4009 = vmatprep.subr.mxu0 0.0
  %4010 = vmatpush2.msra.mxu0 0.0
  %4011 = vmatprep.subr.mxu0 0.0
  %4012 = vmatpush2.msra.mxu0 0.0
  %4013 = vmatprep.subr.mxu0 0.0
  %4014 = vmatpush2.msra.mxu0 0.0
  %4015 = vmatprep.subr.mxu0 0.0
  %4016 = vmatpush2.msra.mxu0 0.0
  %4017 = vmatprep.subr.mxu0 0.0
  %4018 = vmatpush2.msra.mxu0 0.0
  %4019 = vmatprep.subr.mxu0 0.0
  %4020 = vmatpush2.msra.mxu0 0.0
  %4021 = vmatprep.subr.mxu0 0.0
  %4022 = vmatpush2.msra.mxu0 0.0
  %4023 = vmatprep.subr.mxu0 0.0
  %4024 = vmatpush2.msra.mxu0 0.0
  %4025 = vmatprep.subr.mxu0 0.0
  %4026 = vmatpush2.msra.mxu0 0.0
  %4027 = vmatprep.subr.mxu0 0.0
  %4028 = vmatpush2.msra.mxu0 0.0
  %4029 = vmatprep.subr.mxu0 0.0
  %4030 = vmatpush2.msra.mxu0 0.0
  %4031 = vmatprep.subr.mxu0 0.0
  %4032 = vmatpush2.msra.mxu0 0.0
  %4033 = vmatprep.subr.mxu0 0.0
  %4034 = vmatpush2.msra.mxu0 0.0
  %4035 = vmatprep.mubr.f32.mxu0 0.0
  %v4036 = vand.u32 %v3630, 4294901760
  %4037 = vmatmul.mubr.f32.gmra.mxu0 %v4036
  %v4038 = vpop.f32.mrf.mxu0
  %v4039 = vadd.f32 %v3956, %v4038
  %v4040 = vpop.f32.mrf.mxu0
  %4041 = vdwg.mxu0
  %4042 = vmatprep.subr.mxu0 0.0
  %4043 = vmatpush1.msra.mxu0 0.0
  %4044 = vmatprep.subr.mxu0 0.0
  %4045 = vmatpush1.msra.mxu0 0.0
  %4046 = vmatprep.subr.mxu0 0.0
  %4047 = vmatpush1.msra.mxu0 0.0
  %4048 = vmatprep.subr.mxu0 0.0
  %4049 = vmatpush1.msra.mxu0 0.0
  %4050 = vmatprep.subr.mxu0 0.0
  %4051 = vmatpush1.msra.mxu0 0.0
  %4052 = vmatprep.subr.mxu0 0.0
  %4053 = vmatpush1.msra.mxu0 0.0
  %4054 = vmatprep.subr.mxu0 0.0
  %4055 = vmatpush1.msra.mxu0 0.0
  %4056 = vmatprep.subr.mxu0 0.0
  %4057 = vmatpush1.msra.mxu0 0.0
  %4058 = vmatprep.subr.mxu0 0.0
  %4059 = vmatpush1.msra.mxu0 0.0
  %4060 = vmatprep.subr.mxu0 0.0
  %4061 = vmatpush1.msra.mxu0 0.0
  %4062 = vmatprep.subr.mxu0 0.0
  %4063 = vmatpush1.msra.mxu0 0.0
  %4064 = vmatprep.subr.mxu0 0.0
  %4065 = vmatpush1.msra.mxu0 0.0
  %4066 = vmatprep.subr.mxu0 0.0
  %v4067 = vand.u32 %v2064, 4294901760
  %4068 = vmatpush1.msra.mxu0 %v4067
  %4069 = vmatprep.subr.mxu0 0.0
  %v4070 = vand.u32 %v2063, 4294901760
  %4071 = vmatpush1.msra.mxu0 %v4070
  %4072 = vmatprep.subr.mxu0 0.0
  %v4073 = vand.u32 %v2062, 4294901760
  %4074 = vmatpush1.msra.mxu0 %v4073
  %4075 = vmatprep.subr.mxu0 0.0
  %v4076 = vand.u32 %v2061, 4294901760
  %4077 = vmatpush1.msra.mxu0 %v4076
  %4078 = vmatprep.subr.mxu0 0.0
  %4079 = vmatpush2.msra.mxu0 0.0
  %4080 = vmatprep.subr.mxu0 0.0
  %4081 = vmatpush2.msra.mxu0 0.0
  %4082 = vmatprep.subr.mxu0 0.0
  %4083 = vmatpush2.msra.mxu0 0.0
  %4084 = vmatprep.subr.mxu0 0.0
  %4085 = vmatpush2.msra.mxu0 0.0
  %4086 = vmatprep.subr.mxu0 0.0
  %4087 = vmatpush2.msra.mxu0 0.0
  %4088 = vmatprep.subr.mxu0 0.0
  %4089 = vmatpush2.msra.mxu0 0.0
  %4090 = vmatprep.subr.mxu0 0.0
  %4091 = vmatpush2.msra.mxu0 0.0
  %4092 = vmatprep.subr.mxu0 0.0
  %4093 = vmatpush2.msra.mxu0 0.0
  %4094 = vmatprep.subr.mxu0 0.0
  %4095 = vmatpush2.msra.mxu0 0.0
  %4096 = vmatprep.subr.mxu0 0.0
  %4097 = vmatpush2.msra.mxu0 0.0
  %4098 = vmatprep.subr.mxu0 0.0
  %4099 = vmatpush2.msra.mxu0 0.0
  %4100 = vmatprep.subr.mxu0 0.0
  %4101 = vmatpush2.msra.mxu0 0.0
  %4102 = vmatprep.subr.mxu0 0.0
  %4103 = vmatpush2.msra.mxu0 0.0
  %4104 = vmatprep.subr.mxu0 0.0
  %4105 = vmatpush2.msra.mxu0 0.0
  %4106 = vmatprep.subr.mxu0 0.0
  %4107 = vmatpush2.msra.mxu0 0.0
  %4108 = vmatprep.subr.mxu0 0.0
  %4109 = vmatpush2.msra.mxu0 0.0
  %4110 = vmatprep.mubr.f32.mxu0 0.0
  %v4111 = vand.u32 %v3630, 4294901760
  %4112 = vmatmul.mubr.f32.gmra.mxu0 %v4111
  %v4113 = vpop.f32.mrf.mxu0
  %v4114 = vadd.f32 %v4039, %v4113
  %v4115 = vpop.f32.mrf.mxu0
  %4116 = vdwg.mxu0
  %v4117 = vadd.f32 %v3629, %v4114
  %v4118 = vxor.u32 %v4117, 2147483648
  %v4119 = vmul.f32 %v4118, 1.442695
  %v4120 = vpow.pop %v4119
  %v4121 = vadd.f32 %v4120, 1.0
  %v4122 = vrcp.pop %v4121
  %v4123 = vmul.f32 1.0, %v4122
  %4125 = vrot.lane.b32.xlu0 %v4114, 64
  %v4126 = vpop.permute.xlu0 %4125
  %v4128 = vmul.f32 %v4123, %v4126
  %4130 = vrot.lane.b32.xlu0 %v4128, 64
  %v4131 = vpop.permute.xlu0 %4130
  %v4133 = vadd.f32 %v3629, %v4131
  %v4134 = vtanh.pop %v4133
  %v4135 = vsub.f32 1.0, %v4123
  %4137 = vrot.lane.b32.xlu0 %v4134, 96
  %v4138 = vpop.permute.xlu0 %4137
  %v4140 = vmul.f32 %v4135, %v4138
  %v4141 = vmul.f32 %v4123, %v3623
  %v4142 = vadd.f32 %v4140, %v4141
  %4144 = vrot.lane.b32.xlu0 %v4142, 96
  %v4145 = vpop.permute.xlu0 %4144
  %4147 = vst.msk [vmem:[#allocation3 + $0x18] sm:$0xff] %vm2071, %v4145
  %v4148 = vld [vmem:[#allocation2 + $0x20] sm:$0xff]
  %v4149 = vsel %vm2071, %v4145, 0
  %4151 = vmatprep.subr.mxu0 0.0
  %4152 = vmatpush1.msra.mxu0 0.0
  %4153 = vmatprep.subr.mxu0 0.0
  %4154 = vmatpush1.msra.mxu0 0.0
  %4155 = vmatprep.subr.mxu0 0.0
  %4156 = vmatpush1.msra.mxu0 0.0
  %4157 = vmatprep.subr.mxu0 0.0
  %4158 = vmatpush1.msra.mxu0 0.0
  %4159 = vmatprep.subr.mxu0 0.0
  %4160 = vmatpush1.msra.mxu0 0.0
  %4161 = vmatprep.subr.mxu0 0.0
  %4162 = vmatpush1.msra.mxu0 0.0
  %4163 = vmatprep.subr.mxu0 0.0
  %4164 = vmatpush1.msra.mxu0 0.0
  %4165 = vmatprep.subr.mxu0 0.0
  %4166 = vmatpush1.msra.mxu0 0.0
  %4167 = vmatprep.subr.mxu0 0.0
  %4168 = vmatpush1.msra.mxu0 0.0
  %4169 = vmatprep.subr.mxu0 0.0
  %4170 = vmatpush1.msra.mxu0 0.0
  %4171 = vmatprep.subr.mxu0 0.0
  %4172 = vmatpush1.msra.mxu0 0.0
  %4173 = vmatprep.subr.mxu0 0.0
  %4174 = vmatpush1.msra.mxu0 0.0
  %4175 = vmatprep.subr.mxu0 0.0
  %v4176 = vand.u32 %v2064, 4294901760
  %4177 = vmatpush1.msra.mxu0 %v4176
  %4178 = vmatprep.subr.mxu0 0.0
  %v4179 = vand.u32 %v2063, 4294901760
  %4180 = vmatpush1.msra.mxu0 %v4179
  %4181 = vmatprep.subr.mxu0 0.0
  %v4182 = vand.u32 %v2062, 4294901760
  %4183 = vmatpush1.msra.mxu0 %v4182
  %4184 = vmatprep.subr.mxu0 0.0
  %v4185 = vand.u32 %v2061, 4294901760
  %4186 = vmatpush1.msra.mxu0 %v4185
  %4187 = vmatprep.subr.mxu0 0.0
  %4188 = vmatpush2.msra.mxu0 0.0
  %4189 = vmatprep.subr.mxu0 0.0
  %4190 = vmatpush2.msra.mxu0 0.0
  %4191 = vmatprep.subr.mxu0 0.0
  %4192 = vmatpush2.msra.mxu0 0.0
  %4193 = vmatprep.subr.mxu0 0.0
  %4194 = vmatpush2.msra.mxu0 0.0
  %4195 = vmatprep.subr.mxu0 0.0
  %4196 = vmatpush2.msra.mxu0 0.0
  %4197 = vmatprep.subr.mxu0 0.0
  %4198 = vmatpush2.msra.mxu0 0.0
  %4199 = vmatprep.subr.mxu0 0.0
  %4200 = vmatpush2.msra.mxu0 0.0
  %4201 = vmatprep.subr.mxu0 0.0
  %4202 = vmatpush2.msra.mxu0 0.0
  %4203 = vmatprep.subr.mxu0 0.0
  %4204 = vmatpush2.msra.mxu0 0.0
  %4205 = vmatprep.subr.mxu0 0.0
  %4206 = vmatpush2.msra.mxu0 0.0
  %4207 = vmatprep.subr.mxu0 0.0
  %4208 = vmatpush2.msra.mxu0 0.0
  %4209 = vmatprep.subr.mxu0 0.0
  %4210 = vmatpush2.msra.mxu0 0.0
  %4211 = vmatprep.subr.mxu0 0.0
  %4212 = vmatpush2.msra.mxu0 0.0
  %4213 = vmatprep.subr.mxu0 0.0
  %4214 = vmatpush2.msra.mxu0 0.0
  %4215 = vmatprep.subr.mxu0 0.0
  %4216 = vmatpush2.msra.mxu0 0.0
  %4217 = vmatprep.subr.mxu0 0.0
  %4218 = vmatpush2.msra.mxu0 0.0
  %4219 = vmatprep.mubr.f32.mxu0 0.0
  %v4220 = vand.u32 %v4149, 4294901760
  %v4221 = vsub.f32 %v4149, %v4220
  %v4222 = vand.u32 %v4221, 4294901760
  %v4223 = vsub.f32 %v4221, %v4222
  %v4224 = vand.u32 %v4223, 4294901760
  %4225 = vmatmul.mubr.f32.gmra.mxu0 %v4224
  %v4226 = vpop.f32.mrf.mxu0
  %v4227 = vadd.f32 %v2070, %v4226
  %v4228 = vpop.f32.mrf.mxu0
  %4229 = vdwg.mxu0
  %4230 = vmatprep.subr.mxu0 0.0
  %4231 = vmatpush1.msra.mxu0 0.0
  %4232 = vmatprep.subr.mxu0 0.0
  %4233 = vmatpush1.msra.mxu0 0.0
  %4234 = vmatprep.subr.mxu0 0.0
  %4235 = vmatpush1.msra.mxu0 0.0
  %4236 = vmatprep.subr.mxu0 0.0
  %4237 = vmatpush1.msra.mxu0 0.0
  %4238 = vmatprep.subr.mxu0 0.0
  %4239 = vmatpush1.msra.mxu0 0.0
  %4240 = vmatprep.subr.mxu0 0.0
  %4241 = vmatpush1.msra.mxu0 0.0
  %4242 = vmatprep.subr.mxu0 0.0
  %4243 = vmatpush1.msra.mxu0 0.0
  %4244 = vmatprep.subr.mxu0 0.0
  %4245 = vmatpush1.msra.mxu0 0.0
  %4246 = vmatprep.subr.mxu0 0.0
  %4247 = vmatpush1.msra.mxu0 0.0
  %4248 = vmatprep.subr.mxu0 0.0
  %4249 = vmatpush1.msra.mxu0 0.0
  %4250 = vmatprep.subr.mxu0 0.0
  %4251 = vmatpush1.msra.mxu0 0.0
  %4252 = vmatprep.subr.mxu0 0.0
  %4253 = vmatpush1.msra.mxu0 0.0
  %4254 = vmatprep.subr.mxu0 0.0
  %v4255 = vand.u32 %v2064, 4294901760
  %v4256 = vsub.f32 %v2064, %v4255
  %v4257 = vand.u32 %v4256, 4294901760
  %v4258 = vsub.f32 %v4256, %v4257
  %v4259 = vand.u32 %v4258, 4294901760
  %4260 = vmatpush1.msra.mxu0 %v4259
  %4261 = vmatprep.subr.mxu0 0.0
  %v4262 = vand.u32 %v2063, 4294901760
  %v4263 = vsub.f32 %v2063, %v4262
  %v4264 = vand.u32 %v4263, 4294901760
  %v4265 = vsub.f32 %v4263, %v4264
  %v4266 = vand.u32 %v4265, 4294901760
  %4267 = vmatpush1.msra.mxu0 %v4266
  %4268 = vmatprep.subr.mxu0 0.0
  %v4269 = vand.u32 %v2062, 4294901760
  %v4270 = vsub.f32 %v2062, %v4269
  %v4271 = vand.u32 %v4270, 4294901760
  %v4272 = vsub.f32 %v4270, %v4271
  %v4273 = vand.u32 %v4272, 4294901760
  %4274 = vmatpush1.msra.mxu0 %v4273
  %4275 = vmatprep.subr.mxu0 0.0
  %v4276 = vand.u32 %v2061, 4294901760
  %v4277 = vsub.f32 %v2061, %v4276
  %v4278 = vand.u32 %v4277, 4294901760
  %v4279 = vsub.f32 %v4277, %v4278
  %v4280 = vand.u32 %v4279, 4294901760
  %4281 = vmatpush1.msra.mxu0 %v4280
  %4282 = vmatprep.subr.mxu0 0.0
  %4283 = vmatpush2.msra.mxu0 0.0
  %4284 = vmatprep.subr.mxu0 0.0
  %4285 = vmatpush2.msra.mxu0 0.0
  %4286 = vmatprep.subr.mxu0 0.0
  %4287 = vmatpush2.msra.mxu0 0.0
  %4288 = vmatprep.subr.mxu0 0.0
  %4289 = vmatpush2.msra.mxu0 0.0
  %4290 = vmatprep.subr.mxu0 0.0
  %4291 = vmatpush2.msra.mxu0 0.0
  %4292 = vmatprep.subr.mxu0 0.0
  %4293 = vmatpush2.msra.mxu0 0.0
  %4294 = vmatprep.subr.mxu0 0.0
  %4295 = vmatpush2.msra.mxu0 0.0
  %4296 = vmatprep.subr.mxu0 0.0
  %4297 = vmatpush2.msra.mxu0 0.0
  %4298 = vmatprep.subr.mxu0 0.0
  %4299 = vmatpush2.msra.mxu0 0.0
  %4300 = vmatprep.subr.mxu0 0.0
  %4301 = vmatpush2.msra.mxu0 0.0
  %4302 = vmatprep.subr.mxu0 0.0
  %4303 = vmatpush2.msra.mxu0 0.0
  %4304 = vmatprep.subr.mxu0 0.0
  %4305 = vmatpush2.msra.mxu0 0.0
  %4306 = vmatprep.subr.mxu0 0.0
  %4307 = vmatpush2.msra.mxu0 0.0
  %4308 = vmatprep.subr.mxu0 0.0
  %4309 = vmatpush2.msra.mxu0 0.0
  %4310 = vmatprep.subr.mxu0 0.0
  %4311 = vmatpush2.msra.mxu0 0.0
  %4312 = vmatprep.subr.mxu0 0.0
  %4313 = vmatpush2.msra.mxu0 0.0
  %4314 = vmatprep.mubr.f32.mxu0 0.0
  %v4315 = vand.u32 %v4149, 4294901760
  %4316 = vmatmul.mubr.f32.gmra.mxu0 %v4315
  %v4317 = vpop.f32.mrf.mxu0
  %v4318 = vadd.f32 %v4227, %v4317
  %v4319 = vpop.f32.mrf.mxu0
  %4320 = vdwg.mxu0
  %4321 = vmatprep.subr.mxu0 0.0
  %4322 = vmatpush1.msra.mxu0 0.0
  %4323 = vmatprep.subr.mxu0 0.0
  %4324 = vmatpush1.msra.mxu0 0.0
  %4325 = vmatprep.subr.mxu0 0.0
  %4326 = vmatpush1.msra.mxu0 0.0
  %4327 = vmatprep.subr.mxu0 0.0
  %4328 = vmatpush1.msra.mxu0 0.0
  %4329 = vmatprep.subr.mxu0 0.0
  %4330 = vmatpush1.msra.mxu0 0.0
  %4331 = vmatprep.subr.mxu0 0.0
  %4332 = vmatpush1.msra.mxu0 0.0
  %4333 = vmatprep.subr.mxu0 0.0
  %4334 = vmatpush1.msra.mxu0 0.0
  %4335 = vmatprep.subr.mxu0 0.0
  %4336 = vmatpush1.msra.mxu0 0.0
  %4337 = vmatprep.subr.mxu0 0.0
  %4338 = vmatpush1.msra.mxu0 0.0
  %4339 = vmatprep.subr.mxu0 0.0
  %4340 = vmatpush1.msra.mxu0 0.0
  %4341 = vmatprep.subr.mxu0 0.0
  %4342 = vmatpush1.msra.mxu0 0.0
  %4343 = vmatprep.subr.mxu0 0.0
  %4344 = vmatpush1.msra.mxu0 0.0
  %4345 = vmatprep.subr.mxu0 0.0
  %v4346 = vand.u32 %v2064, 4294901760
  %v4347 = vsub.f32 %v2064, %v4346
  %4348 = vmatpush1.msra.mxu0 %v4347
  %4349 = vmatprep.subr.mxu0 0.0
  %v4350 = vand.u32 %v2063, 4294901760
  %v4351 = vsub.f32 %v2063, %v4350
  %4352 = vmatpush1.msra.mxu0 %v4351
  %4353 = vmatprep.subr.mxu0 0.0
  %v4354 = vand.u32 %v2062, 4294901760
  %v4355 = vsub.f32 %v2062, %v4354
  %4356 = vmatpush1.msra.mxu0 %v4355
  %4357 = vmatprep.subr.mxu0 0.0
  %v4358 = vand.u32 %v2061, 4294901760
  %v4359 = vsub.f32 %v2061, %v4358
  %4360 = vmatpush1.msra.mxu0 %v4359
  %4361 = vmatprep.subr.mxu0 0.0
  %4362 = vmatpush2.msra.mxu0 0.0
  %4363 = vmatprep.subr.mxu0 0.0
  %4364 = vmatpush2.msra.mxu0 0.0
  %4365 = vmatprep.subr.mxu0 0.0
  %4366 = vmatpush2.msra.mxu0 0.0
  %4367 = vmatprep.subr.mxu0 0.0
  %4368 = vmatpush2.msra.mxu0 0.0
  %4369 = vmatprep.subr.mxu0 0.0
  %4370 = vmatpush2.msra.mxu0 0.0
  %4371 = vmatprep.subr.mxu0 0.0
  %4372 = vmatpush2.msra.mxu0 0.0
  %4373 = vmatprep.subr.mxu0 0.0
  %4374 = vmatpush2.msra.mxu0 0.0
  %4375 = vmatprep.subr.mxu0 0.0
  %4376 = vmatpush2.msra.mxu0 0.0
  %4377 = vmatprep.subr.mxu0 0.0
  %4378 = vmatpush2.msra.mxu0 0.0
  %4379 = vmatprep.subr.mxu0 0.0
  %4380 = vmatpush2.msra.mxu0 0.0
  %4381 = vmatprep.subr.mxu0 0.0
  %4382 = vmatpush2.msra.mxu0 0.0
  %4383 = vmatprep.subr.mxu0 0.0
  %4384 = vmatpush2.msra.mxu0 0.0
  %4385 = vmatprep.subr.mxu0 0.0
  %4386 = vmatpush2.msra.mxu0 0.0
  %4387 = vmatprep.subr.mxu0 0.0
  %4388 = vmatpush2.msra.mxu0 0.0
  %4389 = vmatprep.subr.mxu0 0.0
  %4390 = vmatpush2.msra.mxu0 0.0
  %4391 = vmatprep.subr.mxu0 0.0
  %4392 = vmatpush2.msra.mxu0 0.0
  %4393 = vmatprep.mubr.f32.mxu0 0.0
  %v4394 = vand.u32 %v4149, 4294901760
  %v4395 = vsub.f32 %v4149, %v4394
  %4396 = vmatmul.mubr.f32.gmra.mxu0 %v4395
  %v4397 = vpop.f32.mrf.mxu0
  %v4398 = vadd.f32 %v4318, %v4397
  %v4399 = vpop.f32.mrf.mxu0
  %4400 = vdwg.mxu0
  %4401 = vmatprep.subr.mxu0 0.0
  %4402 = vmatpush1.msra.mxu0 0.0
  %4403 = vmatprep.subr.mxu0 0.0
  %4404 = vmatpush1.msra.mxu0 0.0
  %4405 = vmatprep.subr.mxu0 0.0
  %4406 = vmatpush1.msra.mxu0 0.0
  %4407 = vmatprep.subr.mxu0 0.0
  %4408 = vmatpush1.msra.mxu0 0.0
  %4409 = vmatprep.subr.mxu0 0.0
  %4410 = vmatpush1.msra.mxu0 0.0
  %4411 = vmatprep.subr.mxu0 0.0
  %4412 = vmatpush1.msra.mxu0 0.0
  %4413 = vmatprep.subr.mxu0 0.0
  %4414 = vmatpush1.msra.mxu0 0.0
  %4415 = vmatprep.subr.mxu0 0.0
  %4416 = vmatpush1.msra.mxu0 0.0
  %4417 = vmatprep.subr.mxu0 0.0
  %4418 = vmatpush1.msra.mxu0 0.0
  %4419 = vmatprep.subr.mxu0 0.0
  %4420 = vmatpush1.msra.mxu0 0.0
  %4421 = vmatprep.subr.mxu0 0.0
  %4422 = vmatpush1.msra.mxu0 0.0
  %4423 = vmatprep.subr.mxu0 0.0
  %4424 = vmatpush1.msra.mxu0 0.0
  %4425 = vmatprep.subr.mxu0 0.0
  %v4426 = vand.u32 %v2064, 4294901760
  %4427 = vmatpush1.msra.mxu0 %v4426
  %4428 = vmatprep.subr.mxu0 0.0
  %v4429 = vand.u32 %v2063, 4294901760
  %4430 = vmatpush1.msra.mxu0 %v4429
  %4431 = vmatprep.subr.mxu0 0.0
  %v4432 = vand.u32 %v2062, 4294901760
  %4433 = vmatpush1.msra.mxu0 %v4432
  %4434 = vmatprep.subr.mxu0 0.0
  %v4435 = vand.u32 %v2061, 4294901760
  %4436 = vmatpush1.msra.mxu0 %v4435
  %4437 = vmatprep.subr.mxu0 0.0
  %4438 = vmatpush2.msra.mxu0 0.0
  %4439 = vmatprep.subr.mxu0 0.0
  %4440 = vmatpush2.msra.mxu0 0.0
  %4441 = vmatprep.subr.mxu0 0.0
  %4442 = vmatpush2.msra.mxu0 0.0
  %4443 = vmatprep.subr.mxu0 0.0
  %4444 = vmatpush2.msra.mxu0 0.0
  %4445 = vmatprep.subr.mxu0 0.0
  %4446 = vmatpush2.msra.mxu0 0.0
  %4447 = vmatprep.subr.mxu0 0.0
  %4448 = vmatpush2.msra.mxu0 0.0
  %4449 = vmatprep.subr.mxu0 0.0
  %4450 = vmatpush2.msra.mxu0 0.0
  %4451 = vmatprep.subr.mxu0 0.0
  %4452 = vmatpush2.msra.mxu0 0.0
  %4453 = vmatprep.subr.mxu0 0.0
  %4454 = vmatpush2.msra.mxu0 0.0
  %4455 = vmatprep.subr.mxu0 0.0
  %4456 = vmatpush2.msra.mxu0 0.0
  %4457 = vmatprep.subr.mxu0 0.0
  %4458 = vmatpush2.msra.mxu0 0.0
  %4459 = vmatprep.subr.mxu0 0.0
  %4460 = vmatpush2.msra.mxu0 0.0
  %4461 = vmatprep.subr.mxu0 0.0
  %4462 = vmatpush2.msra.mxu0 0.0
  %4463 = vmatprep.subr.mxu0 0.0
  %4464 = vmatpush2.msra.mxu0 0.0
  %4465 = vmatprep.subr.mxu0 0.0
  %4466 = vmatpush2.msra.mxu0 0.0
  %4467 = vmatprep.subr.mxu0 0.0
  %4468 = vmatpush2.msra.mxu0 0.0
  %4469 = vmatprep.mubr.f32.mxu0 0.0
  %v4470 = vand.u32 %v4149, 4294901760
  %v4471 = vsub.f32 %v4149, %v4470
  %v4472 = vand.u32 %v4471, 4294901760
  %4473 = vmatmul.mubr.f32.gmra.mxu0 %v4472
  %v4474 = vpop.f32.mrf.mxu0
  %v4475 = vadd.f32 %v4398, %v4474
  %v4476 = vpop.f32.mrf.mxu0
  %4477 = vdwg.mxu0
  %4478 = vmatprep.subr.mxu0 0.0
  %4479 = vmatpush1.msra.mxu0 0.0
  %4480 = vmatprep.subr.mxu0 0.0
  %4481 = vmatpush1.msra.mxu0 0.0
  %4482 = vmatprep.subr.mxu0 0.0
  %4483 = vmatpush1.msra.mxu0 0.0
  %4484 = vmatprep.subr.mxu0 0.0
  %4485 = vmatpush1.msra.mxu0 0.0
  %4486 = vmatprep.subr.mxu0 0.0
  %4487 = vmatpush1.msra.mxu0 0.0
  %4488 = vmatprep.subr.mxu0 0.0
  %4489 = vmatpush1.msra.mxu0 0.0
  %4490 = vmatprep.subr.mxu0 0.0
  %4491 = vmatpush1.msra.mxu0 0.0
  %4492 = vmatprep.subr.mxu0 0.0
  %4493 = vmatpush1.msra.mxu0 0.0
  %4494 = vmatprep.subr.mxu0 0.0
  %4495 = vmatpush1.msra.mxu0 0.0
  %4496 = vmatprep.subr.mxu0 0.0
  %4497 = vmatpush1.msra.mxu0 0.0
  %4498 = vmatprep.subr.mxu0 0.0
  %4499 = vmatpush1.msra.mxu0 0.0
  %4500 = vmatprep.subr.mxu0 0.0
  %4501 = vmatpush1.msra.mxu0 0.0
  %4502 = vmatprep.subr.mxu0 0.0
  %v4503 = vand.u32 %v2064, 4294901760
  %v4504 = vsub.f32 %v2064, %v4503
  %v4505 = vand.u32 %v4504, 4294901760
  %4506 = vmatpush1.msra.mxu0 %v4505
  %4507 = vmatprep.subr.mxu0 0.0
  %v4508 = vand.u32 %v2063, 4294901760
  %v4509 = vsub.f32 %v2063, %v4508
  %v4510 = vand.u32 %v4509, 4294901760
  %4511 = vmatpush1.msra.mxu0 %v4510
  %4512 = vmatprep.subr.mxu0 0.0
  %v4513 = vand.u32 %v2062, 4294901760
  %v4514 = vsub.f32 %v2062, %v4513
  %v4515 = vand.u32 %v4514, 4294901760
  %4516 = vmatpush1.msra.mxu0 %v4515
  %4517 = vmatprep.subr.mxu0 0.0
  %v4518 = vand.u32 %v2061, 4294901760
  %v4519 = vsub.f32 %v2061, %v4518
  %v4520 = vand.u32 %v4519, 4294901760
  %4521 = vmatpush1.msra.mxu0 %v4520
  %4522 = vmatprep.subr.mxu0 0.0
  %4523 = vmatpush2.msra.mxu0 0.0
  %4524 = vmatprep.subr.mxu0 0.0
  %4525 = vmatpush2.msra.mxu0 0.0
  %4526 = vmatprep.subr.mxu0 0.0
  %4527 = vmatpush2.msra.mxu0 0.0
  %4528 = vmatprep.subr.mxu0 0.0
  %4529 = vmatpush2.msra.mxu0 0.0
  %4530 = vmatprep.subr.mxu0 0.0
  %4531 = vmatpush2.msra.mxu0 0.0
  %4532 = vmatprep.subr.mxu0 0.0
  %4533 = vmatpush2.msra.mxu0 0.0
  %4534 = vmatprep.subr.mxu0 0.0
  %4535 = vmatpush2.msra.mxu0 0.0
  %4536 = vmatprep.subr.mxu0 0.0
  %4537 = vmatpush2.msra.mxu0 0.0
  %4538 = vmatprep.subr.mxu0 0.0
  %4539 = vmatpush2.msra.mxu0 0.0
  %4540 = vmatprep.subr.mxu0 0.0
  %4541 = vmatpush2.msra.mxu0 0.0
  %4542 = vmatprep.subr.mxu0 0.0
  %4543 = vmatpush2.msra.mxu0 0.0
  %4544 = vmatprep.subr.mxu0 0.0
  %4545 = vmatpush2.msra.mxu0 0.0
  %4546 = vmatprep.subr.mxu0 0.0
  %4547 = vmatpush2.msra.mxu0 0.0
  %4548 = vmatprep.subr.mxu0 0.0
  %4549 = vmatpush2.msra.mxu0 0.0
  %4550 = vmatprep.subr.mxu0 0.0
  %4551 = vmatpush2.msra.mxu0 0.0
  %4552 = vmatprep.subr.mxu0 0.0
  %4553 = vmatpush2.msra.mxu0 0.0
  %4554 = vmatprep.mubr.f32.mxu0 0.0
  %v4555 = vand.u32 %v4149, 4294901760
  %4556 = vmatmul.mubr.f32.gmra.mxu0 %v4555
  %v4557 = vpop.f32.mrf.mxu0
  %v4558 = vadd.f32 %v4475, %v4557
  %v4559 = vpop.f32.mrf.mxu0
  %4560 = vdwg.mxu0
  %4561 = vmatprep.subr.mxu0 0.0
  %4562 = vmatpush1.msra.mxu0 0.0
  %4563 = vmatprep.subr.mxu0 0.0
  %4564 = vmatpush1.msra.mxu0 0.0
  %4565 = vmatprep.subr.mxu0 0.0
  %4566 = vmatpush1.msra.mxu0 0.0
  %4567 = vmatprep.subr.mxu0 0.0
  %4568 = vmatpush1.msra.mxu0 0.0
  %4569 = vmatprep.subr.mxu0 0.0
  %4570 = vmatpush1.msra.mxu0 0.0
  %4571 = vmatprep.subr.mxu0 0.0
  %4572 = vmatpush1.msra.mxu0 0.0
  %4573 = vmatprep.subr.mxu0 0.0
  %4574 = vmatpush1.msra.mxu0 0.0
  %4575 = vmatprep.subr.mxu0 0.0
  %4576 = vmatpush1.msra.mxu0 0.0
  %4577 = vmatprep.subr.mxu0 0.0
  %4578 = vmatpush1.msra.mxu0 0.0
  %4579 = vmatprep.subr.mxu0 0.0
  %4580 = vmatpush1.msra.mxu0 0.0
  %4581 = vmatprep.subr.mxu0 0.0
  %4582 = vmatpush1.msra.mxu0 0.0
  %4583 = vmatprep.subr.mxu0 0.0
  %4584 = vmatpush1.msra.mxu0 0.0
  %4585 = vmatprep.subr.mxu0 0.0
  %v4586 = vand.u32 %v2064, 4294901760
  %4587 = vmatpush1.msra.mxu0 %v4586
  %4588 = vmatprep.subr.mxu0 0.0
  %v4589 = vand.u32 %v2063, 4294901760
  %4590 = vmatpush1.msra.mxu0 %v4589
  %4591 = vmatprep.subr.mxu0 0.0
  %v4592 = vand.u32 %v2062, 4294901760
  %4593 = vmatpush1.msra.mxu0 %v4592
  %4594 = vmatprep.subr.mxu0 0.0
  %v4595 = vand.u32 %v2061, 4294901760
  %4596 = vmatpush1.msra.mxu0 %v4595
  %4597 = vmatprep.subr.mxu0 0.0
  %4598 = vmatpush2.msra.mxu0 0.0
  %4599 = vmatprep.subr.mxu0 0.0
  %4600 = vmatpush2.msra.mxu0 0.0
  %4601 = vmatprep.subr.mxu0 0.0
  %4602 = vmatpush2.msra.mxu0 0.0
  %4603 = vmatprep.subr.mxu0 0.0
  %4604 = vmatpush2.msra.mxu0 0.0
  %4605 = vmatprep.subr.mxu0 0.0
  %4606 = vmatpush2.msra.mxu0 0.0
  %4607 = vmatprep.subr.mxu0 0.0
  %4608 = vmatpush2.msra.mxu0 0.0
  %4609 = vmatprep.subr.mxu0 0.0
  %4610 = vmatpush2.msra.mxu0 0.0
  %4611 = vmatprep.subr.mxu0 0.0
  %4612 = vmatpush2.msra.mxu0 0.0
  %4613 = vmatprep.subr.mxu0 0.0
  %4614 = vmatpush2.msra.mxu0 0.0
  %4615 = vmatprep.subr.mxu0 0.0
  %4616 = vmatpush2.msra.mxu0 0.0
  %4617 = vmatprep.subr.mxu0 0.0
  %4618 = vmatpush2.msra.mxu0 0.0
  %4619 = vmatprep.subr.mxu0 0.0
  %4620 = vmatpush2.msra.mxu0 0.0
  %4621 = vmatprep.subr.mxu0 0.0
  %4622 = vmatpush2.msra.mxu0 0.0
  %4623 = vmatprep.subr.mxu0 0.0
  %4624 = vmatpush2.msra.mxu0 0.0
  %4625 = vmatprep.subr.mxu0 0.0
  %4626 = vmatpush2.msra.mxu0 0.0
  %4627 = vmatprep.subr.mxu0 0.0
  %4628 = vmatpush2.msra.mxu0 0.0
  %4629 = vmatprep.mubr.f32.mxu0 0.0
  %v4630 = vand.u32 %v4149, 4294901760
  %4631 = vmatmul.mubr.f32.gmra.mxu0 %v4630
  %v4632 = vpop.f32.mrf.mxu0
  %v4633 = vadd.f32 %v4558, %v4632
  %v4634 = vpop.f32.mrf.mxu0
  %4635 = vdwg.mxu0
  %v4636 = vadd.f32 %v4148, %v4633
  %v4637 = vxor.u32 %v4636, 2147483648
  %v4638 = vmul.f32 %v4637, 1.442695
  %v4639 = vpow.pop %v4638
  %v4640 = vadd.f32 %v4639, 1.0
  %v4641 = vrcp.pop %v4640
  %v4642 = vmul.f32 1.0, %v4641
  %4644 = vrot.lane.b32.xlu0 %v4633, 64
  %v4645 = vpop.permute.xlu0 %4644
  %v4647 = vmul.f32 %v4642, %v4645
  %4649 = vrot.lane.b32.xlu0 %v4647, 64
  %v4650 = vpop.permute.xlu0 %4649
  %v4652 = vadd.f32 %v4148, %v4650
  %v4653 = vtanh.pop %v4652
  %v4654 = vsub.f32 1.0, %v4642
  %4656 = vrot.lane.b32.xlu0 %v4653, 96
  %v4657 = vpop.permute.xlu0 %4656
  %v4659 = vmul.f32 %v4654, %v4657
  %v4660 = vmul.f32 %v4642, %v4142
  %v4661 = vadd.f32 %v4659, %v4660
  %4663 = vrot.lane.b32.xlu0 %v4661, 96
  %v4664 = vpop.permute.xlu0 %4663
  %4666 = vst.msk [vmem:[#allocation3 + $0x20] sm:$0xff] %vm2071, %v4664
  %v4667 = vld [vmem:[#allocation2 + $0x28] sm:$0xff]
  %v4668 = vsel %vm2071, %v4664, 0
  %4670 = vmatprep.subr.mxu0 0.0
  %4671 = vmatpush1.msra.mxu0 0.0
  %4672 = vmatprep.subr.mxu0 0.0
  %4673 = vmatpush1.msra.mxu0 0.0
  %4674 = vmatprep.subr.mxu0 0.0
  %4675 = vmatpush1.msra.mxu0 0.0
  %4676 = vmatprep.subr.mxu0 0.0
  %4677 = vmatpush1.msra.mxu0 0.0
  %4678 = vmatprep.subr.mxu0 0.0
  %4679 = vmatpush1.msra.mxu0 0.0
  %4680 = vmatprep.subr.mxu0 0.0
  %4681 = vmatpush1.msra.mxu0 0.0
  %4682 = vmatprep.subr.mxu0 0.0
  %4683 = vmatpush1.msra.mxu0 0.0
  %4684 = vmatprep.subr.mxu0 0.0
  %4685 = vmatpush1.msra.mxu0 0.0
  %4686 = vmatprep.subr.mxu0 0.0
  %4687 = vmatpush1.msra.mxu0 0.0
  %4688 = vmatprep.subr.mxu0 0.0
  %4689 = vmatpush1.msra.mxu0 0.0
  %4690 = vmatprep.subr.mxu0 0.0
  %4691 = vmatpush1.msra.mxu0 0.0
  %4692 = vmatprep.subr.mxu0 0.0
  %4693 = vmatpush1.msra.mxu0 0.0
  %4694 = vmatprep.subr.mxu0 0.0
  %v4695 = vand.u32 %v2064, 4294901760
  %4696 = vmatpush1.msra.mxu0 %v4695
  %4697 = vmatprep.subr.mxu0 0.0
  %v4698 = vand.u32 %v2063, 4294901760
  %4699 = vmatpush1.msra.mxu0 %v4698
  %4700 = vmatprep.subr.mxu0 0.0
  %v4701 = vand.u32 %v2062, 4294901760
  %4702 = vmatpush1.msra.mxu0 %v4701
  %4703 = vmatprep.subr.mxu0 0.0
  %v4704 = vand.u32 %v2061, 4294901760
  %4705 = vmatpush1.msra.mxu0 %v4704
  %4706 = vmatprep.subr.mxu0 0.0
  %4707 = vmatpush2.msra.mxu0 0.0
  %4708 = vmatprep.subr.mxu0 0.0
  %4709 = vmatpush2.msra.mxu0 0.0
  %4710 = vmatprep.subr.mxu0 0.0
  %4711 = vmatpush2.msra.mxu0 0.0
  %4712 = vmatprep.subr.mxu0 0.0
  %4713 = vmatpush2.msra.mxu0 0.0
  %4714 = vmatprep.subr.mxu0 0.0
  %4715 = vmatpush2.msra.mxu0 0.0
  %4716 = vmatprep.subr.mxu0 0.0
  %4717 = vmatpush2.msra.mxu0 0.0
  %4718 = vmatprep.subr.mxu0 0.0
  %4719 = vmatpush2.msra.mxu0 0.0
  %4720 = vmatprep.subr.mxu0 0.0
  %4721 = vmatpush2.msra.mxu0 0.0
  %4722 = vmatprep.subr.mxu0 0.0
  %4723 = vmatpush2.msra.mxu0 0.0
  %4724 = vmatprep.subr.mxu0 0.0
  %4725 = vmatpush2.msra.mxu0 0.0
  %4726 = vmatprep.subr.mxu0 0.0
  %4727 = vmatpush2.msra.mxu0 0.0
  %4728 = vmatprep.subr.mxu0 0.0
  %4729 = vmatpush2.msra.mxu0 0.0
  %4730 = vmatprep.subr.mxu0 0.0
  %4731 = vmatpush2.msra.mxu0 0.0
  %4732 = vmatprep.subr.mxu0 0.0
  %4733 = vmatpush2.msra.mxu0 0.0
  %4734 = vmatprep.subr.mxu0 0.0
  %4735 = vmatpush2.msra.mxu0 0.0
  %4736 = vmatprep.subr.mxu0 0.0
  %4737 = vmatpush2.msra.mxu0 0.0
  %4738 = vmatprep.mubr.f32.mxu0 0.0
  %v4739 = vand.u32 %v4668, 4294901760
  %v4740 = vsub.f32 %v4668, %v4739
  %v4741 = vand.u32 %v4740, 4294901760
  %v4742 = vsub.f32 %v4740, %v4741
  %v4743 = vand.u32 %v4742, 4294901760
  %4744 = vmatmul.mubr.f32.gmra.mxu0 %v4743
  %v4745 = vpop.f32.mrf.mxu0
  %v4746 = vadd.f32 %v2070, %v4745
  %v4747 = vpop.f32.mrf.mxu0
  %4748 = vdwg.mxu0
  %4749 = vmatprep.subr.mxu0 0.0
  %4750 = vmatpush1.msra.mxu0 0.0
  %4751 = vmatprep.subr.mxu0 0.0
  %4752 = vmatpush1.msra.mxu0 0.0
  %4753 = vmatprep.subr.mxu0 0.0
  %4754 = vmatpush1.msra.mxu0 0.0
  %4755 = vmatprep.subr.mxu0 0.0
  %4756 = vmatpush1.msra.mxu0 0.0
  %4757 = vmatprep.subr.mxu0 0.0
  %4758 = vmatpush1.msra.mxu0 0.0
  %4759 = vmatprep.subr.mxu0 0.0
  %4760 = vmatpush1.msra.mxu0 0.0
  %4761 = vmatprep.subr.mxu0 0.0
  %4762 = vmatpush1.msra.mxu0 0.0
  %4763 = vmatprep.subr.mxu0 0.0
  %4764 = vmatpush1.msra.mxu0 0.0
  %4765 = vmatprep.subr.mxu0 0.0
  %4766 = vmatpush1.msra.mxu0 0.0
  %4767 = vmatprep.subr.mxu0 0.0
  %4768 = vmatpush1.msra.mxu0 0.0
  %4769 = vmatprep.subr.mxu0 0.0
  %4770 = vmatpush1.msra.mxu0 0.0
  %4771 = vmatprep.subr.mxu0 0.0
  %4772 = vmatpush1.msra.mxu0 0.0
  %4773 = vmatprep.subr.mxu0 0.0
  %v4774 = vand.u32 %v2064, 4294901760
  %v4775 = vsub.f32 %v2064, %v4774
  %v4776 = vand.u32 %v4775, 4294901760
  %v4777 = vsub.f32 %v4775, %v4776
  %v4778 = vand.u32 %v4777, 4294901760
  %4779 = vmatpush1.msra.mxu0 %v4778
  %4780 = vmatprep.subr.mxu0 0.0
  %v4781 = vand.u32 %v2063, 4294901760
  %v4782 = vsub.f32 %v2063, %v4781
  %v4783 = vand.u32 %v4782, 4294901760
  %v4784 = vsub.f32 %v4782, %v4783
  %v4785 = vand.u32 %v4784, 4294901760
  %4786 = vmatpush1.msra.mxu0 %v4785
  %4787 = vmatprep.subr.mxu0 0.0
  %v4788 = vand.u32 %v2062, 4294901760
  %v4789 = vsub.f32 %v2062, %v4788
  %v4790 = vand.u32 %v4789, 4294901760
  %v4791 = vsub.f32 %v4789, %v4790
  %v4792 = vand.u32 %v4791, 4294901760
  %4793 = vmatpush1.msra.mxu0 %v4792
  %4794 = vmatprep.subr.mxu0 0.0
  %v4795 = vand.u32 %v2061, 4294901760
  %v4796 = vsub.f32 %v2061, %v4795
  %v4797 = vand.u32 %v4796, 4294901760
  %v4798 = vsub.f32 %v4796, %v4797
  %v4799 = vand.u32 %v4798, 4294901760
  %4800 = vmatpush1.msra.mxu0 %v4799
  %4801 = vmatprep.subr.mxu0 0.0
  %4802 = vmatpush2.msra.mxu0 0.0
  %4803 = vmatprep.subr.mxu0 0.0
  %4804 = vmatpush2.msra.mxu0 0.0
  %4805 = vmatprep.subr.mxu0 0.0
  %4806 = vmatpush2.msra.mxu0 0.0
  %4807 = vmatprep.subr.mxu0 0.0
  %4808 = vmatpush2.msra.mxu0 0.0
  %4809 = vmatprep.subr.mxu0 0.0
  %4810 = vmatpush2.msra.mxu0 0.0
  %4811 = vmatprep.subr.mxu0 0.0
  %4812 = vmatpush2.msra.mxu0 0.0
  %4813 = vmatprep.subr.mxu0 0.0
  %4814 = vmatpush2.msra.mxu0 0.0
  %4815 = vmatprep.subr.mxu0 0.0
  %4816 = vmatpush2.msra.mxu0 0.0
  %4817 = vmatprep.subr.mxu0 0.0
  %4818 = vmatpush2.msra.mxu0 0.0
  %4819 = vmatprep.subr.mxu0 0.0
  %4820 = vmatpush2.msra.mxu0 0.0
  %4821 = vmatprep.subr.mxu0 0.0
  %4822 = vmatpush2.msra.mxu0 0.0
  %4823 = vmatprep.subr.mxu0 0.0
  %4824 = vmatpush2.msra.mxu0 0.0
  %4825 = vmatprep.subr.mxu0 0.0
  %4826 = vmatpush2.msra.mxu0 0.0
  %4827 = vmatprep.subr.mxu0 0.0
  %4828 = vmatpush2.msra.mxu0 0.0
  %4829 = vmatprep.subr.mxu0 0.0
  %4830 = vmatpush2.msra.mxu0 0.0
  %4831 = vmatprep.subr.mxu0 0.0
  %4832 = vmatpush2.msra.mxu0 0.0
  %4833 = vmatprep.mubr.f32.mxu0 0.0
  %v4834 = vand.u32 %v4668, 4294901760
  %4835 = vmatmul.mubr.f32.gmra.mxu0 %v4834
  %v4836 = vpop.f32.mrf.mxu0
  %v4837 = vadd.f32 %v4746, %v4836
  %v4838 = vpop.f32.mrf.mxu0
  %4839 = vdwg.mxu0
  %4840 = vmatprep.subr.mxu0 0.0
  %4841 = vmatpush1.msra.mxu0 0.0
  %4842 = vmatprep.subr.mxu0 0.0
  %4843 = vmatpush1.msra.mxu0 0.0
  %4844 = vmatprep.subr.mxu0 0.0
  %4845 = vmatpush1.msra.mxu0 0.0
  %4846 = vmatprep.subr.mxu0 0.0
  %4847 = vmatpush1.msra.mxu0 0.0
  %4848 = vmatprep.subr.mxu0 0.0
  %4849 = vmatpush1.msra.mxu0 0.0
  %4850 = vmatprep.subr.mxu0 0.0
  %4851 = vmatpush1.msra.mxu0 0.0
  %4852 = vmatprep.subr.mxu0 0.0
  %4853 = vmatpush1.msra.mxu0 0.0
  %4854 = vmatprep.subr.mxu0 0.0
  %4855 = vmatpush1.msra.mxu0 0.0
  %4856 = vmatprep.subr.mxu0 0.0
  %4857 = vmatpush1.msra.mxu0 0.0
  %4858 = vmatprep.subr.mxu0 0.0
  %4859 = vmatpush1.msra.mxu0 0.0
  %4860 = vmatprep.subr.mxu0 0.0
  %4861 = vmatpush1.msra.mxu0 0.0
  %4862 = vmatprep.subr.mxu0 0.0
  %4863 = vmatpush1.msra.mxu0 0.0
  %4864 = vmatprep.subr.mxu0 0.0
  %v4865 = vand.u32 %v2064, 4294901760
  %v4866 = vsub.f32 %v2064, %v4865
  %4867 = vmatpush1.msra.mxu0 %v4866
  %4868 = vmatprep.subr.mxu0 0.0
  %v4869 = vand.u32 %v2063, 4294901760
  %v4870 = vsub.f32 %v2063, %v4869
  %4871 = vmatpush1.msra.mxu0 %v4870
  %4872 = vmatprep.subr.mxu0 0.0
  %v4873 = vand.u32 %v2062, 4294901760
  %v4874 = vsub.f32 %v2062, %v4873
  %4875 = vmatpush1.msra.mxu0 %v4874
  %4876 = vmatprep.subr.mxu0 0.0
  %v4877 = vand.u32 %v2061, 4294901760
  %v4878 = vsub.f32 %v2061, %v4877
  %4879 = vmatpush1.msra.mxu0 %v4878
  %4880 = vmatprep.subr.mxu0 0.0
  %4881 = vmatpush2.msra.mxu0 0.0
  %4882 = vmatprep.subr.mxu0 0.0
  %4883 = vmatpush2.msra.mxu0 0.0
  %4884 = vmatprep.subr.mxu0 0.0
  %4885 = vmatpush2.msra.mxu0 0.0
  %4886 = vmatprep.subr.mxu0 0.0
  %4887 = vmatpush2.msra.mxu0 0.0
  %4888 = vmatprep.subr.mxu0 0.0
  %4889 = vmatpush2.msra.mxu0 0.0
  %4890 = vmatprep.subr.mxu0 0.0
  %4891 = vmatpush2.msra.mxu0 0.0
  %4892 = vmatprep.subr.mxu0 0.0
  %4893 = vmatpush2.msra.mxu0 0.0
  %4894 = vmatprep.subr.mxu0 0.0
  %4895 = vmatpush2.msra.mxu0 0.0
  %4896 = vmatprep.subr.mxu0 0.0
  %4897 = vmatpush2.msra.mxu0 0.0
  %4898 = vmatprep.subr.mxu0 0.0
  %4899 = vmatpush2.msra.mxu0 0.0
  %4900 = vmatprep.subr.mxu0 0.0
  %4901 = vmatpush2.msra.mxu0 0.0
  %4902 = vmatprep.subr.mxu0 0.0
  %4903 = vmatpush2.msra.mxu0 0.0
  %4904 = vmatprep.subr.mxu0 0.0
  %4905 = vmatpush2.msra.mxu0 0.0
  %4906 = vmatprep.subr.mxu0 0.0
  %4907 = vmatpush2.msra.mxu0 0.0
  %4908 = vmatprep.subr.mxu0 0.0
  %4909 = vmatpush2.msra.mxu0 0.0
  %4910 = vmatprep.subr.mxu0 0.0
  %4911 = vmatpush2.msra.mxu0 0.0
  %4912 = vmatprep.mubr.f32.mxu0 0.0
  %v4913 = vand.u32 %v4668, 4294901760
  %v4914 = vsub.f32 %v4668, %v4913
  %4915 = vmatmul.mubr.f32.gmra.mxu0 %v4914
  %v4916 = vpop.f32.mrf.mxu0
  %v4917 = vadd.f32 %v4837, %v4916
  %v4918 = vpop.f32.mrf.mxu0
  %4919 = vdwg.mxu0
  %4920 = vmatprep.subr.mxu0 0.0
  %4921 = vmatpush1.msra.mxu0 0.0
  %4922 = vmatprep.subr.mxu0 0.0
  %4923 = vmatpush1.msra.mxu0 0.0
  %4924 = vmatprep.subr.mxu0 0.0
  %4925 = vmatpush1.msra.mxu0 0.0
  %4926 = vmatprep.subr.mxu0 0.0
  %4927 = vmatpush1.msra.mxu0 0.0
  %4928 = vmatprep.subr.mxu0 0.0
  %4929 = vmatpush1.msra.mxu0 0.0
  %4930 = vmatprep.subr.mxu0 0.0
  %4931 = vmatpush1.msra.mxu0 0.0
  %4932 = vmatprep.subr.mxu0 0.0
  %4933 = vmatpush1.msra.mxu0 0.0
  %4934 = vmatprep.subr.mxu0 0.0
  %4935 = vmatpush1.msra.mxu0 0.0
  %4936 = vmatprep.subr.mxu0 0.0
  %4937 = vmatpush1.msra.mxu0 0.0
  %4938 = vmatprep.subr.mxu0 0.0
  %4939 = vmatpush1.msra.mxu0 0.0
  %4940 = vmatprep.subr.mxu0 0.0
  %4941 = vmatpush1.msra.mxu0 0.0
  %4942 = vmatprep.subr.mxu0 0.0
  %4943 = vmatpush1.msra.mxu0 0.0
  %4944 = vmatprep.subr.mxu0 0.0
  %v4945 = vand.u32 %v2064, 4294901760
  %4946 = vmatpush1.msra.mxu0 %v4945
  %4947 = vmatprep.subr.mxu0 0.0
  %v4948 = vand.u32 %v2063, 4294901760
  %4949 = vmatpush1.msra.mxu0 %v4948
  %4950 = vmatprep.subr.mxu0 0.0
  %v4951 = vand.u32 %v2062, 4294901760
  %4952 = vmatpush1.msra.mxu0 %v4951
  %4953 = vmatprep.subr.mxu0 0.0
  %v4954 = vand.u32 %v2061, 4294901760
  %4955 = vmatpush1.msra.mxu0 %v4954
  %4956 = vmatprep.subr.mxu0 0.0
  %4957 = vmatpush2.msra.mxu0 0.0
  %4958 = vmatprep.subr.mxu0 0.0
  %4959 = vmatpush2.msra.mxu0 0.0
  %4960 = vmatprep.subr.mxu0 0.0
  %4961 = vmatpush2.msra.mxu0 0.0
  %4962 = vmatprep.subr.mxu0 0.0
  %4963 = vmatpush2.msra.mxu0 0.0
  %4964 = vmatprep.subr.mxu0 0.0
  %4965 = vmatpush2.msra.mxu0 0.0
  %4966 = vmatprep.subr.mxu0 0.0
  %4967 = vmatpush2.msra.mxu0 0.0
  %4968 = vmatprep.subr.mxu0 0.0
  %4969 = vmatpush2.msra.mxu0 0.0
  %4970 = vmatprep.subr.mxu0 0.0
  %4971 = vmatpush2.msra.mxu0 0.0
  %4972 = vmatprep.subr.mxu0 0.0
  %4973 = vmatpush2.msra.mxu0 0.0
  %4974 = vmatprep.subr.mxu0 0.0
  %4975 = vmatpush2.msra.mxu0 0.0
  %4976 = vmatprep.subr.mxu0 0.0
  %4977 = vmatpush2.msra.mxu0 0.0
  %4978 = vmatprep.subr.mxu0 0.0
  %4979 = vmatpush2.msra.mxu0 0.0
  %4980 = vmatprep.subr.mxu0 0.0
  %4981 = vmatpush2.msra.mxu0 0.0
  %4982 = vmatprep.subr.mxu0 0.0
  %4983 = vmatpush2.msra.mxu0 0.0
  %4984 = vmatprep.subr.mxu0 0.0
  %4985 = vmatpush2.msra.mxu0 0.0
  %4986 = vmatprep.subr.mxu0 0.0
  %4987 = vmatpush2.msra.mxu0 0.0
  %4988 = vmatprep.mubr.f32.mxu0 0.0
  %v4989 = vand.u32 %v4668, 4294901760
  %v4990 = vsub.f32 %v4668, %v4989
  %v4991 = vand.u32 %v4990, 4294901760
  %4992 = vmatmul.mubr.f32.gmra.mxu0 %v4991
  %v4993 = vpop.f32.mrf.mxu0
  %v4994 = vadd.f32 %v4917, %v4993
  %v4995 = vpop.f32.mrf.mxu0
  %4996 = vdwg.mxu0
  %4997 = vmatprep.subr.mxu0 0.0
  %4998 = vmatpush1.msra.mxu0 0.0
  %4999 = vmatprep.subr.mxu0 0.0
  %5000 = vmatpush1.msra.mxu0 0.0
  %5001 = vmatprep.subr.mxu0 0.0
  %5002 = vmatpush1.msra.mxu0 0.0
  %5003 = vmatprep.subr.mxu0 0.0
  %5004 = vmatpush1.msra.mxu0 0.0
  %5005 = vmatprep.subr.mxu0 0.0
  %5006 = vmatpush1.msra.mxu0 0.0
  %5007 = vmatprep.subr.mxu0 0.0
  %5008 = vmatpush1.msra.mxu0 0.0
  %5009 = vmatprep.subr.mxu0 0.0
  %5010 = vmatpush1.msra.mxu0 0.0
  %5011 = vmatprep.subr.mxu0 0.0
  %5012 = vmatpush1.msra.mxu0 0.0
  %5013 = vmatprep.subr.mxu0 0.0
  %5014 = vmatpush1.msra.mxu0 0.0
  %5015 = vmatprep.subr.mxu0 0.0
  %5016 = vmatpush1.msra.mxu0 0.0
  %5017 = vmatprep.subr.mxu0 0.0
  %5018 = vmatpush1.msra.mxu0 0.0
  %5019 = vmatprep.subr.mxu0 0.0
  %5020 = vmatpush1.msra.mxu0 0.0
  %5021 = vmatprep.subr.mxu0 0.0
  %v5022 = vand.u32 %v2064, 4294901760
  %v5023 = vsub.f32 %v2064, %v5022
  %v5024 = vand.u32 %v5023, 4294901760
  %5025 = vmatpush1.msra.mxu0 %v5024
  %5026 = vmatprep.subr.mxu0 0.0
  %v5027 = vand.u32 %v2063, 4294901760
  %v5028 = vsub.f32 %v2063, %v5027
  %v5029 = vand.u32 %v5028, 4294901760
  %5030 = vmatpush1.msra.mxu0 %v5029
  %5031 = vmatprep.subr.mxu0 0.0
  %v5032 = vand.u32 %v2062, 4294901760
  %v5033 = vsub.f32 %v2062, %v5032
  %v5034 = vand.u32 %v5033, 4294901760
  %5035 = vmatpush1.msra.mxu0 %v5034
  %5036 = vmatprep.subr.mxu0 0.0
  %v5037 = vand.u32 %v2061, 4294901760
  %v5038 = vsub.f32 %v2061, %v5037
  %v5039 = vand.u32 %v5038, 4294901760
  %5040 = vmatpush1.msra.mxu0 %v5039
  %5041 = vmatprep.subr.mxu0 0.0
  %5042 = vmatpush2.msra.mxu0 0.0
  %5043 = vmatprep.subr.mxu0 0.0
  %5044 = vmatpush2.msra.mxu0 0.0
  %5045 = vmatprep.subr.mxu0 0.0
  %5046 = vmatpush2.msra.mxu0 0.0
  %5047 = vmatprep.subr.mxu0 0.0
  %5048 = vmatpush2.msra.mxu0 0.0
  %5049 = vmatprep.subr.mxu0 0.0
  %5050 = vmatpush2.msra.mxu0 0.0
  %5051 = vmatprep.subr.mxu0 0.0
  %5052 = vmatpush2.msra.mxu0 0.0
  %5053 = vmatprep.subr.mxu0 0.0
  %5054 = vmatpush2.msra.mxu0 0.0
  %5055 = vmatprep.subr.mxu0 0.0
  %5056 = vmatpush2.msra.mxu0 0.0
  %5057 = vmatprep.subr.mxu0 0.0
  %5058 = vmatpush2.msra.mxu0 0.0
  %5059 = vmatprep.subr.mxu0 0.0
  %5060 = vmatpush2.msra.mxu0 0.0
  %5061 = vmatprep.subr.mxu0 0.0
  %5062 = vmatpush2.msra.mxu0 0.0
  %5063 = vmatprep.subr.mxu0 0.0
  %5064 = vmatpush2.msra.mxu0 0.0
  %5065 = vmatprep.subr.mxu0 0.0
  %5066 = vmatpush2.msra.mxu0 0.0
  %5067 = vmatprep.subr.mxu0 0.0
  %5068 = vmatpush2.msra.mxu0 0.0
  %5069 = vmatprep.subr.mxu0 0.0
  %5070 = vmatpush2.msra.mxu0 0.0
  %5071 = vmatprep.subr.mxu0 0.0
  %5072 = vmatpush2.msra.mxu0 0.0
  %5073 = vmatprep.mubr.f32.mxu0 0.0
  %v5074 = vand.u32 %v4668, 4294901760
  %5075 = vmatmul.mubr.f32.gmra.mxu0 %v5074
  %v5076 = vpop.f32.mrf.mxu0
  %v5077 = vadd.f32 %v4994, %v5076
  %v5078 = vpop.f32.mrf.mxu0
  %5079 = vdwg.mxu0
  %5080 = vmatprep.subr.mxu0 0.0
  %5081 = vmatpush1.msra.mxu0 0.0
  %5082 = vmatprep.subr.mxu0 0.0
  %5083 = vmatpush1.msra.mxu0 0.0
  %5084 = vmatprep.subr.mxu0 0.0
  %5085 = vmatpush1.msra.mxu0 0.0
  %5086 = vmatprep.subr.mxu0 0.0
  %5087 = vmatpush1.msra.mxu0 0.0
  %5088 = vmatprep.subr.mxu0 0.0
  %5089 = vmatpush1.msra.mxu0 0.0
  %5090 = vmatprep.subr.mxu0 0.0
  %5091 = vmatpush1.msra.mxu0 0.0
  %5092 = vmatprep.subr.mxu0 0.0
  %5093 = vmatpush1.msra.mxu0 0.0
  %5094 = vmatprep.subr.mxu0 0.0
  %5095 = vmatpush1.msra.mxu0 0.0
  %5096 = vmatprep.subr.mxu0 0.0
  %5097 = vmatpush1.msra.mxu0 0.0
  %5098 = vmatprep.subr.mxu0 0.0
  %5099 = vmatpush1.msra.mxu0 0.0
  %5100 = vmatprep.subr.mxu0 0.0
  %5101 = vmatpush1.msra.mxu0 0.0
  %5102 = vmatprep.subr.mxu0 0.0
  %5103 = vmatpush1.msra.mxu0 0.0
  %5104 = vmatprep.subr.mxu0 0.0
  %v5105 = vand.u32 %v2064, 4294901760
  %5106 = vmatpush1.msra.mxu0 %v5105
  %5107 = vmatprep.subr.mxu0 0.0
  %v5108 = vand.u32 %v2063, 4294901760
  %5109 = vmatpush1.msra.mxu0 %v5108
  %5110 = vmatprep.subr.mxu0 0.0
  %v5111 = vand.u32 %v2062, 4294901760
  %5112 = vmatpush1.msra.mxu0 %v5111
  %5113 = vmatprep.subr.mxu0 0.0
  %v5114 = vand.u32 %v2061, 4294901760
  %5115 = vmatpush1.msra.mxu0 %v5114
  %5116 = vmatprep.subr.mxu0 0.0
  %5117 = vmatpush2.msra.mxu0 0.0
  %5118 = vmatprep.subr.mxu0 0.0
  %5119 = vmatpush2.msra.mxu0 0.0
  %5120 = vmatprep.subr.mxu0 0.0
  %5121 = vmatpush2.msra.mxu0 0.0
  %5122 = vmatprep.subr.mxu0 0.0
  %5123 = vmatpush2.msra.mxu0 0.0
  %5124 = vmatprep.subr.mxu0 0.0
  %5125 = vmatpush2.msra.mxu0 0.0
  %5126 = vmatprep.subr.mxu0 0.0
  %5127 = vmatpush2.msra.mxu0 0.0
  %5128 = vmatprep.subr.mxu0 0.0
  %5129 = vmatpush2.msra.mxu0 0.0
  %5130 = vmatprep.subr.mxu0 0.0
  %5131 = vmatpush2.msra.mxu0 0.0
  %5132 = vmatprep.subr.mxu0 0.0
  %5133 = vmatpush2.msra.mxu0 0.0
  %5134 = vmatprep.subr.mxu0 0.0
  %5135 = vmatpush2.msra.mxu0 0.0
  %5136 = vmatprep.subr.mxu0 0.0
  %5137 = vmatpush2.msra.mxu0 0.0
  %5138 = vmatprep.subr.mxu0 0.0
  %5139 = vmatpush2.msra.mxu0 0.0
  %5140 = vmatprep.subr.mxu0 0.0
  %5141 = vmatpush2.msra.mxu0 0.0
  %5142 = vmatprep.subr.mxu0 0.0
  %5143 = vmatpush2.msra.mxu0 0.0
  %5144 = vmatprep.subr.mxu0 0.0
  %5145 = vmatpush2.msra.mxu0 0.0
  %5146 = vmatprep.subr.mxu0 0.0
  %5147 = vmatpush2.msra.mxu0 0.0
  %5148 = vmatprep.mubr.f32.mxu0 0.0
  %v5149 = vand.u32 %v4668, 4294901760
  %5150 = vmatmul.mubr.f32.gmra.mxu0 %v5149
  %v5151 = vpop.f32.mrf.mxu0
  %v5152 = vadd.f32 %v5077, %v5151
  %v5153 = vpop.f32.mrf.mxu0
  %5154 = vdwg.mxu0
  %v5155 = vadd.f32 %v4667, %v5152
  %v5156 = vxor.u32 %v5155, 2147483648
  %v5157 = vmul.f32 %v5156, 1.442695
  %v5158 = vpow.pop %v5157
  %v5159 = vadd.f32 %v5158, 1.0
  %v5160 = vrcp.pop %v5159
  %v5161 = vmul.f32 1.0, %v5160
  %5163 = vrot.lane.b32.xlu0 %v5152, 64
  %v5164 = vpop.permute.xlu0 %5163
  %v5166 = vmul.f32 %v5161, %v5164
  %5168 = vrot.lane.b32.xlu0 %v5166, 64
  %v5169 = vpop.permute.xlu0 %5168
  %v5171 = vadd.f32 %v4667, %v5169
  %v5172 = vtanh.pop %v5171
  %v5173 = vsub.f32 1.0, %v5161
  %5175 = vrot.lane.b32.xlu0 %v5172, 96
  %v5176 = vpop.permute.xlu0 %5175
  %v5178 = vmul.f32 %v5173, %v5176
  %v5179 = vmul.f32 %v5161, %v4661
  %v5180 = vadd.f32 %v5178, %v5179
  %5182 = vrot.lane.b32.xlu0 %v5180, 96
  %v5183 = vpop.permute.xlu0 %5182
  %5185 = vst.msk [vmem:[#allocation3 + $0x28] sm:$0xff] %vm2071, %v5183
  %v5186 = vld [vmem:[#allocation2 + $0x30] sm:$0xff]
  %v5187 = vsel %vm2071, %v5183, 0
  %5189 = vmatprep.subr.mxu0 0.0
  %5190 = vmatpush1.msra.mxu0 0.0
  %5191 = vmatprep.subr.mxu0 0.0
  %5192 = vmatpush1.msra.mxu0 0.0
  %5193 = vmatprep.subr.mxu0 0.0
  %5194 = vmatpush1.msra.mxu0 0.0
  %5195 = vmatprep.subr.mxu0 0.0
  %5196 = vmatpush1.msra.mxu0 0.0
  %5197 = vmatprep.subr.mxu0 0.0
  %5198 = vmatpush1.msra.mxu0 0.0
  %5199 = vmatprep.subr.mxu0 0.0
  %5200 = vmatpush1.msra.mxu0 0.0
  %5201 = vmatprep.subr.mxu0 0.0
  %5202 = vmatpush1.msra.mxu0 0.0
  %5203 = vmatprep.subr.mxu0 0.0
  %5204 = vmatpush1.msra.mxu0 0.0
  %5205 = vmatprep.subr.mxu0 0.0
  %5206 = vmatpush1.msra.mxu0 0.0
  %5207 = vmatprep.subr.mxu0 0.0
  %5208 = vmatpush1.msra.mxu0 0.0
  %5209 = vmatprep.subr.mxu0 0.0
  %5210 = vmatpush1.msra.mxu0 0.0
  %5211 = vmatprep.subr.mxu0 0.0
  %5212 = vmatpush1.msra.mxu0 0.0
  %5213 = vmatprep.subr.mxu0 0.0
  %v5214 = vand.u32 %v2064, 4294901760
  %5215 = vmatpush1.msra.mxu0 %v5214
  %5216 = vmatprep.subr.mxu0 0.0
  %v5217 = vand.u32 %v2063, 4294901760
  %5218 = vmatpush1.msra.mxu0 %v5217
  %5219 = vmatprep.subr.mxu0 0.0
  %v5220 = vand.u32 %v2062, 4294901760
  %5221 = vmatpush1.msra.mxu0 %v5220
  %5222 = vmatprep.subr.mxu0 0.0
  %v5223 = vand.u32 %v2061, 4294901760
  %5224 = vmatpush1.msra.mxu0 %v5223
  %5225 = vmatprep.subr.mxu0 0.0
  %5226 = vmatpush2.msra.mxu0 0.0
  %5227 = vmatprep.subr.mxu0 0.0
  %5228 = vmatpush2.msra.mxu0 0.0
  %5229 = vmatprep.subr.mxu0 0.0
  %5230 = vmatpush2.msra.mxu0 0.0
  %5231 = vmatprep.subr.mxu0 0.0
  %5232 = vmatpush2.msra.mxu0 0.0
  %5233 = vmatprep.subr.mxu0 0.0
  %5234 = vmatpush2.msra.mxu0 0.0
  %5235 = vmatprep.subr.mxu0 0.0
  %5236 = vmatpush2.msra.mxu0 0.0
  %5237 = vmatprep.subr.mxu0 0.0
  %5238 = vmatpush2.msra.mxu0 0.0
  %5239 = vmatprep.subr.mxu0 0.0
  %5240 = vmatpush2.msra.mxu0 0.0
  %5241 = vmatprep.subr.mxu0 0.0
  %5242 = vmatpush2.msra.mxu0 0.0
  %5243 = vmatprep.subr.mxu0 0.0
  %5244 = vmatpush2.msra.mxu0 0.0
  %5245 = vmatprep.subr.mxu0 0.0
  %5246 = vmatpush2.msra.mxu0 0.0
  %5247 = vmatprep.subr.mxu0 0.0
  %5248 = vmatpush2.msra.mxu0 0.0
  %5249 = vmatprep.subr.mxu0 0.0
  %5250 = vmatpush2.msra.mxu0 0.0
  %5251 = vmatprep.subr.mxu0 0.0
  %5252 = vmatpush2.msra.mxu0 0.0
  %5253 = vmatprep.subr.mxu0 0.0
  %5254 = vmatpush2.msra.mxu0 0.0
  %5255 = vmatprep.subr.mxu0 0.0
  %5256 = vmatpush2.msra.mxu0 0.0
  %5257 = vmatprep.mubr.f32.mxu0 0.0
  %v5258 = vand.u32 %v5187, 4294901760
  %v5259 = vsub.f32 %v5187, %v5258
  %v5260 = vand.u32 %v5259, 4294901760
  %v5261 = vsub.f32 %v5259, %v5260
  %v5262 = vand.u32 %v5261, 4294901760
  %5263 = vmatmul.mubr.f32.gmra.mxu0 %v5262
  %v5264 = vpop.f32.mrf.mxu0
  %v5265 = vadd.f32 %v2070, %v5264
  %v5266 = vpop.f32.mrf.mxu0
  %5267 = vdwg.mxu0
  %5268 = vmatprep.subr.mxu0 0.0
  %5269 = vmatpush1.msra.mxu0 0.0
  %5270 = vmatprep.subr.mxu0 0.0
  %5271 = vmatpush1.msra.mxu0 0.0
  %5272 = vmatprep.subr.mxu0 0.0
  %5273 = vmatpush1.msra.mxu0 0.0
  %5274 = vmatprep.subr.mxu0 0.0
  %5275 = vmatpush1.msra.mxu0 0.0
  %5276 = vmatprep.subr.mxu0 0.0
  %5277 = vmatpush1.msra.mxu0 0.0
  %5278 = vmatprep.subr.mxu0 0.0
  %5279 = vmatpush1.msra.mxu0 0.0
  %5280 = vmatprep.subr.mxu0 0.0
  %5281 = vmatpush1.msra.mxu0 0.0
  %5282 = vmatprep.subr.mxu0 0.0
  %5283 = vmatpush1.msra.mxu0 0.0
  %5284 = vmatprep.subr.mxu0 0.0
  %5285 = vmatpush1.msra.mxu0 0.0
  %5286 = vmatprep.subr.mxu0 0.0
  %5287 = vmatpush1.msra.mxu0 0.0
  %5288 = vmatprep.subr.mxu0 0.0
  %5289 = vmatpush1.msra.mxu0 0.0
  %5290 = vmatprep.subr.mxu0 0.0
  %5291 = vmatpush1.msra.mxu0 0.0
  %5292 = vmatprep.subr.mxu0 0.0
  %v5293 = vand.u32 %v2064, 4294901760
  %v5294 = vsub.f32 %v2064, %v5293
  %v5295 = vand.u32 %v5294, 4294901760
  %v5296 = vsub.f32 %v5294, %v5295
  %v5297 = vand.u32 %v5296, 4294901760
  %5298 = vmatpush1.msra.mxu0 %v5297
  %5299 = vmatprep.subr.mxu0 0.0
  %v5300 = vand.u32 %v2063, 4294901760
  %v5301 = vsub.f32 %v2063, %v5300
  %v5302 = vand.u32 %v5301, 4294901760
  %v5303 = vsub.f32 %v5301, %v5302
  %v5304 = vand.u32 %v5303, 4294901760
  %5305 = vmatpush1.msra.mxu0 %v5304
  %5306 = vmatprep.subr.mxu0 0.0
  %v5307 = vand.u32 %v2062, 4294901760
  %v5308 = vsub.f32 %v2062, %v5307
  %v5309 = vand.u32 %v5308, 4294901760
  %v5310 = vsub.f32 %v5308, %v5309
  %v5311 = vand.u32 %v5310, 4294901760
  %5312 = vmatpush1.msra.mxu0 %v5311
  %5313 = vmatprep.subr.mxu0 0.0
  %v5314 = vand.u32 %v2061, 4294901760
  %v5315 = vsub.f32 %v2061, %v5314
  %v5316 = vand.u32 %v5315, 4294901760
  %v5317 = vsub.f32 %v5315, %v5316
  %v5318 = vand.u32 %v5317, 4294901760
  %5319 = vmatpush1.msra.mxu0 %v5318
  %5320 = vmatprep.subr.mxu0 0.0
  %5321 = vmatpush2.msra.mxu0 0.0
  %5322 = vmatprep.subr.mxu0 0.0
  %5323 = vmatpush2.msra.mxu0 0.0
  %5324 = vmatprep.subr.mxu0 0.0
  %5325 = vmatpush2.msra.mxu0 0.0
  %5326 = vmatprep.subr.mxu0 0.0
  %5327 = vmatpush2.msra.mxu0 0.0
  %5328 = vmatprep.subr.mxu0 0.0
  %5329 = vmatpush2.msra.mxu0 0.0
  %5330 = vmatprep.subr.mxu0 0.0
  %5331 = vmatpush2.msra.mxu0 0.0
  %5332 = vmatprep.subr.mxu0 0.0
  %5333 = vmatpush2.msra.mxu0 0.0
  %5334 = vmatprep.subr.mxu0 0.0
  %5335 = vmatpush2.msra.mxu0 0.0
  %5336 = vmatprep.subr.mxu0 0.0
  %5337 = vmatpush2.msra.mxu0 0.0
  %5338 = vmatprep.subr.mxu0 0.0
  %5339 = vmatpush2.msra.mxu0 0.0
  %5340 = vmatprep.subr.mxu0 0.0
  %5341 = vmatpush2.msra.mxu0 0.0
  %5342 = vmatprep.subr.mxu0 0.0
  %5343 = vmatpush2.msra.mxu0 0.0
  %5344 = vmatprep.subr.mxu0 0.0
  %5345 = vmatpush2.msra.mxu0 0.0
  %5346 = vmatprep.subr.mxu0 0.0
  %5347 = vmatpush2.msra.mxu0 0.0
  %5348 = vmatprep.subr.mxu0 0.0
  %5349 = vmatpush2.msra.mxu0 0.0
  %5350 = vmatprep.subr.mxu0 0.0
  %5351 = vmatpush2.msra.mxu0 0.0
  %5352 = vmatprep.mubr.f32.mxu0 0.0
  %v5353 = vand.u32 %v5187, 4294901760
  %5354 = vmatmul.mubr.f32.gmra.mxu0 %v5353
  %v5355 = vpop.f32.mrf.mxu0
  %v5356 = vadd.f32 %v5265, %v5355
  %v5357 = vpop.f32.mrf.mxu0
  %5358 = vdwg.mxu0
  %5359 = vmatprep.subr.mxu0 0.0
  %5360 = vmatpush1.msra.mxu0 0.0
  %5361 = vmatprep.subr.mxu0 0.0
  %5362 = vmatpush1.msra.mxu0 0.0
  %5363 = vmatprep.subr.mxu0 0.0
  %5364 = vmatpush1.msra.mxu0 0.0
  %5365 = vmatprep.subr.mxu0 0.0
  %5366 = vmatpush1.msra.mxu0 0.0
  %5367 = vmatprep.subr.mxu0 0.0
  %5368 = vmatpush1.msra.mxu0 0.0
  %5369 = vmatprep.subr.mxu0 0.0
  %5370 = vmatpush1.msra.mxu0 0.0
  %5371 = vmatprep.subr.mxu0 0.0
  %5372 = vmatpush1.msra.mxu0 0.0
  %5373 = vmatprep.subr.mxu0 0.0
  %5374 = vmatpush1.msra.mxu0 0.0
  %5375 = vmatprep.subr.mxu0 0.0
  %5376 = vmatpush1.msra.mxu0 0.0
  %5377 = vmatprep.subr.mxu0 0.0
  %5378 = vmatpush1.msra.mxu0 0.0
  %5379 = vmatprep.subr.mxu0 0.0
  %5380 = vmatpush1.msra.mxu0 0.0
  %5381 = vmatprep.subr.mxu0 0.0
  %5382 = vmatpush1.msra.mxu0 0.0
  %5383 = vmatprep.subr.mxu0 0.0
  %v5384 = vand.u32 %v2064, 4294901760
  %v5385 = vsub.f32 %v2064, %v5384
  %5386 = vmatpush1.msra.mxu0 %v5385
  %5387 = vmatprep.subr.mxu0 0.0
  %v5388 = vand.u32 %v2063, 4294901760
  %v5389 = vsub.f32 %v2063, %v5388
  %5390 = vmatpush1.msra.mxu0 %v5389
  %5391 = vmatprep.subr.mxu0 0.0
  %v5392 = vand.u32 %v2062, 4294901760
  %v5393 = vsub.f32 %v2062, %v5392
  %5394 = vmatpush1.msra.mxu0 %v5393
  %5395 = vmatprep.subr.mxu0 0.0
  %v5396 = vand.u32 %v2061, 4294901760
  %v5397 = vsub.f32 %v2061, %v5396
  %5398 = vmatpush1.msra.mxu0 %v5397
  %5399 = vmatprep.subr.mxu0 0.0
  %5400 = vmatpush2.msra.mxu0 0.0
  %5401 = vmatprep.subr.mxu0 0.0
  %5402 = vmatpush2.msra.mxu0 0.0
  %5403 = vmatprep.subr.mxu0 0.0
  %5404 = vmatpush2.msra.mxu0 0.0
  %5405 = vmatprep.subr.mxu0 0.0
  %5406 = vmatpush2.msra.mxu0 0.0
  %5407 = vmatprep.subr.mxu0 0.0
  %5408 = vmatpush2.msra.mxu0 0.0
  %5409 = vmatprep.subr.mxu0 0.0
  %5410 = vmatpush2.msra.mxu0 0.0
  %5411 = vmatprep.subr.mxu0 0.0
  %5412 = vmatpush2.msra.mxu0 0.0
  %5413 = vmatprep.subr.mxu0 0.0
  %5414 = vmatpush2.msra.mxu0 0.0
  %5415 = vmatprep.subr.mxu0 0.0
  %5416 = vmatpush2.msra.mxu0 0.0
  %5417 = vmatprep.subr.mxu0 0.0
  %5418 = vmatpush2.msra.mxu0 0.0
  %5419 = vmatprep.subr.mxu0 0.0
  %5420 = vmatpush2.msra.mxu0 0.0
  %5421 = vmatprep.subr.mxu0 0.0
  %5422 = vmatpush2.msra.mxu0 0.0
  %5423 = vmatprep.subr.mxu0 0.0
  %5424 = vmatpush2.msra.mxu0 0.0
  %5425 = vmatprep.subr.mxu0 0.0
  %5426 = vmatpush2.msra.mxu0 0.0
  %5427 = vmatprep.subr.mxu0 0.0
  %5428 = vmatpush2.msra.mxu0 0.0
  %5429 = vmatprep.subr.mxu0 0.0
  %5430 = vmatpush2.msra.mxu0 0.0
  %5431 = vmatprep.mubr.f32.mxu0 0.0
  %v5432 = vand.u32 %v5187, 4294901760
  %v5433 = vsub.f32 %v5187, %v5432
  %5434 = vmatmul.mubr.f32.gmra.mxu0 %v5433
  %v5435 = vpop.f32.mrf.mxu0
  %v5436 = vadd.f32 %v5356, %v5435
  %v5437 = vpop.f32.mrf.mxu0
  %5438 = vdwg.mxu0
  %5439 = vmatprep.subr.mxu0 0.0
  %5440 = vmatpush1.msra.mxu0 0.0
  %5441 = vmatprep.subr.mxu0 0.0
  %5442 = vmatpush1.msra.mxu0 0.0
  %5443 = vmatprep.subr.mxu0 0.0
  %5444 = vmatpush1.msra.mxu0 0.0
  %5445 = vmatprep.subr.mxu0 0.0
  %5446 = vmatpush1.msra.mxu0 0.0
  %5447 = vmatprep.subr.mxu0 0.0
  %5448 = vmatpush1.msra.mxu0 0.0
  %5449 = vmatprep.subr.mxu0 0.0
  %5450 = vmatpush1.msra.mxu0 0.0
  %5451 = vmatprep.subr.mxu0 0.0
  %5452 = vmatpush1.msra.mxu0 0.0
  %5453 = vmatprep.subr.mxu0 0.0
  %5454 = vmatpush1.msra.mxu0 0.0
  %5455 = vmatprep.subr.mxu0 0.0
  %5456 = vmatpush1.msra.mxu0 0.0
  %5457 = vmatprep.subr.mxu0 0.0
  %5458 = vmatpush1.msra.mxu0 0.0
  %5459 = vmatprep.subr.mxu0 0.0
  %5460 = vmatpush1.msra.mxu0 0.0
  %5461 = vmatprep.subr.mxu0 0.0
  %5462 = vmatpush1.msra.mxu0 0.0
  %5463 = vmatprep.subr.mxu0 0.0
  %v5464 = vand.u32 %v2064, 4294901760
  %5465 = vmatpush1.msra.mxu0 %v5464
  %5466 = vmatprep.subr.mxu0 0.0
  %v5467 = vand.u32 %v2063, 4294901760
  %5468 = vmatpush1.msra.mxu0 %v5467
  %5469 = vmatprep.subr.mxu0 0.0
  %v5470 = vand.u32 %v2062, 4294901760
  %5471 = vmatpush1.msra.mxu0 %v5470
  %5472 = vmatprep.subr.mxu0 0.0
  %v5473 = vand.u32 %v2061, 4294901760
  %5474 = vmatpush1.msra.mxu0 %v5473
  %5475 = vmatprep.subr.mxu0 0.0
  %5476 = vmatpush2.msra.mxu0 0.0
  %5477 = vmatprep.subr.mxu0 0.0
  %5478 = vmatpush2.msra.mxu0 0.0
  %5479 = vmatprep.subr.mxu0 0.0
  %5480 = vmatpush2.msra.mxu0 0.0
  %5481 = vmatprep.subr.mxu0 0.0
  %5482 = vmatpush2.msra.mxu0 0.0
  %5483 = vmatprep.subr.mxu0 0.0
  %5484 = vmatpush2.msra.mxu0 0.0
  %5485 = vmatprep.subr.mxu0 0.0
  %5486 = vmatpush2.msra.mxu0 0.0
  %5487 = vmatprep.subr.mxu0 0.0
  %5488 = vmatpush2.msra.mxu0 0.0
  %5489 = vmatprep.subr.mxu0 0.0
  %5490 = vmatpush2.msra.mxu0 0.0
  %5491 = vmatprep.subr.mxu0 0.0
  %5492 = vmatpush2.msra.mxu0 0.0
  %5493 = vmatprep.subr.mxu0 0.0
  %5494 = vmatpush2.msra.mxu0 0.0
  %5495 = vmatprep.subr.mxu0 0.0
  %5496 = vmatpush2.msra.mxu0 0.0
  %5497 = vmatprep.subr.mxu0 0.0
  %5498 = vmatpush2.msra.mxu0 0.0
  %5499 = vmatprep.subr.mxu0 0.0
  %5500 = vmatpush2.msra.mxu0 0.0
  %5501 = vmatprep.subr.mxu0 0.0
  %5502 = vmatpush2.msra.mxu0 0.0
  %5503 = vmatprep.subr.mxu0 0.0
  %5504 = vmatpush2.msra.mxu0 0.0
  %5505 = vmatprep.subr.mxu0 0.0
  %5506 = vmatpush2.msra.mxu0 0.0
  %5507 = vmatprep.mubr.f32.mxu0 0.0
  %v5508 = vand.u32 %v5187, 4294901760
  %v5509 = vsub.f32 %v5187, %v5508
  %v5510 = vand.u32 %v5509, 4294901760
  %5511 = vmatmul.mubr.f32.gmra.mxu0 %v5510
  %v5512 = vpop.f32.mrf.mxu0
  %v5513 = vadd.f32 %v5436, %v5512
  %v5514 = vpop.f32.mrf.mxu0
  %5515 = vdwg.mxu0
  %5516 = vmatprep.subr.mxu0 0.0
  %5517 = vmatpush1.msra.mxu0 0.0
  %5518 = vmatprep.subr.mxu0 0.0
  %5519 = vmatpush1.msra.mxu0 0.0
  %5520 = vmatprep.subr.mxu0 0.0
  %5521 = vmatpush1.msra.mxu0 0.0
  %5522 = vmatprep.subr.mxu0 0.0
  %5523 = vmatpush1.msra.mxu0 0.0
  %5524 = vmatprep.subr.mxu0 0.0
  %5525 = vmatpush1.msra.mxu0 0.0
  %5526 = vmatprep.subr.mxu0 0.0
  %5527 = vmatpush1.msra.mxu0 0.0
  %5528 = vmatprep.subr.mxu0 0.0
  %5529 = vmatpush1.msra.mxu0 0.0
  %5530 = vmatprep.subr.mxu0 0.0
  %5531 = vmatpush1.msra.mxu0 0.0
  %5532 = vmatprep.subr.mxu0 0.0
  %5533 = vmatpush1.msra.mxu0 0.0
  %5534 = vmatprep.subr.mxu0 0.0
  %5535 = vmatpush1.msra.mxu0 0.0
  %5536 = vmatprep.subr.mxu0 0.0
  %5537 = vmatpush1.msra.mxu0 0.0
  %5538 = vmatprep.subr.mxu0 0.0
  %5539 = vmatpush1.msra.mxu0 0.0
  %5540 = vmatprep.subr.mxu0 0.0
  %v5541 = vand.u32 %v2064, 4294901760
  %v5542 = vsub.f32 %v2064, %v5541
  %v5543 = vand.u32 %v5542, 4294901760
  %5544 = vmatpush1.msra.mxu0 %v5543
  %5545 = vmatprep.subr.mxu0 0.0
  %v5546 = vand.u32 %v2063, 4294901760
  %v5547 = vsub.f32 %v2063, %v5546
  %v5548 = vand.u32 %v5547, 4294901760
  %5549 = vmatpush1.msra.mxu0 %v5548
  %5550 = vmatprep.subr.mxu0 0.0
  %v5551 = vand.u32 %v2062, 4294901760
  %v5552 = vsub.f32 %v2062, %v5551
  %v5553 = vand.u32 %v5552, 4294901760
  %5554 = vmatpush1.msra.mxu0 %v5553
  %5555 = vmatprep.subr.mxu0 0.0
  %v5556 = vand.u32 %v2061, 4294901760
  %v5557 = vsub.f32 %v2061, %v5556
  %v5558 = vand.u32 %v5557, 4294901760
  %5559 = vmatpush1.msra.mxu0 %v5558
  %5560 = vmatprep.subr.mxu0 0.0
  %5561 = vmatpush2.msra.mxu0 0.0
  %5562 = vmatprep.subr.mxu0 0.0
  %5563 = vmatpush2.msra.mxu0 0.0
  %5564 = vmatprep.subr.mxu0 0.0
  %5565 = vmatpush2.msra.mxu0 0.0
  %5566 = vmatprep.subr.mxu0 0.0
  %5567 = vmatpush2.msra.mxu0 0.0
  %5568 = vmatprep.subr.mxu0 0.0
  %5569 = vmatpush2.msra.mxu0 0.0
  %5570 = vmatprep.subr.mxu0 0.0
  %5571 = vmatpush2.msra.mxu0 0.0
  %5572 = vmatprep.subr.mxu0 0.0
  %5573 = vmatpush2.msra.mxu0 0.0
  %5574 = vmatprep.subr.mxu0 0.0
  %5575 = vmatpush2.msra.mxu0 0.0
  %5576 = vmatprep.subr.mxu0 0.0
  %5577 = vmatpush2.msra.mxu0 0.0
  %5578 = vmatprep.subr.mxu0 0.0
  %5579 = vmatpush2.msra.mxu0 0.0
  %5580 = vmatprep.subr.mxu0 0.0
  %5581 = vmatpush2.msra.mxu0 0.0
  %5582 = vmatprep.subr.mxu0 0.0
  %5583 = vmatpush2.msra.mxu0 0.0
  %5584 = vmatprep.subr.mxu0 0.0
  %5585 = vmatpush2.msra.mxu0 0.0
  %5586 = vmatprep.subr.mxu0 0.0
  %5587 = vmatpush2.msra.mxu0 0.0
  %5588 = vmatprep.subr.mxu0 0.0
  %5589 = vmatpush2.msra.mxu0 0.0
  %5590 = vmatprep.subr.mxu0 0.0
  %5591 = vmatpush2.msra.mxu0 0.0
  %5592 = vmatprep.mubr.f32.mxu0 0.0
  %v5593 = vand.u32 %v5187, 4294901760
  %5594 = vmatmul.mubr.f32.gmra.mxu0 %v5593
  %v5595 = vpop.f32.mrf.mxu0
  %v5596 = vadd.f32 %v5513, %v5595
  %v5597 = vpop.f32.mrf.mxu0
  %5598 = vdwg.mxu0
  %5599 = vmatprep.subr.mxu0 0.0
  %5600 = vmatpush1.msra.mxu0 0.0
  %5601 = vmatprep.subr.mxu0 0.0
  %5602 = vmatpush1.msra.mxu0 0.0
  %5603 = vmatprep.subr.mxu0 0.0
  %5604 = vmatpush1.msra.mxu0 0.0
  %5605 = vmatprep.subr.mxu0 0.0
  %5606 = vmatpush1.msra.mxu0 0.0
  %5607 = vmatprep.subr.mxu0 0.0
  %5608 = vmatpush1.msra.mxu0 0.0
  %5609 = vmatprep.subr.mxu0 0.0
  %5610 = vmatpush1.msra.mxu0 0.0
  %5611 = vmatprep.subr.mxu0 0.0
  %5612 = vmatpush1.msra.mxu0 0.0
  %5613 = vmatprep.subr.mxu0 0.0
  %5614 = vmatpush1.msra.mxu0 0.0
  %5615 = vmatprep.subr.mxu0 0.0
  %5616 = vmatpush1.msra.mxu0 0.0
  %5617 = vmatprep.subr.mxu0 0.0
  %5618 = vmatpush1.msra.mxu0 0.0
  %5619 = vmatprep.subr.mxu0 0.0
  %5620 = vmatpush1.msra.mxu0 0.0
  %5621 = vmatprep.subr.mxu0 0.0
  %5622 = vmatpush1.msra.mxu0 0.0
  %5623 = vmatprep.subr.mxu0 0.0
  %v5624 = vand.u32 %v2064, 4294901760
  %5625 = vmatpush1.msra.mxu0 %v5624
  %5626 = vmatprep.subr.mxu0 0.0
  %v5627 = vand.u32 %v2063, 4294901760
  %5628 = vmatpush1.msra.mxu0 %v5627
  %5629 = vmatprep.subr.mxu0 0.0
  %v5630 = vand.u32 %v2062, 4294901760
  %5631 = vmatpush1.msra.mxu0 %v5630
  %5632 = vmatprep.subr.mxu0 0.0
  %v5633 = vand.u32 %v2061, 4294901760
  %5634 = vmatpush1.msra.mxu0 %v5633
  %5635 = vmatprep.subr.mxu0 0.0
  %5636 = vmatpush2.msra.mxu0 0.0
  %5637 = vmatprep.subr.mxu0 0.0
  %5638 = vmatpush2.msra.mxu0 0.0
  %5639 = vmatprep.subr.mxu0 0.0
  %5640 = vmatpush2.msra.mxu0 0.0
  %5641 = vmatprep.subr.mxu0 0.0
  %5642 = vmatpush2.msra.mxu0 0.0
  %5643 = vmatprep.subr.mxu0 0.0
  %5644 = vmatpush2.msra.mxu0 0.0
  %5645 = vmatprep.subr.mxu0 0.0
  %5646 = vmatpush2.msra.mxu0 0.0
  %5647 = vmatprep.subr.mxu0 0.0
  %5648 = vmatpush2.msra.mxu0 0.0
  %5649 = vmatprep.subr.mxu0 0.0
  %5650 = vmatpush2.msra.mxu0 0.0
  %5651 = vmatprep.subr.mxu0 0.0
  %5652 = vmatpush2.msra.mxu0 0.0
  %5653 = vmatprep.subr.mxu0 0.0
  %5654 = vmatpush2.msra.mxu0 0.0
  %5655 = vmatprep.subr.mxu0 0.0
  %5656 = vmatpush2.msra.mxu0 0.0
  %5657 = vmatprep.subr.mxu0 0.0
  %5658 = vmatpush2.msra.mxu0 0.0
  %5659 = vmatprep.subr.mxu0 0.0
  %5660 = vmatpush2.msra.mxu0 0.0
  %5661 = vmatprep.subr.mxu0 0.0
  %5662 = vmatpush2.msra.mxu0 0.0
  %5663 = vmatprep.subr.mxu0 0.0
  %5664 = vmatpush2.msra.mxu0 0.0
  %5665 = vmatprep.subr.mxu0 0.0
  %5666 = vmatpush2.msra.mxu0 0.0
  %5667 = vmatprep.mubr.f32.mxu0 0.0
  %v5668 = vand.u32 %v5187, 4294901760
  %5669 = vmatmul.mubr.f32.gmra.mxu0 %v5668
  %v5670 = vpop.f32.mrf.mxu0
  %v5671 = vadd.f32 %v5596, %v5670
  %v5672 = vpop.f32.mrf.mxu0
  %5673 = vdwg.mxu0
  %v5674 = vadd.f32 %v5186, %v5671
  %v5675 = vxor.u32 %v5674, 2147483648
  %v5676 = vmul.f32 %v5675, 1.442695
  %v5677 = vpow.pop %v5676
  %v5678 = vadd.f32 %v5677, 1.0
  %v5679 = vrcp.pop %v5678
  %v5680 = vmul.f32 1.0, %v5679
  %5682 = vrot.lane.b32.xlu0 %v5671, 64
  %v5683 = vpop.permute.xlu0 %5682
  %v5685 = vmul.f32 %v5680, %v5683
  %5687 = vrot.lane.b32.xlu0 %v5685, 64
  %v5688 = vpop.permute.xlu0 %5687
  %v5690 = vadd.f32 %v5186, %v5688
  %v5691 = vtanh.pop %v5690
  %v5692 = vsub.f32 1.0, %v5680
  %5694 = vrot.lane.b32.xlu0 %v5691, 96
  %v5695 = vpop.permute.xlu0 %5694
  %v5697 = vmul.f32 %v5692, %v5695
  %v5698 = vmul.f32 %v5680, %v5180
  %v5699 = vadd.f32 %v5697, %v5698
  %5701 = vrot.lane.b32.xlu0 %v5699, 96
  %v5702 = vpop.permute.xlu0 %5701
  %5704 = vst.msk [vmem:[#allocation3 + $0x30] sm:$0xff] %vm2071, %v5702
  %v5705 = vld [vmem:[#allocation2 + $0x38] sm:$0xff]
  %v5706 = vsel %vm2071, %v5702, 0
  %5708 = vmatprep.subr.mxu0 0.0
  %5709 = vmatpush1.msra.mxu0 0.0
  %5710 = vmatprep.subr.mxu0 0.0
  %5711 = vmatpush1.msra.mxu0 0.0
  %5712 = vmatprep.subr.mxu0 0.0
  %5713 = vmatpush1.msra.mxu0 0.0
  %5714 = vmatprep.subr.mxu0 0.0
  %5715 = vmatpush1.msra.mxu0 0.0
  %5716 = vmatprep.subr.mxu0 0.0
  %5717 = vmatpush1.msra.mxu0 0.0
  %5718 = vmatprep.subr.mxu0 0.0
  %5719 = vmatpush1.msra.mxu0 0.0
  %5720 = vmatprep.subr.mxu0 0.0
  %5721 = vmatpush1.msra.mxu0 0.0
  %5722 = vmatprep.subr.mxu0 0.0
  %5723 = vmatpush1.msra.mxu0 0.0
  %5724 = vmatprep.subr.mxu0 0.0
  %5725 = vmatpush1.msra.mxu0 0.0
  %5726 = vmatprep.subr.mxu0 0.0
  %5727 = vmatpush1.msra.mxu0 0.0
  %5728 = vmatprep.subr.mxu0 0.0
  %5729 = vmatpush1.msra.mxu0 0.0
  %5730 = vmatprep.subr.mxu0 0.0
  %5731 = vmatpush1.msra.mxu0 0.0
  %5732 = vmatprep.subr.mxu0 0.0
  %v5733 = vand.u32 %v2064, 4294901760
  %5734 = vmatpush1.msra.mxu0 %v5733
  %5735 = vmatprep.subr.mxu0 0.0
  %v5736 = vand.u32 %v2063, 4294901760
  %5737 = vmatpush1.msra.mxu0 %v5736
  %5738 = vmatprep.subr.mxu0 0.0
  %v5739 = vand.u32 %v2062, 4294901760
  %5740 = vmatpush1.msra.mxu0 %v5739
  %5741 = vmatprep.subr.mxu0 0.0
  %v5742 = vand.u32 %v2061, 4294901760
  %5743 = vmatpush1.msra.mxu0 %v5742
  %5744 = vmatprep.subr.mxu0 0.0
  %5745 = vmatpush2.msra.mxu0 0.0
  %5746 = vmatprep.subr.mxu0 0.0
  %5747 = vmatpush2.msra.mxu0 0.0
  %5748 = vmatprep.subr.mxu0 0.0
  %5749 = vmatpush2.msra.mxu0 0.0
  %5750 = vmatprep.subr.mxu0 0.0
  %5751 = vmatpush2.msra.mxu0 0.0
  %5752 = vmatprep.subr.mxu0 0.0
  %5753 = vmatpush2.msra.mxu0 0.0
  %5754 = vmatprep.subr.mxu0 0.0
  %5755 = vmatpush2.msra.mxu0 0.0
  %5756 = vmatprep.subr.mxu0 0.0
  %5757 = vmatpush2.msra.mxu0 0.0
  %5758 = vmatprep.subr.mxu0 0.0
  %5759 = vmatpush2.msra.mxu0 0.0
  %5760 = vmatprep.subr.mxu0 0.0
  %5761 = vmatpush2.msra.mxu0 0.0
  %5762 = vmatprep.subr.mxu0 0.0
  %5763 = vmatpush2.msra.mxu0 0.0
  %5764 = vmatprep.subr.mxu0 0.0
  %5765 = vmatpush2.msra.mxu0 0.0
  %5766 = vmatprep.subr.mxu0 0.0
  %5767 = vmatpush2.msra.mxu0 0.0
  %5768 = vmatprep.subr.mxu0 0.0
  %5769 = vmatpush2.msra.mxu0 0.0
  %5770 = vmatprep.subr.mxu0 0.0
  %5771 = vmatpush2.msra.mxu0 0.0
  %5772 = vmatprep.subr.mxu0 0.0
  %5773 = vmatpush2.msra.mxu0 0.0
  %5774 = vmatprep.subr.mxu0 0.0
  %5775 = vmatpush2.msra.mxu0 0.0
  %5776 = vmatprep.mubr.f32.mxu0 0.0
  %v5777 = vand.u32 %v5706, 4294901760
  %v5778 = vsub.f32 %v5706, %v5777
  %v5779 = vand.u32 %v5778, 4294901760
  %v5780 = vsub.f32 %v5778, %v5779
  %v5781 = vand.u32 %v5780, 4294901760
  %5782 = vmatmul.mubr.f32.gmra.mxu0 %v5781
  %v5783 = vpop.f32.mrf.mxu0
  %v5784 = vadd.f32 %v2070, %v5783
  %v5785 = vpop.f32.mrf.mxu0
  %5786 = vdwg.mxu0
  %5787 = vmatprep.subr.mxu0 0.0
  %5788 = vmatpush1.msra.mxu0 0.0
  %5789 = vmatprep.subr.mxu0 0.0
  %5790 = vmatpush1.msra.mxu0 0.0
  %5791 = vmatprep.subr.mxu0 0.0
  %5792 = vmatpush1.msra.mxu0 0.0
  %5793 = vmatprep.subr.mxu0 0.0
  %5794 = vmatpush1.msra.mxu0 0.0
  %5795 = vmatprep.subr.mxu0 0.0
  %5796 = vmatpush1.msra.mxu0 0.0
  %5797 = vmatprep.subr.mxu0 0.0
  %5798 = vmatpush1.msra.mxu0 0.0
  %5799 = vmatprep.subr.mxu0 0.0
  %5800 = vmatpush1.msra.mxu0 0.0
  %5801 = vmatprep.subr.mxu0 0.0
  %5802 = vmatpush1.msra.mxu0 0.0
  %5803 = vmatprep.subr.mxu0 0.0
  %5804 = vmatpush1.msra.mxu0 0.0
  %5805 = vmatprep.subr.mxu0 0.0
  %5806 = vmatpush1.msra.mxu0 0.0
  %5807 = vmatprep.subr.mxu0 0.0
  %5808 = vmatpush1.msra.mxu0 0.0
  %5809 = vmatprep.subr.mxu0 0.0
  %5810 = vmatpush1.msra.mxu0 0.0
  %5811 = vmatprep.subr.mxu0 0.0
  %v5812 = vand.u32 %v2064, 4294901760
  %v5813 = vsub.f32 %v2064, %v5812
  %v5814 = vand.u32 %v5813, 4294901760
  %v5815 = vsub.f32 %v5813, %v5814
  %v5816 = vand.u32 %v5815, 4294901760
  %5817 = vmatpush1.msra.mxu0 %v5816
  %5818 = vmatprep.subr.mxu0 0.0
  %v5819 = vand.u32 %v2063, 4294901760
  %v5820 = vsub.f32 %v2063, %v5819
  %v5821 = vand.u32 %v5820, 4294901760
  %v5822 = vsub.f32 %v5820, %v5821
  %v5823 = vand.u32 %v5822, 4294901760
  %5824 = vmatpush1.msra.mxu0 %v5823
  %5825 = vmatprep.subr.mxu0 0.0
  %v5826 = vand.u32 %v2062, 4294901760
  %v5827 = vsub.f32 %v2062, %v5826
  %v5828 = vand.u32 %v5827, 4294901760
  %v5829 = vsub.f32 %v5827, %v5828
  %v5830 = vand.u32 %v5829, 4294901760
  %5831 = vmatpush1.msra.mxu0 %v5830
  %5832 = vmatprep.subr.mxu0 0.0
  %v5833 = vand.u32 %v2061, 4294901760
  %v5834 = vsub.f32 %v2061, %v5833
  %v5835 = vand.u32 %v5834, 4294901760
  %v5836 = vsub.f32 %v5834, %v5835
  %v5837 = vand.u32 %v5836, 4294901760
  %5838 = vmatpush1.msra.mxu0 %v5837
  %5839 = vmatprep.subr.mxu0 0.0
  %5840 = vmatpush2.msra.mxu0 0.0
  %5841 = vmatprep.subr.mxu0 0.0
  %5842 = vmatpush2.msra.mxu0 0.0
  %5843 = vmatprep.subr.mxu0 0.0
  %5844 = vmatpush2.msra.mxu0 0.0
  %5845 = vmatprep.subr.mxu0 0.0
  %5846 = vmatpush2.msra.mxu0 0.0
  %5847 = vmatprep.subr.mxu0 0.0
  %5848 = vmatpush2.msra.mxu0 0.0
  %5849 = vmatprep.subr.mxu0 0.0
  %5850 = vmatpush2.msra.mxu0 0.0
  %5851 = vmatprep.subr.mxu0 0.0
  %5852 = vmatpush2.msra.mxu0 0.0
  %5853 = vmatprep.subr.mxu0 0.0
  %5854 = vmatpush2.msra.mxu0 0.0
  %5855 = vmatprep.subr.mxu0 0.0
  %5856 = vmatpush2.msra.mxu0 0.0
  %5857 = vmatprep.subr.mxu0 0.0
  %5858 = vmatpush2.msra.mxu0 0.0
  %5859 = vmatprep.subr.mxu0 0.0
  %5860 = vmatpush2.msra.mxu0 0.0
  %5861 = vmatprep.subr.mxu0 0.0
  %5862 = vmatpush2.msra.mxu0 0.0
  %5863 = vmatprep.subr.mxu0 0.0
  %5864 = vmatpush2.msra.mxu0 0.0
  %5865 = vmatprep.subr.mxu0 0.0
  %5866 = vmatpush2.msra.mxu0 0.0
  %5867 = vmatprep.subr.mxu0 0.0
  %5868 = vmatpush2.msra.mxu0 0.0
  %5869 = vmatprep.subr.mxu0 0.0
  %5870 = vmatpush2.msra.mxu0 0.0
  %5871 = vmatprep.mubr.f32.mxu0 0.0
  %v5872 = vand.u32 %v5706, 4294901760
  %5873 = vmatmul.mubr.f32.gmra.mxu0 %v5872
  %v5874 = vpop.f32.mrf.mxu0
  %v5875 = vadd.f32 %v5784, %v5874
  %v5876 = vpop.f32.mrf.mxu0
  %5877 = vdwg.mxu0
  %5878 = vmatprep.subr.mxu0 0.0
  %5879 = vmatpush1.msra.mxu0 0.0
  %5880 = vmatprep.subr.mxu0 0.0
  %5881 = vmatpush1.msra.mxu0 0.0
  %5882 = vmatprep.subr.mxu0 0.0
  %5883 = vmatpush1.msra.mxu0 0.0
  %5884 = vmatprep.subr.mxu0 0.0
  %5885 = vmatpush1.msra.mxu0 0.0
  %5886 = vmatprep.subr.mxu0 0.0
  %5887 = vmatpush1.msra.mxu0 0.0
  %5888 = vmatprep.subr.mxu0 0.0
  %5889 = vmatpush1.msra.mxu0 0.0
  %5890 = vmatprep.subr.mxu0 0.0
  %5891 = vmatpush1.msra.mxu0 0.0
  %5892 = vmatprep.subr.mxu0 0.0
  %5893 = vmatpush1.msra.mxu0 0.0
  %5894 = vmatprep.subr.mxu0 0.0
  %5895 = vmatpush1.msra.mxu0 0.0
  %5896 = vmatprep.subr.mxu0 0.0
  %5897 = vmatpush1.msra.mxu0 0.0
  %5898 = vmatprep.subr.mxu0 0.0
  %5899 = vmatpush1.msra.mxu0 0.0
  %5900 = vmatprep.subr.mxu0 0.0
  %5901 = vmatpush1.msra.mxu0 0.0
  %5902 = vmatprep.subr.mxu0 0.0
  %v5903 = vand.u32 %v2064, 4294901760
  %v5904 = vsub.f32 %v2064, %v5903
  %5905 = vmatpush1.msra.mxu0 %v5904
  %5906 = vmatprep.subr.mxu0 0.0
  %v5907 = vand.u32 %v2063, 4294901760
  %v5908 = vsub.f32 %v2063, %v5907
  %5909 = vmatpush1.msra.mxu0 %v5908
  %5910 = vmatprep.subr.mxu0 0.0
  %v5911 = vand.u32 %v2062, 4294901760
  %v5912 = vsub.f32 %v2062, %v5911
  %5913 = vmatpush1.msra.mxu0 %v5912
  %5914 = vmatprep.subr.mxu0 0.0
  %v5915 = vand.u32 %v2061, 4294901760
  %v5916 = vsub.f32 %v2061, %v5915
  %5917 = vmatpush1.msra.mxu0 %v5916
  %5918 = vmatprep.subr.mxu0 0.0
  %5919 = vmatpush2.msra.mxu0 0.0
  %5920 = vmatprep.subr.mxu0 0.0
  %5921 = vmatpush2.msra.mxu0 0.0
  %5922 = vmatprep.subr.mxu0 0.0
  %5923 = vmatpush2.msra.mxu0 0.0
  %5924 = vmatprep.subr.mxu0 0.0
  %5925 = vmatpush2.msra.mxu0 0.0
  %5926 = vmatprep.subr.mxu0 0.0
  %5927 = vmatpush2.msra.mxu0 0.0
  %5928 = vmatprep.subr.mxu0 0.0
  %5929 = vmatpush2.msra.mxu0 0.0
  %5930 = vmatprep.subr.mxu0 0.0
  %5931 = vmatpush2.msra.mxu0 0.0
  %5932 = vmatprep.subr.mxu0 0.0
  %5933 = vmatpush2.msra.mxu0 0.0
  %5934 = vmatprep.subr.mxu0 0.0
  %5935 = vmatpush2.msra.mxu0 0.0
  %5936 = vmatprep.subr.mxu0 0.0
  %5937 = vmatpush2.msra.mxu0 0.0
  %5938 = vmatprep.subr.mxu0 0.0
  %5939 = vmatpush2.msra.mxu0 0.0
  %5940 = vmatprep.subr.mxu0 0.0
  %5941 = vmatpush2.msra.mxu0 0.0
  %5942 = vmatprep.subr.mxu0 0.0
  %5943 = vmatpush2.msra.mxu0 0.0
  %5944 = vmatprep.subr.mxu0 0.0
  %5945 = vmatpush2.msra.mxu0 0.0
  %5946 = vmatprep.subr.mxu0 0.0
  %5947 = vmatpush2.msra.mxu0 0.0
  %5948 = vmatprep.subr.mxu0 0.0
  %5949 = vmatpush2.msra.mxu0 0.0
  %5950 = vmatprep.mubr.f32.mxu0 0.0
  %v5951 = vand.u32 %v5706, 4294901760
  %v5952 = vsub.f32 %v5706, %v5951
  %5953 = vmatmul.mubr.f32.gmra.mxu0 %v5952
  %v5954 = vpop.f32.mrf.mxu0
  %v5955 = vadd.f32 %v5875, %v5954
  %v5956 = vpop.f32.mrf.mxu0
  %5957 = vdwg.mxu0
  %5958 = vmatprep.subr.mxu0 0.0
  %5959 = vmatpush1.msra.mxu0 0.0
  %5960 = vmatprep.subr.mxu0 0.0
  %5961 = vmatpush1.msra.mxu0 0.0
  %5962 = vmatprep.subr.mxu0 0.0
  %5963 = vmatpush1.msra.mxu0 0.0
  %5964 = vmatprep.subr.mxu0 0.0
  %5965 = vmatpush1.msra.mxu0 0.0
  %5966 = vmatprep.subr.mxu0 0.0
  %5967 = vmatpush1.msra.mxu0 0.0
  %5968 = vmatprep.subr.mxu0 0.0
  %5969 = vmatpush1.msra.mxu0 0.0
  %5970 = vmatprep.subr.mxu0 0.0
  %5971 = vmatpush1.msra.mxu0 0.0
  %5972 = vmatprep.subr.mxu0 0.0
  %5973 = vmatpush1.msra.mxu0 0.0
  %5974 = vmatprep.subr.mxu0 0.0
  %5975 = vmatpush1.msra.mxu0 0.0
  %5976 = vmatprep.subr.mxu0 0.0
  %5977 = vmatpush1.msra.mxu0 0.0
  %5978 = vmatprep.subr.mxu0 0.0
  %5979 = vmatpush1.msra.mxu0 0.0
  %5980 = vmatprep.subr.mxu0 0.0
  %5981 = vmatpush1.msra.mxu0 0.0
  %5982 = vmatprep.subr.mxu0 0.0
  %v5983 = vand.u32 %v2064, 4294901760
  %5984 = vmatpush1.msra.mxu0 %v5983
  %5985 = vmatprep.subr.mxu0 0.0
  %v5986 = vand.u32 %v2063, 4294901760
  %5987 = vmatpush1.msra.mxu0 %v5986
  %5988 = vmatprep.subr.mxu0 0.0
  %v5989 = vand.u32 %v2062, 4294901760
  %5990 = vmatpush1.msra.mxu0 %v5989
  %5991 = vmatprep.subr.mxu0 0.0
  %v5992 = vand.u32 %v2061, 4294901760
  %5993 = vmatpush1.msra.mxu0 %v5992
  %5994 = vmatprep.subr.mxu0 0.0
  %5995 = vmatpush2.msra.mxu0 0.0
  %5996 = vmatprep.subr.mxu0 0.0
  %5997 = vmatpush2.msra.mxu0 0.0
  %5998 = vmatprep.subr.mxu0 0.0
  %5999 = vmatpush2.msra.mxu0 0.0
  %6000 = vmatprep.subr.mxu0 0.0
  %6001 = vmatpush2.msra.mxu0 0.0
  %6002 = vmatprep.subr.mxu0 0.0
  %6003 = vmatpush2.msra.mxu0 0.0
  %6004 = vmatprep.subr.mxu0 0.0
  %6005 = vmatpush2.msra.mxu0 0.0
  %6006 = vmatprep.subr.mxu0 0.0
  %6007 = vmatpush2.msra.mxu0 0.0
  %6008 = vmatprep.subr.mxu0 0.0
  %6009 = vmatpush2.msra.mxu0 0.0
  %6010 = vmatprep.subr.mxu0 0.0
  %6011 = vmatpush2.msra.mxu0 0.0
  %6012 = vmatprep.subr.mxu0 0.0
  %6013 = vmatpush2.msra.mxu0 0.0
  %6014 = vmatprep.subr.mxu0 0.0
  %6015 = vmatpush2.msra.mxu0 0.0
  %6016 = vmatprep.subr.mxu0 0.0
  %6017 = vmatpush2.msra.mxu0 0.0
  %6018 = vmatprep.subr.mxu0 0.0
  %6019 = vmatpush2.msra.mxu0 0.0
  %6020 = vmatprep.subr.mxu0 0.0
  %6021 = vmatpush2.msra.mxu0 0.0
  %6022 = vmatprep.subr.mxu0 0.0
  %6023 = vmatpush2.msra.mxu0 0.0
  %6024 = vmatprep.subr.mxu0 0.0
  %6025 = vmatpush2.msra.mxu0 0.0
  %6026 = vmatprep.mubr.f32.mxu0 0.0
  %v6027 = vand.u32 %v5706, 4294901760
  %v6028 = vsub.f32 %v5706, %v6027
  %v6029 = vand.u32 %v6028, 4294901760
  %6030 = vmatmul.mubr.f32.gmra.mxu0 %v6029
  %v6031 = vpop.f32.mrf.mxu0
  %v6032 = vadd.f32 %v5955, %v6031
  %v6033 = vpop.f32.mrf.mxu0
  %6034 = vdwg.mxu0
  %6035 = vmatprep.subr.mxu0 0.0
  %6036 = vmatpush1.msra.mxu0 0.0
  %6037 = vmatprep.subr.mxu0 0.0
  %6038 = vmatpush1.msra.mxu0 0.0
  %6039 = vmatprep.subr.mxu0 0.0
  %6040 = vmatpush1.msra.mxu0 0.0
  %6041 = vmatprep.subr.mxu0 0.0
  %6042 = vmatpush1.msra.mxu0 0.0
  %6043 = vmatprep.subr.mxu0 0.0
  %6044 = vmatpush1.msra.mxu0 0.0
  %6045 = vmatprep.subr.mxu0 0.0
  %6046 = vmatpush1.msra.mxu0 0.0
  %6047 = vmatprep.subr.mxu0 0.0
  %6048 = vmatpush1.msra.mxu0 0.0
  %6049 = vmatprep.subr.mxu0 0.0
  %6050 = vmatpush1.msra.mxu0 0.0
  %6051 = vmatprep.subr.mxu0 0.0
  %6052 = vmatpush1.msra.mxu0 0.0
  %6053 = vmatprep.subr.mxu0 0.0
  %6054 = vmatpush1.msra.mxu0 0.0
  %6055 = vmatprep.subr.mxu0 0.0
  %6056 = vmatpush1.msra.mxu0 0.0
  %6057 = vmatprep.subr.mxu0 0.0
  %6058 = vmatpush1.msra.mxu0 0.0
  %6059 = vmatprep.subr.mxu0 0.0
  %v6060 = vand.u32 %v2064, 4294901760
  %v6061 = vsub.f32 %v2064, %v6060
  %v6062 = vand.u32 %v6061, 4294901760
  %6063 = vmatpush1.msra.mxu0 %v6062
  %6064 = vmatprep.subr.mxu0 0.0
  %v6065 = vand.u32 %v2063, 4294901760
  %v6066 = vsub.f32 %v2063, %v6065
  %v6067 = vand.u32 %v6066, 4294901760
  %6068 = vmatpush1.msra.mxu0 %v6067
  %6069 = vmatprep.subr.mxu0 0.0
  %v6070 = vand.u32 %v2062, 4294901760
  %v6071 = vsub.f32 %v2062, %v6070
  %v6072 = vand.u32 %v6071, 4294901760
  %6073 = vmatpush1.msra.mxu0 %v6072
  %6074 = vmatprep.subr.mxu0 0.0
  %v6075 = vand.u32 %v2061, 4294901760
  %v6076 = vsub.f32 %v2061, %v6075
  %v6077 = vand.u32 %v6076, 4294901760
  %6078 = vmatpush1.msra.mxu0 %v6077
  %6079 = vmatprep.subr.mxu0 0.0
  %6080 = vmatpush2.msra.mxu0 0.0
  %6081 = vmatprep.subr.mxu0 0.0
  %6082 = vmatpush2.msra.mxu0 0.0
  %6083 = vmatprep.subr.mxu0 0.0
  %6084 = vmatpush2.msra.mxu0 0.0
  %6085 = vmatprep.subr.mxu0 0.0
  %6086 = vmatpush2.msra.mxu0 0.0
  %6087 = vmatprep.subr.mxu0 0.0
  %6088 = vmatpush2.msra.mxu0 0.0
  %6089 = vmatprep.subr.mxu0 0.0
  %6090 = vmatpush2.msra.mxu0 0.0
  %6091 = vmatprep.subr.mxu0 0.0
  %6092 = vmatpush2.msra.mxu0 0.0
  %6093 = vmatprep.subr.mxu0 0.0
  %6094 = vmatpush2.msra.mxu0 0.0
  %6095 = vmatprep.subr.mxu0 0.0
  %6096 = vmatpush2.msra.mxu0 0.0
  %6097 = vmatprep.subr.mxu0 0.0
  %6098 = vmatpush2.msra.mxu0 0.0
  %6099 = vmatprep.subr.mxu0 0.0
  %6100 = vmatpush2.msra.mxu0 0.0
  %6101 = vmatprep.subr.mxu0 0.0
  %6102 = vmatpush2.msra.mxu0 0.0
  %6103 = vmatprep.subr.mxu0 0.0
  %6104 = vmatpush2.msra.mxu0 0.0
  %6105 = vmatprep.subr.mxu0 0.0
  %6106 = vmatpush2.msra.mxu0 0.0
  %6107 = vmatprep.subr.mxu0 0.0
  %6108 = vmatpush2.msra.mxu0 0.0
  %6109 = vmatprep.subr.mxu0 0.0
  %6110 = vmatpush2.msra.mxu0 0.0
  %6111 = vmatprep.mubr.f32.mxu0 0.0
  %v6112 = vand.u32 %v5706, 4294901760
  %6113 = vmatmul.mubr.f32.gmra.mxu0 %v6112
  %v6114 = vpop.f32.mrf.mxu0
  %v6115 = vadd.f32 %v6032, %v6114
  %v6116 = vpop.f32.mrf.mxu0
  %6117 = vdwg.mxu0
  %6118 = vmatprep.subr.mxu0 0.0
  %6119 = vmatpush1.msra.mxu0 0.0
  %6120 = vmatprep.subr.mxu0 0.0
  %6121 = vmatpush1.msra.mxu0 0.0
  %6122 = vmatprep.subr.mxu0 0.0
  %6123 = vmatpush1.msra.mxu0 0.0
  %6124 = vmatprep.subr.mxu0 0.0
  %6125 = vmatpush1.msra.mxu0 0.0
  %6126 = vmatprep.subr.mxu0 0.0
  %6127 = vmatpush1.msra.mxu0 0.0
  %6128 = vmatprep.subr.mxu0 0.0
  %6129 = vmatpush1.msra.mxu0 0.0
  %6130 = vmatprep.subr.mxu0 0.0
  %6131 = vmatpush1.msra.mxu0 0.0
  %6132 = vmatprep.subr.mxu0 0.0
  %6133 = vmatpush1.msra.mxu0 0.0
  %6134 = vmatprep.subr.mxu0 0.0
  %6135 = vmatpush1.msra.mxu0 0.0
  %6136 = vmatprep.subr.mxu0 0.0
  %6137 = vmatpush1.msra.mxu0 0.0
  %6138 = vmatprep.subr.mxu0 0.0
  %6139 = vmatpush1.msra.mxu0 0.0
  %6140 = vmatprep.subr.mxu0 0.0
  %6141 = vmatpush1.msra.mxu0 0.0
  %6142 = vmatprep.subr.mxu0 0.0
  %v6143 = vand.u32 %v2064, 4294901760
  %6144 = vmatpush1.msra.mxu0 %v6143
  %6145 = vmatprep.subr.mxu0 0.0
  %v6146 = vand.u32 %v2063, 4294901760
  %6147 = vmatpush1.msra.mxu0 %v6146
  %6148 = vmatprep.subr.mxu0 0.0
  %v6149 = vand.u32 %v2062, 4294901760
  %6150 = vmatpush1.msra.mxu0 %v6149
  %6151 = vmatprep.subr.mxu0 0.0
  %v6152 = vand.u32 %v2061, 4294901760
  %6153 = vmatpush1.msra.mxu0 %v6152
  %6154 = vmatprep.subr.mxu0 0.0
  %6155 = vmatpush2.msra.mxu0 0.0
  %6156 = vmatprep.subr.mxu0 0.0
  %6157 = vmatpush2.msra.mxu0 0.0
  %6158 = vmatprep.subr.mxu0 0.0
  %6159 = vmatpush2.msra.mxu0 0.0
  %6160 = vmatprep.subr.mxu0 0.0
  %6161 = vmatpush2.msra.mxu0 0.0
  %6162 = vmatprep.subr.mxu0 0.0
  %6163 = vmatpush2.msra.mxu0 0.0
  %6164 = vmatprep.subr.mxu0 0.0
  %6165 = vmatpush2.msra.mxu0 0.0
  %6166 = vmatprep.subr.mxu0 0.0
  %6167 = vmatpush2.msra.mxu0 0.0
  %6168 = vmatprep.subr.mxu0 0.0
  %6169 = vmatpush2.msra.mxu0 0.0
  %6170 = vmatprep.subr.mxu0 0.0
  %6171 = vmatpush2.msra.mxu0 0.0
  %6172 = vmatprep.subr.mxu0 0.0
  %6173 = vmatpush2.msra.mxu0 0.0
  %6174 = vmatprep.subr.mxu0 0.0
  %6175 = vmatpush2.msra.mxu0 0.0
  %6176 = vmatprep.subr.mxu0 0.0
  %6177 = vmatpush2.msra.mxu0 0.0
  %6178 = vmatprep.subr.mxu0 0.0
  %6179 = vmatpush2.msra.mxu0 0.0
  %6180 = vmatprep.subr.mxu0 0.0
  %6181 = vmatpush2.msra.mxu0 0.0
  %6182 = vmatprep.subr.mxu0 0.0
  %6183 = vmatpush2.msra.mxu0 0.0
  %6184 = vmatprep.subr.mxu0 0.0
  %6185 = vmatpush2.msra.mxu0 0.0
  %6186 = vmatprep.mubr.f32.mxu0 0.0
  %v6187 = vand.u32 %v5706, 4294901760
  %6188 = vmatmul.mubr.f32.gmra.mxu0 %v6187
  %v6189 = vpop.f32.mrf.mxu0
  %v6190 = vadd.f32 %v6115, %v6189
  %v6191 = vpop.f32.mrf.mxu0
  %6192 = vdwg.mxu0
  %v6193 = vadd.f32 %v5705, %v6190
  %v6194 = vxor.u32 %v6193, 2147483648
  %v6195 = vmul.f32 %v6194, 1.442695
  %v6196 = vpow.pop %v6195
  %v6197 = vadd.f32 %v6196, 1.0
  %v6198 = vrcp.pop %v6197
  %v6199 = vmul.f32 1.0, %v6198
  %6201 = vrot.lane.b32.xlu0 %v6190, 64
  %v6202 = vpop.permute.xlu0 %6201
  %v6204 = vmul.f32 %v6199, %v6202
  %6206 = vrot.lane.b32.xlu0 %v6204, 64
  %v6207 = vpop.permute.xlu0 %6206
  %v6209 = vadd.f32 %v5705, %v6207
  %v6210 = vtanh.pop %v6209
  %v6211 = vsub.f32 1.0, %v6199
  %6213 = vrot.lane.b32.xlu0 %v6210, 96
  %v6214 = vpop.permute.xlu0 %6213
  %v6216 = vmul.f32 %v6211, %v6214
  %v6217 = vmul.f32 %v6199, %v5699
  %v6218 = vadd.f32 %v6216, %v6217
  %6220 = vrot.lane.b32.xlu0 %v6218, 96
  %v6221 = vpop.permute.xlu0 %6220
  %6223 = vst.msk [vmem:[#allocation3 + $0x38] sm:$0xff] %vm2071, %v6221
  %v6224 = vld [vmem:[#allocation2 + $0x40] sm:$0xff]
  %v6225 = vsel %vm2071, %v6221, 0
  %6227 = vmatprep.subr.mxu0 0.0
  %6228 = vmatpush1.msra.mxu0 0.0
  %6229 = vmatprep.subr.mxu0 0.0
  %6230 = vmatpush1.msra.mxu0 0.0
  %6231 = vmatprep.subr.mxu0 0.0
  %6232 = vmatpush1.msra.mxu0 0.0
  %6233 = vmatprep.subr.mxu0 0.0
  %6234 = vmatpush1.msra.mxu0 0.0
  %6235 = vmatprep.subr.mxu0 0.0
  %6236 = vmatpush1.msra.mxu0 0.0
  %6237 = vmatprep.subr.mxu0 0.0
  %6238 = vmatpush1.msra.mxu0 0.0
  %6239 = vmatprep.subr.mxu0 0.0
  %6240 = vmatpush1.msra.mxu0 0.0
  %6241 = vmatprep.subr.mxu0 0.0
  %6242 = vmatpush1.msra.mxu0 0.0
  %6243 = vmatprep.subr.mxu0 0.0
  %6244 = vmatpush1.msra.mxu0 0.0
  %6245 = vmatprep.subr.mxu0 0.0
  %6246 = vmatpush1.msra.mxu0 0.0
  %6247 = vmatprep.subr.mxu0 0.0
  %6248 = vmatpush1.msra.mxu0 0.0
  %6249 = vmatprep.subr.mxu0 0.0
  %6250 = vmatpush1.msra.mxu0 0.0
  %6251 = vmatprep.subr.mxu0 0.0
  %v6252 = vand.u32 %v2064, 4294901760
  %6253 = vmatpush1.msra.mxu0 %v6252
  %6254 = vmatprep.subr.mxu0 0.0
  %v6255 = vand.u32 %v2063, 4294901760
  %6256 = vmatpush1.msra.mxu0 %v6255
  %6257 = vmatprep.subr.mxu0 0.0
  %v6258 = vand.u32 %v2062, 4294901760
  %6259 = vmatpush1.msra.mxu0 %v6258
  %6260 = vmatprep.subr.mxu0 0.0
  %v6261 = vand.u32 %v2061, 4294901760
  %6262 = vmatpush1.msra.mxu0 %v6261
  %6263 = vmatprep.subr.mxu0 0.0
  %6264 = vmatpush2.msra.mxu0 0.0
  %6265 = vmatprep.subr.mxu0 0.0
  %6266 = vmatpush2.msra.mxu0 0.0
  %6267 = vmatprep.subr.mxu0 0.0
  %6268 = vmatpush2.msra.mxu0 0.0
  %6269 = vmatprep.subr.mxu0 0.0
  %6270 = vmatpush2.msra.mxu0 0.0
  %6271 = vmatprep.subr.mxu0 0.0
  %6272 = vmatpush2.msra.mxu0 0.0
  %6273 = vmatprep.subr.mxu0 0.0
  %6274 = vmatpush2.msra.mxu0 0.0
  %6275 = vmatprep.subr.mxu0 0.0
  %6276 = vmatpush2.msra.mxu0 0.0
  %6277 = vmatprep.subr.mxu0 0.0
  %6278 = vmatpush2.msra.mxu0 0.0
  %6279 = vmatprep.subr.mxu0 0.0
  %6280 = vmatpush2.msra.mxu0 0.0
  %6281 = vmatprep.subr.mxu0 0.0
  %6282 = vmatpush2.msra.mxu0 0.0
  %6283 = vmatprep.subr.mxu0 0.0
  %6284 = vmatpush2.msra.mxu0 0.0
  %6285 = vmatprep.subr.mxu0 0.0
  %6286 = vmatpush2.msra.mxu0 0.0
  %6287 = vmatprep.subr.mxu0 0.0
  %6288 = vmatpush2.msra.mxu0 0.0
  %6289 = vmatprep.subr.mxu0 0.0
  %6290 = vmatpush2.msra.mxu0 0.0
  %6291 = vmatprep.subr.mxu0 0.0
  %6292 = vmatpush2.msra.mxu0 0.0
  %6293 = vmatprep.subr.mxu0 0.0
  %6294 = vmatpush2.msra.mxu0 0.0
  %6295 = vmatprep.mubr.f32.mxu0 0.0
  %v6296 = vand.u32 %v6225, 4294901760
  %v6297 = vsub.f32 %v6225, %v6296
  %v6298 = vand.u32 %v6297, 4294901760
  %v6299 = vsub.f32 %v6297, %v6298
  %v6300 = vand.u32 %v6299, 4294901760
  %6301 = vmatmul.mubr.f32.gmra.mxu0 %v6300
  %v6302 = vpop.f32.mrf.mxu0
  %v6303 = vadd.f32 %v2070, %v6302
  %v6304 = vpop.f32.mrf.mxu0
  %6305 = vdwg.mxu0
  %6306 = vmatprep.subr.mxu0 0.0
  %6307 = vmatpush1.msra.mxu0 0.0
  %6308 = vmatprep.subr.mxu0 0.0
  %6309 = vmatpush1.msra.mxu0 0.0
  %6310 = vmatprep.subr.mxu0 0.0
  %6311 = vmatpush1.msra.mxu0 0.0
  %6312 = vmatprep.subr.mxu0 0.0
  %6313 = vmatpush1.msra.mxu0 0.0
  %6314 = vmatprep.subr.mxu0 0.0
  %6315 = vmatpush1.msra.mxu0 0.0
  %6316 = vmatprep.subr.mxu0 0.0
  %6317 = vmatpush1.msra.mxu0 0.0
  %6318 = vmatprep.subr.mxu0 0.0
  %6319 = vmatpush1.msra.mxu0 0.0
  %6320 = vmatprep.subr.mxu0 0.0
  %6321 = vmatpush1.msra.mxu0 0.0
  %6322 = vmatprep.subr.mxu0 0.0
  %6323 = vmatpush1.msra.mxu0 0.0
  %6324 = vmatprep.subr.mxu0 0.0
  %6325 = vmatpush1.msra.mxu0 0.0
  %6326 = vmatprep.subr.mxu0 0.0
  %6327 = vmatpush1.msra.mxu0 0.0
  %6328 = vmatprep.subr.mxu0 0.0
  %6329 = vmatpush1.msra.mxu0 0.0
  %6330 = vmatprep.subr.mxu0 0.0
  %v6331 = vand.u32 %v2064, 4294901760
  %v6332 = vsub.f32 %v2064, %v6331
  %v6333 = vand.u32 %v6332, 4294901760
  %v6334 = vsub.f32 %v6332, %v6333
  %v6335 = vand.u32 %v6334, 4294901760
  %6336 = vmatpush1.msra.mxu0 %v6335
  %6337 = vmatprep.subr.mxu0 0.0
  %v6338 = vand.u32 %v2063, 4294901760
  %v6339 = vsub.f32 %v2063, %v6338
  %v6340 = vand.u32 %v6339, 4294901760
  %v6341 = vsub.f32 %v6339, %v6340
  %v6342 = vand.u32 %v6341, 4294901760
  %6343 = vmatpush1.msra.mxu0 %v6342
  %6344 = vmatprep.subr.mxu0 0.0
  %v6345 = vand.u32 %v2062, 4294901760
  %v6346 = vsub.f32 %v2062, %v6345
  %v6347 = vand.u32 %v6346, 4294901760
  %v6348 = vsub.f32 %v6346, %v6347
  %v6349 = vand.u32 %v6348, 4294901760
  %6350 = vmatpush1.msra.mxu0 %v6349
  %6351 = vmatprep.subr.mxu0 0.0
  %v6352 = vand.u32 %v2061, 4294901760
  %v6353 = vsub.f32 %v2061, %v6352
  %v6354 = vand.u32 %v6353, 4294901760
  %v6355 = vsub.f32 %v6353, %v6354
  %v6356 = vand.u32 %v6355, 4294901760
  %6357 = vmatpush1.msra.mxu0 %v6356
  %6358 = vmatprep.subr.mxu0 0.0
  %6359 = vmatpush2.msra.mxu0 0.0
  %6360 = vmatprep.subr.mxu0 0.0
  %6361 = vmatpush2.msra.mxu0 0.0
  %6362 = vmatprep.subr.mxu0 0.0
  %6363 = vmatpush2.msra.mxu0 0.0
  %6364 = vmatprep.subr.mxu0 0.0
  %6365 = vmatpush2.msra.mxu0 0.0
  %6366 = vmatprep.subr.mxu0 0.0
  %6367 = vmatpush2.msra.mxu0 0.0
  %6368 = vmatprep.subr.mxu0 0.0
  %6369 = vmatpush2.msra.mxu0 0.0
  %6370 = vmatprep.subr.mxu0 0.0
  %6371 = vmatpush2.msra.mxu0 0.0
  %6372 = vmatprep.subr.mxu0 0.0
  %6373 = vmatpush2.msra.mxu0 0.0
  %6374 = vmatprep.subr.mxu0 0.0
  %6375 = vmatpush2.msra.mxu0 0.0
  %6376 = vmatprep.subr.mxu0 0.0
  %6377 = vmatpush2.msra.mxu0 0.0
  %6378 = vmatprep.subr.mxu0 0.0
  %6379 = vmatpush2.msra.mxu0 0.0
  %6380 = vmatprep.subr.mxu0 0.0
  %6381 = vmatpush2.msra.mxu0 0.0
  %6382 = vmatprep.subr.mxu0 0.0
  %6383 = vmatpush2.msra.mxu0 0.0
  %6384 = vmatprep.subr.mxu0 0.0
  %6385 = vmatpush2.msra.mxu0 0.0
  %6386 = vmatprep.subr.mxu0 0.0
  %6387 = vmatpush2.msra.mxu0 0.0
  %6388 = vmatprep.subr.mxu0 0.0
  %6389 = vmatpush2.msra.mxu0 0.0
  %6390 = vmatprep.mubr.f32.mxu0 0.0
  %v6391 = vand.u32 %v6225, 4294901760
  %6392 = vmatmul.mubr.f32.gmra.mxu0 %v6391
  %v6393 = vpop.f32.mrf.mxu0
  %v6394 = vadd.f32 %v6303, %v6393
  %v6395 = vpop.f32.mrf.mxu0
  %6396 = vdwg.mxu0
  %6397 = vmatprep.subr.mxu0 0.0
  %6398 = vmatpush1.msra.mxu0 0.0
  %6399 = vmatprep.subr.mxu0 0.0
  %6400 = vmatpush1.msra.mxu0 0.0
  %6401 = vmatprep.subr.mxu0 0.0
  %6402 = vmatpush1.msra.mxu0 0.0
  %6403 = vmatprep.subr.mxu0 0.0
  %6404 = vmatpush1.msra.mxu0 0.0
  %6405 = vmatprep.subr.mxu0 0.0
  %6406 = vmatpush1.msra.mxu0 0.0
  %6407 = vmatprep.subr.mxu0 0.0
  %6408 = vmatpush1.msra.mxu0 0.0
  %6409 = vmatprep.subr.mxu0 0.0
  %6410 = vmatpush1.msra.mxu0 0.0
  %6411 = vmatprep.subr.mxu0 0.0
  %6412 = vmatpush1.msra.mxu0 0.0
  %6413 = vmatprep.subr.mxu0 0.0
  %6414 = vmatpush1.msra.mxu0 0.0
  %6415 = vmatprep.subr.mxu0 0.0
  %6416 = vmatpush1.msra.mxu0 0.0
  %6417 = vmatprep.subr.mxu0 0.0
  %6418 = vmatpush1.msra.mxu0 0.0
  %6419 = vmatprep.subr.mxu0 0.0
  %6420 = vmatpush1.msra.mxu0 0.0
  %6421 = vmatprep.subr.mxu0 0.0
  %v6422 = vand.u32 %v2064, 4294901760
  %v6423 = vsub.f32 %v2064, %v6422
  %6424 = vmatpush1.msra.mxu0 %v6423
  %6425 = vmatprep.subr.mxu0 0.0
  %v6426 = vand.u32 %v2063, 4294901760
  %v6427 = vsub.f32 %v2063, %v6426
  %6428 = vmatpush1.msra.mxu0 %v6427
  %6429 = vmatprep.subr.mxu0 0.0
  %v6430 = vand.u32 %v2062, 4294901760
  %v6431 = vsub.f32 %v2062, %v6430
  %6432 = vmatpush1.msra.mxu0 %v6431
  %6433 = vmatprep.subr.mxu0 0.0
  %v6434 = vand.u32 %v2061, 4294901760
  %v6435 = vsub.f32 %v2061, %v6434
  %6436 = vmatpush1.msra.mxu0 %v6435
  %6437 = vmatprep.subr.mxu0 0.0
  %6438 = vmatpush2.msra.mxu0 0.0
  %6439 = vmatprep.subr.mxu0 0.0
  %6440 = vmatpush2.msra.mxu0 0.0
  %6441 = vmatprep.subr.mxu0 0.0
  %6442 = vmatpush2.msra.mxu0 0.0
  %6443 = vmatprep.subr.mxu0 0.0
  %6444 = vmatpush2.msra.mxu0 0.0
  %6445 = vmatprep.subr.mxu0 0.0
  %6446 = vmatpush2.msra.mxu0 0.0
  %6447 = vmatprep.subr.mxu0 0.0
  %6448 = vmatpush2.msra.mxu0 0.0
  %6449 = vmatprep.subr.mxu0 0.0
  %6450 = vmatpush2.msra.mxu0 0.0
  %6451 = vmatprep.subr.mxu0 0.0
  %6452 = vmatpush2.msra.mxu0 0.0
  %6453 = vmatprep.subr.mxu0 0.0
  %6454 = vmatpush2.msra.mxu0 0.0
  %6455 = vmatprep.subr.mxu0 0.0
  %6456 = vmatpush2.msra.mxu0 0.0
  %6457 = vmatprep.subr.mxu0 0.0
  %6458 = vmatpush2.msra.mxu0 0.0
  %6459 = vmatprep.subr.mxu0 0.0
  %6460 = vmatpush2.msra.mxu0 0.0
  %6461 = vmatprep.subr.mxu0 0.0
  %6462 = vmatpush2.msra.mxu0 0.0
  %6463 = vmatprep.subr.mxu0 0.0
  %6464 = vmatpush2.msra.mxu0 0.0
  %6465 = vmatprep.subr.mxu0 0.0
  %6466 = vmatpush2.msra.mxu0 0.0
  %6467 = vmatprep.subr.mxu0 0.0
  %6468 = vmatpush2.msra.mxu0 0.0
  %6469 = vmatprep.mubr.f32.mxu0 0.0
  %v6470 = vand.u32 %v6225, 4294901760
  %v6471 = vsub.f32 %v6225, %v6470
  %6472 = vmatmul.mubr.f32.gmra.mxu0 %v6471
  %v6473 = vpop.f32.mrf.mxu0
  %v6474 = vadd.f32 %v6394, %v6473
  %v6475 = vpop.f32.mrf.mxu0
  %6476 = vdwg.mxu0
  %6477 = vmatprep.subr.mxu0 0.0
  %6478 = vmatpush1.msra.mxu0 0.0
  %6479 = vmatprep.subr.mxu0 0.0
  %6480 = vmatpush1.msra.mxu0 0.0
  %6481 = vmatprep.subr.mxu0 0.0
  %6482 = vmatpush1.msra.mxu0 0.0
  %6483 = vmatprep.subr.mxu0 0.0
  %6484 = vmatpush1.msra.mxu0 0.0
  %6485 = vmatprep.subr.mxu0 0.0
  %6486 = vmatpush1.msra.mxu0 0.0
  %6487 = vmatprep.subr.mxu0 0.0
  %6488 = vmatpush1.msra.mxu0 0.0
  %6489 = vmatprep.subr.mxu0 0.0
  %6490 = vmatpush1.msra.mxu0 0.0
  %6491 = vmatprep.subr.mxu0 0.0
  %6492 = vmatpush1.msra.mxu0 0.0
  %6493 = vmatprep.subr.mxu0 0.0
  %6494 = vmatpush1.msra.mxu0 0.0
  %6495 = vmatprep.subr.mxu0 0.0
  %6496 = vmatpush1.msra.mxu0 0.0
  %6497 = vmatprep.subr.mxu0 0.0
  %6498 = vmatpush1.msra.mxu0 0.0
  %6499 = vmatprep.subr.mxu0 0.0
  %6500 = vmatpush1.msra.mxu0 0.0
  %6501 = vmatprep.subr.mxu0 0.0
  %v6502 = vand.u32 %v2064, 4294901760
  %6503 = vmatpush1.msra.mxu0 %v6502
  %6504 = vmatprep.subr.mxu0 0.0
  %v6505 = vand.u32 %v2063, 4294901760
  %6506 = vmatpush1.msra.mxu0 %v6505
  %6507 = vmatprep.subr.mxu0 0.0
  %v6508 = vand.u32 %v2062, 4294901760
  %6509 = vmatpush1.msra.mxu0 %v6508
  %6510 = vmatprep.subr.mxu0 0.0
  %v6511 = vand.u32 %v2061, 4294901760
  %6512 = vmatpush1.msra.mxu0 %v6511
  %6513 = vmatprep.subr.mxu0 0.0
  %6514 = vmatpush2.msra.mxu0 0.0
  %6515 = vmatprep.subr.mxu0 0.0
  %6516 = vmatpush2.msra.mxu0 0.0
  %6517 = vmatprep.subr.mxu0 0.0
  %6518 = vmatpush2.msra.mxu0 0.0
  %6519 = vmatprep.subr.mxu0 0.0
  %6520 = vmatpush2.msra.mxu0 0.0
  %6521 = vmatprep.subr.mxu0 0.0
  %6522 = vmatpush2.msra.mxu0 0.0
  %6523 = vmatprep.subr.mxu0 0.0
  %6524 = vmatpush2.msra.mxu0 0.0
  %6525 = vmatprep.subr.mxu0 0.0
  %6526 = vmatpush2.msra.mxu0 0.0
  %6527 = vmatprep.subr.mxu0 0.0
  %6528 = vmatpush2.msra.mxu0 0.0
  %6529 = vmatprep.subr.mxu0 0.0
  %6530 = vmatpush2.msra.mxu0 0.0
  %6531 = vmatprep.subr.mxu0 0.0
  %6532 = vmatpush2.msra.mxu0 0.0
  %6533 = vmatprep.subr.mxu0 0.0
  %6534 = vmatpush2.msra.mxu0 0.0
  %6535 = vmatprep.subr.mxu0 0.0
  %6536 = vmatpush2.msra.mxu0 0.0
  %6537 = vmatprep.subr.mxu0 0.0
  %6538 = vmatpush2.msra.mxu0 0.0
  %6539 = vmatprep.subr.mxu0 0.0
  %6540 = vmatpush2.msra.mxu0 0.0
  %6541 = vmatprep.subr.mxu0 0.0
  %6542 = vmatpush2.msra.mxu0 0.0
  %6543 = vmatprep.subr.mxu0 0.0
  %6544 = vmatpush2.msra.mxu0 0.0
  %6545 = vmatprep.mubr.f32.mxu0 0.0
  %v6546 = vand.u32 %v6225, 4294901760
  %v6547 = vsub.f32 %v6225, %v6546
  %v6548 = vand.u32 %v6547, 4294901760
  %6549 = vmatmul.mubr.f32.gmra.mxu0 %v6548
  %v6550 = vpop.f32.mrf.mxu0
  %v6551 = vadd.f32 %v6474, %v6550
  %v6552 = vpop.f32.mrf.mxu0
  %6553 = vdwg.mxu0
  %6554 = vmatprep.subr.mxu0 0.0
  %6555 = vmatpush1.msra.mxu0 0.0
  %6556 = vmatprep.subr.mxu0 0.0
  %6557 = vmatpush1.msra.mxu0 0.0
  %6558 = vmatprep.subr.mxu0 0.0
  %6559 = vmatpush1.msra.mxu0 0.0
  %6560 = vmatprep.subr.mxu0 0.0
  %6561 = vmatpush1.msra.mxu0 0.0
  %6562 = vmatprep.subr.mxu0 0.0
  %6563 = vmatpush1.msra.mxu0 0.0
  %6564 = vmatprep.subr.mxu0 0.0
  %6565 = vmatpush1.msra.mxu0 0.0
  %6566 = vmatprep.subr.mxu0 0.0
  %6567 = vmatpush1.msra.mxu0 0.0
  %6568 = vmatprep.subr.mxu0 0.0
  %6569 = vmatpush1.msra.mxu0 0.0
  %6570 = vmatprep.subr.mxu0 0.0
  %6571 = vmatpush1.msra.mxu0 0.0
  %6572 = vmatprep.subr.mxu0 0.0
  %6573 = vmatpush1.msra.mxu0 0.0
  %6574 = vmatprep.subr.mxu0 0.0
  %6575 = vmatpush1.msra.mxu0 0.0
  %6576 = vmatprep.subr.mxu0 0.0
  %6577 = vmatpush1.msra.mxu0 0.0
  %6578 = vmatprep.subr.mxu0 0.0
  %v6579 = vand.u32 %v2064, 4294901760
  %v6580 = vsub.f32 %v2064, %v6579
  %v6581 = vand.u32 %v6580, 4294901760
  %6582 = vmatpush1.msra.mxu0 %v6581
  %6583 = vmatprep.subr.mxu0 0.0
  %v6584 = vand.u32 %v2063, 4294901760
  %v6585 = vsub.f32 %v2063, %v6584
  %v6586 = vand.u32 %v6585, 4294901760
  %6587 = vmatpush1.msra.mxu0 %v6586
  %6588 = vmatprep.subr.mxu0 0.0
  %v6589 = vand.u32 %v2062, 4294901760
  %v6590 = vsub.f32 %v2062, %v6589
  %v6591 = vand.u32 %v6590, 4294901760
  %6592 = vmatpush1.msra.mxu0 %v6591
  %6593 = vmatprep.subr.mxu0 0.0
  %v6594 = vand.u32 %v2061, 4294901760
  %v6595 = vsub.f32 %v2061, %v6594
  %v6596 = vand.u32 %v6595, 4294901760
  %6597 = vmatpush1.msra.mxu0 %v6596
  %6598 = vmatprep.subr.mxu0 0.0
  %6599 = vmatpush2.msra.mxu0 0.0
  %6600 = vmatprep.subr.mxu0 0.0
  %6601 = vmatpush2.msra.mxu0 0.0
  %6602 = vmatprep.subr.mxu0 0.0
  %6603 = vmatpush2.msra.mxu0 0.0
  %6604 = vmatprep.subr.mxu0 0.0
  %6605 = vmatpush2.msra.mxu0 0.0
  %6606 = vmatprep.subr.mxu0 0.0
  %6607 = vmatpush2.msra.mxu0 0.0
  %6608 = vmatprep.subr.mxu0 0.0
  %6609 = vmatpush2.msra.mxu0 0.0
  %6610 = vmatprep.subr.mxu0 0.0
  %6611 = vmatpush2.msra.mxu0 0.0
  %6612 = vmatprep.subr.mxu0 0.0
  %6613 = vmatpush2.msra.mxu0 0.0
  %6614 = vmatprep.subr.mxu0 0.0
  %6615 = vmatpush2.msra.mxu0 0.0
  %6616 = vmatprep.subr.mxu0 0.0
  %6617 = vmatpush2.msra.mxu0 0.0
  %6618 = vmatprep.subr.mxu0 0.0
  %6619 = vmatpush2.msra.mxu0 0.0
  %6620 = vmatprep.subr.mxu0 0.0
  %6621 = vmatpush2.msra.mxu0 0.0
  %6622 = vmatprep.subr.mxu0 0.0
  %6623 = vmatpush2.msra.mxu0 0.0
  %6624 = vmatprep.subr.mxu0 0.0
  %6625 = vmatpush2.msra.mxu0 0.0
  %6626 = vmatprep.subr.mxu0 0.0
  %6627 = vmatpush2.msra.mxu0 0.0
  %6628 = vmatprep.subr.mxu0 0.0
  %6629 = vmatpush2.msra.mxu0 0.0
  %6630 = vmatprep.mubr.f32.mxu0 0.0
  %v6631 = vand.u32 %v6225, 4294901760
  %6632 = vmatmul.mubr.f32.gmra.mxu0 %v6631
  %v6633 = vpop.f32.mrf.mxu0
  %v6634 = vadd.f32 %v6551, %v6633
  %v6635 = vpop.f32.mrf.mxu0
  %6636 = vdwg.mxu0
  %6637 = vmatprep.subr.mxu0 0.0
  %6638 = vmatpush1.msra.mxu0 0.0
  %6639 = vmatprep.subr.mxu0 0.0
  %6640 = vmatpush1.msra.mxu0 0.0
  %6641 = vmatprep.subr.mxu0 0.0
  %6642 = vmatpush1.msra.mxu0 0.0
  %6643 = vmatprep.subr.mxu0 0.0
  %6644 = vmatpush1.msra.mxu0 0.0
  %6645 = vmatprep.subr.mxu0 0.0
  %6646 = vmatpush1.msra.mxu0 0.0
  %6647 = vmatprep.subr.mxu0 0.0
  %6648 = vmatpush1.msra.mxu0 0.0
  %6649 = vmatprep.subr.mxu0 0.0
  %6650 = vmatpush1.msra.mxu0 0.0
  %6651 = vmatprep.subr.mxu0 0.0
  %6652 = vmatpush1.msra.mxu0 0.0
  %6653 = vmatprep.subr.mxu0 0.0
  %6654 = vmatpush1.msra.mxu0 0.0
  %6655 = vmatprep.subr.mxu0 0.0
  %6656 = vmatpush1.msra.mxu0 0.0
  %6657 = vmatprep.subr.mxu0 0.0
  %6658 = vmatpush1.msra.mxu0 0.0
  %6659 = vmatprep.subr.mxu0 0.0
  %6660 = vmatpush1.msra.mxu0 0.0
  %6661 = vmatprep.subr.mxu0 0.0
  %v6662 = vand.u32 %v2064, 4294901760
  %6663 = vmatpush1.msra.mxu0 %v6662
  %6664 = vmatprep.subr.mxu0 0.0
  %v6665 = vand.u32 %v2063, 4294901760
  %6666 = vmatpush1.msra.mxu0 %v6665
  %6667 = vmatprep.subr.mxu0 0.0
  %v6668 = vand.u32 %v2062, 4294901760
  %6669 = vmatpush1.msra.mxu0 %v6668
  %6670 = vmatprep.subr.mxu0 0.0
  %v6671 = vand.u32 %v2061, 4294901760
  %6672 = vmatpush1.msra.mxu0 %v6671
  %6673 = vmatprep.subr.mxu0 0.0
  %6674 = vmatpush2.msra.mxu0 0.0
  %6675 = vmatprep.subr.mxu0 0.0
  %6676 = vmatpush2.msra.mxu0 0.0
  %6677 = vmatprep.subr.mxu0 0.0
  %6678 = vmatpush2.msra.mxu0 0.0
  %6679 = vmatprep.subr.mxu0 0.0
  %6680 = vmatpush2.msra.mxu0 0.0
  %6681 = vmatprep.subr.mxu0 0.0
  %6682 = vmatpush2.msra.mxu0 0.0
  %6683 = vmatprep.subr.mxu0 0.0
  %6684 = vmatpush2.msra.mxu0 0.0
  %6685 = vmatprep.subr.mxu0 0.0
  %6686 = vmatpush2.msra.mxu0 0.0
  %6687 = vmatprep.subr.mxu0 0.0
  %6688 = vmatpush2.msra.mxu0 0.0
  %6689 = vmatprep.subr.mxu0 0.0
  %6690 = vmatpush2.msra.mxu0 0.0
  %6691 = vmatprep.subr.mxu0 0.0
  %6692 = vmatpush2.msra.mxu0 0.0
  %6693 = vmatprep.subr.mxu0 0.0
  %6694 = vmatpush2.msra.mxu0 0.0
  %6695 = vmatprep.subr.mxu0 0.0
  %6696 = vmatpush2.msra.mxu0 0.0
  %6697 = vmatprep.subr.mxu0 0.0
  %6698 = vmatpush2.msra.mxu0 0.0
  %6699 = vmatprep.subr.mxu0 0.0
  %6700 = vmatpush2.msra.mxu0 0.0
  %6701 = vmatprep.subr.mxu0 0.0
  %6702 = vmatpush2.msra.mxu0 0.0
  %6703 = vmatprep.subr.mxu0 0.0
  %6704 = vmatpush2.msra.mxu0 0.0
  %6705 = vmatprep.mubr.f32.mxu0 0.0
  %v6706 = vand.u32 %v6225, 4294901760
  %6707 = vmatmul.mubr.f32.gmra.mxu0 %v6706
  %v6708 = vpop.f32.mrf.mxu0
  %v6709 = vadd.f32 %v6634, %v6708
  %v6710 = vpop.f32.mrf.mxu0
  %6711 = vdwg.mxu0
  %v6712 = vadd.f32 %v6224, %v6709
  %v6713 = vxor.u32 %v6712, 2147483648
  %v6714 = vmul.f32 %v6713, 1.442695
  %v6715 = vpow.pop %v6714
  %v6716 = vadd.f32 %v6715, 1.0
  %v6717 = vrcp.pop %v6716
  %v6718 = vmul.f32 1.0, %v6717
  %6720 = vrot.lane.b32.xlu0 %v6709, 64
  %v6721 = vpop.permute.xlu0 %6720
  %v6723 = vmul.f32 %v6718, %v6721
  %6725 = vrot.lane.b32.xlu0 %v6723, 64
  %v6726 = vpop.permute.xlu0 %6725
  %v6728 = vadd.f32 %v6224, %v6726
  %v6729 = vtanh.pop %v6728
  %v6730 = vsub.f32 1.0, %v6718
  %6732 = vrot.lane.b32.xlu0 %v6729, 96
  %v6733 = vpop.permute.xlu0 %6732
  %v6735 = vmul.f32 %v6730, %v6733
  %v6736 = vmul.f32 %v6718, %v6218
  %v6737 = vadd.f32 %v6735, %v6736
  %6739 = vrot.lane.b32.xlu0 %v6737, 96
  %v6740 = vpop.permute.xlu0 %6739
  %6742 = vst.msk [vmem:[#allocation3 + $0x40] sm:$0xff] %vm2071, %v6740
  %v6743 = vld [vmem:[#allocation2 + $0x48] sm:$0xff]
  %v6744 = vsel %vm2071, %v6740, 0
  %6746 = vmatprep.subr.mxu0 0.0
  %6747 = vmatpush1.msra.mxu0 0.0
  %6748 = vmatprep.subr.mxu0 0.0
  %6749 = vmatpush1.msra.mxu0 0.0
  %6750 = vmatprep.subr.mxu0 0.0
  %6751 = vmatpush1.msra.mxu0 0.0
  %6752 = vmatprep.subr.mxu0 0.0
  %6753 = vmatpush1.msra.mxu0 0.0
  %6754 = vmatprep.subr.mxu0 0.0
  %6755 = vmatpush1.msra.mxu0 0.0
  %6756 = vmatprep.subr.mxu0 0.0
  %6757 = vmatpush1.msra.mxu0 0.0
  %6758 = vmatprep.subr.mxu0 0.0
  %6759 = vmatpush1.msra.mxu0 0.0
  %6760 = vmatprep.subr.mxu0 0.0
  %6761 = vmatpush1.msra.mxu0 0.0
  %6762 = vmatprep.subr.mxu0 0.0
  %6763 = vmatpush1.msra.mxu0 0.0
  %6764 = vmatprep.subr.mxu0 0.0
  %6765 = vmatpush1.msra.mxu0 0.0
  %6766 = vmatprep.subr.mxu0 0.0
  %6767 = vmatpush1.msra.mxu0 0.0
  %6768 = vmatprep.subr.mxu0 0.0
  %6769 = vmatpush1.msra.mxu0 0.0
  %6770 = vmatprep.subr.mxu0 0.0
  %v6771 = vand.u32 %v2064, 4294901760
  %6772 = vmatpush1.msra.mxu0 %v6771
  %6773 = vmatprep.subr.mxu0 0.0
  %v6774 = vand.u32 %v2063, 4294901760
  %6775 = vmatpush1.msra.mxu0 %v6774
  %6776 = vmatprep.subr.mxu0 0.0
  %v6777 = vand.u32 %v2062, 4294901760
  %6778 = vmatpush1.msra.mxu0 %v6777
  %6779 = vmatprep.subr.mxu0 0.0
  %v6780 = vand.u32 %v2061, 4294901760
  %6781 = vmatpush1.msra.mxu0 %v6780
  %6782 = vmatprep.subr.mxu0 0.0
  %6783 = vmatpush2.msra.mxu0 0.0
  %6784 = vmatprep.subr.mxu0 0.0
  %6785 = vmatpush2.msra.mxu0 0.0
  %6786 = vmatprep.subr.mxu0 0.0
  %6787 = vmatpush2.msra.mxu0 0.0
  %6788 = vmatprep.subr.mxu0 0.0
  %6789 = vmatpush2.msra.mxu0 0.0
  %6790 = vmatprep.subr.mxu0 0.0
  %6791 = vmatpush2.msra.mxu0 0.0
  %6792 = vmatprep.subr.mxu0 0.0
  %6793 = vmatpush2.msra.mxu0 0.0
  %6794 = vmatprep.subr.mxu0 0.0
  %6795 = vmatpush2.msra.mxu0 0.0
  %6796 = vmatprep.subr.mxu0 0.0
  %6797 = vmatpush2.msra.mxu0 0.0
  %6798 = vmatprep.subr.mxu0 0.0
  %6799 = vmatpush2.msra.mxu0 0.0
  %6800 = vmatprep.subr.mxu0 0.0
  %6801 = vmatpush2.msra.mxu0 0.0
  %6802 = vmatprep.subr.mxu0 0.0
  %6803 = vmatpush2.msra.mxu0 0.0
  %6804 = vmatprep.subr.mxu0 0.0
  %6805 = vmatpush2.msra.mxu0 0.0
  %6806 = vmatprep.subr.mxu0 0.0
  %6807 = vmatpush2.msra.mxu0 0.0
  %6808 = vmatprep.subr.mxu0 0.0
  %6809 = vmatpush2.msra.mxu0 0.0
  %6810 = vmatprep.subr.mxu0 0.0
  %6811 = vmatpush2.msra.mxu0 0.0
  %6812 = vmatprep.subr.mxu0 0.0
  %6813 = vmatpush2.msra.mxu0 0.0
  %6814 = vmatprep.mubr.f32.mxu0 0.0
  %v6815 = vand.u32 %v6744, 4294901760
  %v6816 = vsub.f32 %v6744, %v6815
  %v6817 = vand.u32 %v6816, 4294901760
  %v6818 = vsub.f32 %v6816, %v6817
  %v6819 = vand.u32 %v6818, 4294901760
  %6820 = vmatmul.mubr.f32.gmra.mxu0 %v6819
  %v6821 = vpop.f32.mrf.mxu0
  %v6822 = vadd.f32 %v2070, %v6821
  %v6823 = vpop.f32.mrf.mxu0
  %6824 = vdwg.mxu0
  %6825 = vmatprep.subr.mxu0 0.0
  %6826 = vmatpush1.msra.mxu0 0.0
  %6827 = vmatprep.subr.mxu0 0.0
  %6828 = vmatpush1.msra.mxu0 0.0
  %6829 = vmatprep.subr.mxu0 0.0
  %6830 = vmatpush1.msra.mxu0 0.0
  %6831 = vmatprep.subr.mxu0 0.0
  %6832 = vmatpush1.msra.mxu0 0.0
  %6833 = vmatprep.subr.mxu0 0.0
  %6834 = vmatpush1.msra.mxu0 0.0
  %6835 = vmatprep.subr.mxu0 0.0
  %6836 = vmatpush1.msra.mxu0 0.0
  %6837 = vmatprep.subr.mxu0 0.0
  %6838 = vmatpush1.msra.mxu0 0.0
  %6839 = vmatprep.subr.mxu0 0.0
  %6840 = vmatpush1.msra.mxu0 0.0
  %6841 = vmatprep.subr.mxu0 0.0
  %6842 = vmatpush1.msra.mxu0 0.0
  %6843 = vmatprep.subr.mxu0 0.0
  %6844 = vmatpush1.msra.mxu0 0.0
  %6845 = vmatprep.subr.mxu0 0.0
  %6846 = vmatpush1.msra.mxu0 0.0
  %6847 = vmatprep.subr.mxu0 0.0
  %6848 = vmatpush1.msra.mxu0 0.0
  %6849 = vmatprep.subr.mxu0 0.0
  %v6850 = vand.u32 %v2064, 4294901760
  %v6851 = vsub.f32 %v2064, %v6850
  %v6852 = vand.u32 %v6851, 4294901760
  %v6853 = vsub.f32 %v6851, %v6852
  %v6854 = vand.u32 %v6853, 4294901760
  %6855 = vmatpush1.msra.mxu0 %v6854
  %6856 = vmatprep.subr.mxu0 0.0
  %v6857 = vand.u32 %v2063, 4294901760
  %v6858 = vsub.f32 %v2063, %v6857
  %v6859 = vand.u32 %v6858, 4294901760
  %v6860 = vsub.f32 %v6858, %v6859
  %v6861 = vand.u32 %v6860, 4294901760
  %6862 = vmatpush1.msra.mxu0 %v6861
  %6863 = vmatprep.subr.mxu0 0.0
  %v6864 = vand.u32 %v2062, 4294901760
  %v6865 = vsub.f32 %v2062, %v6864
  %v6866 = vand.u32 %v6865, 4294901760
  %v6867 = vsub.f32 %v6865, %v6866
  %v6868 = vand.u32 %v6867, 4294901760
  %6869 = vmatpush1.msra.mxu0 %v6868
  %6870 = vmatprep.subr.mxu0 0.0
  %v6871 = vand.u32 %v2061, 4294901760
  %v6872 = vsub.f32 %v2061, %v6871
  %v6873 = vand.u32 %v6872, 4294901760
  %v6874 = vsub.f32 %v6872, %v6873
  %v6875 = vand.u32 %v6874, 4294901760
  %6876 = vmatpush1.msra.mxu0 %v6875
  %6877 = vmatprep.subr.mxu0 0.0
  %6878 = vmatpush2.msra.mxu0 0.0
  %6879 = vmatprep.subr.mxu0 0.0
  %6880 = vmatpush2.msra.mxu0 0.0
  %6881 = vmatprep.subr.mxu0 0.0
  %6882 = vmatpush2.msra.mxu0 0.0
  %6883 = vmatprep.subr.mxu0 0.0
  %6884 = vmatpush2.msra.mxu0 0.0
  %6885 = vmatprep.subr.mxu0 0.0
  %6886 = vmatpush2.msra.mxu0 0.0
  %6887 = vmatprep.subr.mxu0 0.0
  %6888 = vmatpush2.msra.mxu0 0.0
  %6889 = vmatprep.subr.mxu0 0.0
  %6890 = vmatpush2.msra.mxu0 0.0
  %6891 = vmatprep.subr.mxu0 0.0
  %6892 = vmatpush2.msra.mxu0 0.0
  %6893 = vmatprep.subr.mxu0 0.0
  %6894 = vmatpush2.msra.mxu0 0.0
  %6895 = vmatprep.subr.mxu0 0.0
  %6896 = vmatpush2.msra.mxu0 0.0
  %6897 = vmatprep.subr.mxu0 0.0
  %6898 = vmatpush2.msra.mxu0 0.0
  %6899 = vmatprep.subr.mxu0 0.0
  %6900 = vmatpush2.msra.mxu0 0.0
  %6901 = vmatprep.subr.mxu0 0.0
  %6902 = vmatpush2.msra.mxu0 0.0
  %6903 = vmatprep.subr.mxu0 0.0
  %6904 = vmatpush2.msra.mxu0 0.0
  %6905 = vmatprep.subr.mxu0 0.0
  %6906 = vmatpush2.msra.mxu0 0.0
  %6907 = vmatprep.subr.mxu0 0.0
  %6908 = vmatpush2.msra.mxu0 0.0
  %6909 = vmatprep.mubr.f32.mxu0 0.0
  %v6910 = vand.u32 %v6744, 4294901760
  %6911 = vmatmul.mubr.f32.gmra.mxu0 %v6910
  %v6912 = vpop.f32.mrf.mxu0
  %v6913 = vadd.f32 %v6822, %v6912
  %v6914 = vpop.f32.mrf.mxu0
  %6915 = vdwg.mxu0
  %6916 = vmatprep.subr.mxu0 0.0
  %6917 = vmatpush1.msra.mxu0 0.0
  %6918 = vmatprep.subr.mxu0 0.0
  %6919 = vmatpush1.msra.mxu0 0.0
  %6920 = vmatprep.subr.mxu0 0.0
  %6921 = vmatpush1.msra.mxu0 0.0
  %6922 = vmatprep.subr.mxu0 0.0
  %6923 = vmatpush1.msra.mxu0 0.0
  %6924 = vmatprep.subr.mxu0 0.0
  %6925 = vmatpush1.msra.mxu0 0.0
  %6926 = vmatprep.subr.mxu0 0.0
  %6927 = vmatpush1.msra.mxu0 0.0
  %6928 = vmatprep.subr.mxu0 0.0
  %6929 = vmatpush1.msra.mxu0 0.0
  %6930 = vmatprep.subr.mxu0 0.0
  %6931 = vmatpush1.msra.mxu0 0.0
  %6932 = vmatprep.subr.mxu0 0.0
  %6933 = vmatpush1.msra.mxu0 0.0
  %6934 = vmatprep.subr.mxu0 0.0
  %6935 = vmatpush1.msra.mxu0 0.0
  %6936 = vmatprep.subr.mxu0 0.0
  %6937 = vmatpush1.msra.mxu0 0.0
  %6938 = vmatprep.subr.mxu0 0.0
  %6939 = vmatpush1.msra.mxu0 0.0
  %6940 = vmatprep.subr.mxu0 0.0
  %v6941 = vand.u32 %v2064, 4294901760
  %v6942 = vsub.f32 %v2064, %v6941
  %6943 = vmatpush1.msra.mxu0 %v6942
  %6944 = vmatprep.subr.mxu0 0.0
  %v6945 = vand.u32 %v2063, 4294901760
  %v6946 = vsub.f32 %v2063, %v6945
  %6947 = vmatpush1.msra.mxu0 %v6946
  %6948 = vmatprep.subr.mxu0 0.0
  %v6949 = vand.u32 %v2062, 4294901760
  %v6950 = vsub.f32 %v2062, %v6949
  %6951 = vmatpush1.msra.mxu0 %v6950
  %6952 = vmatprep.subr.mxu0 0.0
  %v6953 = vand.u32 %v2061, 4294901760
  %v6954 = vsub.f32 %v2061, %v6953
  %6955 = vmatpush1.msra.mxu0 %v6954
  %6956 = vmatprep.subr.mxu0 0.0
  %6957 = vmatpush2.msra.mxu0 0.0
  %6958 = vmatprep.subr.mxu0 0.0
  %6959 = vmatpush2.msra.mxu0 0.0
  %6960 = vmatprep.subr.mxu0 0.0
  %6961 = vmatpush2.msra.mxu0 0.0
  %6962 = vmatprep.subr.mxu0 0.0
  %6963 = vmatpush2.msra.mxu0 0.0
  %6964 = vmatprep.subr.mxu0 0.0
  %6965 = vmatpush2.msra.mxu0 0.0
  %6966 = vmatprep.subr.mxu0 0.0
  %6967 = vmatpush2.msra.mxu0 0.0
  %6968 = vmatprep.subr.mxu0 0.0
  %6969 = vmatpush2.msra.mxu0 0.0
  %6970 = vmatprep.subr.mxu0 0.0
  %6971 = vmatpush2.msra.mxu0 0.0
  %6972 = vmatprep.subr.mxu0 0.0
  %6973 = vmatpush2.msra.mxu0 0.0
  %6974 = vmatprep.subr.mxu0 0.0
  %6975 = vmatpush2.msra.mxu0 0.0
  %6976 = vmatprep.subr.mxu0 0.0
  %6977 = vmatpush2.msra.mxu0 0.0
  %6978 = vmatprep.subr.mxu0 0.0
  %6979 = vmatpush2.msra.mxu0 0.0
  %6980 = vmatprep.subr.mxu0 0.0
  %6981 = vmatpush2.msra.mxu0 0.0
  %6982 = vmatprep.subr.mxu0 0.0
  %6983 = vmatpush2.msra.mxu0 0.0
  %6984 = vmatprep.subr.mxu0 0.0
  %6985 = vmatpush2.msra.mxu0 0.0
  %6986 = vmatprep.subr.mxu0 0.0
  %6987 = vmatpush2.msra.mxu0 0.0
  %6988 = vmatprep.mubr.f32.mxu0 0.0
  %v6989 = vand.u32 %v6744, 4294901760
  %v6990 = vsub.f32 %v6744, %v6989
  %6991 = vmatmul.mubr.f32.gmra.mxu0 %v6990
  %v6992 = vpop.f32.mrf.mxu0
  %v6993 = vadd.f32 %v6913, %v6992
  %v6994 = vpop.f32.mrf.mxu0
  %6995 = vdwg.mxu0
  %6996 = vmatprep.subr.mxu0 0.0
  %6997 = vmatpush1.msra.mxu0 0.0
  %6998 = vmatprep.subr.mxu0 0.0
  %6999 = vmatpush1.msra.mxu0 0.0
  %7000 = vmatprep.subr.mxu0 0.0
  %7001 = vmatpush1.msra.mxu0 0.0
  %7002 = vmatprep.subr.mxu0 0.0
  %7003 = vmatpush1.msra.mxu0 0.0
  %7004 = vmatprep.subr.mxu0 0.0
  %7005 = vmatpush1.msra.mxu0 0.0
  %7006 = vmatprep.subr.mxu0 0.0
  %7007 = vmatpush1.msra.mxu0 0.0
  %7008 = vmatprep.subr.mxu0 0.0
  %7009 = vmatpush1.msra.mxu0 0.0
  %7010 = vmatprep.subr.mxu0 0.0
  %7011 = vmatpush1.msra.mxu0 0.0
  %7012 = vmatprep.subr.mxu0 0.0
  %7013 = vmatpush1.msra.mxu0 0.0
  %7014 = vmatprep.subr.mxu0 0.0
  %7015 = vmatpush1.msra.mxu0 0.0
  %7016 = vmatprep.subr.mxu0 0.0
  %7017 = vmatpush1.msra.mxu0 0.0
  %7018 = vmatprep.subr.mxu0 0.0
  %7019 = vmatpush1.msra.mxu0 0.0
  %7020 = vmatprep.subr.mxu0 0.0
  %v7021 = vand.u32 %v2064, 4294901760
  %7022 = vmatpush1.msra.mxu0 %v7021
  %7023 = vmatprep.subr.mxu0 0.0
  %v7024 = vand.u32 %v2063, 4294901760
  %7025 = vmatpush1.msra.mxu0 %v7024
  %7026 = vmatprep.subr.mxu0 0.0
  %v7027 = vand.u32 %v2062, 4294901760
  %7028 = vmatpush1.msra.mxu0 %v7027
  %7029 = vmatprep.subr.mxu0 0.0
  %v7030 = vand.u32 %v2061, 4294901760
  %7031 = vmatpush1.msra.mxu0 %v7030
  %7032 = vmatprep.subr.mxu0 0.0
  %7033 = vmatpush2.msra.mxu0 0.0
  %7034 = vmatprep.subr.mxu0 0.0
  %7035 = vmatpush2.msra.mxu0 0.0
  %7036 = vmatprep.subr.mxu0 0.0
  %7037 = vmatpush2.msra.mxu0 0.0
  %7038 = vmatprep.subr.mxu0 0.0
  %7039 = vmatpush2.msra.mxu0 0.0
  %7040 = vmatprep.subr.mxu0 0.0
  %7041 = vmatpush2.msra.mxu0 0.0
  %7042 = vmatprep.subr.mxu0 0.0
  %7043 = vmatpush2.msra.mxu0 0.0
  %7044 = vmatprep.subr.mxu0 0.0
  %7045 = vmatpush2.msra.mxu0 0.0
  %7046 = vmatprep.subr.mxu0 0.0
  %7047 = vmatpush2.msra.mxu0 0.0
  %7048 = vmatprep.subr.mxu0 0.0
  %7049 = vmatpush2.msra.mxu0 0.0
  %7050 = vmatprep.subr.mxu0 0.0
  %7051 = vmatpush2.msra.mxu0 0.0
  %7052 = vmatprep.subr.mxu0 0.0
  %7053 = vmatpush2.msra.mxu0 0.0
  %7054 = vmatprep.subr.mxu0 0.0
  %7055 = vmatpush2.msra.mxu0 0.0
  %7056 = vmatprep.subr.mxu0 0.0
  %7057 = vmatpush2.msra.mxu0 0.0
  %7058 = vmatprep.subr.mxu0 0.0
  %7059 = vmatpush2.msra.mxu0 0.0
  %7060 = vmatprep.subr.mxu0 0.0
  %7061 = vmatpush2.msra.mxu0 0.0
  %7062 = vmatprep.subr.mxu0 0.0
  %7063 = vmatpush2.msra.mxu0 0.0
  %7064 = vmatprep.mubr.f32.mxu0 0.0
  %v7065 = vand.u32 %v6744, 4294901760
  %v7066 = vsub.f32 %v6744, %v7065
  %v7067 = vand.u32 %v7066, 4294901760
  %7068 = vmatmul.mubr.f32.gmra.mxu0 %v7067
  %v7069 = vpop.f32.mrf.mxu0
  %v7070 = vadd.f32 %v6993, %v7069
  %v7071 = vpop.f32.mrf.mxu0
  %7072 = vdwg.mxu0
  %7073 = vmatprep.subr.mxu0 0.0
  %7074 = vmatpush1.msra.mxu0 0.0
  %7075 = vmatprep.subr.mxu0 0.0
  %7076 = vmatpush1.msra.mxu0 0.0
  %7077 = vmatprep.subr.mxu0 0.0
  %7078 = vmatpush1.msra.mxu0 0.0
  %7079 = vmatprep.subr.mxu0 0.0
  %7080 = vmatpush1.msra.mxu0 0.0
  %7081 = vmatprep.subr.mxu0 0.0
  %7082 = vmatpush1.msra.mxu0 0.0
  %7083 = vmatprep.subr.mxu0 0.0
  %7084 = vmatpush1.msra.mxu0 0.0
  %7085 = vmatprep.subr.mxu0 0.0
  %7086 = vmatpush1.msra.mxu0 0.0
  %7087 = vmatprep.subr.mxu0 0.0
  %7088 = vmatpush1.msra.mxu0 0.0
  %7089 = vmatprep.subr.mxu0 0.0
  %7090 = vmatpush1.msra.mxu0 0.0
  %7091 = vmatprep.subr.mxu0 0.0
  %7092 = vmatpush1.msra.mxu0 0.0
  %7093 = vmatprep.subr.mxu0 0.0
  %7094 = vmatpush1.msra.mxu0 0.0
  %7095 = vmatprep.subr.mxu0 0.0
  %7096 = vmatpush1.msra.mxu0 0.0
  %7097 = vmatprep.subr.mxu0 0.0
  %v7098 = vand.u32 %v2064, 4294901760
  %v7099 = vsub.f32 %v2064, %v7098
  %v7100 = vand.u32 %v7099, 4294901760
  %7101 = vmatpush1.msra.mxu0 %v7100
  %7102 = vmatprep.subr.mxu0 0.0
  %v7103 = vand.u32 %v2063, 4294901760
  %v7104 = vsub.f32 %v2063, %v7103
  %v7105 = vand.u32 %v7104, 4294901760
  %7106 = vmatpush1.msra.mxu0 %v7105
  %7107 = vmatprep.subr.mxu0 0.0
  %v7108 = vand.u32 %v2062, 4294901760
  %v7109 = vsub.f32 %v2062, %v7108
  %v7110 = vand.u32 %v7109, 4294901760
  %7111 = vmatpush1.msra.mxu0 %v7110
  %7112 = vmatprep.subr.mxu0 0.0
  %v7113 = vand.u32 %v2061, 4294901760
  %v7114 = vsub.f32 %v2061, %v7113
  %v7115 = vand.u32 %v7114, 4294901760
  %7116 = vmatpush1.msra.mxu0 %v7115
  %7117 = vmatprep.subr.mxu0 0.0
  %7118 = vmatpush2.msra.mxu0 0.0
  %7119 = vmatprep.subr.mxu0 0.0
  %7120 = vmatpush2.msra.mxu0 0.0
  %7121 = vmatprep.subr.mxu0 0.0
  %7122 = vmatpush2.msra.mxu0 0.0
  %7123 = vmatprep.subr.mxu0 0.0
  %7124 = vmatpush2.msra.mxu0 0.0
  %7125 = vmatprep.subr.mxu0 0.0
  %7126 = vmatpush2.msra.mxu0 0.0
  %7127 = vmatprep.subr.mxu0 0.0
  %7128 = vmatpush2.msra.mxu0 0.0
  %7129 = vmatprep.subr.mxu0 0.0
  %7130 = vmatpush2.msra.mxu0 0.0
  %7131 = vmatprep.subr.mxu0 0.0
  %7132 = vmatpush2.msra.mxu0 0.0
  %7133 = vmatprep.subr.mxu0 0.0
  %7134 = vmatpush2.msra.mxu0 0.0
  %7135 = vmatprep.subr.mxu0 0.0
  %7136 = vmatpush2.msra.mxu0 0.0
  %7137 = vmatprep.subr.mxu0 0.0
  %7138 = vmatpush2.msra.mxu0 0.0
  %7139 = vmatprep.subr.mxu0 0.0
  %7140 = vmatpush2.msra.mxu0 0.0
  %7141 = vmatprep.subr.mxu0 0.0
  %7142 = vmatpush2.msra.mxu0 0.0
  %7143 = vmatprep.subr.mxu0 0.0
  %7144 = vmatpush2.msra.mxu0 0.0
  %7145 = vmatprep.subr.mxu0 0.0
  %7146 = vmatpush2.msra.mxu0 0.0
  %7147 = vmatprep.subr.mxu0 0.0
  %7148 = vmatpush2.msra.mxu0 0.0
  %7149 = vmatprep.mubr.f32.mxu0 0.0
  %v7150 = vand.u32 %v6744, 4294901760
  %7151 = vmatmul.mubr.f32.gmra.mxu0 %v7150
  %v7152 = vpop.f32.mrf.mxu0
  %v7153 = vadd.f32 %v7070, %v7152
  %v7154 = vpop.f32.mrf.mxu0
  %7155 = vdwg.mxu0
  %7156 = vmatprep.subr.mxu0 0.0
  %7157 = vmatpush1.msra.mxu0 0.0
  %7158 = vmatprep.subr.mxu0 0.0
  %7159 = vmatpush1.msra.mxu0 0.0
  %7160 = vmatprep.subr.mxu0 0.0
  %7161 = vmatpush1.msra.mxu0 0.0
  %7162 = vmatprep.subr.mxu0 0.0
  %7163 = vmatpush1.msra.mxu0 0.0
  %7164 = vmatprep.subr.mxu0 0.0
  %7165 = vmatpush1.msra.mxu0 0.0
  %7166 = vmatprep.subr.mxu0 0.0
  %7167 = vmatpush1.msra.mxu0 0.0
  %7168 = vmatprep.subr.mxu0 0.0
  %7169 = vmatpush1.msra.mxu0 0.0
  %7170 = vmatprep.subr.mxu0 0.0
  %7171 = vmatpush1.msra.mxu0 0.0
  %7172 = vmatprep.subr.mxu0 0.0
  %7173 = vmatpush1.msra.mxu0 0.0
  %7174 = vmatprep.subr.mxu0 0.0
  %7175 = vmatpush1.msra.mxu0 0.0
  %7176 = vmatprep.subr.mxu0 0.0
  %7177 = vmatpush1.msra.mxu0 0.0
  %7178 = vmatprep.subr.mxu0 0.0
  %7179 = vmatpush1.msra.mxu0 0.0
  %7180 = vmatprep.subr.mxu0 0.0
  %v7181 = vand.u32 %v2064, 4294901760
  %7182 = vmatpush1.msra.mxu0 %v7181
  %7183 = vmatprep.subr.mxu0 0.0
  %v7184 = vand.u32 %v2063, 4294901760
  %7185 = vmatpush1.msra.mxu0 %v7184
  %7186 = vmatprep.subr.mxu0 0.0
  %v7187 = vand.u32 %v2062, 4294901760
  %7188 = vmatpush1.msra.mxu0 %v7187
  %7189 = vmatprep.subr.mxu0 0.0
  %v7190 = vand.u32 %v2061, 4294901760
  %7191 = vmatpush1.msra.mxu0 %v7190
  %7192 = vmatprep.subr.mxu0 0.0
  %7193 = vmatpush2.msra.mxu0 0.0
  %7194 = vmatprep.subr.mxu0 0.0
  %7195 = vmatpush2.msra.mxu0 0.0
  %7196 = vmatprep.subr.mxu0 0.0
  %7197 = vmatpush2.msra.mxu0 0.0
  %7198 = vmatprep.subr.mxu0 0.0
  %7199 = vmatpush2.msra.mxu0 0.0
  %7200 = vmatprep.subr.mxu0 0.0
  %7201 = vmatpush2.msra.mxu0 0.0
  %7202 = vmatprep.subr.mxu0 0.0
  %7203 = vmatpush2.msra.mxu0 0.0
  %7204 = vmatprep.subr.mxu0 0.0
  %7205 = vmatpush2.msra.mxu0 0.0
  %7206 = vmatprep.subr.mxu0 0.0
  %7207 = vmatpush2.msra.mxu0 0.0
  %7208 = vmatprep.subr.mxu0 0.0
  %7209 = vmatpush2.msra.mxu0 0.0
  %7210 = vmatprep.subr.mxu0 0.0
  %7211 = vmatpush2.msra.mxu0 0.0
  %7212 = vmatprep.subr.mxu0 0.0
  %7213 = vmatpush2.msra.mxu0 0.0
  %7214 = vmatprep.subr.mxu0 0.0
  %7215 = vmatpush2.msra.mxu0 0.0
  %7216 = vmatprep.subr.mxu0 0.0
  %7217 = vmatpush2.msra.mxu0 0.0
  %7218 = vmatprep.subr.mxu0 0.0
  %7219 = vmatpush2.msra.mxu0 0.0
  %7220 = vmatprep.subr.mxu0 0.0
  %7221 = vmatpush2.msra.mxu0 0.0
  %7222 = vmatprep.subr.mxu0 0.0
  %7223 = vmatpush2.msra.mxu0 0.0
  %7224 = vmatprep.mubr.f32.mxu0 0.0
  %v7225 = vand.u32 %v6744, 4294901760
  %7226 = vmatmul.mubr.f32.gmra.mxu0 %v7225
  %v7227 = vpop.f32.mrf.mxu0
  %v7228 = vadd.f32 %v7153, %v7227
  %v7229 = vpop.f32.mrf.mxu0
  %7230 = vdwg.mxu0
  %v7231 = vadd.f32 %v6743, %v7228
  %v7232 = vxor.u32 %v7231, 2147483648
  %v7233 = vmul.f32 %v7232, 1.442695
  %v7234 = vpow.pop %v7233
  %v7235 = vadd.f32 %v7234, 1.0
  %v7236 = vrcp.pop %v7235
  %v7237 = vmul.f32 1.0, %v7236
  %7239 = vrot.lane.b32.xlu0 %v7228, 64
  %v7240 = vpop.permute.xlu0 %7239
  %v7242 = vmul.f32 %v7237, %v7240
  %7244 = vrot.lane.b32.xlu0 %v7242, 64
  %v7245 = vpop.permute.xlu0 %7244
  %v7247 = vadd.f32 %v6743, %v7245
  %v7248 = vtanh.pop %v7247
  %v7249 = vsub.f32 1.0, %v7237
  %7251 = vrot.lane.b32.xlu0 %v7248, 96
  %v7252 = vpop.permute.xlu0 %7251
  %v7254 = vmul.f32 %v7249, %v7252
  %v7255 = vmul.f32 %v7237, %v6737
  %v7256 = vadd.f32 %v7254, %v7255
  %7258 = vrot.lane.b32.xlu0 %v7256, 96
  %v7259 = vpop.permute.xlu0 %7258
  %7261 = vst.msk [vmem:[#allocation3 + $0x48] sm:$0xff] %vm2071, %v7259
  %v7262 = vld [vmem:[#allocation2 + $0x50] sm:$0xff]
  %v7263 = vsel %vm2071, %v7259, 0
  %7265 = vmatprep.subr.mxu0 0.0
  %7266 = vmatpush1.msra.mxu0 0.0
  %7267 = vmatprep.subr.mxu0 0.0
  %7268 = vmatpush1.msra.mxu0 0.0
  %7269 = vmatprep.subr.mxu0 0.0
  %7270 = vmatpush1.msra.mxu0 0.0
  %7271 = vmatprep.subr.mxu0 0.0
  %7272 = vmatpush1.msra.mxu0 0.0
  %7273 = vmatprep.subr.mxu0 0.0
  %7274 = vmatpush1.msra.mxu0 0.0
  %7275 = vmatprep.subr.mxu0 0.0
  %7276 = vmatpush1.msra.mxu0 0.0
  %7277 = vmatprep.subr.mxu0 0.0
  %7278 = vmatpush1.msra.mxu0 0.0
  %7279 = vmatprep.subr.mxu0 0.0
  %7280 = vmatpush1.msra.mxu0 0.0
  %7281 = vmatprep.subr.mxu0 0.0
  %7282 = vmatpush1.msra.mxu0 0.0
  %7283 = vmatprep.subr.mxu0 0.0
  %7284 = vmatpush1.msra.mxu0 0.0
  %7285 = vmatprep.subr.mxu0 0.0
  %7286 = vmatpush1.msra.mxu0 0.0
  %7287 = vmatprep.subr.mxu0 0.0
  %7288 = vmatpush1.msra.mxu0 0.0
  %7289 = vmatprep.subr.mxu0 0.0
  %v7290 = vand.u32 %v2064, 4294901760
  %7291 = vmatpush1.msra.mxu0 %v7290
  %7292 = vmatprep.subr.mxu0 0.0
  %v7293 = vand.u32 %v2063, 4294901760
  %7294 = vmatpush1.msra.mxu0 %v7293
  %7295 = vmatprep.subr.mxu0 0.0
  %v7296 = vand.u32 %v2062, 4294901760
  %7297 = vmatpush1.msra.mxu0 %v7296
  %7298 = vmatprep.subr.mxu0 0.0
  %v7299 = vand.u32 %v2061, 4294901760
  %7300 = vmatpush1.msra.mxu0 %v7299
  %7301 = vmatprep.subr.mxu0 0.0
  %7302 = vmatpush2.msra.mxu0 0.0
  %7303 = vmatprep.subr.mxu0 0.0
  %7304 = vmatpush2.msra.mxu0 0.0
  %7305 = vmatprep.subr.mxu0 0.0
  %7306 = vmatpush2.msra.mxu0 0.0
  %7307 = vmatprep.subr.mxu0 0.0
  %7308 = vmatpush2.msra.mxu0 0.0
  %7309 = vmatprep.subr.mxu0 0.0
  %7310 = vmatpush2.msra.mxu0 0.0
  %7311 = vmatprep.subr.mxu0 0.0
  %7312 = vmatpush2.msra.mxu0 0.0
  %7313 = vmatprep.subr.mxu0 0.0
  %7314 = vmatpush2.msra.mxu0 0.0
  %7315 = vmatprep.subr.mxu0 0.0
  %7316 = vmatpush2.msra.mxu0 0.0
  %7317 = vmatprep.subr.mxu0 0.0
  %7318 = vmatpush2.msra.mxu0 0.0
  %7319 = vmatprep.subr.mxu0 0.0
  %7320 = vmatpush2.msra.mxu0 0.0
  %7321 = vmatprep.subr.mxu0 0.0
  %7322 = vmatpush2.msra.mxu0 0.0
  %7323 = vmatprep.subr.mxu0 0.0
  %7324 = vmatpush2.msra.mxu0 0.0
  %7325 = vmatprep.subr.mxu0 0.0
  %7326 = vmatpush2.msra.mxu0 0.0
  %7327 = vmatprep.subr.mxu0 0.0
  %7328 = vmatpush2.msra.mxu0 0.0
  %7329 = vmatprep.subr.mxu0 0.0
  %7330 = vmatpush2.msra.mxu0 0.0
  %7331 = vmatprep.subr.mxu0 0.0
  %7332 = vmatpush2.msra.mxu0 0.0
  %7333 = vmatprep.mubr.f32.mxu0 0.0
  %v7334 = vand.u32 %v7263, 4294901760
  %v7335 = vsub.f32 %v7263, %v7334
  %v7336 = vand.u32 %v7335, 4294901760
  %v7337 = vsub.f32 %v7335, %v7336
  %v7338 = vand.u32 %v7337, 4294901760
  %7339 = vmatmul.mubr.f32.gmra.mxu0 %v7338
  %v7340 = vpop.f32.mrf.mxu0
  %v7341 = vadd.f32 %v2070, %v7340
  %v7342 = vpop.f32.mrf.mxu0
  %7343 = vdwg.mxu0
  %7344 = vmatprep.subr.mxu0 0.0
  %7345 = vmatpush1.msra.mxu0 0.0
  %7346 = vmatprep.subr.mxu0 0.0
  %7347 = vmatpush1.msra.mxu0 0.0
  %7348 = vmatprep.subr.mxu0 0.0
  %7349 = vmatpush1.msra.mxu0 0.0
  %7350 = vmatprep.subr.mxu0 0.0
  %7351 = vmatpush1.msra.mxu0 0.0
  %7352 = vmatprep.subr.mxu0 0.0
  %7353 = vmatpush1.msra.mxu0 0.0
  %7354 = vmatprep.subr.mxu0 0.0
  %7355 = vmatpush1.msra.mxu0 0.0
  %7356 = vmatprep.subr.mxu0 0.0
  %7357 = vmatpush1.msra.mxu0 0.0
  %7358 = vmatprep.subr.mxu0 0.0
  %7359 = vmatpush1.msra.mxu0 0.0
  %7360 = vmatprep.subr.mxu0 0.0
  %7361 = vmatpush1.msra.mxu0 0.0
  %7362 = vmatprep.subr.mxu0 0.0
  %7363 = vmatpush1.msra.mxu0 0.0
  %7364 = vmatprep.subr.mxu0 0.0
  %7365 = vmatpush1.msra.mxu0 0.0
  %7366 = vmatprep.subr.mxu0 0.0
  %7367 = vmatpush1.msra.mxu0 0.0
  %7368 = vmatprep.subr.mxu0 0.0
  %v7369 = vand.u32 %v2064, 4294901760
  %v7370 = vsub.f32 %v2064, %v7369
  %v7371 = vand.u32 %v7370, 4294901760
  %v7372 = vsub.f32 %v7370, %v7371
  %v7373 = vand.u32 %v7372, 4294901760
  %7374 = vmatpush1.msra.mxu0 %v7373
  %7375 = vmatprep.subr.mxu0 0.0
  %v7376 = vand.u32 %v2063, 4294901760
  %v7377 = vsub.f32 %v2063, %v7376
  %v7378 = vand.u32 %v7377, 4294901760
  %v7379 = vsub.f32 %v7377, %v7378
  %v7380 = vand.u32 %v7379, 4294901760
  %7381 = vmatpush1.msra.mxu0 %v7380
  %7382 = vmatprep.subr.mxu0 0.0
  %v7383 = vand.u32 %v2062, 4294901760
  %v7384 = vsub.f32 %v2062, %v7383
  %v7385 = vand.u32 %v7384, 4294901760
  %v7386 = vsub.f32 %v7384, %v7385
  %v7387 = vand.u32 %v7386, 4294901760
  %7388 = vmatpush1.msra.mxu0 %v7387
  %7389 = vmatprep.subr.mxu0 0.0
  %v7390 = vand.u32 %v2061, 4294901760
  %v7391 = vsub.f32 %v2061, %v7390
  %v7392 = vand.u32 %v7391, 4294901760
  %v7393 = vsub.f32 %v7391, %v7392
  %v7394 = vand.u32 %v7393, 4294901760
  %7395 = vmatpush1.msra.mxu0 %v7394
  %7396 = vmatprep.subr.mxu0 0.0
  %7397 = vmatpush2.msra.mxu0 0.0
  %7398 = vmatprep.subr.mxu0 0.0
  %7399 = vmatpush2.msra.mxu0 0.0
  %7400 = vmatprep.subr.mxu0 0.0
  %7401 = vmatpush2.msra.mxu0 0.0
  %7402 = vmatprep.subr.mxu0 0.0
  %7403 = vmatpush2.msra.mxu0 0.0
  %7404 = vmatprep.subr.mxu0 0.0
  %7405 = vmatpush2.msra.mxu0 0.0
  %7406 = vmatprep.subr.mxu0 0.0
  %7407 = vmatpush2.msra.mxu0 0.0
  %7408 = vmatprep.subr.mxu0 0.0
  %7409 = vmatpush2.msra.mxu0 0.0
  %7410 = vmatprep.subr.mxu0 0.0
  %7411 = vmatpush2.msra.mxu0 0.0
  %7412 = vmatprep.subr.mxu0 0.0
  %7413 = vmatpush2.msra.mxu0 0.0
  %7414 = vmatprep.subr.mxu0 0.0
  %7415 = vmatpush2.msra.mxu0 0.0
  %7416 = vmatprep.subr.mxu0 0.0
  %7417 = vmatpush2.msra.mxu0 0.0
  %7418 = vmatprep.subr.mxu0 0.0
  %7419 = vmatpush2.msra.mxu0 0.0
  %7420 = vmatprep.subr.mxu0 0.0
  %7421 = vmatpush2.msra.mxu0 0.0
  %7422 = vmatprep.subr.mxu0 0.0
  %7423 = vmatpush2.msra.mxu0 0.0
  %7424 = vmatprep.subr.mxu0 0.0
  %7425 = vmatpush2.msra.mxu0 0.0
  %7426 = vmatprep.subr.mxu0 0.0
  %7427 = vmatpush2.msra.mxu0 0.0
  %7428 = vmatprep.mubr.f32.mxu0 0.0
  %v7429 = vand.u32 %v7263, 4294901760
  %7430 = vmatmul.mubr.f32.gmra.mxu0 %v7429
  %v7431 = vpop.f32.mrf.mxu0
  %v7432 = vadd.f32 %v7341, %v7431
  %v7433 = vpop.f32.mrf.mxu0
  %7434 = vdwg.mxu0
  %7435 = vmatprep.subr.mxu0 0.0
  %7436 = vmatpush1.msra.mxu0 0.0
  %7437 = vmatprep.subr.mxu0 0.0
  %7438 = vmatpush1.msra.mxu0 0.0
  %7439 = vmatprep.subr.mxu0 0.0
  %7440 = vmatpush1.msra.mxu0 0.0
  %7441 = vmatprep.subr.mxu0 0.0
  %7442 = vmatpush1.msra.mxu0 0.0
  %7443 = vmatprep.subr.mxu0 0.0
  %7444 = vmatpush1.msra.mxu0 0.0
  %7445 = vmatprep.subr.mxu0 0.0
  %7446 = vmatpush1.msra.mxu0 0.0
  %7447 = vmatprep.subr.mxu0 0.0
  %7448 = vmatpush1.msra.mxu0 0.0
  %7449 = vmatprep.subr.mxu0 0.0
  %7450 = vmatpush1.msra.mxu0 0.0
  %7451 = vmatprep.subr.mxu0 0.0
  %7452 = vmatpush1.msra.mxu0 0.0
  %7453 = vmatprep.subr.mxu0 0.0
  %7454 = vmatpush1.msra.mxu0 0.0
  %7455 = vmatprep.subr.mxu0 0.0
  %7456 = vmatpush1.msra.mxu0 0.0
  %7457 = vmatprep.subr.mxu0 0.0
  %7458 = vmatpush1.msra.mxu0 0.0
  %7459 = vmatprep.subr.mxu0 0.0
  %v7460 = vand.u32 %v2064, 4294901760
  %v7461 = vsub.f32 %v2064, %v7460
  %7462 = vmatpush1.msra.mxu0 %v7461
  %7463 = vmatprep.subr.mxu0 0.0
  %v7464 = vand.u32 %v2063, 4294901760
  %v7465 = vsub.f32 %v2063, %v7464
  %7466 = vmatpush1.msra.mxu0 %v7465
  %7467 = vmatprep.subr.mxu0 0.0
  %v7468 = vand.u32 %v2062, 4294901760
  %v7469 = vsub.f32 %v2062, %v7468
  %7470 = vmatpush1.msra.mxu0 %v7469
  %7471 = vmatprep.subr.mxu0 0.0
  %v7472 = vand.u32 %v2061, 4294901760
  %v7473 = vsub.f32 %v2061, %v7472
  %7474 = vmatpush1.msra.mxu0 %v7473
  %7475 = vmatprep.subr.mxu0 0.0
  %7476 = vmatpush2.msra.mxu0 0.0
  %7477 = vmatprep.subr.mxu0 0.0
  %7478 = vmatpush2.msra.mxu0 0.0
  %7479 = vmatprep.subr.mxu0 0.0
  %7480 = vmatpush2.msra.mxu0 0.0
  %7481 = vmatprep.subr.mxu0 0.0
  %7482 = vmatpush2.msra.mxu0 0.0
  %7483 = vmatprep.subr.mxu0 0.0
  %7484 = vmatpush2.msra.mxu0 0.0
  %7485 = vmatprep.subr.mxu0 0.0
  %7486 = vmatpush2.msra.mxu0 0.0
  %7487 = vmatprep.subr.mxu0 0.0
  %7488 = vmatpush2.msra.mxu0 0.0
  %7489 = vmatprep.subr.mxu0 0.0
  %7490 = vmatpush2.msra.mxu0 0.0
  %7491 = vmatprep.subr.mxu0 0.0
  %7492 = vmatpush2.msra.mxu0 0.0
  %7493 = vmatprep.subr.mxu0 0.0
  %7494 = vmatpush2.msra.mxu0 0.0
  %7495 = vmatprep.subr.mxu0 0.0
  %7496 = vmatpush2.msra.mxu0 0.0
  %7497 = vmatprep.subr.mxu0 0.0
  %7498 = vmatpush2.msra.mxu0 0.0
  %7499 = vmatprep.subr.mxu0 0.0
  %7500 = vmatpush2.msra.mxu0 0.0
  %7501 = vmatprep.subr.mxu0 0.0
  %7502 = vmatpush2.msra.mxu0 0.0
  %7503 = vmatprep.subr.mxu0 0.0
  %7504 = vmatpush2.msra.mxu0 0.0
  %7505 = vmatprep.subr.mxu0 0.0
  %7506 = vmatpush2.msra.mxu0 0.0
  %7507 = vmatprep.mubr.f32.mxu0 0.0
  %v7508 = vand.u32 %v7263, 4294901760
  %v7509 = vsub.f32 %v7263, %v7508
  %7510 = vmatmul.mubr.f32.gmra.mxu0 %v7509
  %v7511 = vpop.f32.mrf.mxu0
  %v7512 = vadd.f32 %v7432, %v7511
  %v7513 = vpop.f32.mrf.mxu0
  %7514 = vdwg.mxu0
  %7515 = vmatprep.subr.mxu0 0.0
  %7516 = vmatpush1.msra.mxu0 0.0
  %7517 = vmatprep.subr.mxu0 0.0
  %7518 = vmatpush1.msra.mxu0 0.0
  %7519 = vmatprep.subr.mxu0 0.0
  %7520 = vmatpush1.msra.mxu0 0.0
  %7521 = vmatprep.subr.mxu0 0.0
  %7522 = vmatpush1.msra.mxu0 0.0
  %7523 = vmatprep.subr.mxu0 0.0
  %7524 = vmatpush1.msra.mxu0 0.0
  %7525 = vmatprep.subr.mxu0 0.0
  %7526 = vmatpush1.msra.mxu0 0.0
  %7527 = vmatprep.subr.mxu0 0.0
  %7528 = vmatpush1.msra.mxu0 0.0
  %7529 = vmatprep.subr.mxu0 0.0
  %7530 = vmatpush1.msra.mxu0 0.0
  %7531 = vmatprep.subr.mxu0 0.0
  %7532 = vmatpush1.msra.mxu0 0.0
  %7533 = vmatprep.subr.mxu0 0.0
  %7534 = vmatpush1.msra.mxu0 0.0
  %7535 = vmatprep.subr.mxu0 0.0
  %7536 = vmatpush1.msra.mxu0 0.0
  %7537 = vmatprep.subr.mxu0 0.0
  %7538 = vmatpush1.msra.mxu0 0.0
  %7539 = vmatprep.subr.mxu0 0.0
  %v7540 = vand.u32 %v2064, 4294901760
  %7541 = vmatpush1.msra.mxu0 %v7540
  %7542 = vmatprep.subr.mxu0 0.0
  %v7543 = vand.u32 %v2063, 4294901760
  %7544 = vmatpush1.msra.mxu0 %v7543
  %7545 = vmatprep.subr.mxu0 0.0
  %v7546 = vand.u32 %v2062, 4294901760
  %7547 = vmatpush1.msra.mxu0 %v7546
  %7548 = vmatprep.subr.mxu0 0.0
  %v7549 = vand.u32 %v2061, 4294901760
  %7550 = vmatpush1.msra.mxu0 %v7549
  %7551 = vmatprep.subr.mxu0 0.0
  %7552 = vmatpush2.msra.mxu0 0.0
  %7553 = vmatprep.subr.mxu0 0.0
  %7554 = vmatpush2.msra.mxu0 0.0
  %7555 = vmatprep.subr.mxu0 0.0
  %7556 = vmatpush2.msra.mxu0 0.0
  %7557 = vmatprep.subr.mxu0 0.0
  %7558 = vmatpush2.msra.mxu0 0.0
  %7559 = vmatprep.subr.mxu0 0.0
  %7560 = vmatpush2.msra.mxu0 0.0
  %7561 = vmatprep.subr.mxu0 0.0
  %7562 = vmatpush2.msra.mxu0 0.0
  %7563 = vmatprep.subr.mxu0 0.0
  %7564 = vmatpush2.msra.mxu0 0.0
  %7565 = vmatprep.subr.mxu0 0.0
  %7566 = vmatpush2.msra.mxu0 0.0
  %7567 = vmatprep.subr.mxu0 0.0
  %7568 = vmatpush2.msra.mxu0 0.0
  %7569 = vmatprep.subr.mxu0 0.0
  %7570 = vmatpush2.msra.mxu0 0.0
  %7571 = vmatprep.subr.mxu0 0.0
  %7572 = vmatpush2.msra.mxu0 0.0
  %7573 = vmatprep.subr.mxu0 0.0
  %7574 = vmatpush2.msra.mxu0 0.0
  %7575 = vmatprep.subr.mxu0 0.0
  %7576 = vmatpush2.msra.mxu0 0.0
  %7577 = vmatprep.subr.mxu0 0.0
  %7578 = vmatpush2.msra.mxu0 0.0
  %7579 = vmatprep.subr.mxu0 0.0
  %7580 = vmatpush2.msra.mxu0 0.0
  %7581 = vmatprep.subr.mxu0 0.0
  %7582 = vmatpush2.msra.mxu0 0.0
  %7583 = vmatprep.mubr.f32.mxu0 0.0
  %v7584 = vand.u32 %v7263, 4294901760
  %v7585 = vsub.f32 %v7263, %v7584
  %v7586 = vand.u32 %v7585, 4294901760
  %7587 = vmatmul.mubr.f32.gmra.mxu0 %v7586
  %v7588 = vpop.f32.mrf.mxu0
  %v7589 = vadd.f32 %v7512, %v7588
  %v7590 = vpop.f32.mrf.mxu0
  %7591 = vdwg.mxu0
  %7592 = vmatprep.subr.mxu0 0.0
  %7593 = vmatpush1.msra.mxu0 0.0
  %7594 = vmatprep.subr.mxu0 0.0
  %7595 = vmatpush1.msra.mxu0 0.0
  %7596 = vmatprep.subr.mxu0 0.0
  %7597 = vmatpush1.msra.mxu0 0.0
  %7598 = vmatprep.subr.mxu0 0.0
  %7599 = vmatpush1.msra.mxu0 0.0
  %7600 = vmatprep.subr.mxu0 0.0
  %7601 = vmatpush1.msra.mxu0 0.0
  %7602 = vmatprep.subr.mxu0 0.0
  %7603 = vmatpush1.msra.mxu0 0.0
  %7604 = vmatprep.subr.mxu0 0.0
  %7605 = vmatpush1.msra.mxu0 0.0
  %7606 = vmatprep.subr.mxu0 0.0
  %7607 = vmatpush1.msra.mxu0 0.0
  %7608 = vmatprep.subr.mxu0 0.0
  %7609 = vmatpush1.msra.mxu0 0.0
  %7610 = vmatprep.subr.mxu0 0.0
  %7611 = vmatpush1.msra.mxu0 0.0
  %7612 = vmatprep.subr.mxu0 0.0
  %7613 = vmatpush1.msra.mxu0 0.0
  %7614 = vmatprep.subr.mxu0 0.0
  %7615 = vmatpush1.msra.mxu0 0.0
  %7616 = vmatprep.subr.mxu0 0.0
  %v7617 = vand.u32 %v2064, 4294901760
  %v7618 = vsub.f32 %v2064, %v7617
  %v7619 = vand.u32 %v7618, 4294901760
  %7620 = vmatpush1.msra.mxu0 %v7619
  %7621 = vmatprep.subr.mxu0 0.0
  %v7622 = vand.u32 %v2063, 4294901760
  %v7623 = vsub.f32 %v2063, %v7622
  %v7624 = vand.u32 %v7623, 4294901760
  %7625 = vmatpush1.msra.mxu0 %v7624
  %7626 = vmatprep.subr.mxu0 0.0
  %v7627 = vand.u32 %v2062, 4294901760
  %v7628 = vsub.f32 %v2062, %v7627
  %v7629 = vand.u32 %v7628, 4294901760
  %7630 = vmatpush1.msra.mxu0 %v7629
  %7631 = vmatprep.subr.mxu0 0.0
  %v7632 = vand.u32 %v2061, 4294901760
  %v7633 = vsub.f32 %v2061, %v7632
  %v7634 = vand.u32 %v7633, 4294901760
  %7635 = vmatpush1.msra.mxu0 %v7634
  %7636 = vmatprep.subr.mxu0 0.0
  %7637 = vmatpush2.msra.mxu0 0.0
  %7638 = vmatprep.subr.mxu0 0.0
  %7639 = vmatpush2.msra.mxu0 0.0
  %7640 = vmatprep.subr.mxu0 0.0
  %7641 = vmatpush2.msra.mxu0 0.0
  %7642 = vmatprep.subr.mxu0 0.0
  %7643 = vmatpush2.msra.mxu0 0.0
  %7644 = vmatprep.subr.mxu0 0.0
  %7645 = vmatpush2.msra.mxu0 0.0
  %7646 = vmatprep.subr.mxu0 0.0
  %7647 = vmatpush2.msra.mxu0 0.0
  %7648 = vmatprep.subr.mxu0 0.0
  %7649 = vmatpush2.msra.mxu0 0.0
  %7650 = vmatprep.subr.mxu0 0.0
  %7651 = vmatpush2.msra.mxu0 0.0
  %7652 = vmatprep.subr.mxu0 0.0
  %7653 = vmatpush2.msra.mxu0 0.0
  %7654 = vmatprep.subr.mxu0 0.0
  %7655 = vmatpush2.msra.mxu0 0.0
  %7656 = vmatprep.subr.mxu0 0.0
  %7657 = vmatpush2.msra.mxu0 0.0
  %7658 = vmatprep.subr.mxu0 0.0
  %7659 = vmatpush2.msra.mxu0 0.0
  %7660 = vmatprep.subr.mxu0 0.0
  %7661 = vmatpush2.msra.mxu0 0.0
  %7662 = vmatprep.subr.mxu0 0.0
  %7663 = vmatpush2.msra.mxu0 0.0
  %7664 = vmatprep.subr.mxu0 0.0
  %7665 = vmatpush2.msra.mxu0 0.0
  %7666 = vmatprep.subr.mxu0 0.0
  %7667 = vmatpush2.msra.mxu0 0.0
  %7668 = vmatprep.mubr.f32.mxu0 0.0
  %v7669 = vand.u32 %v7263, 4294901760
  %7670 = vmatmul.mubr.f32.gmra.mxu0 %v7669
  %v7671 = vpop.f32.mrf.mxu0
  %v7672 = vadd.f32 %v7589, %v7671
  %v7673 = vpop.f32.mrf.mxu0
  %7674 = vdwg.mxu0
  %7675 = vmatprep.subr.mxu0 0.0
  %7676 = vmatpush1.msra.mxu0 0.0
  %7677 = vmatprep.subr.mxu0 0.0
  %7678 = vmatpush1.msra.mxu0 0.0
  %7679 = vmatprep.subr.mxu0 0.0
  %7680 = vmatpush1.msra.mxu0 0.0
  %7681 = vmatprep.subr.mxu0 0.0
  %7682 = vmatpush1.msra.mxu0 0.0
  %7683 = vmatprep.subr.mxu0 0.0
  %7684 = vmatpush1.msra.mxu0 0.0
  %7685 = vmatprep.subr.mxu0 0.0
  %7686 = vmatpush1.msra.mxu0 0.0
  %7687 = vmatprep.subr.mxu0 0.0
  %7688 = vmatpush1.msra.mxu0 0.0
  %7689 = vmatprep.subr.mxu0 0.0
  %7690 = vmatpush1.msra.mxu0 0.0
  %7691 = vmatprep.subr.mxu0 0.0
  %7692 = vmatpush1.msra.mxu0 0.0
  %7693 = vmatprep.subr.mxu0 0.0
  %7694 = vmatpush1.msra.mxu0 0.0
  %7695 = vmatprep.subr.mxu0 0.0
  %7696 = vmatpush1.msra.mxu0 0.0
  %7697 = vmatprep.subr.mxu0 0.0
  %7698 = vmatpush1.msra.mxu0 0.0
  %7699 = vmatprep.subr.mxu0 0.0
  %v7700 = vand.u32 %v2064, 4294901760
  %7701 = vmatpush1.msra.mxu0 %v7700
  %7702 = vmatprep.subr.mxu0 0.0
  %v7703 = vand.u32 %v2063, 4294901760
  %7704 = vmatpush1.msra.mxu0 %v7703
  %7705 = vmatprep.subr.mxu0 0.0
  %v7706 = vand.u32 %v2062, 4294901760
  %7707 = vmatpush1.msra.mxu0 %v7706
  %7708 = vmatprep.subr.mxu0 0.0
  %v7709 = vand.u32 %v2061, 4294901760
  %7710 = vmatpush1.msra.mxu0 %v7709
  %7711 = vmatprep.subr.mxu0 0.0
  %7712 = vmatpush2.msra.mxu0 0.0
  %7713 = vmatprep.subr.mxu0 0.0
  %7714 = vmatpush2.msra.mxu0 0.0
  %7715 = vmatprep.subr.mxu0 0.0
  %7716 = vmatpush2.msra.mxu0 0.0
  %7717 = vmatprep.subr.mxu0 0.0
  %7718 = vmatpush2.msra.mxu0 0.0
  %7719 = vmatprep.subr.mxu0 0.0
  %7720 = vmatpush2.msra.mxu0 0.0
  %7721 = vmatprep.subr.mxu0 0.0
  %7722 = vmatpush2.msra.mxu0 0.0
  %7723 = vmatprep.subr.mxu0 0.0
  %7724 = vmatpush2.msra.mxu0 0.0
  %7725 = vmatprep.subr.mxu0 0.0
  %7726 = vmatpush2.msra.mxu0 0.0
  %7727 = vmatprep.subr.mxu0 0.0
  %7728 = vmatpush2.msra.mxu0 0.0
  %7729 = vmatprep.subr.mxu0 0.0
  %7730 = vmatpush2.msra.mxu0 0.0
  %7731 = vmatprep.subr.mxu0 0.0
  %7732 = vmatpush2.msra.mxu0 0.0
  %7733 = vmatprep.subr.mxu0 0.0
  %7734 = vmatpush2.msra.mxu0 0.0
  %7735 = vmatprep.subr.mxu0 0.0
  %7736 = vmatpush2.msra.mxu0 0.0
  %7737 = vmatprep.subr.mxu0 0.0
  %7738 = vmatpush2.msra.mxu0 0.0
  %7739 = vmatprep.subr.mxu0 0.0
  %7740 = vmatpush2.msra.mxu0 0.0
  %7741 = vmatprep.subr.mxu0 0.0
  %7742 = vmatpush2.msra.mxu0 0.0
  %7743 = vmatprep.mubr.f32.mxu0 0.0
  %v7744 = vand.u32 %v7263, 4294901760
  %7745 = vmatmul.mubr.f32.gmra.mxu0 %v7744
  %v7746 = vpop.f32.mrf.mxu0
  %v7747 = vadd.f32 %v7672, %v7746
  %v7748 = vpop.f32.mrf.mxu0
  %7749 = vdwg.mxu0
  %v7750 = vadd.f32 %v7262, %v7747
  %v7751 = vxor.u32 %v7750, 2147483648
  %v7752 = vmul.f32 %v7751, 1.442695
  %v7753 = vpow.pop %v7752
  %v7754 = vadd.f32 %v7753, 1.0
  %v7755 = vrcp.pop %v7754
  %v7756 = vmul.f32 1.0, %v7755
  %7758 = vrot.lane.b32.xlu0 %v7747, 64
  %v7759 = vpop.permute.xlu0 %7758
  %v7761 = vmul.f32 %v7756, %v7759
  %7763 = vrot.lane.b32.xlu0 %v7761, 64
  %v7764 = vpop.permute.xlu0 %7763
  %v7766 = vadd.f32 %v7262, %v7764
  %v7767 = vtanh.pop %v7766
  %v7768 = vsub.f32 1.0, %v7756
  %7770 = vrot.lane.b32.xlu0 %v7767, 96
  %v7771 = vpop.permute.xlu0 %7770
  %v7773 = vmul.f32 %v7768, %v7771
  %v7774 = vmul.f32 %v7756, %v7256
  %v7775 = vadd.f32 %v7773, %v7774
  %7777 = vrot.lane.b32.xlu0 %v7775, 96
  %v7778 = vpop.permute.xlu0 %7777
  %7780 = vst.msk [vmem:[#allocation3 + $0x50] sm:$0xff] %vm2071, %v7778
  %v7781 = vld [vmem:[#allocation2 + $0x58] sm:$0xff]
  %v7782 = vsel %vm2071, %v7778, 0
  %7784 = vmatprep.subr.mxu0 0.0
  %7785 = vmatpush1.msra.mxu0 0.0
  %7786 = vmatprep.subr.mxu0 0.0
  %7787 = vmatpush1.msra.mxu0 0.0
  %7788 = vmatprep.subr.mxu0 0.0
  %7789 = vmatpush1.msra.mxu0 0.0
  %7790 = vmatprep.subr.mxu0 0.0
  %7791 = vmatpush1.msra.mxu0 0.0
  %7792 = vmatprep.subr.mxu0 0.0
  %7793 = vmatpush1.msra.mxu0 0.0
  %7794 = vmatprep.subr.mxu0 0.0
  %7795 = vmatpush1.msra.mxu0 0.0
  %7796 = vmatprep.subr.mxu0 0.0
  %7797 = vmatpush1.msra.mxu0 0.0
  %7798 = vmatprep.subr.mxu0 0.0
  %7799 = vmatpush1.msra.mxu0 0.0
  %7800 = vmatprep.subr.mxu0 0.0
  %7801 = vmatpush1.msra.mxu0 0.0
  %7802 = vmatprep.subr.mxu0 0.0
  %7803 = vmatpush1.msra.mxu0 0.0
  %7804 = vmatprep.subr.mxu0 0.0
  %7805 = vmatpush1.msra.mxu0 0.0
  %7806 = vmatprep.subr.mxu0 0.0
  %7807 = vmatpush1.msra.mxu0 0.0
  %7808 = vmatprep.subr.mxu0 0.0
  %v7809 = vand.u32 %v2064, 4294901760
  %7810 = vmatpush1.msra.mxu0 %v7809
  %7811 = vmatprep.subr.mxu0 0.0
  %v7812 = vand.u32 %v2063, 4294901760
  %7813 = vmatpush1.msra.mxu0 %v7812
  %7814 = vmatprep.subr.mxu0 0.0
  %v7815 = vand.u32 %v2062, 4294901760
  %7816 = vmatpush1.msra.mxu0 %v7815
  %7817 = vmatprep.subr.mxu0 0.0
  %v7818 = vand.u32 %v2061, 4294901760
  %7819 = vmatpush1.msra.mxu0 %v7818
  %7820 = vmatprep.subr.mxu0 0.0
  %7821 = vmatpush2.msra.mxu0 0.0
  %7822 = vmatprep.subr.mxu0 0.0
  %7823 = vmatpush2.msra.mxu0 0.0
  %7824 = vmatprep.subr.mxu0 0.0
  %7825 = vmatpush2.msra.mxu0 0.0
  %7826 = vmatprep.subr.mxu0 0.0
  %7827 = vmatpush2.msra.mxu0 0.0
  %7828 = vmatprep.subr.mxu0 0.0
  %7829 = vmatpush2.msra.mxu0 0.0
  %7830 = vmatprep.subr.mxu0 0.0
  %7831 = vmatpush2.msra.mxu0 0.0
  %7832 = vmatprep.subr.mxu0 0.0
  %7833 = vmatpush2.msra.mxu0 0.0
  %7834 = vmatprep.subr.mxu0 0.0
  %7835 = vmatpush2.msra.mxu0 0.0
  %7836 = vmatprep.subr.mxu0 0.0
  %7837 = vmatpush2.msra.mxu0 0.0
  %7838 = vmatprep.subr.mxu0 0.0
  %7839 = vmatpush2.msra.mxu0 0.0
  %7840 = vmatprep.subr.mxu0 0.0
  %7841 = vmatpush2.msra.mxu0 0.0
  %7842 = vmatprep.subr.mxu0 0.0
  %7843 = vmatpush2.msra.mxu0 0.0
  %7844 = vmatprep.subr.mxu0 0.0
  %7845 = vmatpush2.msra.mxu0 0.0
  %7846 = vmatprep.subr.mxu0 0.0
  %7847 = vmatpush2.msra.mxu0 0.0
  %7848 = vmatprep.subr.mxu0 0.0
  %7849 = vmatpush2.msra.mxu0 0.0
  %7850 = vmatprep.subr.mxu0 0.0
  %7851 = vmatpush2.msra.mxu0 0.0
  %7852 = vmatprep.mubr.f32.mxu0 0.0
  %v7853 = vand.u32 %v7782, 4294901760
  %v7854 = vsub.f32 %v7782, %v7853
  %v7855 = vand.u32 %v7854, 4294901760
  %v7856 = vsub.f32 %v7854, %v7855
  %v7857 = vand.u32 %v7856, 4294901760
  %7858 = vmatmul.mubr.f32.gmra.mxu0 %v7857
  %v7859 = vpop.f32.mrf.mxu0
  %v7860 = vadd.f32 %v2070, %v7859
  %v7861 = vpop.f32.mrf.mxu0
  %7862 = vdwg.mxu0
  %7863 = vmatprep.subr.mxu0 0.0
  %7864 = vmatpush1.msra.mxu0 0.0
  %7865 = vmatprep.subr.mxu0 0.0
  %7866 = vmatpush1.msra.mxu0 0.0
  %7867 = vmatprep.subr.mxu0 0.0
  %7868 = vmatpush1.msra.mxu0 0.0
  %7869 = vmatprep.subr.mxu0 0.0
  %7870 = vmatpush1.msra.mxu0 0.0
  %7871 = vmatprep.subr.mxu0 0.0
  %7872 = vmatpush1.msra.mxu0 0.0
  %7873 = vmatprep.subr.mxu0 0.0
  %7874 = vmatpush1.msra.mxu0 0.0
  %7875 = vmatprep.subr.mxu0 0.0
  %7876 = vmatpush1.msra.mxu0 0.0
  %7877 = vmatprep.subr.mxu0 0.0
  %7878 = vmatpush1.msra.mxu0 0.0
  %7879 = vmatprep.subr.mxu0 0.0
  %7880 = vmatpush1.msra.mxu0 0.0
  %7881 = vmatprep.subr.mxu0 0.0
  %7882 = vmatpush1.msra.mxu0 0.0
  %7883 = vmatprep.subr.mxu0 0.0
  %7884 = vmatpush1.msra.mxu0 0.0
  %7885 = vmatprep.subr.mxu0 0.0
  %7886 = vmatpush1.msra.mxu0 0.0
  %7887 = vmatprep.subr.mxu0 0.0
  %v7888 = vand.u32 %v2064, 4294901760
  %v7889 = vsub.f32 %v2064, %v7888
  %v7890 = vand.u32 %v7889, 4294901760
  %v7891 = vsub.f32 %v7889, %v7890
  %v7892 = vand.u32 %v7891, 4294901760
  %7893 = vmatpush1.msra.mxu0 %v7892
  %7894 = vmatprep.subr.mxu0 0.0
  %v7895 = vand.u32 %v2063, 4294901760
  %v7896 = vsub.f32 %v2063, %v7895
  %v7897 = vand.u32 %v7896, 4294901760
  %v7898 = vsub.f32 %v7896, %v7897
  %v7899 = vand.u32 %v7898, 4294901760
  %7900 = vmatpush1.msra.mxu0 %v7899
  %7901 = vmatprep.subr.mxu0 0.0
  %v7902 = vand.u32 %v2062, 4294901760
  %v7903 = vsub.f32 %v2062, %v7902
  %v7904 = vand.u32 %v7903, 4294901760
  %v7905 = vsub.f32 %v7903, %v7904
  %v7906 = vand.u32 %v7905, 4294901760
  %7907 = vmatpush1.msra.mxu0 %v7906
  %7908 = vmatprep.subr.mxu0 0.0
  %v7909 = vand.u32 %v2061, 4294901760
  %v7910 = vsub.f32 %v2061, %v7909
  %v7911 = vand.u32 %v7910, 4294901760
  %v7912 = vsub.f32 %v7910, %v7911
  %v7913 = vand.u32 %v7912, 4294901760
  %7914 = vmatpush1.msra.mxu0 %v7913
  %7915 = vmatprep.subr.mxu0 0.0
  %7916 = vmatpush2.msra.mxu0 0.0
  %7917 = vmatprep.subr.mxu0 0.0
  %7918 = vmatpush2.msra.mxu0 0.0
  %7919 = vmatprep.subr.mxu0 0.0
  %7920 = vmatpush2.msra.mxu0 0.0
  %7921 = vmatprep.subr.mxu0 0.0
  %7922 = vmatpush2.msra.mxu0 0.0
  %7923 = vmatprep.subr.mxu0 0.0
  %7924 = vmatpush2.msra.mxu0 0.0
  %7925 = vmatprep.subr.mxu0 0.0
  %7926 = vmatpush2.msra.mxu0 0.0
  %7927 = vmatprep.subr.mxu0 0.0
  %7928 = vmatpush2.msra.mxu0 0.0
  %7929 = vmatprep.subr.mxu0 0.0
  %7930 = vmatpush2.msra.mxu0 0.0
  %7931 = vmatprep.subr.mxu0 0.0
  %7932 = vmatpush2.msra.mxu0 0.0
  %7933 = vmatprep.subr.mxu0 0.0
  %7934 = vmatpush2.msra.mxu0 0.0
  %7935 = vmatprep.subr.mxu0 0.0
  %7936 = vmatpush2.msra.mxu0 0.0
  %7937 = vmatprep.subr.mxu0 0.0
  %7938 = vmatpush2.msra.mxu0 0.0
  %7939 = vmatprep.subr.mxu0 0.0
  %7940 = vmatpush2.msra.mxu0 0.0
  %7941 = vmatprep.subr.mxu0 0.0
  %7942 = vmatpush2.msra.mxu0 0.0
  %7943 = vmatprep.subr.mxu0 0.0
  %7944 = vmatpush2.msra.mxu0 0.0
  %7945 = vmatprep.subr.mxu0 0.0
  %7946 = vmatpush2.msra.mxu0 0.0
  %7947 = vmatprep.mubr.f32.mxu0 0.0
  %v7948 = vand.u32 %v7782, 4294901760
  %7949 = vmatmul.mubr.f32.gmra.mxu0 %v7948
  %v7950 = vpop.f32.mrf.mxu0
  %v7951 = vadd.f32 %v7860, %v7950
  %v7952 = vpop.f32.mrf.mxu0
  %7953 = vdwg.mxu0
  %7954 = vmatprep.subr.mxu0 0.0
  %7955 = vmatpush1.msra.mxu0 0.0
  %7956 = vmatprep.subr.mxu0 0.0
  %7957 = vmatpush1.msra.mxu0 0.0
  %7958 = vmatprep.subr.mxu0 0.0
  %7959 = vmatpush1.msra.mxu0 0.0
  %7960 = vmatprep.subr.mxu0 0.0
  %7961 = vmatpush1.msra.mxu0 0.0
  %7962 = vmatprep.subr.mxu0 0.0
  %7963 = vmatpush1.msra.mxu0 0.0
  %7964 = vmatprep.subr.mxu0 0.0
  %7965 = vmatpush1.msra.mxu0 0.0
  %7966 = vmatprep.subr.mxu0 0.0
  %7967 = vmatpush1.msra.mxu0 0.0
  %7968 = vmatprep.subr.mxu0 0.0
  %7969 = vmatpush1.msra.mxu0 0.0
  %7970 = vmatprep.subr.mxu0 0.0
  %7971 = vmatpush1.msra.mxu0 0.0
  %7972 = vmatprep.subr.mxu0 0.0
  %7973 = vmatpush1.msra.mxu0 0.0
  %7974 = vmatprep.subr.mxu0 0.0
  %7975 = vmatpush1.msra.mxu0 0.0
  %7976 = vmatprep.subr.mxu0 0.0
  %7977 = vmatpush1.msra.mxu0 0.0
  %7978 = vmatprep.subr.mxu0 0.0
  %v7979 = vand.u32 %v2064, 4294901760
  %v7980 = vsub.f32 %v2064, %v7979
  %7981 = vmatpush1.msra.mxu0 %v7980
  %7982 = vmatprep.subr.mxu0 0.0
  %v7983 = vand.u32 %v2063, 4294901760
  %v7984 = vsub.f32 %v2063, %v7983
  %7985 = vmatpush1.msra.mxu0 %v7984
  %7986 = vmatprep.subr.mxu0 0.0
  %v7987 = vand.u32 %v2062, 4294901760
  %v7988 = vsub.f32 %v2062, %v7987
  %7989 = vmatpush1.msra.mxu0 %v7988
  %7990 = vmatprep.subr.mxu0 0.0
  %v7991 = vand.u32 %v2061, 4294901760
  %v7992 = vsub.f32 %v2061, %v7991
  %7993 = vmatpush1.msra.mxu0 %v7992
  %7994 = vmatprep.subr.mxu0 0.0
  %7995 = vmatpush2.msra.mxu0 0.0
  %7996 = vmatprep.subr.mxu0 0.0
  %7997 = vmatpush2.msra.mxu0 0.0
  %7998 = vmatprep.subr.mxu0 0.0
  %7999 = vmatpush2.msra.mxu0 0.0
  %8000 = vmatprep.subr.mxu0 0.0
  %8001 = vmatpush2.msra.mxu0 0.0
  %8002 = vmatprep.subr.mxu0 0.0
  %8003 = vmatpush2.msra.mxu0 0.0
  %8004 = vmatprep.subr.mxu0 0.0
  %8005 = vmatpush2.msra.mxu0 0.0
  %8006 = vmatprep.subr.mxu0 0.0
  %8007 = vmatpush2.msra.mxu0 0.0
  %8008 = vmatprep.subr.mxu0 0.0
  %8009 = vmatpush2.msra.mxu0 0.0
  %8010 = vmatprep.subr.mxu0 0.0
  %8011 = vmatpush2.msra.mxu0 0.0
  %8012 = vmatprep.subr.mxu0 0.0
  %8013 = vmatpush2.msra.mxu0 0.0
  %8014 = vmatprep.subr.mxu0 0.0
  %8015 = vmatpush2.msra.mxu0 0.0
  %8016 = vmatprep.subr.mxu0 0.0
  %8017 = vmatpush2.msra.mxu0 0.0
  %8018 = vmatprep.subr.mxu0 0.0
  %8019 = vmatpush2.msra.mxu0 0.0
  %8020 = vmatprep.subr.mxu0 0.0
  %8021 = vmatpush2.msra.mxu0 0.0
  %8022 = vmatprep.subr.mxu0 0.0
  %8023 = vmatpush2.msra.mxu0 0.0
  %8024 = vmatprep.subr.mxu0 0.0
  %8025 = vmatpush2.msra.mxu0 0.0
  %8026 = vmatprep.mubr.f32.mxu0 0.0
  %v8027 = vand.u32 %v7782, 4294901760
  %v8028 = vsub.f32 %v7782, %v8027
  %8029 = vmatmul.mubr.f32.gmra.mxu0 %v8028
  %v8030 = vpop.f32.mrf.mxu0
  %v8031 = vadd.f32 %v7951, %v8030
  %v8032 = vpop.f32.mrf.mxu0
  %8033 = vdwg.mxu0
  %8034 = vmatprep.subr.mxu0 0.0
  %8035 = vmatpush1.msra.mxu0 0.0
  %8036 = vmatprep.subr.mxu0 0.0
  %8037 = vmatpush1.msra.mxu0 0.0
  %8038 = vmatprep.subr.mxu0 0.0
  %8039 = vmatpush1.msra.mxu0 0.0
  %8040 = vmatprep.subr.mxu0 0.0
  %8041 = vmatpush1.msra.mxu0 0.0
  %8042 = vmatprep.subr.mxu0 0.0
  %8043 = vmatpush1.msra.mxu0 0.0
  %8044 = vmatprep.subr.mxu0 0.0
  %8045 = vmatpush1.msra.mxu0 0.0
  %8046 = vmatprep.subr.mxu0 0.0
  %8047 = vmatpush1.msra.mxu0 0.0
  %8048 = vmatprep.subr.mxu0 0.0
  %8049 = vmatpush1.msra.mxu0 0.0
  %8050 = vmatprep.subr.mxu0 0.0
  %8051 = vmatpush1.msra.mxu0 0.0
  %8052 = vmatprep.subr.mxu0 0.0
  %8053 = vmatpush1.msra.mxu0 0.0
  %8054 = vmatprep.subr.mxu0 0.0
  %8055 = vmatpush1.msra.mxu0 0.0
  %8056 = vmatprep.subr.mxu0 0.0
  %8057 = vmatpush1.msra.mxu0 0.0
  %8058 = vmatprep.subr.mxu0 0.0
  %v8059 = vand.u32 %v2064, 4294901760
  %8060 = vmatpush1.msra.mxu0 %v8059
  %8061 = vmatprep.subr.mxu0 0.0
  %v8062 = vand.u32 %v2063, 4294901760
  %8063 = vmatpush1.msra.mxu0 %v8062
  %8064 = vmatprep.subr.mxu0 0.0
  %v8065 = vand.u32 %v2062, 4294901760
  %8066 = vmatpush1.msra.mxu0 %v8065
  %8067 = vmatprep.subr.mxu0 0.0
  %v8068 = vand.u32 %v2061, 4294901760
  %8069 = vmatpush1.msra.mxu0 %v8068
  %8070 = vmatprep.subr.mxu0 0.0
  %8071 = vmatpush2.msra.mxu0 0.0
  %8072 = vmatprep.subr.mxu0 0.0
  %8073 = vmatpush2.msra.mxu0 0.0
  %8074 = vmatprep.subr.mxu0 0.0
  %8075 = vmatpush2.msra.mxu0 0.0
  %8076 = vmatprep.subr.mxu0 0.0
  %8077 = vmatpush2.msra.mxu0 0.0
  %8078 = vmatprep.subr.mxu0 0.0
  %8079 = vmatpush2.msra.mxu0 0.0
  %8080 = vmatprep.subr.mxu0 0.0
  %8081 = vmatpush2.msra.mxu0 0.0
  %8082 = vmatprep.subr.mxu0 0.0
  %8083 = vmatpush2.msra.mxu0 0.0
  %8084 = vmatprep.subr.mxu0 0.0
  %8085 = vmatpush2.msra.mxu0 0.0
  %8086 = vmatprep.subr.mxu0 0.0
  %8087 = vmatpush2.msra.mxu0 0.0
  %8088 = vmatprep.subr.mxu0 0.0
  %8089 = vmatpush2.msra.mxu0 0.0
  %8090 = vmatprep.subr.mxu0 0.0
  %8091 = vmatpush2.msra.mxu0 0.0
  %8092 = vmatprep.subr.mxu0 0.0
  %8093 = vmatpush2.msra.mxu0 0.0
  %8094 = vmatprep.subr.mxu0 0.0
  %8095 = vmatpush2.msra.mxu0 0.0
  %8096 = vmatprep.subr.mxu0 0.0
  %8097 = vmatpush2.msra.mxu0 0.0
  %8098 = vmatprep.subr.mxu0 0.0
  %8099 = vmatpush2.msra.mxu0 0.0
  %8100 = vmatprep.subr.mxu0 0.0
  %8101 = vmatpush2.msra.mxu0 0.0
  %8102 = vmatprep.mubr.f32.mxu0 0.0
  %v8103 = vand.u32 %v7782, 4294901760
  %v8104 = vsub.f32 %v7782, %v8103
  %v8105 = vand.u32 %v8104, 4294901760
  %8106 = vmatmul.mubr.f32.gmra.mxu0 %v8105
  %v8107 = vpop.f32.mrf.mxu0
  %v8108 = vadd.f32 %v8031, %v8107
  %v8109 = vpop.f32.mrf.mxu0
  %8110 = vdwg.mxu0
  %8111 = vmatprep.subr.mxu0 0.0
  %8112 = vmatpush1.msra.mxu0 0.0
  %8113 = vmatprep.subr.mxu0 0.0
  %8114 = vmatpush1.msra.mxu0 0.0
  %8115 = vmatprep.subr.mxu0 0.0
  %8116 = vmatpush1.msra.mxu0 0.0
  %8117 = vmatprep.subr.mxu0 0.0
  %8118 = vmatpush1.msra.mxu0 0.0
  %8119 = vmatprep.subr.mxu0 0.0
  %8120 = vmatpush1.msra.mxu0 0.0
  %8121 = vmatprep.subr.mxu0 0.0
  %8122 = vmatpush1.msra.mxu0 0.0
  %8123 = vmatprep.subr.mxu0 0.0
  %8124 = vmatpush1.msra.mxu0 0.0
  %8125 = vmatprep.subr.mxu0 0.0
  %8126 = vmatpush1.msra.mxu0 0.0
  %8127 = vmatprep.subr.mxu0 0.0
  %8128 = vmatpush1.msra.mxu0 0.0
  %8129 = vmatprep.subr.mxu0 0.0
  %8130 = vmatpush1.msra.mxu0 0.0
  %8131 = vmatprep.subr.mxu0 0.0
  %8132 = vmatpush1.msra.mxu0 0.0
  %8133 = vmatprep.subr.mxu0 0.0
  %8134 = vmatpush1.msra.mxu0 0.0
  %8135 = vmatprep.subr.mxu0 0.0
  %v8136 = vand.u32 %v2064, 4294901760
  %v8137 = vsub.f32 %v2064, %v8136
  %v8138 = vand.u32 %v8137, 4294901760
  %8139 = vmatpush1.msra.mxu0 %v8138
  %8140 = vmatprep.subr.mxu0 0.0
  %v8141 = vand.u32 %v2063, 4294901760
  %v8142 = vsub.f32 %v2063, %v8141
  %v8143 = vand.u32 %v8142, 4294901760
  %8144 = vmatpush1.msra.mxu0 %v8143
  %8145 = vmatprep.subr.mxu0 0.0
  %v8146 = vand.u32 %v2062, 4294901760
  %v8147 = vsub.f32 %v2062, %v8146
  %v8148 = vand.u32 %v8147, 4294901760
  %8149 = vmatpush1.msra.mxu0 %v8148
  %8150 = vmatprep.subr.mxu0 0.0
  %v8151 = vand.u32 %v2061, 4294901760
  %v8152 = vsub.f32 %v2061, %v8151
  %v8153 = vand.u32 %v8152, 4294901760
  %8154 = vmatpush1.msra.mxu0 %v8153
  %8155 = vmatprep.subr.mxu0 0.0
  %8156 = vmatpush2.msra.mxu0 0.0
  %8157 = vmatprep.subr.mxu0 0.0
  %8158 = vmatpush2.msra.mxu0 0.0
  %8159 = vmatprep.subr.mxu0 0.0
  %8160 = vmatpush2.msra.mxu0 0.0
  %8161 = vmatprep.subr.mxu0 0.0
  %8162 = vmatpush2.msra.mxu0 0.0
  %8163 = vmatprep.subr.mxu0 0.0
  %8164 = vmatpush2.msra.mxu0 0.0
  %8165 = vmatprep.subr.mxu0 0.0
  %8166 = vmatpush2.msra.mxu0 0.0
  %8167 = vmatprep.subr.mxu0 0.0
  %8168 = vmatpush2.msra.mxu0 0.0
  %8169 = vmatprep.subr.mxu0 0.0
  %8170 = vmatpush2.msra.mxu0 0.0
  %8171 = vmatprep.subr.mxu0 0.0
  %8172 = vmatpush2.msra.mxu0 0.0
  %8173 = vmatprep.subr.mxu0 0.0
  %8174 = vmatpush2.msra.mxu0 0.0
  %8175 = vmatprep.subr.mxu0 0.0
  %8176 = vmatpush2.msra.mxu0 0.0
  %8177 = vmatprep.subr.mxu0 0.0
  %8178 = vmatpush2.msra.mxu0 0.0
  %8179 = vmatprep.subr.mxu0 0.0
  %8180 = vmatpush2.msra.mxu0 0.0
  %8181 = vmatprep.subr.mxu0 0.0
  %8182 = vmatpush2.msra.mxu0 0.0
  %8183 = vmatprep.subr.mxu0 0.0
  %8184 = vmatpush2.msra.mxu0 0.0
  %8185 = vmatprep.subr.mxu0 0.0
  %8186 = vmatpush2.msra.mxu0 0.0
  %8187 = vmatprep.mubr.f32.mxu0 0.0
  %v8188 = vand.u32 %v7782, 4294901760
  %8189 = vmatmul.mubr.f32.gmra.mxu0 %v8188
  %v8190 = vpop.f32.mrf.mxu0
  %v8191 = vadd.f32 %v8108, %v8190
  %v8192 = vpop.f32.mrf.mxu0
  %8193 = vdwg.mxu0
  %8194 = vmatprep.subr.mxu0 0.0
  %8195 = vmatpush1.msra.mxu0 0.0
  %8196 = vmatprep.subr.mxu0 0.0
  %8197 = vmatpush1.msra.mxu0 0.0
  %8198 = vmatprep.subr.mxu0 0.0
  %8199 = vmatpush1.msra.mxu0 0.0
  %8200 = vmatprep.subr.mxu0 0.0
  %8201 = vmatpush1.msra.mxu0 0.0
  %8202 = vmatprep.subr.mxu0 0.0
  %8203 = vmatpush1.msra.mxu0 0.0
  %8204 = vmatprep.subr.mxu0 0.0
  %8205 = vmatpush1.msra.mxu0 0.0
  %8206 = vmatprep.subr.mxu0 0.0
  %8207 = vmatpush1.msra.mxu0 0.0
  %8208 = vmatprep.subr.mxu0 0.0
  %8209 = vmatpush1.msra.mxu0 0.0
  %8210 = vmatprep.subr.mxu0 0.0
  %8211 = vmatpush1.msra.mxu0 0.0
  %8212 = vmatprep.subr.mxu0 0.0
  %8213 = vmatpush1.msra.mxu0 0.0
  %8214 = vmatprep.subr.mxu0 0.0
  %8215 = vmatpush1.msra.mxu0 0.0
  %8216 = vmatprep.subr.mxu0 0.0
  %8217 = vmatpush1.msra.mxu0 0.0
  %8218 = vmatprep.subr.mxu0 0.0
  %v8219 = vand.u32 %v2064, 4294901760
  %8220 = vmatpush1.msra.mxu0 %v8219
  %8221 = vmatprep.subr.mxu0 0.0
  %v8222 = vand.u32 %v2063, 4294901760
  %8223 = vmatpush1.msra.mxu0 %v8222
  %8224 = vmatprep.subr.mxu0 0.0
  %v8225 = vand.u32 %v2062, 4294901760
  %8226 = vmatpush1.msra.mxu0 %v8225
  %8227 = vmatprep.subr.mxu0 0.0
  %v8228 = vand.u32 %v2061, 4294901760
  %8229 = vmatpush1.msra.mxu0 %v8228
  %8230 = vmatprep.subr.mxu0 0.0
  %8231 = vmatpush2.msra.mxu0 0.0
  %8232 = vmatprep.subr.mxu0 0.0
  %8233 = vmatpush2.msra.mxu0 0.0
  %8234 = vmatprep.subr.mxu0 0.0
  %8235 = vmatpush2.msra.mxu0 0.0
  %8236 = vmatprep.subr.mxu0 0.0
  %8237 = vmatpush2.msra.mxu0 0.0
  %8238 = vmatprep.subr.mxu0 0.0
  %8239 = vmatpush2.msra.mxu0 0.0
  %8240 = vmatprep.subr.mxu0 0.0
  %8241 = vmatpush2.msra.mxu0 0.0
  %8242 = vmatprep.subr.mxu0 0.0
  %8243 = vmatpush2.msra.mxu0 0.0
  %8244 = vmatprep.subr.mxu0 0.0
  %8245 = vmatpush2.msra.mxu0 0.0
  %8246 = vmatprep.subr.mxu0 0.0
  %8247 = vmatpush2.msra.mxu0 0.0
  %8248 = vmatprep.subr.mxu0 0.0
  %8249 = vmatpush2.msra.mxu0 0.0
  %8250 = vmatprep.subr.mxu0 0.0
  %8251 = vmatpush2.msra.mxu0 0.0
  %8252 = vmatprep.subr.mxu0 0.0
  %8253 = vmatpush2.msra.mxu0 0.0
  %8254 = vmatprep.subr.mxu0 0.0
  %8255 = vmatpush2.msra.mxu0 0.0
  %8256 = vmatprep.subr.mxu0 0.0
  %8257 = vmatpush2.msra.mxu0 0.0
  %8258 = vmatprep.subr.mxu0 0.0
  %8259 = vmatpush2.msra.mxu0 0.0
  %8260 = vmatprep.subr.mxu0 0.0
  %8261 = vmatpush2.msra.mxu0 0.0
  %8262 = vmatprep.mubr.f32.mxu0 0.0
  %v8263 = vand.u32 %v7782, 4294901760
  %8264 = vmatmul.mubr.f32.gmra.mxu0 %v8263
  %v8265 = vpop.f32.mrf.mxu0
  %v8266 = vadd.f32 %v8191, %v8265
  %v8267 = vpop.f32.mrf.mxu0
  %8268 = vdwg.mxu0
  %v8269 = vadd.f32 %v7781, %v8266
  %v8270 = vxor.u32 %v8269, 2147483648
  %v8271 = vmul.f32 %v8270, 1.442695
  %v8272 = vpow.pop %v8271
  %v8273 = vadd.f32 %v8272, 1.0
  %v8274 = vrcp.pop %v8273
  %v8275 = vmul.f32 1.0, %v8274
  %8277 = vrot.lane.b32.xlu0 %v8266, 64
  %v8278 = vpop.permute.xlu0 %8277
  %v8280 = vmul.f32 %v8275, %v8278
  %8282 = vrot.lane.b32.xlu0 %v8280, 64
  %v8283 = vpop.permute.xlu0 %8282
  %v8285 = vadd.f32 %v7781, %v8283
  %v8286 = vtanh.pop %v8285
  %v8287 = vsub.f32 1.0, %v8275
  %8289 = vrot.lane.b32.xlu0 %v8286, 96
  %v8290 = vpop.permute.xlu0 %8289
  %v8292 = vmul.f32 %v8287, %v8290
  %v8293 = vmul.f32 %v8275, %v7775
  %v8294 = vadd.f32 %v8292, %v8293
  %8296 = vrot.lane.b32.xlu0 %v8294, 96
  %v8297 = vpop.permute.xlu0 %8296
  %8299 = vst.msk [vmem:[#allocation3 + $0x58] sm:$0xff] %vm2071, %v8297
  %v8300 = vld [vmem:[#allocation2 + $0x60] sm:$0xff]
  %v8301 = vsel %vm2071, %v8297, 0
  %8303 = vmatprep.subr.mxu0 0.0
  %8304 = vmatpush1.msra.mxu0 0.0
  %8305 = vmatprep.subr.mxu0 0.0
  %8306 = vmatpush1.msra.mxu0 0.0
  %8307 = vmatprep.subr.mxu0 0.0
  %8308 = vmatpush1.msra.mxu0 0.0
  %8309 = vmatprep.subr.mxu0 0.0
  %8310 = vmatpush1.msra.mxu0 0.0
  %8311 = vmatprep.subr.mxu0 0.0
  %8312 = vmatpush1.msra.mxu0 0.0
  %8313 = vmatprep.subr.mxu0 0.0
  %8314 = vmatpush1.msra.mxu0 0.0
  %8315 = vmatprep.subr.mxu0 0.0
  %8316 = vmatpush1.msra.mxu0 0.0
  %8317 = vmatprep.subr.mxu0 0.0
  %8318 = vmatpush1.msra.mxu0 0.0
  %8319 = vmatprep.subr.mxu0 0.0
  %8320 = vmatpush1.msra.mxu0 0.0
  %8321 = vmatprep.subr.mxu0 0.0
  %8322 = vmatpush1.msra.mxu0 0.0
  %8323 = vmatprep.subr.mxu0 0.0
  %8324 = vmatpush1.msra.mxu0 0.0
  %8325 = vmatprep.subr.mxu0 0.0
  %8326 = vmatpush1.msra.mxu0 0.0
  %8327 = vmatprep.subr.mxu0 0.0
  %v8328 = vand.u32 %v2064, 4294901760
  %8329 = vmatpush1.msra.mxu0 %v8328
  %8330 = vmatprep.subr.mxu0 0.0
  %v8331 = vand.u32 %v2063, 4294901760
  %8332 = vmatpush1.msra.mxu0 %v8331
  %8333 = vmatprep.subr.mxu0 0.0
  %v8334 = vand.u32 %v2062, 4294901760
  %8335 = vmatpush1.msra.mxu0 %v8334
  %8336 = vmatprep.subr.mxu0 0.0
  %v8337 = vand.u32 %v2061, 4294901760
  %8338 = vmatpush1.msra.mxu0 %v8337
  %8339 = vmatprep.subr.mxu0 0.0
  %8340 = vmatpush2.msra.mxu0 0.0
  %8341 = vmatprep.subr.mxu0 0.0
  %8342 = vmatpush2.msra.mxu0 0.0
  %8343 = vmatprep.subr.mxu0 0.0
  %8344 = vmatpush2.msra.mxu0 0.0
  %8345 = vmatprep.subr.mxu0 0.0
  %8346 = vmatpush2.msra.mxu0 0.0
  %8347 = vmatprep.subr.mxu0 0.0
  %8348 = vmatpush2.msra.mxu0 0.0
  %8349 = vmatprep.subr.mxu0 0.0
  %8350 = vmatpush2.msra.mxu0 0.0
  %8351 = vmatprep.subr.mxu0 0.0
  %8352 = vmatpush2.msra.mxu0 0.0
  %8353 = vmatprep.subr.mxu0 0.0
  %8354 = vmatpush2.msra.mxu0 0.0
  %8355 = vmatprep.subr.mxu0 0.0
  %8356 = vmatpush2.msra.mxu0 0.0
  %8357 = vmatprep.subr.mxu0 0.0
  %8358 = vmatpush2.msra.mxu0 0.0
  %8359 = vmatprep.subr.mxu0 0.0
  %8360 = vmatpush2.msra.mxu0 0.0
  %8361 = vmatprep.subr.mxu0 0.0
  %8362 = vmatpush2.msra.mxu0 0.0
  %8363 = vmatprep.subr.mxu0 0.0
  %8364 = vmatpush2.msra.mxu0 0.0
  %8365 = vmatprep.subr.mxu0 0.0
  %8366 = vmatpush2.msra.mxu0 0.0
  %8367 = vmatprep.subr.mxu0 0.0
  %8368 = vmatpush2.msra.mxu0 0.0
  %8369 = vmatprep.subr.mxu0 0.0
  %8370 = vmatpush2.msra.mxu0 0.0
  %8371 = vmatprep.mubr.f32.mxu0 0.0
  %v8372 = vand.u32 %v8301, 4294901760
  %v8373 = vsub.f32 %v8301, %v8372
  %v8374 = vand.u32 %v8373, 4294901760
  %v8375 = vsub.f32 %v8373, %v8374
  %v8376 = vand.u32 %v8375, 4294901760
  %8377 = vmatmul.mubr.f32.gmra.mxu0 %v8376
  %v8378 = vpop.f32.mrf.mxu0
  %v8379 = vadd.f32 %v2070, %v8378
  %v8380 = vpop.f32.mrf.mxu0
  %8381 = vdwg.mxu0
  %8382 = vmatprep.subr.mxu0 0.0
  %8383 = vmatpush1.msra.mxu0 0.0
  %8384 = vmatprep.subr.mxu0 0.0
  %8385 = vmatpush1.msra.mxu0 0.0
  %8386 = vmatprep.subr.mxu0 0.0
  %8387 = vmatpush1.msra.mxu0 0.0
  %8388 = vmatprep.subr.mxu0 0.0
  %8389 = vmatpush1.msra.mxu0 0.0
  %8390 = vmatprep.subr.mxu0 0.0
  %8391 = vmatpush1.msra.mxu0 0.0
  %8392 = vmatprep.subr.mxu0 0.0
  %8393 = vmatpush1.msra.mxu0 0.0
  %8394 = vmatprep.subr.mxu0 0.0
  %8395 = vmatpush1.msra.mxu0 0.0
  %8396 = vmatprep.subr.mxu0 0.0
  %8397 = vmatpush1.msra.mxu0 0.0
  %8398 = vmatprep.subr.mxu0 0.0
  %8399 = vmatpush1.msra.mxu0 0.0
  %8400 = vmatprep.subr.mxu0 0.0
  %8401 = vmatpush1.msra.mxu0 0.0
  %8402 = vmatprep.subr.mxu0 0.0
  %8403 = vmatpush1.msra.mxu0 0.0
  %8404 = vmatprep.subr.mxu0 0.0
  %8405 = vmatpush1.msra.mxu0 0.0
  %8406 = vmatprep.subr.mxu0 0.0
  %v8407 = vand.u32 %v2064, 4294901760
  %v8408 = vsub.f32 %v2064, %v8407
  %v8409 = vand.u32 %v8408, 4294901760
  %v8410 = vsub.f32 %v8408, %v8409
  %v8411 = vand.u32 %v8410, 4294901760
  %8412 = vmatpush1.msra.mxu0 %v8411
  %8413 = vmatprep.subr.mxu0 0.0
  %v8414 = vand.u32 %v2063, 4294901760
  %v8415 = vsub.f32 %v2063, %v8414
  %v8416 = vand.u32 %v8415, 4294901760
  %v8417 = vsub.f32 %v8415, %v8416
  %v8418 = vand.u32 %v8417, 4294901760
  %8419 = vmatpush1.msra.mxu0 %v8418
  %8420 = vmatprep.subr.mxu0 0.0
  %v8421 = vand.u32 %v2062, 4294901760
  %v8422 = vsub.f32 %v2062, %v8421
  %v8423 = vand.u32 %v8422, 4294901760
  %v8424 = vsub.f32 %v8422, %v8423
  %v8425 = vand.u32 %v8424, 4294901760
  %8426 = vmatpush1.msra.mxu0 %v8425
  %8427 = vmatprep.subr.mxu0 0.0
  %v8428 = vand.u32 %v2061, 4294901760
  %v8429 = vsub.f32 %v2061, %v8428
  %v8430 = vand.u32 %v8429, 4294901760
  %v8431 = vsub.f32 %v8429, %v8430
  %v8432 = vand.u32 %v8431, 4294901760
  %8433 = vmatpush1.msra.mxu0 %v8432
  %8434 = vmatprep.subr.mxu0 0.0
  %8435 = vmatpush2.msra.mxu0 0.0
  %8436 = vmatprep.subr.mxu0 0.0
  %8437 = vmatpush2.msra.mxu0 0.0
  %8438 = vmatprep.subr.mxu0 0.0
  %8439 = vmatpush2.msra.mxu0 0.0
  %8440 = vmatprep.subr.mxu0 0.0
  %8441 = vmatpush2.msra.mxu0 0.0
  %8442 = vmatprep.subr.mxu0 0.0
  %8443 = vmatpush2.msra.mxu0 0.0
  %8444 = vmatprep.subr.mxu0 0.0
  %8445 = vmatpush2.msra.mxu0 0.0
  %8446 = vmatprep.subr.mxu0 0.0
  %8447 = vmatpush2.msra.mxu0 0.0
  %8448 = vmatprep.subr.mxu0 0.0
  %8449 = vmatpush2.msra.mxu0 0.0
  %8450 = vmatprep.subr.mxu0 0.0
  %8451 = vmatpush2.msra.mxu0 0.0
  %8452 = vmatprep.subr.mxu0 0.0
  %8453 = vmatpush2.msra.mxu0 0.0
  %8454 = vmatprep.subr.mxu0 0.0
  %8455 = vmatpush2.msra.mxu0 0.0
  %8456 = vmatprep.subr.mxu0 0.0
  %8457 = vmatpush2.msra.mxu0 0.0
  %8458 = vmatprep.subr.mxu0 0.0
  %8459 = vmatpush2.msra.mxu0 0.0
  %8460 = vmatprep.subr.mxu0 0.0
  %8461 = vmatpush2.msra.mxu0 0.0
  %8462 = vmatprep.subr.mxu0 0.0
  %8463 = vmatpush2.msra.mxu0 0.0
  %8464 = vmatprep.subr.mxu0 0.0
  %8465 = vmatpush2.msra.mxu0 0.0
  %8466 = vmatprep.mubr.f32.mxu0 0.0
  %v8467 = vand.u32 %v8301, 4294901760
  %8468 = vmatmul.mubr.f32.gmra.mxu0 %v8467
  %v8469 = vpop.f32.mrf.mxu0
  %v8470 = vadd.f32 %v8379, %v8469
  %v8471 = vpop.f32.mrf.mxu0
  %8472 = vdwg.mxu0
  %8473 = vmatprep.subr.mxu0 0.0
  %8474 = vmatpush1.msra.mxu0 0.0
  %8475 = vmatprep.subr.mxu0 0.0
  %8476 = vmatpush1.msra.mxu0 0.0
  %8477 = vmatprep.subr.mxu0 0.0
  %8478 = vmatpush1.msra.mxu0 0.0
  %8479 = vmatprep.subr.mxu0 0.0
  %8480 = vmatpush1.msra.mxu0 0.0
  %8481 = vmatprep.subr.mxu0 0.0
  %8482 = vmatpush1.msra.mxu0 0.0
  %8483 = vmatprep.subr.mxu0 0.0
  %8484 = vmatpush1.msra.mxu0 0.0
  %8485 = vmatprep.subr.mxu0 0.0
  %8486 = vmatpush1.msra.mxu0 0.0
  %8487 = vmatprep.subr.mxu0 0.0
  %8488 = vmatpush1.msra.mxu0 0.0
  %8489 = vmatprep.subr.mxu0 0.0
  %8490 = vmatpush1.msra.mxu0 0.0
  %8491 = vmatprep.subr.mxu0 0.0
  %8492 = vmatpush1.msra.mxu0 0.0
  %8493 = vmatprep.subr.mxu0 0.0
  %8494 = vmatpush1.msra.mxu0 0.0
  %8495 = vmatprep.subr.mxu0 0.0
  %8496 = vmatpush1.msra.mxu0 0.0
  %8497 = vmatprep.subr.mxu0 0.0
  %v8498 = vand.u32 %v2064, 4294901760
  %v8499 = vsub.f32 %v2064, %v8498
  %8500 = vmatpush1.msra.mxu0 %v8499
  %8501 = vmatprep.subr.mxu0 0.0
  %v8502 = vand.u32 %v2063, 4294901760
  %v8503 = vsub.f32 %v2063, %v8502
  %8504 = vmatpush1.msra.mxu0 %v8503
  %8505 = vmatprep.subr.mxu0 0.0
  %v8506 = vand.u32 %v2062, 4294901760
  %v8507 = vsub.f32 %v2062, %v8506
  %8508 = vmatpush1.msra.mxu0 %v8507
  %8509 = vmatprep.subr.mxu0 0.0
  %v8510 = vand.u32 %v2061, 4294901760
  %v8511 = vsub.f32 %v2061, %v8510
  %8512 = vmatpush1.msra.mxu0 %v8511
  %8513 = vmatprep.subr.mxu0 0.0
  %8514 = vmatpush2.msra.mxu0 0.0
  %8515 = vmatprep.subr.mxu0 0.0
  %8516 = vmatpush2.msra.mxu0 0.0
  %8517 = vmatprep.subr.mxu0 0.0
  %8518 = vmatpush2.msra.mxu0 0.0
  %8519 = vmatprep.subr.mxu0 0.0
  %8520 = vmatpush2.msra.mxu0 0.0
  %8521 = vmatprep.subr.mxu0 0.0
  %8522 = vmatpush2.msra.mxu0 0.0
  %8523 = vmatprep.subr.mxu0 0.0
  %8524 = vmatpush2.msra.mxu0 0.0
  %8525 = vmatprep.subr.mxu0 0.0
  %8526 = vmatpush2.msra.mxu0 0.0
  %8527 = vmatprep.subr.mxu0 0.0
  %8528 = vmatpush2.msra.mxu0 0.0
  %8529 = vmatprep.subr.mxu0 0.0
  %8530 = vmatpush2.msra.mxu0 0.0
  %8531 = vmatprep.subr.mxu0 0.0
  %8532 = vmatpush2.msra.mxu0 0.0
  %8533 = vmatprep.subr.mxu0 0.0
  %8534 = vmatpush2.msra.mxu0 0.0
  %8535 = vmatprep.subr.mxu0 0.0
  %8536 = vmatpush2.msra.mxu0 0.0
  %8537 = vmatprep.subr.mxu0 0.0
  %8538 = vmatpush2.msra.mxu0 0.0
  %8539 = vmatprep.subr.mxu0 0.0
  %8540 = vmatpush2.msra.mxu0 0.0
  %8541 = vmatprep.subr.mxu0 0.0
  %8542 = vmatpush2.msra.mxu0 0.0
  %8543 = vmatprep.subr.mxu0 0.0
  %8544 = vmatpush2.msra.mxu0 0.0
  %8545 = vmatprep.mubr.f32.mxu0 0.0
  %v8546 = vand.u32 %v8301, 4294901760
  %v8547 = vsub.f32 %v8301, %v8546
  %8548 = vmatmul.mubr.f32.gmra.mxu0 %v8547
  %v8549 = vpop.f32.mrf.mxu0
  %v8550 = vadd.f32 %v8470, %v8549
  %v8551 = vpop.f32.mrf.mxu0
  %8552 = vdwg.mxu0
  %8553 = vmatprep.subr.mxu0 0.0
  %8554 = vmatpush1.msra.mxu0 0.0
  %8555 = vmatprep.subr.mxu0 0.0
  %8556 = vmatpush1.msra.mxu0 0.0
  %8557 = vmatprep.subr.mxu0 0.0
  %8558 = vmatpush1.msra.mxu0 0.0
  %8559 = vmatprep.subr.mxu0 0.0
  %8560 = vmatpush1.msra.mxu0 0.0
  %8561 = vmatprep.subr.mxu0 0.0
  %8562 = vmatpush1.msra.mxu0 0.0
  %8563 = vmatprep.subr.mxu0 0.0
  %8564 = vmatpush1.msra.mxu0 0.0
  %8565 = vmatprep.subr.mxu0 0.0
  %8566 = vmatpush1.msra.mxu0 0.0
  %8567 = vmatprep.subr.mxu0 0.0
  %8568 = vmatpush1.msra.mxu0 0.0
  %8569 = vmatprep.subr.mxu0 0.0
  %8570 = vmatpush1.msra.mxu0 0.0
  %8571 = vmatprep.subr.mxu0 0.0
  %8572 = vmatpush1.msra.mxu0 0.0
  %8573 = vmatprep.subr.mxu0 0.0
  %8574 = vmatpush1.msra.mxu0 0.0
  %8575 = vmatprep.subr.mxu0 0.0
  %8576 = vmatpush1.msra.mxu0 0.0
  %8577 = vmatprep.subr.mxu0 0.0
  %v8578 = vand.u32 %v2064, 4294901760
  %8579 = vmatpush1.msra.mxu0 %v8578
  %8580 = vmatprep.subr.mxu0 0.0
  %v8581 = vand.u32 %v2063, 4294901760
  %8582 = vmatpush1.msra.mxu0 %v8581
  %8583 = vmatprep.subr.mxu0 0.0
  %v8584 = vand.u32 %v2062, 4294901760
  %8585 = vmatpush1.msra.mxu0 %v8584
  %8586 = vmatprep.subr.mxu0 0.0
  %v8587 = vand.u32 %v2061, 4294901760
  %8588 = vmatpush1.msra.mxu0 %v8587
  %8589 = vmatprep.subr.mxu0 0.0
  %8590 = vmatpush2.msra.mxu0 0.0
  %8591 = vmatprep.subr.mxu0 0.0
  %8592 = vmatpush2.msra.mxu0 0.0
  %8593 = vmatprep.subr.mxu0 0.0
  %8594 = vmatpush2.msra.mxu0 0.0
  %8595 = vmatprep.subr.mxu0 0.0
  %8596 = vmatpush2.msra.mxu0 0.0
  %8597 = vmatprep.subr.mxu0 0.0
  %8598 = vmatpush2.msra.mxu0 0.0
  %8599 = vmatprep.subr.mxu0 0.0
  %8600 = vmatpush2.msra.mxu0 0.0
  %8601 = vmatprep.subr.mxu0 0.0
  %8602 = vmatpush2.msra.mxu0 0.0
  %8603 = vmatprep.subr.mxu0 0.0
  %8604 = vmatpush2.msra.mxu0 0.0
  %8605 = vmatprep.subr.mxu0 0.0
  %8606 = vmatpush2.msra.mxu0 0.0
  %8607 = vmatprep.subr.mxu0 0.0
  %8608 = vmatpush2.msra.mxu0 0.0
  %8609 = vmatprep.subr.mxu0 0.0
  %8610 = vmatpush2.msra.mxu0 0.0
  %8611 = vmatprep.subr.mxu0 0.0
  %8612 = vmatpush2.msra.mxu0 0.0
  %8613 = vmatprep.subr.mxu0 0.0
  %8614 = vmatpush2.msra.mxu0 0.0
  %8615 = vmatprep.subr.mxu0 0.0
  %8616 = vmatpush2.msra.mxu0 0.0
  %8617 = vmatprep.subr.mxu0 0.0
  %8618 = vmatpush2.msra.mxu0 0.0
  %8619 = vmatprep.subr.mxu0 0.0
  %8620 = vmatpush2.msra.mxu0 0.0
  %8621 = vmatprep.mubr.f32.mxu0 0.0
  %v8622 = vand.u32 %v8301, 4294901760
  %v8623 = vsub.f32 %v8301, %v8622
  %v8624 = vand.u32 %v8623, 4294901760
  %8625 = vmatmul.mubr.f32.gmra.mxu0 %v8624
  %v8626 = vpop.f32.mrf.mxu0
  %v8627 = vadd.f32 %v8550, %v8626
  %v8628 = vpop.f32.mrf.mxu0
  %8629 = vdwg.mxu0
  %8630 = vmatprep.subr.mxu0 0.0
  %8631 = vmatpush1.msra.mxu0 0.0
  %8632 = vmatprep.subr.mxu0 0.0
  %8633 = vmatpush1.msra.mxu0 0.0
  %8634 = vmatprep.subr.mxu0 0.0
  %8635 = vmatpush1.msra.mxu0 0.0
  %8636 = vmatprep.subr.mxu0 0.0
  %8637 = vmatpush1.msra.mxu0 0.0
  %8638 = vmatprep.subr.mxu0 0.0
  %8639 = vmatpush1.msra.mxu0 0.0
  %8640 = vmatprep.subr.mxu0 0.0
  %8641 = vmatpush1.msra.mxu0 0.0
  %8642 = vmatprep.subr.mxu0 0.0
  %8643 = vmatpush1.msra.mxu0 0.0
  %8644 = vmatprep.subr.mxu0 0.0
  %8645 = vmatpush1.msra.mxu0 0.0
  %8646 = vmatprep.subr.mxu0 0.0
  %8647 = vmatpush1.msra.mxu0 0.0
  %8648 = vmatprep.subr.mxu0 0.0
  %8649 = vmatpush1.msra.mxu0 0.0
  %8650 = vmatprep.subr.mxu0 0.0
  %8651 = vmatpush1.msra.mxu0 0.0
  %8652 = vmatprep.subr.mxu0 0.0
  %8653 = vmatpush1.msra.mxu0 0.0
  %8654 = vmatprep.subr.mxu0 0.0
  %v8655 = vand.u32 %v2064, 4294901760
  %v8656 = vsub.f32 %v2064, %v8655
  %v8657 = vand.u32 %v8656, 4294901760
  %8658 = vmatpush1.msra.mxu0 %v8657
  %8659 = vmatprep.subr.mxu0 0.0
  %v8660 = vand.u32 %v2063, 4294901760
  %v8661 = vsub.f32 %v2063, %v8660
  %v8662 = vand.u32 %v8661, 4294901760
  %8663 = vmatpush1.msra.mxu0 %v8662
  %8664 = vmatprep.subr.mxu0 0.0
  %v8665 = vand.u32 %v2062, 4294901760
  %v8666 = vsub.f32 %v2062, %v8665
  %v8667 = vand.u32 %v8666, 4294901760
  %8668 = vmatpush1.msra.mxu0 %v8667
  %8669 = vmatprep.subr.mxu0 0.0
  %v8670 = vand.u32 %v2061, 4294901760
  %v8671 = vsub.f32 %v2061, %v8670
  %v8672 = vand.u32 %v8671, 4294901760
  %8673 = vmatpush1.msra.mxu0 %v8672
  %8674 = vmatprep.subr.mxu0 0.0
  %8675 = vmatpush2.msra.mxu0 0.0
  %8676 = vmatprep.subr.mxu0 0.0
  %8677 = vmatpush2.msra.mxu0 0.0
  %8678 = vmatprep.subr.mxu0 0.0
  %8679 = vmatpush2.msra.mxu0 0.0
  %8680 = vmatprep.subr.mxu0 0.0
  %8681 = vmatpush2.msra.mxu0 0.0
  %8682 = vmatprep.subr.mxu0 0.0
  %8683 = vmatpush2.msra.mxu0 0.0
  %8684 = vmatprep.subr.mxu0 0.0
  %8685 = vmatpush2.msra.mxu0 0.0
  %8686 = vmatprep.subr.mxu0 0.0
  %8687 = vmatpush2.msra.mxu0 0.0
  %8688 = vmatprep.subr.mxu0 0.0
  %8689 = vmatpush2.msra.mxu0 0.0
  %8690 = vmatprep.subr.mxu0 0.0
  %8691 = vmatpush2.msra.mxu0 0.0
  %8692 = vmatprep.subr.mxu0 0.0
  %8693 = vmatpush2.msra.mxu0 0.0
  %8694 = vmatprep.subr.mxu0 0.0
  %8695 = vmatpush2.msra.mxu0 0.0
  %8696 = vmatprep.subr.mxu0 0.0
  %8697 = vmatpush2.msra.mxu0 0.0
  %8698 = vmatprep.subr.mxu0 0.0
  %8699 = vmatpush2.msra.mxu0 0.0
  %8700 = vmatprep.subr.mxu0 0.0
  %8701 = vmatpush2.msra.mxu0 0.0
  %8702 = vmatprep.subr.mxu0 0.0
  %8703 = vmatpush2.msra.mxu0 0.0
  %8704 = vmatprep.subr.mxu0 0.0
  %8705 = vmatpush2.msra.mxu0 0.0
  %8706 = vmatprep.mubr.f32.mxu0 0.0
  %v8707 = vand.u32 %v8301, 4294901760
  %8708 = vmatmul.mubr.f32.gmra.mxu0 %v8707
  %v8709 = vpop.f32.mrf.mxu0
  %v8710 = vadd.f32 %v8627, %v8709
  %v8711 = vpop.f32.mrf.mxu0
  %8712 = vdwg.mxu0
  %8713 = vmatprep.subr.mxu0 0.0
  %8714 = vmatpush1.msra.mxu0 0.0
  %8715 = vmatprep.subr.mxu0 0.0
  %8716 = vmatpush1.msra.mxu0 0.0
  %8717 = vmatprep.subr.mxu0 0.0
  %8718 = vmatpush1.msra.mxu0 0.0
  %8719 = vmatprep.subr.mxu0 0.0
  %8720 = vmatpush1.msra.mxu0 0.0
  %8721 = vmatprep.subr.mxu0 0.0
  %8722 = vmatpush1.msra.mxu0 0.0
  %8723 = vmatprep.subr.mxu0 0.0
  %8724 = vmatpush1.msra.mxu0 0.0
  %8725 = vmatprep.subr.mxu0 0.0
  %8726 = vmatpush1.msra.mxu0 0.0
  %8727 = vmatprep.subr.mxu0 0.0
  %8728 = vmatpush1.msra.mxu0 0.0
  %8729 = vmatprep.subr.mxu0 0.0
  %8730 = vmatpush1.msra.mxu0 0.0
  %8731 = vmatprep.subr.mxu0 0.0
  %8732 = vmatpush1.msra.mxu0 0.0
  %8733 = vmatprep.subr.mxu0 0.0
  %8734 = vmatpush1.msra.mxu0 0.0
  %8735 = vmatprep.subr.mxu0 0.0
  %8736 = vmatpush1.msra.mxu0 0.0
  %8737 = vmatprep.subr.mxu0 0.0
  %v8738 = vand.u32 %v2064, 4294901760
  %8739 = vmatpush1.msra.mxu0 %v8738
  %8740 = vmatprep.subr.mxu0 0.0
  %v8741 = vand.u32 %v2063, 4294901760
  %8742 = vmatpush1.msra.mxu0 %v8741
  %8743 = vmatprep.subr.mxu0 0.0
  %v8744 = vand.u32 %v2062, 4294901760
  %8745 = vmatpush1.msra.mxu0 %v8744
  %8746 = vmatprep.subr.mxu0 0.0
  %v8747 = vand.u32 %v2061, 4294901760
  %8748 = vmatpush1.msra.mxu0 %v8747
  %8749 = vmatprep.subr.mxu0 0.0
  %8750 = vmatpush2.msra.mxu0 0.0
  %8751 = vmatprep.subr.mxu0 0.0
  %8752 = vmatpush2.msra.mxu0 0.0
  %8753 = vmatprep.subr.mxu0 0.0
  %8754 = vmatpush2.msra.mxu0 0.0
  %8755 = vmatprep.subr.mxu0 0.0
  %8756 = vmatpush2.msra.mxu0 0.0
  %8757 = vmatprep.subr.mxu0 0.0
  %8758 = vmatpush2.msra.mxu0 0.0
  %8759 = vmatprep.subr.mxu0 0.0
  %8760 = vmatpush2.msra.mxu0 0.0
  %8761 = vmatprep.subr.mxu0 0.0
  %8762 = vmatpush2.msra.mxu0 0.0
  %8763 = vmatprep.subr.mxu0 0.0
  %8764 = vmatpush2.msra.mxu0 0.0
  %8765 = vmatprep.subr.mxu0 0.0
  %8766 = vmatpush2.msra.mxu0 0.0
  %8767 = vmatprep.subr.mxu0 0.0
  %8768 = vmatpush2.msra.mxu0 0.0
  %8769 = vmatprep.subr.mxu0 0.0
  %8770 = vmatpush2.msra.mxu0 0.0
  %8771 = vmatprep.subr.mxu0 0.0
  %8772 = vmatpush2.msra.mxu0 0.0
  %8773 = vmatprep.subr.mxu0 0.0
  %8774 = vmatpush2.msra.mxu0 0.0
  %8775 = vmatprep.subr.mxu0 0.0
  %8776 = vmatpush2.msra.mxu0 0.0
  %8777 = vmatprep.subr.mxu0 0.0
  %8778 = vmatpush2.msra.mxu0 0.0
  %8779 = vmatprep.subr.mxu0 0.0
  %8780 = vmatpush2.msra.mxu0 0.0
  %8781 = vmatprep.mubr.f32.mxu0 0.0
  %v8782 = vand.u32 %v8301, 4294901760
  %8783 = vmatmul.mubr.f32.gmra.mxu0 %v8782
  %v8784 = vpop.f32.mrf.mxu0
  %v8785 = vadd.f32 %v8710, %v8784
  %v8786 = vpop.f32.mrf.mxu0
  %8787 = vdwg.mxu0
  %v8788 = vadd.f32 %v8300, %v8785
  %v8789 = vxor.u32 %v8788, 2147483648
  %v8790 = vmul.f32 %v8789, 1.442695
  %v8791 = vpow.pop %v8790
  %v8792 = vadd.f32 %v8791, 1.0
  %v8793 = vrcp.pop %v8792
  %v8794 = vmul.f32 1.0, %v8793
  %8796 = vrot.lane.b32.xlu0 %v8785, 64
  %v8797 = vpop.permute.xlu0 %8796
  %v8799 = vmul.f32 %v8794, %v8797
  %8801 = vrot.lane.b32.xlu0 %v8799, 64
  %v8802 = vpop.permute.xlu0 %8801
  %v8804 = vadd.f32 %v8300, %v8802
  %v8805 = vtanh.pop %v8804
  %v8806 = vsub.f32 1.0, %v8794
  %8808 = vrot.lane.b32.xlu0 %v8805, 96
  %v8809 = vpop.permute.xlu0 %8808
  %v8811 = vmul.f32 %v8806, %v8809
  %v8812 = vmul.f32 %v8794, %v8294
  %v8813 = vadd.f32 %v8811, %v8812
  %8815 = vrot.lane.b32.xlu0 %v8813, 96
  %v8816 = vpop.permute.xlu0 %8815
  %8818 = vst.msk [vmem:[#allocation3 + $0x60] sm:$0xff] %vm2071, %v8816
  %v8819 = vld [vmem:[#allocation2 + $0x68] sm:$0xff]
  %v8820 = vsel %vm2071, %v8816, 0
  %8822 = vmatprep.subr.mxu0 0.0
  %8823 = vmatpush1.msra.mxu0 0.0
  %8824 = vmatprep.subr.mxu0 0.0
  %8825 = vmatpush1.msra.mxu0 0.0
  %8826 = vmatprep.subr.mxu0 0.0
  %8827 = vmatpush1.msra.mxu0 0.0
  %8828 = vmatprep.subr.mxu0 0.0
  %8829 = vmatpush1.msra.mxu0 0.0
  %8830 = vmatprep.subr.mxu0 0.0
  %8831 = vmatpush1.msra.mxu0 0.0
  %8832 = vmatprep.subr.mxu0 0.0
  %8833 = vmatpush1.msra.mxu0 0.0
  %8834 = vmatprep.subr.mxu0 0.0
  %8835 = vmatpush1.msra.mxu0 0.0
  %8836 = vmatprep.subr.mxu0 0.0
  %8837 = vmatpush1.msra.mxu0 0.0
  %8838 = vmatprep.subr.mxu0 0.0
  %8839 = vmatpush1.msra.mxu0 0.0
  %8840 = vmatprep.subr.mxu0 0.0
  %8841 = vmatpush1.msra.mxu0 0.0
  %8842 = vmatprep.subr.mxu0 0.0
  %8843 = vmatpush1.msra.mxu0 0.0
  %8844 = vmatprep.subr.mxu0 0.0
  %8845 = vmatpush1.msra.mxu0 0.0
  %8846 = vmatprep.subr.mxu0 0.0
  %v8847 = vand.u32 %v2064, 4294901760
  %8848 = vmatpush1.msra.mxu0 %v8847
  %8849 = vmatprep.subr.mxu0 0.0
  %v8850 = vand.u32 %v2063, 4294901760
  %8851 = vmatpush1.msra.mxu0 %v8850
  %8852 = vmatprep.subr.mxu0 0.0
  %v8853 = vand.u32 %v2062, 4294901760
  %8854 = vmatpush1.msra.mxu0 %v8853
  %8855 = vmatprep.subr.mxu0 0.0
  %v8856 = vand.u32 %v2061, 4294901760
  %8857 = vmatpush1.msra.mxu0 %v8856
  %8858 = vmatprep.subr.mxu0 0.0
  %8859 = vmatpush2.msra.mxu0 0.0
  %8860 = vmatprep.subr.mxu0 0.0
  %8861 = vmatpush2.msra.mxu0 0.0
  %8862 = vmatprep.subr.mxu0 0.0
  %8863 = vmatpush2.msra.mxu0 0.0
  %8864 = vmatprep.subr.mxu0 0.0
  %8865 = vmatpush2.msra.mxu0 0.0
  %8866 = vmatprep.subr.mxu0 0.0
  %8867 = vmatpush2.msra.mxu0 0.0
  %8868 = vmatprep.subr.mxu0 0.0
  %8869 = vmatpush2.msra.mxu0 0.0
  %8870 = vmatprep.subr.mxu0 0.0
  %8871 = vmatpush2.msra.mxu0 0.0
  %8872 = vmatprep.subr.mxu0 0.0
  %8873 = vmatpush2.msra.mxu0 0.0
  %8874 = vmatprep.subr.mxu0 0.0
  %8875 = vmatpush2.msra.mxu0 0.0
  %8876 = vmatprep.subr.mxu0 0.0
  %8877 = vmatpush2.msra.mxu0 0.0
  %8878 = vmatprep.subr.mxu0 0.0
  %8879 = vmatpush2.msra.mxu0 0.0
  %8880 = vmatprep.subr.mxu0 0.0
  %8881 = vmatpush2.msra.mxu0 0.0
  %8882 = vmatprep.subr.mxu0 0.0
  %8883 = vmatpush2.msra.mxu0 0.0
  %8884 = vmatprep.subr.mxu0 0.0
  %8885 = vmatpush2.msra.mxu0 0.0
  %8886 = vmatprep.subr.mxu0 0.0
  %8887 = vmatpush2.msra.mxu0 0.0
  %8888 = vmatprep.subr.mxu0 0.0
  %8889 = vmatpush2.msra.mxu0 0.0
  %8890 = vmatprep.mubr.f32.mxu0 0.0
  %v8891 = vand.u32 %v8820, 4294901760
  %v8892 = vsub.f32 %v8820, %v8891
  %v8893 = vand.u32 %v8892, 4294901760
  %v8894 = vsub.f32 %v8892, %v8893
  %v8895 = vand.u32 %v8894, 4294901760
  %8896 = vmatmul.mubr.f32.gmra.mxu0 %v8895
  %v8897 = vpop.f32.mrf.mxu0
  %v8898 = vadd.f32 %v2070, %v8897
  %v8899 = vpop.f32.mrf.mxu0
  %8900 = vdwg.mxu0
  %8901 = vmatprep.subr.mxu0 0.0
  %8902 = vmatpush1.msra.mxu0 0.0
  %8903 = vmatprep.subr.mxu0 0.0
  %8904 = vmatpush1.msra.mxu0 0.0
  %8905 = vmatprep.subr.mxu0 0.0
  %8906 = vmatpush1.msra.mxu0 0.0
  %8907 = vmatprep.subr.mxu0 0.0
  %8908 = vmatpush1.msra.mxu0 0.0
  %8909 = vmatprep.subr.mxu0 0.0
  %8910 = vmatpush1.msra.mxu0 0.0
  %8911 = vmatprep.subr.mxu0 0.0
  %8912 = vmatpush1.msra.mxu0 0.0
  %8913 = vmatprep.subr.mxu0 0.0
  %8914 = vmatpush1.msra.mxu0 0.0
  %8915 = vmatprep.subr.mxu0 0.0
  %8916 = vmatpush1.msra.mxu0 0.0
  %8917 = vmatprep.subr.mxu0 0.0
  %8918 = vmatpush1.msra.mxu0 0.0
  %8919 = vmatprep.subr.mxu0 0.0
  %8920 = vmatpush1.msra.mxu0 0.0
  %8921 = vmatprep.subr.mxu0 0.0
  %8922 = vmatpush1.msra.mxu0 0.0
  %8923 = vmatprep.subr.mxu0 0.0
  %8924 = vmatpush1.msra.mxu0 0.0
  %8925 = vmatprep.subr.mxu0 0.0
  %v8926 = vand.u32 %v2064, 4294901760
  %v8927 = vsub.f32 %v2064, %v8926
  %v8928 = vand.u32 %v8927, 4294901760
  %v8929 = vsub.f32 %v8927, %v8928
  %v8930 = vand.u32 %v8929, 4294901760
  %8931 = vmatpush1.msra.mxu0 %v8930
  %8932 = vmatprep.subr.mxu0 0.0
  %v8933 = vand.u32 %v2063, 4294901760
  %v8934 = vsub.f32 %v2063, %v8933
  %v8935 = vand.u32 %v8934, 4294901760
  %v8936 = vsub.f32 %v8934, %v8935
  %v8937 = vand.u32 %v8936, 4294901760
  %8938 = vmatpush1.msra.mxu0 %v8937
  %8939 = vmatprep.subr.mxu0 0.0
  %v8940 = vand.u32 %v2062, 4294901760
  %v8941 = vsub.f32 %v2062, %v8940
  %v8942 = vand.u32 %v8941, 4294901760
  %v8943 = vsub.f32 %v8941, %v8942
  %v8944 = vand.u32 %v8943, 4294901760
  %8945 = vmatpush1.msra.mxu0 %v8944
  %8946 = vmatprep.subr.mxu0 0.0
  %v8947 = vand.u32 %v2061, 4294901760
  %v8948 = vsub.f32 %v2061, %v8947
  %v8949 = vand.u32 %v8948, 4294901760
  %v8950 = vsub.f32 %v8948, %v8949
  %v8951 = vand.u32 %v8950, 4294901760
  %8952 = vmatpush1.msra.mxu0 %v8951
  %8953 = vmatprep.subr.mxu0 0.0
  %8954 = vmatpush2.msra.mxu0 0.0
  %8955 = vmatprep.subr.mxu0 0.0
  %8956 = vmatpush2.msra.mxu0 0.0
  %8957 = vmatprep.subr.mxu0 0.0
  %8958 = vmatpush2.msra.mxu0 0.0
  %8959 = vmatprep.subr.mxu0 0.0
  %8960 = vmatpush2.msra.mxu0 0.0
  %8961 = vmatprep.subr.mxu0 0.0
  %8962 = vmatpush2.msra.mxu0 0.0
  %8963 = vmatprep.subr.mxu0 0.0
  %8964 = vmatpush2.msra.mxu0 0.0
  %8965 = vmatprep.subr.mxu0 0.0
  %8966 = vmatpush2.msra.mxu0 0.0
  %8967 = vmatprep.subr.mxu0 0.0
  %8968 = vmatpush2.msra.mxu0 0.0
  %8969 = vmatprep.subr.mxu0 0.0
  %8970 = vmatpush2.msra.mxu0 0.0
  %8971 = vmatprep.subr.mxu0 0.0
  %8972 = vmatpush2.msra.mxu0 0.0
  %8973 = vmatprep.subr.mxu0 0.0
  %8974 = vmatpush2.msra.mxu0 0.0
  %8975 = vmatprep.subr.mxu0 0.0
  %8976 = vmatpush2.msra.mxu0 0.0
  %8977 = vmatprep.subr.mxu0 0.0
  %8978 = vmatpush2.msra.mxu0 0.0
  %8979 = vmatprep.subr.mxu0 0.0
  %8980 = vmatpush2.msra.mxu0 0.0
  %8981 = vmatprep.subr.mxu0 0.0
  %8982 = vmatpush2.msra.mxu0 0.0
  %8983 = vmatprep.subr.mxu0 0.0
  %8984 = vmatpush2.msra.mxu0 0.0
  %8985 = vmatprep.mubr.f32.mxu0 0.0
  %v8986 = vand.u32 %v8820, 4294901760
  %8987 = vmatmul.mubr.f32.gmra.mxu0 %v8986
  %v8988 = vpop.f32.mrf.mxu0
  %v8989 = vadd.f32 %v8898, %v8988
  %v8990 = vpop.f32.mrf.mxu0
  %8991 = vdwg.mxu0
  %8992 = vmatprep.subr.mxu0 0.0
  %8993 = vmatpush1.msra.mxu0 0.0
  %8994 = vmatprep.subr.mxu0 0.0
  %8995 = vmatpush1.msra.mxu0 0.0
  %8996 = vmatprep.subr.mxu0 0.0
  %8997 = vmatpush1.msra.mxu0 0.0
  %8998 = vmatprep.subr.mxu0 0.0
  %8999 = vmatpush1.msra.mxu0 0.0
  %9000 = vmatprep.subr.mxu0 0.0
  %9001 = vmatpush1.msra.mxu0 0.0
  %9002 = vmatprep.subr.mxu0 0.0
  %9003 = vmatpush1.msra.mxu0 0.0
  %9004 = vmatprep.subr.mxu0 0.0
  %9005 = vmatpush1.msra.mxu0 0.0
  %9006 = vmatprep.subr.mxu0 0.0
  %9007 = vmatpush1.msra.mxu0 0.0
  %9008 = vmatprep.subr.mxu0 0.0
  %9009 = vmatpush1.msra.mxu0 0.0
  %9010 = vmatprep.subr.mxu0 0.0
  %9011 = vmatpush1.msra.mxu0 0.0
  %9012 = vmatprep.subr.mxu0 0.0
  %9013 = vmatpush1.msra.mxu0 0.0
  %9014 = vmatprep.subr.mxu0 0.0
  %9015 = vmatpush1.msra.mxu0 0.0
  %9016 = vmatprep.subr.mxu0 0.0
  %v9017 = vand.u32 %v2064, 4294901760
  %v9018 = vsub.f32 %v2064, %v9017
  %9019 = vmatpush1.msra.mxu0 %v9018
  %9020 = vmatprep.subr.mxu0 0.0
  %v9021 = vand.u32 %v2063, 4294901760
  %v9022 = vsub.f32 %v2063, %v9021
  %9023 = vmatpush1.msra.mxu0 %v9022
  %9024 = vmatprep.subr.mxu0 0.0
  %v9025 = vand.u32 %v2062, 4294901760
  %v9026 = vsub.f32 %v2062, %v9025
  %9027 = vmatpush1.msra.mxu0 %v9026
  %9028 = vmatprep.subr.mxu0 0.0
  %v9029 = vand.u32 %v2061, 4294901760
  %v9030 = vsub.f32 %v2061, %v9029
  %9031 = vmatpush1.msra.mxu0 %v9030
  %9032 = vmatprep.subr.mxu0 0.0
  %9033 = vmatpush2.msra.mxu0 0.0
  %9034 = vmatprep.subr.mxu0 0.0
  %9035 = vmatpush2.msra.mxu0 0.0
  %9036 = vmatprep.subr.mxu0 0.0
  %9037 = vmatpush2.msra.mxu0 0.0
  %9038 = vmatprep.subr.mxu0 0.0
  %9039 = vmatpush2.msra.mxu0 0.0
  %9040 = vmatprep.subr.mxu0 0.0
  %9041 = vmatpush2.msra.mxu0 0.0
  %9042 = vmatprep.subr.mxu0 0.0
  %9043 = vmatpush2.msra.mxu0 0.0
  %9044 = vmatprep.subr.mxu0 0.0
  %9045 = vmatpush2.msra.mxu0 0.0
  %9046 = vmatprep.subr.mxu0 0.0
  %9047 = vmatpush2.msra.mxu0 0.0
  %9048 = vmatprep.subr.mxu0 0.0
  %9049 = vmatpush2.msra.mxu0 0.0
  %9050 = vmatprep.subr.mxu0 0.0
  %9051 = vmatpush2.msra.mxu0 0.0
  %9052 = vmatprep.subr.mxu0 0.0
  %9053 = vmatpush2.msra.mxu0 0.0
  %9054 = vmatprep.subr.mxu0 0.0
  %9055 = vmatpush2.msra.mxu0 0.0
  %9056 = vmatprep.subr.mxu0 0.0
  %9057 = vmatpush2.msra.mxu0 0.0
  %9058 = vmatprep.subr.mxu0 0.0
  %9059 = vmatpush2.msra.mxu0 0.0
  %9060 = vmatprep.subr.mxu0 0.0
  %9061 = vmatpush2.msra.mxu0 0.0
  %9062 = vmatprep.subr.mxu0 0.0
  %9063 = vmatpush2.msra.mxu0 0.0
  %9064 = vmatprep.mubr.f32.mxu0 0.0
  %v9065 = vand.u32 %v8820, 4294901760
  %v9066 = vsub.f32 %v8820, %v9065
  %9067 = vmatmul.mubr.f32.gmra.mxu0 %v9066
  %v9068 = vpop.f32.mrf.mxu0
  %v9069 = vadd.f32 %v8989, %v9068
  %v9070 = vpop.f32.mrf.mxu0
  %9071 = vdwg.mxu0
  %9072 = vmatprep.subr.mxu0 0.0
  %9073 = vmatpush1.msra.mxu0 0.0
  %9074 = vmatprep.subr.mxu0 0.0
  %9075 = vmatpush1.msra.mxu0 0.0
  %9076 = vmatprep.subr.mxu0 0.0
  %9077 = vmatpush1.msra.mxu0 0.0
  %9078 = vmatprep.subr.mxu0 0.0
  %9079 = vmatpush1.msra.mxu0 0.0
  %9080 = vmatprep.subr.mxu0 0.0
  %9081 = vmatpush1.msra.mxu0 0.0
  %9082 = vmatprep.subr.mxu0 0.0
  %9083 = vmatpush1.msra.mxu0 0.0
  %9084 = vmatprep.subr.mxu0 0.0
  %9085 = vmatpush1.msra.mxu0 0.0
  %9086 = vmatprep.subr.mxu0 0.0
  %9087 = vmatpush1.msra.mxu0 0.0
  %9088 = vmatprep.subr.mxu0 0.0
  %9089 = vmatpush1.msra.mxu0 0.0
  %9090 = vmatprep.subr.mxu0 0.0
  %9091 = vmatpush1.msra.mxu0 0.0
  %9092 = vmatprep.subr.mxu0 0.0
  %9093 = vmatpush1.msra.mxu0 0.0
  %9094 = vmatprep.subr.mxu0 0.0
  %9095 = vmatpush1.msra.mxu0 0.0
  %9096 = vmatprep.subr.mxu0 0.0
  %v9097 = vand.u32 %v2064, 4294901760
  %9098 = vmatpush1.msra.mxu0 %v9097
  %9099 = vmatprep.subr.mxu0 0.0
  %v9100 = vand.u32 %v2063, 4294901760
  %9101 = vmatpush1.msra.mxu0 %v9100
  %9102 = vmatprep.subr.mxu0 0.0
  %v9103 = vand.u32 %v2062, 4294901760
  %9104 = vmatpush1.msra.mxu0 %v9103
  %9105 = vmatprep.subr.mxu0 0.0
  %v9106 = vand.u32 %v2061, 4294901760
  %9107 = vmatpush1.msra.mxu0 %v9106
  %9108 = vmatprep.subr.mxu0 0.0
  %9109 = vmatpush2.msra.mxu0 0.0
  %9110 = vmatprep.subr.mxu0 0.0
  %9111 = vmatpush2.msra.mxu0 0.0
  %9112 = vmatprep.subr.mxu0 0.0
  %9113 = vmatpush2.msra.mxu0 0.0
  %9114 = vmatprep.subr.mxu0 0.0
  %9115 = vmatpush2.msra.mxu0 0.0
  %9116 = vmatprep.subr.mxu0 0.0
  %9117 = vmatpush2.msra.mxu0 0.0
  %9118 = vmatprep.subr.mxu0 0.0
  %9119 = vmatpush2.msra.mxu0 0.0
  %9120 = vmatprep.subr.mxu0 0.0
  %9121 = vmatpush2.msra.mxu0 0.0
  %9122 = vmatprep.subr.mxu0 0.0
  %9123 = vmatpush2.msra.mxu0 0.0
  %9124 = vmatprep.subr.mxu0 0.0
  %9125 = vmatpush2.msra.mxu0 0.0
  %9126 = vmatprep.subr.mxu0 0.0
  %9127 = vmatpush2.msra.mxu0 0.0
  %9128 = vmatprep.subr.mxu0 0.0
  %9129 = vmatpush2.msra.mxu0 0.0
  %9130 = vmatprep.subr.mxu0 0.0
  %9131 = vmatpush2.msra.mxu0 0.0
  %9132 = vmatprep.subr.mxu0 0.0
  %9133 = vmatpush2.msra.mxu0 0.0
  %9134 = vmatprep.subr.mxu0 0.0
  %9135 = vmatpush2.msra.mxu0 0.0
  %9136 = vmatprep.subr.mxu0 0.0
  %9137 = vmatpush2.msra.mxu0 0.0
  %9138 = vmatprep.subr.mxu0 0.0
  %9139 = vmatpush2.msra.mxu0 0.0
  %9140 = vmatprep.mubr.f32.mxu0 0.0
  %v9141 = vand.u32 %v8820, 4294901760
  %v9142 = vsub.f32 %v8820, %v9141
  %v9143 = vand.u32 %v9142, 4294901760
  %9144 = vmatmul.mubr.f32.gmra.mxu0 %v9143
  %v9145 = vpop.f32.mrf.mxu0
  %v9146 = vadd.f32 %v9069, %v9145
  %v9147 = vpop.f32.mrf.mxu0
  %9148 = vdwg.mxu0
  %9149 = vmatprep.subr.mxu0 0.0
  %9150 = vmatpush1.msra.mxu0 0.0
  %9151 = vmatprep.subr.mxu0 0.0
  %9152 = vmatpush1.msra.mxu0 0.0
  %9153 = vmatprep.subr.mxu0 0.0
  %9154 = vmatpush1.msra.mxu0 0.0
  %9155 = vmatprep.subr.mxu0 0.0
  %9156 = vmatpush1.msra.mxu0 0.0
  %9157 = vmatprep.subr.mxu0 0.0
  %9158 = vmatpush1.msra.mxu0 0.0
  %9159 = vmatprep.subr.mxu0 0.0
  %9160 = vmatpush1.msra.mxu0 0.0
  %9161 = vmatprep.subr.mxu0 0.0
  %9162 = vmatpush1.msra.mxu0 0.0
  %9163 = vmatprep.subr.mxu0 0.0
  %9164 = vmatpush1.msra.mxu0 0.0
  %9165 = vmatprep.subr.mxu0 0.0
  %9166 = vmatpush1.msra.mxu0 0.0
  %9167 = vmatprep.subr.mxu0 0.0
  %9168 = vmatpush1.msra.mxu0 0.0
  %9169 = vmatprep.subr.mxu0 0.0
  %9170 = vmatpush1.msra.mxu0 0.0
  %9171 = vmatprep.subr.mxu0 0.0
  %9172 = vmatpush1.msra.mxu0 0.0
  %9173 = vmatprep.subr.mxu0 0.0
  %v9174 = vand.u32 %v2064, 4294901760
  %v9175 = vsub.f32 %v2064, %v9174
  %v9176 = vand.u32 %v9175, 4294901760
  %9177 = vmatpush1.msra.mxu0 %v9176
  %9178 = vmatprep.subr.mxu0 0.0
  %v9179 = vand.u32 %v2063, 4294901760
  %v9180 = vsub.f32 %v2063, %v9179
  %v9181 = vand.u32 %v9180, 4294901760
  %9182 = vmatpush1.msra.mxu0 %v9181
  %9183 = vmatprep.subr.mxu0 0.0
  %v9184 = vand.u32 %v2062, 4294901760
  %v9185 = vsub.f32 %v2062, %v9184
  %v9186 = vand.u32 %v9185, 4294901760
  %9187 = vmatpush1.msra.mxu0 %v9186
  %9188 = vmatprep.subr.mxu0 0.0
  %v9189 = vand.u32 %v2061, 4294901760
  %v9190 = vsub.f32 %v2061, %v9189
  %v9191 = vand.u32 %v9190, 4294901760
  %9192 = vmatpush1.msra.mxu0 %v9191
  %9193 = vmatprep.subr.mxu0 0.0
  %9194 = vmatpush2.msra.mxu0 0.0
  %9195 = vmatprep.subr.mxu0 0.0
  %9196 = vmatpush2.msra.mxu0 0.0
  %9197 = vmatprep.subr.mxu0 0.0
  %9198 = vmatpush2.msra.mxu0 0.0
  %9199 = vmatprep.subr.mxu0 0.0
  %9200 = vmatpush2.msra.mxu0 0.0
  %9201 = vmatprep.subr.mxu0 0.0
  %9202 = vmatpush2.msra.mxu0 0.0
  %9203 = vmatprep.subr.mxu0 0.0
  %9204 = vmatpush2.msra.mxu0 0.0
  %9205 = vmatprep.subr.mxu0 0.0
  %9206 = vmatpush2.msra.mxu0 0.0
  %9207 = vmatprep.subr.mxu0 0.0
  %9208 = vmatpush2.msra.mxu0 0.0
  %9209 = vmatprep.subr.mxu0 0.0
  %9210 = vmatpush2.msra.mxu0 0.0
  %9211 = vmatprep.subr.mxu0 0.0
  %9212 = vmatpush2.msra.mxu0 0.0
  %9213 = vmatprep.subr.mxu0 0.0
  %9214 = vmatpush2.msra.mxu0 0.0
  %9215 = vmatprep.subr.mxu0 0.0
  %9216 = vmatpush2.msra.mxu0 0.0
  %9217 = vmatprep.subr.mxu0 0.0
  %9218 = vmatpush2.msra.mxu0 0.0
  %9219 = vmatprep.subr.mxu0 0.0
  %9220 = vmatpush2.msra.mxu0 0.0
  %9221 = vmatprep.subr.mxu0 0.0
  %9222 = vmatpush2.msra.mxu0 0.0
  %9223 = vmatprep.subr.mxu0 0.0
  %9224 = vmatpush2.msra.mxu0 0.0
  %9225 = vmatprep.mubr.f32.mxu0 0.0
  %v9226 = vand.u32 %v8820, 4294901760
  %9227 = vmatmul.mubr.f32.gmra.mxu0 %v9226
  %v9228 = vpop.f32.mrf.mxu0
  %v9229 = vadd.f32 %v9146, %v9228
  %v9230 = vpop.f32.mrf.mxu0
  %9231 = vdwg.mxu0
  %9232 = vmatprep.subr.mxu0 0.0
  %9233 = vmatpush1.msra.mxu0 0.0
  %9234 = vmatprep.subr.mxu0 0.0
  %9235 = vmatpush1.msra.mxu0 0.0
  %9236 = vmatprep.subr.mxu0 0.0
  %9237 = vmatpush1.msra.mxu0 0.0
  %9238 = vmatprep.subr.mxu0 0.0
  %9239 = vmatpush1.msra.mxu0 0.0
  %9240 = vmatprep.subr.mxu0 0.0
  %9241 = vmatpush1.msra.mxu0 0.0
  %9242 = vmatprep.subr.mxu0 0.0
  %9243 = vmatpush1.msra.mxu0 0.0
  %9244 = vmatprep.subr.mxu0 0.0
  %9245 = vmatpush1.msra.mxu0 0.0
  %9246 = vmatprep.subr.mxu0 0.0
  %9247 = vmatpush1.msra.mxu0 0.0
  %9248 = vmatprep.subr.mxu0 0.0
  %9249 = vmatpush1.msra.mxu0 0.0
  %9250 = vmatprep.subr.mxu0 0.0
  %9251 = vmatpush1.msra.mxu0 0.0
  %9252 = vmatprep.subr.mxu0 0.0
  %9253 = vmatpush1.msra.mxu0 0.0
  %9254 = vmatprep.subr.mxu0 0.0
  %9255 = vmatpush1.msra.mxu0 0.0
  %9256 = vmatprep.subr.mxu0 0.0
  %v9257 = vand.u32 %v2064, 4294901760
  %9258 = vmatpush1.msra.mxu0 %v9257
  %9259 = vmatprep.subr.mxu0 0.0
  %v9260 = vand.u32 %v2063, 4294901760
  %9261 = vmatpush1.msra.mxu0 %v9260
  %9262 = vmatprep.subr.mxu0 0.0
  %v9263 = vand.u32 %v2062, 4294901760
  %9264 = vmatpush1.msra.mxu0 %v9263
  %9265 = vmatprep.subr.mxu0 0.0
  %v9266 = vand.u32 %v2061, 4294901760
  %9267 = vmatpush1.msra.mxu0 %v9266
  %9268 = vmatprep.subr.mxu0 0.0
  %9269 = vmatpush2.msra.mxu0 0.0
  %9270 = vmatprep.subr.mxu0 0.0
  %9271 = vmatpush2.msra.mxu0 0.0
  %9272 = vmatprep.subr.mxu0 0.0
  %9273 = vmatpush2.msra.mxu0 0.0
  %9274 = vmatprep.subr.mxu0 0.0
  %9275 = vmatpush2.msra.mxu0 0.0
  %9276 = vmatprep.subr.mxu0 0.0
  %9277 = vmatpush2.msra.mxu0 0.0
  %9278 = vmatprep.subr.mxu0 0.0
  %9279 = vmatpush2.msra.mxu0 0.0
  %9280 = vmatprep.subr.mxu0 0.0
  %9281 = vmatpush2.msra.mxu0 0.0
  %9282 = vmatprep.subr.mxu0 0.0
  %9283 = vmatpush2.msra.mxu0 0.0
  %9284 = vmatprep.subr.mxu0 0.0
  %9285 = vmatpush2.msra.mxu0 0.0
  %9286 = vmatprep.subr.mxu0 0.0
  %9287 = vmatpush2.msra.mxu0 0.0
  %9288 = vmatprep.subr.mxu0 0.0
  %9289 = vmatpush2.msra.mxu0 0.0
  %9290 = vmatprep.subr.mxu0 0.0
  %9291 = vmatpush2.msra.mxu0 0.0
  %9292 = vmatprep.subr.mxu0 0.0
  %9293 = vmatpush2.msra.mxu0 0.0
  %9294 = vmatprep.subr.mxu0 0.0
  %9295 = vmatpush2.msra.mxu0 0.0
  %9296 = vmatprep.subr.mxu0 0.0
  %9297 = vmatpush2.msra.mxu0 0.0
  %9298 = vmatprep.subr.mxu0 0.0
  %9299 = vmatpush2.msra.mxu0 0.0
  %9300 = vmatprep.mubr.f32.mxu0 0.0
  %v9301 = vand.u32 %v8820, 4294901760
  %9302 = vmatmul.mubr.f32.gmra.mxu0 %v9301
  %v9303 = vpop.f32.mrf.mxu0
  %v9304 = vadd.f32 %v9229, %v9303
  %v9305 = vpop.f32.mrf.mxu0
  %9306 = vdwg.mxu0
  %v9307 = vadd.f32 %v8819, %v9304
  %v9308 = vxor.u32 %v9307, 2147483648
  %v9309 = vmul.f32 %v9308, 1.442695
  %v9310 = vpow.pop %v9309
  %v9311 = vadd.f32 %v9310, 1.0
  %v9312 = vrcp.pop %v9311
  %v9313 = vmul.f32 1.0, %v9312
  %9315 = vrot.lane.b32.xlu0 %v9304, 64
  %v9316 = vpop.permute.xlu0 %9315
  %v9318 = vmul.f32 %v9313, %v9316
  %9320 = vrot.lane.b32.xlu0 %v9318, 64
  %v9321 = vpop.permute.xlu0 %9320
  %v9323 = vadd.f32 %v8819, %v9321
  %v9324 = vtanh.pop %v9323
  %v9325 = vsub.f32 1.0, %v9313
  %9327 = vrot.lane.b32.xlu0 %v9324, 96
  %v9328 = vpop.permute.xlu0 %9327
  %v9330 = vmul.f32 %v9325, %v9328
  %v9331 = vmul.f32 %v9313, %v8813
  %v9332 = vadd.f32 %v9330, %v9331
  %9334 = vrot.lane.b32.xlu0 %v9332, 96
  %v9335 = vpop.permute.xlu0 %9334
  %9337 = vst.msk [vmem:[#allocation3 + $0x68] sm:$0xff] %vm2071, %v9335
  %v9338 = vld [vmem:[#allocation2 + $0x70] sm:$0xff]
  %v9339 = vsel %vm2071, %v9335, 0
  %9341 = vmatprep.subr.mxu0 0.0
  %9342 = vmatpush1.msra.mxu0 0.0
  %9343 = vmatprep.subr.mxu0 0.0
  %9344 = vmatpush1.msra.mxu0 0.0
  %9345 = vmatprep.subr.mxu0 0.0
  %9346 = vmatpush1.msra.mxu0 0.0
  %9347 = vmatprep.subr.mxu0 0.0
  %9348 = vmatpush1.msra.mxu0 0.0
  %9349 = vmatprep.subr.mxu0 0.0
  %9350 = vmatpush1.msra.mxu0 0.0
  %9351 = vmatprep.subr.mxu0 0.0
  %9352 = vmatpush1.msra.mxu0 0.0
  %9353 = vmatprep.subr.mxu0 0.0
  %9354 = vmatpush1.msra.mxu0 0.0
  %9355 = vmatprep.subr.mxu0 0.0
  %9356 = vmatpush1.msra.mxu0 0.0
  %9357 = vmatprep.subr.mxu0 0.0
  %9358 = vmatpush1.msra.mxu0 0.0
  %9359 = vmatprep.subr.mxu0 0.0
  %9360 = vmatpush1.msra.mxu0 0.0
  %9361 = vmatprep.subr.mxu0 0.0
  %9362 = vmatpush1.msra.mxu0 0.0
  %9363 = vmatprep.subr.mxu0 0.0
  %9364 = vmatpush1.msra.mxu0 0.0
  %9365 = vmatprep.subr.mxu0 0.0
  %v9366 = vand.u32 %v2064, 4294901760
  %9367 = vmatpush1.msra.mxu0 %v9366
  %9368 = vmatprep.subr.mxu0 0.0
  %v9369 = vand.u32 %v2063, 4294901760
  %9370 = vmatpush1.msra.mxu0 %v9369
  %9371 = vmatprep.subr.mxu0 0.0
  %v9372 = vand.u32 %v2062, 4294901760
  %9373 = vmatpush1.msra.mxu0 %v9372
  %9374 = vmatprep.subr.mxu0 0.0
  %v9375 = vand.u32 %v2061, 4294901760
  %9376 = vmatpush1.msra.mxu0 %v9375
  %9377 = vmatprep.subr.mxu0 0.0
  %9378 = vmatpush2.msra.mxu0 0.0
  %9379 = vmatprep.subr.mxu0 0.0
  %9380 = vmatpush2.msra.mxu0 0.0
  %9381 = vmatprep.subr.mxu0 0.0
  %9382 = vmatpush2.msra.mxu0 0.0
  %9383 = vmatprep.subr.mxu0 0.0
  %9384 = vmatpush2.msra.mxu0 0.0
  %9385 = vmatprep.subr.mxu0 0.0
  %9386 = vmatpush2.msra.mxu0 0.0
  %9387 = vmatprep.subr.mxu0 0.0
  %9388 = vmatpush2.msra.mxu0 0.0
  %9389 = vmatprep.subr.mxu0 0.0
  %9390 = vmatpush2.msra.mxu0 0.0
  %9391 = vmatprep.subr.mxu0 0.0
  %9392 = vmatpush2.msra.mxu0 0.0
  %9393 = vmatprep.subr.mxu0 0.0
  %9394 = vmatpush2.msra.mxu0 0.0
  %9395 = vmatprep.subr.mxu0 0.0
  %9396 = vmatpush2.msra.mxu0 0.0
  %9397 = vmatprep.subr.mxu0 0.0
  %9398 = vmatpush2.msra.mxu0 0.0
  %9399 = vmatprep.subr.mxu0 0.0
  %9400 = vmatpush2.msra.mxu0 0.0
  %9401 = vmatprep.subr.mxu0 0.0
  %9402 = vmatpush2.msra.mxu0 0.0
  %9403 = vmatprep.subr.mxu0 0.0
  %9404 = vmatpush2.msra.mxu0 0.0
  %9405 = vmatprep.subr.mxu0 0.0
  %9406 = vmatpush2.msra.mxu0 0.0
  %9407 = vmatprep.subr.mxu0 0.0
  %9408 = vmatpush2.msra.mxu0 0.0
  %9409 = vmatprep.mubr.f32.mxu0 0.0
  %v9410 = vand.u32 %v9339, 4294901760
  %v9411 = vsub.f32 %v9339, %v9410
  %v9412 = vand.u32 %v9411, 4294901760
  %v9413 = vsub.f32 %v9411, %v9412
  %v9414 = vand.u32 %v9413, 4294901760
  %9415 = vmatmul.mubr.f32.gmra.mxu0 %v9414
  %v9416 = vpop.f32.mrf.mxu0
  %v9417 = vadd.f32 %v2070, %v9416
  %v9418 = vpop.f32.mrf.mxu0
  %9419 = vdwg.mxu0
  %9420 = vmatprep.subr.mxu0 0.0
  %9421 = vmatpush1.msra.mxu0 0.0
  %9422 = vmatprep.subr.mxu0 0.0
  %9423 = vmatpush1.msra.mxu0 0.0
  %9424 = vmatprep.subr.mxu0 0.0
  %9425 = vmatpush1.msra.mxu0 0.0
  %9426 = vmatprep.subr.mxu0 0.0
  %9427 = vmatpush1.msra.mxu0 0.0
  %9428 = vmatprep.subr.mxu0 0.0
  %9429 = vmatpush1.msra.mxu0 0.0
  %9430 = vmatprep.subr.mxu0 0.0
  %9431 = vmatpush1.msra.mxu0 0.0
  %9432 = vmatprep.subr.mxu0 0.0
  %9433 = vmatpush1.msra.mxu0 0.0
  %9434 = vmatprep.subr.mxu0 0.0
  %9435 = vmatpush1.msra.mxu0 0.0
  %9436 = vmatprep.subr.mxu0 0.0
  %9437 = vmatpush1.msra.mxu0 0.0
  %9438 = vmatprep.subr.mxu0 0.0
  %9439 = vmatpush1.msra.mxu0 0.0
  %9440 = vmatprep.subr.mxu0 0.0
  %9441 = vmatpush1.msra.mxu0 0.0
  %9442 = vmatprep.subr.mxu0 0.0
  %9443 = vmatpush1.msra.mxu0 0.0
  %9444 = vmatprep.subr.mxu0 0.0
  %v9445 = vand.u32 %v2064, 4294901760
  %v9446 = vsub.f32 %v2064, %v9445
  %v9447 = vand.u32 %v9446, 4294901760
  %v9448 = vsub.f32 %v9446, %v9447
  %v9449 = vand.u32 %v9448, 4294901760
  %9450 = vmatpush1.msra.mxu0 %v9449
  %9451 = vmatprep.subr.mxu0 0.0
  %v9452 = vand.u32 %v2063, 4294901760
  %v9453 = vsub.f32 %v2063, %v9452
  %v9454 = vand.u32 %v9453, 4294901760
  %v9455 = vsub.f32 %v9453, %v9454
  %v9456 = vand.u32 %v9455, 4294901760
  %9457 = vmatpush1.msra.mxu0 %v9456
  %9458 = vmatprep.subr.mxu0 0.0
  %v9459 = vand.u32 %v2062, 4294901760
  %v9460 = vsub.f32 %v2062, %v9459
  %v9461 = vand.u32 %v9460, 4294901760
  %v9462 = vsub.f32 %v9460, %v9461
  %v9463 = vand.u32 %v9462, 4294901760
  %9464 = vmatpush1.msra.mxu0 %v9463
  %9465 = vmatprep.subr.mxu0 0.0
  %v9466 = vand.u32 %v2061, 4294901760
  %v9467 = vsub.f32 %v2061, %v9466
  %v9468 = vand.u32 %v9467, 4294901760
  %v9469 = vsub.f32 %v9467, %v9468
  %v9470 = vand.u32 %v9469, 4294901760
  %9471 = vmatpush1.msra.mxu0 %v9470
  %9472 = vmatprep.subr.mxu0 0.0
  %9473 = vmatpush2.msra.mxu0 0.0
  %9474 = vmatprep.subr.mxu0 0.0
  %9475 = vmatpush2.msra.mxu0 0.0
  %9476 = vmatprep.subr.mxu0 0.0
  %9477 = vmatpush2.msra.mxu0 0.0
  %9478 = vmatprep.subr.mxu0 0.0
  %9479 = vmatpush2.msra.mxu0 0.0
  %9480 = vmatprep.subr.mxu0 0.0
  %9481 = vmatpush2.msra.mxu0 0.0
  %9482 = vmatprep.subr.mxu0 0.0
  %9483 = vmatpush2.msra.mxu0 0.0
  %9484 = vmatprep.subr.mxu0 0.0
  %9485 = vmatpush2.msra.mxu0 0.0
  %9486 = vmatprep.subr.mxu0 0.0
  %9487 = vmatpush2.msra.mxu0 0.0
  %9488 = vmatprep.subr.mxu0 0.0
  %9489 = vmatpush2.msra.mxu0 0.0
  %9490 = vmatprep.subr.mxu0 0.0
  %9491 = vmatpush2.msra.mxu0 0.0
  %9492 = vmatprep.subr.mxu0 0.0
  %9493 = vmatpush2.msra.mxu0 0.0
  %9494 = vmatprep.subr.mxu0 0.0
  %9495 = vmatpush2.msra.mxu0 0.0
  %9496 = vmatprep.subr.mxu0 0.0
  %9497 = vmatpush2.msra.mxu0 0.0
  %9498 = vmatprep.subr.mxu0 0.0
  %9499 = vmatpush2.msra.mxu0 0.0
  %9500 = vmatprep.subr.mxu0 0.0
  %9501 = vmatpush2.msra.mxu0 0.0
  %9502 = vmatprep.subr.mxu0 0.0
  %9503 = vmatpush2.msra.mxu0 0.0
  %9504 = vmatprep.mubr.f32.mxu0 0.0
  %v9505 = vand.u32 %v9339, 4294901760
  %9506 = vmatmul.mubr.f32.gmra.mxu0 %v9505
  %v9507 = vpop.f32.mrf.mxu0
  %v9508 = vadd.f32 %v9417, %v9507
  %v9509 = vpop.f32.mrf.mxu0
  %9510 = vdwg.mxu0
  %9511 = vmatprep.subr.mxu0 0.0
  %9512 = vmatpush1.msra.mxu0 0.0
  %9513 = vmatprep.subr.mxu0 0.0
  %9514 = vmatpush1.msra.mxu0 0.0
  %9515 = vmatprep.subr.mxu0 0.0
  %9516 = vmatpush1.msra.mxu0 0.0
  %9517 = vmatprep.subr.mxu0 0.0
  %9518 = vmatpush1.msra.mxu0 0.0
  %9519 = vmatprep.subr.mxu0 0.0
  %9520 = vmatpush1.msra.mxu0 0.0
  %9521 = vmatprep.subr.mxu0 0.0
  %9522 = vmatpush1.msra.mxu0 0.0
  %9523 = vmatprep.subr.mxu0 0.0
  %9524 = vmatpush1.msra.mxu0 0.0
  %9525 = vmatprep.subr.mxu0 0.0
  %9526 = vmatpush1.msra.mxu0 0.0
  %9527 = vmatprep.subr.mxu0 0.0
  %9528 = vmatpush1.msra.mxu0 0.0
  %9529 = vmatprep.subr.mxu0 0.0
  %9530 = vmatpush1.msra.mxu0 0.0
  %9531 = vmatprep.subr.mxu0 0.0
  %9532 = vmatpush1.msra.mxu0 0.0
  %9533 = vmatprep.subr.mxu0 0.0
  %9534 = vmatpush1.msra.mxu0 0.0
  %9535 = vmatprep.subr.mxu0 0.0
  %v9536 = vand.u32 %v2064, 4294901760
  %v9537 = vsub.f32 %v2064, %v9536
  %9538 = vmatpush1.msra.mxu0 %v9537
  %9539 = vmatprep.subr.mxu0 0.0
  %v9540 = vand.u32 %v2063, 4294901760
  %v9541 = vsub.f32 %v2063, %v9540
  %9542 = vmatpush1.msra.mxu0 %v9541
  %9543 = vmatprep.subr.mxu0 0.0
  %v9544 = vand.u32 %v2062, 4294901760
  %v9545 = vsub.f32 %v2062, %v9544
  %9546 = vmatpush1.msra.mxu0 %v9545
  %9547 = vmatprep.subr.mxu0 0.0
  %v9548 = vand.u32 %v2061, 4294901760
  %v9549 = vsub.f32 %v2061, %v9548
  %9550 = vmatpush1.msra.mxu0 %v9549
  %9551 = vmatprep.subr.mxu0 0.0
  %9552 = vmatpush2.msra.mxu0 0.0
  %9553 = vmatprep.subr.mxu0 0.0
  %9554 = vmatpush2.msra.mxu0 0.0
  %9555 = vmatprep.subr.mxu0 0.0
  %9556 = vmatpush2.msra.mxu0 0.0
  %9557 = vmatprep.subr.mxu0 0.0
  %9558 = vmatpush2.msra.mxu0 0.0
  %9559 = vmatprep.subr.mxu0 0.0
  %9560 = vmatpush2.msra.mxu0 0.0
  %9561 = vmatprep.subr.mxu0 0.0
  %9562 = vmatpush2.msra.mxu0 0.0
  %9563 = vmatprep.subr.mxu0 0.0
  %9564 = vmatpush2.msra.mxu0 0.0
  %9565 = vmatprep.subr.mxu0 0.0
  %9566 = vmatpush2.msra.mxu0 0.0
  %9567 = vmatprep.subr.mxu0 0.0
  %9568 = vmatpush2.msra.mxu0 0.0
  %9569 = vmatprep.subr.mxu0 0.0
  %9570 = vmatpush2.msra.mxu0 0.0
  %9571 = vmatprep.subr.mxu0 0.0
  %9572 = vmatpush2.msra.mxu0 0.0
  %9573 = vmatprep.subr.mxu0 0.0
  %9574 = vmatpush2.msra.mxu0 0.0
  %9575 = vmatprep.subr.mxu0 0.0
  %9576 = vmatpush2.msra.mxu0 0.0
  %9577 = vmatprep.subr.mxu0 0.0
  %9578 = vmatpush2.msra.mxu0 0.0
  %9579 = vmatprep.subr.mxu0 0.0
  %9580 = vmatpush2.msra.mxu0 0.0
  %9581 = vmatprep.subr.mxu0 0.0
  %9582 = vmatpush2.msra.mxu0 0.0
  %9583 = vmatprep.mubr.f32.mxu0 0.0
  %v9584 = vand.u32 %v9339, 4294901760
  %v9585 = vsub.f32 %v9339, %v9584
  %9586 = vmatmul.mubr.f32.gmra.mxu0 %v9585
  %v9587 = vpop.f32.mrf.mxu0
  %v9588 = vadd.f32 %v9508, %v9587
  %v9589 = vpop.f32.mrf.mxu0
  %9590 = vdwg.mxu0
  %9591 = vmatprep.subr.mxu0 0.0
  %9592 = vmatpush1.msra.mxu0 0.0
  %9593 = vmatprep.subr.mxu0 0.0
  %9594 = vmatpush1.msra.mxu0 0.0
  %9595 = vmatprep.subr.mxu0 0.0
  %9596 = vmatpush1.msra.mxu0 0.0
  %9597 = vmatprep.subr.mxu0 0.0
  %9598 = vmatpush1.msra.mxu0 0.0
  %9599 = vmatprep.subr.mxu0 0.0
  %9600 = vmatpush1.msra.mxu0 0.0
  %9601 = vmatprep.subr.mxu0 0.0
  %9602 = vmatpush1.msra.mxu0 0.0
  %9603 = vmatprep.subr.mxu0 0.0
  %9604 = vmatpush1.msra.mxu0 0.0
  %9605 = vmatprep.subr.mxu0 0.0
  %9606 = vmatpush1.msra.mxu0 0.0
  %9607 = vmatprep.subr.mxu0 0.0
  %9608 = vmatpush1.msra.mxu0 0.0
  %9609 = vmatprep.subr.mxu0 0.0
  %9610 = vmatpush1.msra.mxu0 0.0
  %9611 = vmatprep.subr.mxu0 0.0
  %9612 = vmatpush1.msra.mxu0 0.0
  %9613 = vmatprep.subr.mxu0 0.0
  %9614 = vmatpush1.msra.mxu0 0.0
  %9615 = vmatprep.subr.mxu0 0.0
  %v9616 = vand.u32 %v2064, 4294901760
  %9617 = vmatpush1.msra.mxu0 %v9616
  %9618 = vmatprep.subr.mxu0 0.0
  %v9619 = vand.u32 %v2063, 4294901760
  %9620 = vmatpush1.msra.mxu0 %v9619
  %9621 = vmatprep.subr.mxu0 0.0
  %v9622 = vand.u32 %v2062, 4294901760
  %9623 = vmatpush1.msra.mxu0 %v9622
  %9624 = vmatprep.subr.mxu0 0.0
  %v9625 = vand.u32 %v2061, 4294901760
  %9626 = vmatpush1.msra.mxu0 %v9625
  %9627 = vmatprep.subr.mxu0 0.0
  %9628 = vmatpush2.msra.mxu0 0.0
  %9629 = vmatprep.subr.mxu0 0.0
  %9630 = vmatpush2.msra.mxu0 0.0
  %9631 = vmatprep.subr.mxu0 0.0
  %9632 = vmatpush2.msra.mxu0 0.0
  %9633 = vmatprep.subr.mxu0 0.0
  %9634 = vmatpush2.msra.mxu0 0.0
  %9635 = vmatprep.subr.mxu0 0.0
  %9636 = vmatpush2.msra.mxu0 0.0
  %9637 = vmatprep.subr.mxu0 0.0
  %9638 = vmatpush2.msra.mxu0 0.0
  %9639 = vmatprep.subr.mxu0 0.0
  %9640 = vmatpush2.msra.mxu0 0.0
  %9641 = vmatprep.subr.mxu0 0.0
  %9642 = vmatpush2.msra.mxu0 0.0
  %9643 = vmatprep.subr.mxu0 0.0
  %9644 = vmatpush2.msra.mxu0 0.0
  %9645 = vmatprep.subr.mxu0 0.0
  %9646 = vmatpush2.msra.mxu0 0.0
  %9647 = vmatprep.subr.mxu0 0.0
  %9648 = vmatpush2.msra.mxu0 0.0
  %9649 = vmatprep.subr.mxu0 0.0
  %9650 = vmatpush2.msra.mxu0 0.0
  %9651 = vmatprep.subr.mxu0 0.0
  %9652 = vmatpush2.msra.mxu0 0.0
  %9653 = vmatprep.subr.mxu0 0.0
  %9654 = vmatpush2.msra.mxu0 0.0
  %9655 = vmatprep.subr.mxu0 0.0
  %9656 = vmatpush2.msra.mxu0 0.0
  %9657 = vmatprep.subr.mxu0 0.0
  %9658 = vmatpush2.msra.mxu0 0.0
  %9659 = vmatprep.mubr.f32.mxu0 0.0
  %v9660 = vand.u32 %v9339, 4294901760
  %v9661 = vsub.f32 %v9339, %v9660
  %v9662 = vand.u32 %v9661, 4294901760
  %9663 = vmatmul.mubr.f32.gmra.mxu0 %v9662
  %v9664 = vpop.f32.mrf.mxu0
  %v9665 = vadd.f32 %v9588, %v9664
  %v9666 = vpop.f32.mrf.mxu0
  %9667 = vdwg.mxu0
  %9668 = vmatprep.subr.mxu0 0.0
  %9669 = vmatpush1.msra.mxu0 0.0
  %9670 = vmatprep.subr.mxu0 0.0
  %9671 = vmatpush1.msra.mxu0 0.0
  %9672 = vmatprep.subr.mxu0 0.0
  %9673 = vmatpush1.msra.mxu0 0.0
  %9674 = vmatprep.subr.mxu0 0.0
  %9675 = vmatpush1.msra.mxu0 0.0
  %9676 = vmatprep.subr.mxu0 0.0
  %9677 = vmatpush1.msra.mxu0 0.0
  %9678 = vmatprep.subr.mxu0 0.0
  %9679 = vmatpush1.msra.mxu0 0.0
  %9680 = vmatprep.subr.mxu0 0.0
  %9681 = vmatpush1.msra.mxu0 0.0
  %9682 = vmatprep.subr.mxu0 0.0
  %9683 = vmatpush1.msra.mxu0 0.0
  %9684 = vmatprep.subr.mxu0 0.0
  %9685 = vmatpush1.msra.mxu0 0.0
  %9686 = vmatprep.subr.mxu0 0.0
  %9687 = vmatpush1.msra.mxu0 0.0
  %9688 = vmatprep.subr.mxu0 0.0
  %9689 = vmatpush1.msra.mxu0 0.0
  %9690 = vmatprep.subr.mxu0 0.0
  %9691 = vmatpush1.msra.mxu0 0.0
  %9692 = vmatprep.subr.mxu0 0.0
  %v9693 = vand.u32 %v2064, 4294901760
  %v9694 = vsub.f32 %v2064, %v9693
  %v9695 = vand.u32 %v9694, 4294901760
  %9696 = vmatpush1.msra.mxu0 %v9695
  %9697 = vmatprep.subr.mxu0 0.0
  %v9698 = vand.u32 %v2063, 4294901760
  %v9699 = vsub.f32 %v2063, %v9698
  %v9700 = vand.u32 %v9699, 4294901760
  %9701 = vmatpush1.msra.mxu0 %v9700
  %9702 = vmatprep.subr.mxu0 0.0
  %v9703 = vand.u32 %v2062, 4294901760
  %v9704 = vsub.f32 %v2062, %v9703
  %v9705 = vand.u32 %v9704, 4294901760
  %9706 = vmatpush1.msra.mxu0 %v9705
  %9707 = vmatprep.subr.mxu0 0.0
  %v9708 = vand.u32 %v2061, 4294901760
  %v9709 = vsub.f32 %v2061, %v9708
  %v9710 = vand.u32 %v9709, 4294901760
  %9711 = vmatpush1.msra.mxu0 %v9710
  %9712 = vmatprep.subr.mxu0 0.0
  %9713 = vmatpush2.msra.mxu0 0.0
  %9714 = vmatprep.subr.mxu0 0.0
  %9715 = vmatpush2.msra.mxu0 0.0
  %9716 = vmatprep.subr.mxu0 0.0
  %9717 = vmatpush2.msra.mxu0 0.0
  %9718 = vmatprep.subr.mxu0 0.0
  %9719 = vmatpush2.msra.mxu0 0.0
  %9720 = vmatprep.subr.mxu0 0.0
  %9721 = vmatpush2.msra.mxu0 0.0
  %9722 = vmatprep.subr.mxu0 0.0
  %9723 = vmatpush2.msra.mxu0 0.0
  %9724 = vmatprep.subr.mxu0 0.0
  %9725 = vmatpush2.msra.mxu0 0.0
  %9726 = vmatprep.subr.mxu0 0.0
  %9727 = vmatpush2.msra.mxu0 0.0
  %9728 = vmatprep.subr.mxu0 0.0
  %9729 = vmatpush2.msra.mxu0 0.0
  %9730 = vmatprep.subr.mxu0 0.0
  %9731 = vmatpush2.msra.mxu0 0.0
  %9732 = vmatprep.subr.mxu0 0.0
  %9733 = vmatpush2.msra.mxu0 0.0
  %9734 = vmatprep.subr.mxu0 0.0
  %9735 = vmatpush2.msra.mxu0 0.0
  %9736 = vmatprep.subr.mxu0 0.0
  %9737 = vmatpush2.msra.mxu0 0.0
  %9738 = vmatprep.subr.mxu0 0.0
  %9739 = vmatpush2.msra.mxu0 0.0
  %9740 = vmatprep.subr.mxu0 0.0
  %9741 = vmatpush2.msra.mxu0 0.0
  %9742 = vmatprep.subr.mxu0 0.0
  %9743 = vmatpush2.msra.mxu0 0.0
  %9744 = vmatprep.mubr.f32.mxu0 0.0
  %v9745 = vand.u32 %v9339, 4294901760
  %9746 = vmatmul.mubr.f32.gmra.mxu0 %v9745
  %v9747 = vpop.f32.mrf.mxu0
  %v9748 = vadd.f32 %v9665, %v9747
  %v9749 = vpop.f32.mrf.mxu0
  %9750 = vdwg.mxu0
  %9751 = vmatprep.subr.mxu0 0.0
  %9752 = vmatpush1.msra.mxu0 0.0
  %9753 = vmatprep.subr.mxu0 0.0
  %9754 = vmatpush1.msra.mxu0 0.0
  %9755 = vmatprep.subr.mxu0 0.0
  %9756 = vmatpush1.msra.mxu0 0.0
  %9757 = vmatprep.subr.mxu0 0.0
  %9758 = vmatpush1.msra.mxu0 0.0
  %9759 = vmatprep.subr.mxu0 0.0
  %9760 = vmatpush1.msra.mxu0 0.0
  %9761 = vmatprep.subr.mxu0 0.0
  %9762 = vmatpush1.msra.mxu0 0.0
  %9763 = vmatprep.subr.mxu0 0.0
  %9764 = vmatpush1.msra.mxu0 0.0
  %9765 = vmatprep.subr.mxu0 0.0
  %9766 = vmatpush1.msra.mxu0 0.0
  %9767 = vmatprep.subr.mxu0 0.0
  %9768 = vmatpush1.msra.mxu0 0.0
  %9769 = vmatprep.subr.mxu0 0.0
  %9770 = vmatpush1.msra.mxu0 0.0
  %9771 = vmatprep.subr.mxu0 0.0
  %9772 = vmatpush1.msra.mxu0 0.0
  %9773 = vmatprep.subr.mxu0 0.0
  %9774 = vmatpush1.msra.mxu0 0.0
  %9775 = vmatprep.subr.mxu0 0.0
  %v9776 = vand.u32 %v2064, 4294901760
  %9777 = vmatpush1.msra.mxu0 %v9776
  %9778 = vmatprep.subr.mxu0 0.0
  %v9779 = vand.u32 %v2063, 4294901760
  %9780 = vmatpush1.msra.mxu0 %v9779
  %9781 = vmatprep.subr.mxu0 0.0
  %v9782 = vand.u32 %v2062, 4294901760
  %9783 = vmatpush1.msra.mxu0 %v9782
  %9784 = vmatprep.subr.mxu0 0.0
  %v9785 = vand.u32 %v2061, 4294901760
  %9786 = vmatpush1.msra.mxu0 %v9785
  %9787 = vmatprep.subr.mxu0 0.0
  %9788 = vmatpush2.msra.mxu0 0.0
  %9789 = vmatprep.subr.mxu0 0.0
  %9790 = vmatpush2.msra.mxu0 0.0
  %9791 = vmatprep.subr.mxu0 0.0
  %9792 = vmatpush2.msra.mxu0 0.0
  %9793 = vmatprep.subr.mxu0 0.0
  %9794 = vmatpush2.msra.mxu0 0.0
  %9795 = vmatprep.subr.mxu0 0.0
  %9796 = vmatpush2.msra.mxu0 0.0
  %9797 = vmatprep.subr.mxu0 0.0
  %9798 = vmatpush2.msra.mxu0 0.0
  %9799 = vmatprep.subr.mxu0 0.0
  %9800 = vmatpush2.msra.mxu0 0.0
  %9801 = vmatprep.subr.mxu0 0.0
  %9802 = vmatpush2.msra.mxu0 0.0
  %9803 = vmatprep.subr.mxu0 0.0
  %9804 = vmatpush2.msra.mxu0 0.0
  %9805 = vmatprep.subr.mxu0 0.0
  %9806 = vmatpush2.msra.mxu0 0.0
  %9807 = vmatprep.subr.mxu0 0.0
  %9808 = vmatpush2.msra.mxu0 0.0
  %9809 = vmatprep.subr.mxu0 0.0
  %9810 = vmatpush2.msra.mxu0 0.0
  %9811 = vmatprep.subr.mxu0 0.0
  %9812 = vmatpush2.msra.mxu0 0.0
  %9813 = vmatprep.subr.mxu0 0.0
  %9814 = vmatpush2.msra.mxu0 0.0
  %9815 = vmatprep.subr.mxu0 0.0
  %9816 = vmatpush2.msra.mxu0 0.0
  %9817 = vmatprep.subr.mxu0 0.0
  %9818 = vmatpush2.msra.mxu0 0.0
  %9819 = vmatprep.mubr.f32.mxu0 0.0
  %v9820 = vand.u32 %v9339, 4294901760
  %9821 = vmatmul.mubr.f32.gmra.mxu0 %v9820
  %v9822 = vpop.f32.mrf.mxu0
  %v9823 = vadd.f32 %v9748, %v9822
  %v9824 = vpop.f32.mrf.mxu0
  %9825 = vdwg.mxu0
  %v9826 = vadd.f32 %v9338, %v9823
  %v9827 = vxor.u32 %v9826, 2147483648
  %v9828 = vmul.f32 %v9827, 1.442695
  %v9829 = vpow.pop %v9828
  %v9830 = vadd.f32 %v9829, 1.0
  %v9831 = vrcp.pop %v9830
  %v9832 = vmul.f32 1.0, %v9831
  %9834 = vrot.lane.b32.xlu0 %v9823, 64
  %v9835 = vpop.permute.xlu0 %9834
  %v9837 = vmul.f32 %v9832, %v9835
  %9839 = vrot.lane.b32.xlu0 %v9837, 64
  %v9840 = vpop.permute.xlu0 %9839
  %v9842 = vadd.f32 %v9338, %v9840
  %v9843 = vtanh.pop %v9842
  %v9844 = vsub.f32 1.0, %v9832
  %9846 = vrot.lane.b32.xlu0 %v9843, 96
  %v9847 = vpop.permute.xlu0 %9846
  %v9849 = vmul.f32 %v9844, %v9847
  %v9850 = vmul.f32 %v9832, %v9332
  %v9851 = vadd.f32 %v9849, %v9850
  %9853 = vrot.lane.b32.xlu0 %v9851, 96
  %v9854 = vpop.permute.xlu0 %9853
  %9856 = vst.msk [vmem:[#allocation3 + $0x70] sm:$0xff] %vm2071, %v9854
  %v9857 = vld [vmem:[#allocation2 + $0x78] sm:$0xff]
  %v9858 = vsel %vm2071, %v9854, 0
  %9860 = vmatprep.subr.mxu0 0.0
  %9861 = vmatpush1.msra.mxu0 0.0
  %9862 = vmatprep.subr.mxu0 0.0
  %9863 = vmatpush1.msra.mxu0 0.0
  %9864 = vmatprep.subr.mxu0 0.0
  %9865 = vmatpush1.msra.mxu0 0.0
  %9866 = vmatprep.subr.mxu0 0.0
  %9867 = vmatpush1.msra.mxu0 0.0
  %9868 = vmatprep.subr.mxu0 0.0
  %9869 = vmatpush1.msra.mxu0 0.0
  %9870 = vmatprep.subr.mxu0 0.0
  %9871 = vmatpush1.msra.mxu0 0.0
  %9872 = vmatprep.subr.mxu0 0.0
  %9873 = vmatpush1.msra.mxu0 0.0
  %9874 = vmatprep.subr.mxu0 0.0
  %9875 = vmatpush1.msra.mxu0 0.0
  %9876 = vmatprep.subr.mxu0 0.0
  %9877 = vmatpush1.msra.mxu0 0.0
  %9878 = vmatprep.subr.mxu0 0.0
  %9879 = vmatpush1.msra.mxu0 0.0
  %9880 = vmatprep.subr.mxu0 0.0
  %9881 = vmatpush1.msra.mxu0 0.0
  %9882 = vmatprep.subr.mxu0 0.0
  %9883 = vmatpush1.msra.mxu0 0.0
  %9884 = vmatprep.subr.mxu0 0.0
  %v9885 = vand.u32 %v2064, 4294901760
  %9886 = vmatpush1.msra.mxu0 %v9885
  %9887 = vmatprep.subr.mxu0 0.0
  %v9888 = vand.u32 %v2063, 4294901760
  %9889 = vmatpush1.msra.mxu0 %v9888
  %9890 = vmatprep.subr.mxu0 0.0
  %v9891 = vand.u32 %v2062, 4294901760
  %9892 = vmatpush1.msra.mxu0 %v9891
  %9893 = vmatprep.subr.mxu0 0.0
  %v9894 = vand.u32 %v2061, 4294901760
  %9895 = vmatpush1.msra.mxu0 %v9894
  %9896 = vmatprep.subr.mxu0 0.0
  %9897 = vmatpush2.msra.mxu0 0.0
  %9898 = vmatprep.subr.mxu0 0.0
  %9899 = vmatpush2.msra.mxu0 0.0
  %9900 = vmatprep.subr.mxu0 0.0
  %9901 = vmatpush2.msra.mxu0 0.0
  %9902 = vmatprep.subr.mxu0 0.0
  %9903 = vmatpush2.msra.mxu0 0.0
  %9904 = vmatprep.subr.mxu0 0.0
  %9905 = vmatpush2.msra.mxu0 0.0
  %9906 = vmatprep.subr.mxu0 0.0
  %9907 = vmatpush2.msra.mxu0 0.0
  %9908 = vmatprep.subr.mxu0 0.0
  %9909 = vmatpush2.msra.mxu0 0.0
  %9910 = vmatprep.subr.mxu0 0.0
  %9911 = vmatpush2.msra.mxu0 0.0
  %9912 = vmatprep.subr.mxu0 0.0
  %9913 = vmatpush2.msra.mxu0 0.0
  %9914 = vmatprep.subr.mxu0 0.0
  %9915 = vmatpush2.msra.mxu0 0.0
  %9916 = vmatprep.subr.mxu0 0.0
  %9917 = vmatpush2.msra.mxu0 0.0
  %9918 = vmatprep.subr.mxu0 0.0
  %9919 = vmatpush2.msra.mxu0 0.0
  %9920 = vmatprep.subr.mxu0 0.0
  %9921 = vmatpush2.msra.mxu0 0.0
  %9922 = vmatprep.subr.mxu0 0.0
  %9923 = vmatpush2.msra.mxu0 0.0
  %9924 = vmatprep.subr.mxu0 0.0
  %9925 = vmatpush2.msra.mxu0 0.0
  %9926 = vmatprep.subr.mxu0 0.0
  %9927 = vmatpush2.msra.mxu0 0.0
  %9928 = vmatprep.mubr.f32.mxu0 0.0
  %v9929 = vand.u32 %v9858, 4294901760
  %v9930 = vsub.f32 %v9858, %v9929
  %v9931 = vand.u32 %v9930, 4294901760
  %v9932 = vsub.f32 %v9930, %v9931
  %v9933 = vand.u32 %v9932, 4294901760
  %9934 = vmatmul.mubr.f32.gmra.mxu0 %v9933
  %v9935 = vpop.f32.mrf.mxu0
  %v9936 = vadd.f32 %v2070, %v9935
  %v9937 = vpop.f32.mrf.mxu0
  %9938 = vdwg.mxu0
  %9939 = vmatprep.subr.mxu0 0.0
  %9940 = vmatpush1.msra.mxu0 0.0
  %9941 = vmatprep.subr.mxu0 0.0
  %9942 = vmatpush1.msra.mxu0 0.0
  %9943 = vmatprep.subr.mxu0 0.0
  %9944 = vmatpush1.msra.mxu0 0.0
  %9945 = vmatprep.subr.mxu0 0.0
  %9946 = vmatpush1.msra.mxu0 0.0
  %9947 = vmatprep.subr.mxu0 0.0
  %9948 = vmatpush1.msra.mxu0 0.0
  %9949 = vmatprep.subr.mxu0 0.0
  %9950 = vmatpush1.msra.mxu0 0.0
  %9951 = vmatprep.subr.mxu0 0.0
  %9952 = vmatpush1.msra.mxu0 0.0
  %9953 = vmatprep.subr.mxu0 0.0
  %9954 = vmatpush1.msra.mxu0 0.0
  %9955 = vmatprep.subr.mxu0 0.0
  %9956 = vmatpush1.msra.mxu0 0.0
  %9957 = vmatprep.subr.mxu0 0.0
  %9958 = vmatpush1.msra.mxu0 0.0
  %9959 = vmatprep.subr.mxu0 0.0
  %9960 = vmatpush1.msra.mxu0 0.0
  %9961 = vmatprep.subr.mxu0 0.0
  %9962 = vmatpush1.msra.mxu0 0.0
  %9963 = vmatprep.subr.mxu0 0.0
  %v9964 = vand.u32 %v2064, 4294901760
  %v9965 = vsub.f32 %v2064, %v9964
  %v9966 = vand.u32 %v9965, 4294901760
  %v9967 = vsub.f32 %v9965, %v9966
  %v9968 = vand.u32 %v9967, 4294901760
  %9969 = vmatpush1.msra.mxu0 %v9968
  %9970 = vmatprep.subr.mxu0 0.0
  %v9971 = vand.u32 %v2063, 4294901760
  %v9972 = vsub.f32 %v2063, %v9971
  %v9973 = vand.u32 %v9972, 4294901760
  %v9974 = vsub.f32 %v9972, %v9973
  %v9975 = vand.u32 %v9974, 4294901760
  %9976 = vmatpush1.msra.mxu0 %v9975
  %9977 = vmatprep.subr.mxu0 0.0
  %v9978 = vand.u32 %v2062, 4294901760
  %v9979 = vsub.f32 %v2062, %v9978
  %v9980 = vand.u32 %v9979, 4294901760
  %v9981 = vsub.f32 %v9979, %v9980
  %v9982 = vand.u32 %v9981, 4294901760
  %9983 = vmatpush1.msra.mxu0 %v9982
  %9984 = vmatprep.subr.mxu0 0.0
  %v9985 = vand.u32 %v2061, 4294901760
  %v9986 = vsub.f32 %v2061, %v9985
  %v9987 = vand.u32 %v9986, 4294901760
  %v9988 = vsub.f32 %v9986, %v9987
  %v9989 = vand.u32 %v9988, 4294901760
  %9990 = vmatpush1.msra.mxu0 %v9989
  %9991 = vmatprep.subr.mxu0 0.0
  %9992 = vmatpush2.msra.mxu0 0.0
  %9993 = vmatprep.subr.mxu0 0.0
  %9994 = vmatpush2.msra.mxu0 0.0
  %9995 = vmatprep.subr.mxu0 0.0
  %9996 = vmatpush2.msra.mxu0 0.0
  %9997 = vmatprep.subr.mxu0 0.0
  %9998 = vmatpush2.msra.mxu0 0.0
  %9999 = vmatprep.subr.mxu0 0.0
  %10000 = vmatpush2.msra.mxu0 0.0
  %10001 = vmatprep.subr.mxu0 0.0
  %10002 = vmatpush2.msra.mxu0 0.0
  %10003 = vmatprep.subr.mxu0 0.0
  %10004 = vmatpush2.msra.mxu0 0.0
  %10005 = vmatprep.subr.mxu0 0.0
  %10006 = vmatpush2.msra.mxu0 0.0
  %10007 = vmatprep.subr.mxu0 0.0
  %10008 = vmatpush2.msra.mxu0 0.0
  %10009 = vmatprep.subr.mxu0 0.0
  %10010 = vmatpush2.msra.mxu0 0.0
  %10011 = vmatprep.subr.mxu0 0.0
  %10012 = vmatpush2.msra.mxu0 0.0
  %10013 = vmatprep.subr.mxu0 0.0
  %10014 = vmatpush2.msra.mxu0 0.0
  %10015 = vmatprep.subr.mxu0 0.0
  %10016 = vmatpush2.msra.mxu0 0.0
  %10017 = vmatprep.subr.mxu0 0.0
  %10018 = vmatpush2.msra.mxu0 0.0
  %10019 = vmatprep.subr.mxu0 0.0
  %10020 = vmatpush2.msra.mxu0 0.0
  %10021 = vmatprep.subr.mxu0 0.0
  %10022 = vmatpush2.msra.mxu0 0.0
  %10023 = vmatprep.mubr.f32.mxu0 0.0
  %v10024 = vand.u32 %v9858, 4294901760
  %10025 = vmatmul.mubr.f32.gmra.mxu0 %v10024
  %v10026 = vpop.f32.mrf.mxu0
  %v10027 = vadd.f32 %v9936, %v10026
  %v10028 = vpop.f32.mrf.mxu0
  %10029 = vdwg.mxu0
  %10030 = vmatprep.subr.mxu0 0.0
  %10031 = vmatpush1.msra.mxu0 0.0
  %10032 = vmatprep.subr.mxu0 0.0
  %10033 = vmatpush1.msra.mxu0 0.0
  %10034 = vmatprep.subr.mxu0 0.0
  %10035 = vmatpush1.msra.mxu0 0.0
  %10036 = vmatprep.subr.mxu0 0.0
  %10037 = vmatpush1.msra.mxu0 0.0
  %10038 = vmatprep.subr.mxu0 0.0
  %10039 = vmatpush1.msra.mxu0 0.0
  %10040 = vmatprep.subr.mxu0 0.0
  %10041 = vmatpush1.msra.mxu0 0.0
  %10042 = vmatprep.subr.mxu0 0.0
  %10043 = vmatpush1.msra.mxu0 0.0
  %10044 = vmatprep.subr.mxu0 0.0
  %10045 = vmatpush1.msra.mxu0 0.0
  %10046 = vmatprep.subr.mxu0 0.0
  %10047 = vmatpush1.msra.mxu0 0.0
  %10048 = vmatprep.subr.mxu0 0.0
  %10049 = vmatpush1.msra.mxu0 0.0
  %10050 = vmatprep.subr.mxu0 0.0
  %10051 = vmatpush1.msra.mxu0 0.0
  %10052 = vmatprep.subr.mxu0 0.0
  %10053 = vmatpush1.msra.mxu0 0.0
  %10054 = vmatprep.subr.mxu0 0.0
  %v10055 = vand.u32 %v2064, 4294901760
  %v10056 = vsub.f32 %v2064, %v10055
  %10057 = vmatpush1.msra.mxu0 %v10056
  %10058 = vmatprep.subr.mxu0 0.0
  %v10059 = vand.u32 %v2063, 4294901760
  %v10060 = vsub.f32 %v2063, %v10059
  %10061 = vmatpush1.msra.mxu0 %v10060
  %10062 = vmatprep.subr.mxu0 0.0
  %v10063 = vand.u32 %v2062, 4294901760
  %v10064 = vsub.f32 %v2062, %v10063
  %10065 = vmatpush1.msra.mxu0 %v10064
  %10066 = vmatprep.subr.mxu0 0.0
  %v10067 = vand.u32 %v2061, 4294901760
  %v10068 = vsub.f32 %v2061, %v10067
  %10069 = vmatpush1.msra.mxu0 %v10068
  %10070 = vmatprep.subr.mxu0 0.0
  %10071 = vmatpush2.msra.mxu0 0.0
  %10072 = vmatprep.subr.mxu0 0.0
  %10073 = vmatpush2.msra.mxu0 0.0
  %10074 = vmatprep.subr.mxu0 0.0
  %10075 = vmatpush2.msra.mxu0 0.0
  %10076 = vmatprep.subr.mxu0 0.0
  %10077 = vmatpush2.msra.mxu0 0.0
  %10078 = vmatprep.subr.mxu0 0.0
  %10079 = vmatpush2.msra.mxu0 0.0
  %10080 = vmatprep.subr.mxu0 0.0
  %10081 = vmatpush2.msra.mxu0 0.0
  %10082 = vmatprep.subr.mxu0 0.0
  %10083 = vmatpush2.msra.mxu0 0.0
  %10084 = vmatprep.subr.mxu0 0.0
  %10085 = vmatpush2.msra.mxu0 0.0
  %10086 = vmatprep.subr.mxu0 0.0
  %10087 = vmatpush2.msra.mxu0 0.0
  %10088 = vmatprep.subr.mxu0 0.0
  %10089 = vmatpush2.msra.mxu0 0.0
  %10090 = vmatprep.subr.mxu0 0.0
  %10091 = vmatpush2.msra.mxu0 0.0
  %10092 = vmatprep.subr.mxu0 0.0
  %10093 = vmatpush2.msra.mxu0 0.0
  %10094 = vmatprep.subr.mxu0 0.0
  %10095 = vmatpush2.msra.mxu0 0.0
  %10096 = vmatprep.subr.mxu0 0.0
  %10097 = vmatpush2.msra.mxu0 0.0
  %10098 = vmatprep.subr.mxu0 0.0
  %10099 = vmatpush2.msra.mxu0 0.0
  %10100 = vmatprep.subr.mxu0 0.0
  %10101 = vmatpush2.msra.mxu0 0.0
  %10102 = vmatprep.mubr.f32.mxu0 0.0
  %v10103 = vand.u32 %v9858, 4294901760
  %v10104 = vsub.f32 %v9858, %v10103
  %10105 = vmatmul.mubr.f32.gmra.mxu0 %v10104
  %v10106 = vpop.f32.mrf.mxu0
  %v10107 = vadd.f32 %v10027, %v10106
  %v10108 = vpop.f32.mrf.mxu0
  %10109 = vdwg.mxu0
  %10110 = vmatprep.subr.mxu0 0.0
  %10111 = vmatpush1.msra.mxu0 0.0
  %10112 = vmatprep.subr.mxu0 0.0
  %10113 = vmatpush1.msra.mxu0 0.0
  %10114 = vmatprep.subr.mxu0 0.0
  %10115 = vmatpush1.msra.mxu0 0.0
  %10116 = vmatprep.subr.mxu0 0.0
  %10117 = vmatpush1.msra.mxu0 0.0
  %10118 = vmatprep.subr.mxu0 0.0
  %10119 = vmatpush1.msra.mxu0 0.0
  %10120 = vmatprep.subr.mxu0 0.0
  %10121 = vmatpush1.msra.mxu0 0.0
  %10122 = vmatprep.subr.mxu0 0.0
  %10123 = vmatpush1.msra.mxu0 0.0
  %10124 = vmatprep.subr.mxu0 0.0
  %10125 = vmatpush1.msra.mxu0 0.0
  %10126 = vmatprep.subr.mxu0 0.0
  %10127 = vmatpush1.msra.mxu0 0.0
  %10128 = vmatprep.subr.mxu0 0.0
  %10129 = vmatpush1.msra.mxu0 0.0
  %10130 = vmatprep.subr.mxu0 0.0
  %10131 = vmatpush1.msra.mxu0 0.0
  %10132 = vmatprep.subr.mxu0 0.0
  %10133 = vmatpush1.msra.mxu0 0.0
  %10134 = vmatprep.subr.mxu0 0.0
  %v10135 = vand.u32 %v2064, 4294901760
  %10136 = vmatpush1.msra.mxu0 %v10135
  %10137 = vmatprep.subr.mxu0 0.0
  %v10138 = vand.u32 %v2063, 4294901760
  %10139 = vmatpush1.msra.mxu0 %v10138
  %10140 = vmatprep.subr.mxu0 0.0
  %v10141 = vand.u32 %v2062, 4294901760
  %10142 = vmatpush1.msra.mxu0 %v10141
  %10143 = vmatprep.subr.mxu0 0.0
  %v10144 = vand.u32 %v2061, 4294901760
  %10145 = vmatpush1.msra.mxu0 %v10144
  %10146 = vmatprep.subr.mxu0 0.0
  %10147 = vmatpush2.msra.mxu0 0.0
  %10148 = vmatprep.subr.mxu0 0.0
  %10149 = vmatpush2.msra.mxu0 0.0
  %10150 = vmatprep.subr.mxu0 0.0
  %10151 = vmatpush2.msra.mxu0 0.0
  %10152 = vmatprep.subr.mxu0 0.0
  %10153 = vmatpush2.msra.mxu0 0.0
  %10154 = vmatprep.subr.mxu0 0.0
  %10155 = vmatpush2.msra.mxu0 0.0
  %10156 = vmatprep.subr.mxu0 0.0
  %10157 = vmatpush2.msra.mxu0 0.0
  %10158 = vmatprep.subr.mxu0 0.0
  %10159 = vmatpush2.msra.mxu0 0.0
  %10160 = vmatprep.subr.mxu0 0.0
  %10161 = vmatpush2.msra.mxu0 0.0
  %10162 = vmatprep.subr.mxu0 0.0
  %10163 = vmatpush2.msra.mxu0 0.0
  %10164 = vmatprep.subr.mxu0 0.0
  %10165 = vmatpush2.msra.mxu0 0.0
  %10166 = vmatprep.subr.mxu0 0.0
  %10167 = vmatpush2.msra.mxu0 0.0
  %10168 = vmatprep.subr.mxu0 0.0
  %10169 = vmatpush2.msra.mxu0 0.0
  %10170 = vmatprep.subr.mxu0 0.0
  %10171 = vmatpush2.msra.mxu0 0.0
  %10172 = vmatprep.subr.mxu0 0.0
  %10173 = vmatpush2.msra.mxu0 0.0
  %10174 = vmatprep.subr.mxu0 0.0
  %10175 = vmatpush2.msra.mxu0 0.0
  %10176 = vmatprep.subr.mxu0 0.0
  %10177 = vmatpush2.msra.mxu0 0.0
  %10178 = vmatprep.mubr.f32.mxu0 0.0
  %v10179 = vand.u32 %v9858, 4294901760
  %v10180 = vsub.f32 %v9858, %v10179
  %v10181 = vand.u32 %v10180, 4294901760
  %10182 = vmatmul.mubr.f32.gmra.mxu0 %v10181
  %v10183 = vpop.f32.mrf.mxu0
  %v10184 = vadd.f32 %v10107, %v10183
  %v10185 = vpop.f32.mrf.mxu0
  %10186 = vdwg.mxu0
  %10187 = vmatprep.subr.mxu0 0.0
  %10188 = vmatpush1.msra.mxu0 0.0
  %10189 = vmatprep.subr.mxu0 0.0
  %10190 = vmatpush1.msra.mxu0 0.0
  %10191 = vmatprep.subr.mxu0 0.0
  %10192 = vmatpush1.msra.mxu0 0.0
  %10193 = vmatprep.subr.mxu0 0.0
  %10194 = vmatpush1.msra.mxu0 0.0
  %10195 = vmatprep.subr.mxu0 0.0
  %10196 = vmatpush1.msra.mxu0 0.0
  %10197 = vmatprep.subr.mxu0 0.0
  %10198 = vmatpush1.msra.mxu0 0.0
  %10199 = vmatprep.subr.mxu0 0.0
  %10200 = vmatpush1.msra.mxu0 0.0
  %10201 = vmatprep.subr.mxu0 0.0
  %10202 = vmatpush1.msra.mxu0 0.0
  %10203 = vmatprep.subr.mxu0 0.0
  %10204 = vmatpush1.msra.mxu0 0.0
  %10205 = vmatprep.subr.mxu0 0.0
  %10206 = vmatpush1.msra.mxu0 0.0
  %10207 = vmatprep.subr.mxu0 0.0
  %10208 = vmatpush1.msra.mxu0 0.0
  %10209 = vmatprep.subr.mxu0 0.0
  %10210 = vmatpush1.msra.mxu0 0.0
  %10211 = vmatprep.subr.mxu0 0.0
  %v10212 = vand.u32 %v2064, 4294901760
  %v10213 = vsub.f32 %v2064, %v10212
  %v10214 = vand.u32 %v10213, 4294901760
  %10215 = vmatpush1.msra.mxu0 %v10214
  %10216 = vmatprep.subr.mxu0 0.0
  %v10217 = vand.u32 %v2063, 4294901760
  %v10218 = vsub.f32 %v2063, %v10217
  %v10219 = vand.u32 %v10218, 4294901760
  %10220 = vmatpush1.msra.mxu0 %v10219
  %10221 = vmatprep.subr.mxu0 0.0
  %v10222 = vand.u32 %v2062, 4294901760
  %v10223 = vsub.f32 %v2062, %v10222
  %v10224 = vand.u32 %v10223, 4294901760
  %10225 = vmatpush1.msra.mxu0 %v10224
  %10226 = vmatprep.subr.mxu0 0.0
  %v10227 = vand.u32 %v2061, 4294901760
  %v10228 = vsub.f32 %v2061, %v10227
  %v10229 = vand.u32 %v10228, 4294901760
  %10230 = vmatpush1.msra.mxu0 %v10229
  %10231 = vmatprep.subr.mxu0 0.0
  %10232 = vmatpush2.msra.mxu0 0.0
  %10233 = vmatprep.subr.mxu0 0.0
  %10234 = vmatpush2.msra.mxu0 0.0
  %10235 = vmatprep.subr.mxu0 0.0
  %10236 = vmatpush2.msra.mxu0 0.0
  %10237 = vmatprep.subr.mxu0 0.0
  %10238 = vmatpush2.msra.mxu0 0.0
  %10239 = vmatprep.subr.mxu0 0.0
  %10240 = vmatpush2.msra.mxu0 0.0
  %10241 = vmatprep.subr.mxu0 0.0
  %10242 = vmatpush2.msra.mxu0 0.0
  %10243 = vmatprep.subr.mxu0 0.0
  %10244 = vmatpush2.msra.mxu0 0.0
  %10245 = vmatprep.subr.mxu0 0.0
  %10246 = vmatpush2.msra.mxu0 0.0
  %10247 = vmatprep.subr.mxu0 0.0
  %10248 = vmatpush2.msra.mxu0 0.0
  %10249 = vmatprep.subr.mxu0 0.0
  %10250 = vmatpush2.msra.mxu0 0.0
  %10251 = vmatprep.subr.mxu0 0.0
  %10252 = vmatpush2.msra.mxu0 0.0
  %10253 = vmatprep.subr.mxu0 0.0
  %10254 = vmatpush2.msra.mxu0 0.0
  %10255 = vmatprep.subr.mxu0 0.0
  %10256 = vmatpush2.msra.mxu0 0.0
  %10257 = vmatprep.subr.mxu0 0.0
  %10258 = vmatpush2.msra.mxu0 0.0
  %10259 = vmatprep.subr.mxu0 0.0
  %10260 = vmatpush2.msra.mxu0 0.0
  %10261 = vmatprep.subr.mxu0 0.0
  %10262 = vmatpush2.msra.mxu0 0.0
  %10263 = vmatprep.mubr.f32.mxu0 0.0
  %v10264 = vand.u32 %v9858, 4294901760
  %10265 = vmatmul.mubr.f32.gmra.mxu0 %v10264
  %v10266 = vpop.f32.mrf.mxu0
  %v10267 = vadd.f32 %v10184, %v10266
  %v10268 = vpop.f32.mrf.mxu0
  %10269 = vdwg.mxu0
  %10270 = vmatprep.subr.mxu0 0.0
  %10271 = vmatpush1.msra.mxu0 0.0
  %10272 = vmatprep.subr.mxu0 0.0
  %10273 = vmatpush1.msra.mxu0 0.0
  %10274 = vmatprep.subr.mxu0 0.0
  %10275 = vmatpush1.msra.mxu0 0.0
  %10276 = vmatprep.subr.mxu0 0.0
  %10277 = vmatpush1.msra.mxu0 0.0
  %10278 = vmatprep.subr.mxu0 0.0
  %10279 = vmatpush1.msra.mxu0 0.0
  %10280 = vmatprep.subr.mxu0 0.0
  %10281 = vmatpush1.msra.mxu0 0.0
  %10282 = vmatprep.subr.mxu0 0.0
  %10283 = vmatpush1.msra.mxu0 0.0
  %10284 = vmatprep.subr.mxu0 0.0
  %10285 = vmatpush1.msra.mxu0 0.0
  %10286 = vmatprep.subr.mxu0 0.0
  %10287 = vmatpush1.msra.mxu0 0.0
  %10288 = vmatprep.subr.mxu0 0.0
  %10289 = vmatpush1.msra.mxu0 0.0
  %10290 = vmatprep.subr.mxu0 0.0
  %10291 = vmatpush1.msra.mxu0 0.0
  %10292 = vmatprep.subr.mxu0 0.0
  %10293 = vmatpush1.msra.mxu0 0.0
  %10294 = vmatprep.subr.mxu0 0.0
  %v10295 = vand.u32 %v2064, 4294901760
  %10296 = vmatpush1.msra.mxu0 %v10295
  %10297 = vmatprep.subr.mxu0 0.0
  %v10298 = vand.u32 %v2063, 4294901760
  %10299 = vmatpush1.msra.mxu0 %v10298
  %10300 = vmatprep.subr.mxu0 0.0
  %v10301 = vand.u32 %v2062, 4294901760
  %10302 = vmatpush1.msra.mxu0 %v10301
  %10303 = vmatprep.subr.mxu0 0.0
  %v10304 = vand.u32 %v2061, 4294901760
  %10305 = vmatpush1.msra.mxu0 %v10304
  %10306 = vmatprep.subr.mxu0 0.0
  %10307 = vmatpush2.msra.mxu0 0.0
  %10308 = vmatprep.subr.mxu0 0.0
  %10309 = vmatpush2.msra.mxu0 0.0
  %10310 = vmatprep.subr.mxu0 0.0
  %10311 = vmatpush2.msra.mxu0 0.0
  %10312 = vmatprep.subr.mxu0 0.0
  %10313 = vmatpush2.msra.mxu0 0.0
  %10314 = vmatprep.subr.mxu0 0.0
  %10315 = vmatpush2.msra.mxu0 0.0
  %10316 = vmatprep.subr.mxu0 0.0
  %10317 = vmatpush2.msra.mxu0 0.0
  %10318 = vmatprep.subr.mxu0 0.0
  %10319 = vmatpush2.msra.mxu0 0.0
  %10320 = vmatprep.subr.mxu0 0.0
  %10321 = vmatpush2.msra.mxu0 0.0
  %10322 = vmatprep.subr.mxu0 0.0
  %10323 = vmatpush2.msra.mxu0 0.0
  %10324 = vmatprep.subr.mxu0 0.0
  %10325 = vmatpush2.msra.mxu0 0.0
  %10326 = vmatprep.subr.mxu0 0.0
  %10327 = vmatpush2.msra.mxu0 0.0
  %10328 = vmatprep.subr.mxu0 0.0
  %10329 = vmatpush2.msra.mxu0 0.0
  %10330 = vmatprep.subr.mxu0 0.0
  %10331 = vmatpush2.msra.mxu0 0.0
  %10332 = vmatprep.subr.mxu0 0.0
  %10333 = vmatpush2.msra.mxu0 0.0
  %10334 = vmatprep.subr.mxu0 0.0
  %10335 = vmatpush2.msra.mxu0 0.0
  %10336 = vmatprep.subr.mxu0 0.0
  %10337 = vmatpush2.msra.mxu0 0.0
  %10338 = vmatprep.mubr.f32.mxu0 0.0
  %v10339 = vand.u32 %v9858, 4294901760
  %10340 = vmatmul.mubr.f32.gmra.mxu0 %v10339
  %v10341 = vpop.f32.mrf.mxu0
  %v10342 = vadd.f32 %v10267, %v10341
  %v10343 = vpop.f32.mrf.mxu0
  %10344 = vdwg.mxu0
  %v10345 = vadd.f32 %v9857, %v10342
  %v10346 = vxor.u32 %v10345, 2147483648
  %v10347 = vmul.f32 %v10346, 1.442695
  %v10348 = vpow.pop %v10347
  %v10349 = vadd.f32 %v10348, 1.0
  %v10350 = vrcp.pop %v10349
  %v10351 = vmul.f32 1.0, %v10350
  %10353 = vrot.lane.b32.xlu0 %v10342, 64
  %v10354 = vpop.permute.xlu0 %10353
  %v10356 = vmul.f32 %v10351, %v10354
  %10358 = vrot.lane.b32.xlu0 %v10356, 64
  %v10359 = vpop.permute.xlu0 %10358
  %v10361 = vadd.f32 %v9857, %v10359
  %v10362 = vtanh.pop %v10361
  %v10363 = vsub.f32 1.0, %v10351
  %10365 = vrot.lane.b32.xlu0 %v10362, 96
  %v10366 = vpop.permute.xlu0 %10365
  %v10368 = vmul.f32 %v10363, %v10366
  %v10369 = vmul.f32 %v10351, %v9851
  %v10370 = vadd.f32 %v10368, %v10369
  %10372 = vrot.lane.b32.xlu0 %v10370, 96
  %v10373 = vpop.permute.xlu0 %10372
  %10375 = vst.msk [vmem:[#allocation3 + $0x78] sm:$0xff] %vm2071, %v10373
  %v10376 = vld [vmem:[#allocation3] sm:$0xff]
  %v10377 = vld [vmem:[#allocation3 + $0x8] sm:$0xff]
  %v10378 = vld [vmem:[#allocation3 + $0x10] sm:$0xff]
  %v10379 = vld [vmem:[#allocation3 + $0x18] sm:$0xff]
  %v10380 = vld [vmem:[#allocation3 + $0x20] sm:$0xff]
  %v10381 = vld [vmem:[#allocation3 + $0x28] sm:$0xff]
  %v10382 = vld [vmem:[#allocation3 + $0x30] sm:$0xff]
  %v10383 = vld [vmem:[#allocation3 + $0x38] sm:$0xff]
  %v10384 = vld [vmem:[#allocation3 + $0x40] sm:$0xff]
  %v10385 = vld [vmem:[#allocation3 + $0x48] sm:$0xff]
  %v10386 = vld [vmem:[#allocation3 + $0x50] sm:$0xff]
  %v10387 = vld [vmem:[#allocation3 + $0x58] sm:$0xff]
  %v10388 = vld [vmem:[#allocation3 + $0x60] sm:$0xff]
  %v10389 = vld [vmem:[#allocation3 + $0x68] sm:$0xff]
  %v10390 = vld [vmem:[#allocation3 + $0x70] sm:$0xff]
  %v10391 = vld [vmem:[#allocation3 + $0x78] sm:$0xff]
  %v10392 = vld [vmem:[%s8] sm:$0xff]
  %v10393 = vld [vmem:[%s8 + $0x8] sm:$0xff]
  %v10394 = vld [vmem:[%s8 + $0x10] sm:$0xff]
  %v10395 = vld [vmem:[%s8 + $0x18] sm:$0xff]
  %v10396 = vld [vmem:[%s8 + $0x20] sm:$0x1]
  %v10397 = vlaneseq
  %v10398 = vshrl.u32 %v10397, 7
  %v10399 = vsub.s32 0, %v10398
  %v10400 = vrot.slane %v10396, %v10399
  %v10402 = vsel %vm2071, %v10376, 0
  %v10405 = vsel %vm2071, %v10377, 0
  %v10408 = vsel %vm2071, %v10378, 0
  %v10411 = vsel %vm2071, %v10379, 0
  %v10414 = vsel %vm2071, %v10380, 0
  %v10417 = vsel %vm2071, %v10381, 0
  %v10420 = vsel %vm2071, %v10382, 0
  %v10423 = vsel %vm2071, %v10383, 0
  %v10426 = vsel %vm2071, %v10384, 0
  %v10429 = vsel %vm2071, %v10385, 0
  %v10432 = vsel %vm2071, %v10386, 0
  %v10435 = vsel %vm2071, %v10387, 0
  %v10438 = vsel %vm2071, %v10388, 0
  %v10441 = vsel %vm2071, %v10389, 0
  %v10444 = vsel %vm2071, %v10390, 0
  %v10447 = vsel %vm2071, %v10391, 0
  %10449 = vmatprep.subr.mxu0 0.0
  %10450 = vmatpush1.msra.mxu0 0.0
  %10451 = vmatprep.subr.mxu0 0.0
  %10452 = vmatpush1.msra.mxu0 0.0
  %10453 = vmatprep.subr.mxu0 0.0
  %10454 = vmatpush1.msra.mxu0 0.0
  %10455 = vmatprep.subr.mxu0 0.0
  %10456 = vmatpush1.msra.mxu0 0.0
  %10457 = vmatprep.subr.mxu0 0.0
  %10458 = vmatpush1.msra.mxu0 0.0
  %10459 = vmatprep.subr.mxu0 0.0
  %10460 = vmatpush1.msra.mxu0 0.0
  %10461 = vmatprep.subr.mxu0 0.0
  %10462 = vmatpush1.msra.mxu0 0.0
  %10463 = vmatprep.subr.mxu0 0.0
  %10464 = vmatpush1.msra.mxu0 0.0
  %10465 = vmatprep.subr.mxu0 0.0
  %10466 = vmatpush1.msra.mxu0 0.0
  %10467 = vmatprep.subr.mxu0 0.0
  %10468 = vmatpush1.msra.mxu0 0.0
  %10469 = vmatprep.subr.mxu0 0.0
  %10470 = vmatpush1.msra.mxu0 0.0
  %10471 = vmatprep.subr.mxu0 0.0
  %10472 = vmatpush1.msra.mxu0 0.0
  %10473 = vmatprep.subr.mxu0 0.0
  %10474 = vmatpush1.msra.mxu0 %v10395
  %10475 = vmatprep.subr.mxu0 0.0
  %10476 = vmatpush1.msra.mxu0 %v10394
  %10477 = vmatprep.subr.mxu0 0.0
  %10478 = vmatpush1.msra.mxu0 %v10393
  %10479 = vmatprep.subr.mxu0 0.0
  %10480 = vmatpush1.msra.mxu0 %v10392
  %10481 = vmatprep.subr.mxu0 0.0
  %10482 = vmatpush2.msra.mxu0 0.0
  %10483 = vmatprep.subr.mxu0 0.0
  %10484 = vmatpush2.msra.mxu0 0.0
  %10485 = vmatprep.subr.mxu0 0.0
  %10486 = vmatpush2.msra.mxu0 0.0
  %10487 = vmatprep.subr.mxu0 0.0
  %10488 = vmatpush2.msra.mxu0 0.0
  %10489 = vmatprep.subr.mxu0 0.0
  %10490 = vmatpush2.msra.mxu0 0.0
  %10491 = vmatprep.subr.mxu0 0.0
  %10492 = vmatpush2.msra.mxu0 0.0
  %10493 = vmatprep.subr.mxu0 0.0
  %10494 = vmatpush2.msra.mxu0 0.0
  %10495 = vmatprep.subr.mxu0 0.0
  %10496 = vmatpush2.msra.mxu0 0.0
  %10497 = vmatprep.subr.mxu0 0.0
  %10498 = vmatpush2.msra.mxu0 0.0
  %10499 = vmatprep.subr.mxu0 0.0
  %10500 = vmatpush2.msra.mxu0 0.0
  %10501 = vmatprep.subr.mxu0 0.0
  %10502 = vmatpush2.msra.mxu0 0.0
  %10503 = vmatprep.subr.mxu0 0.0
  %10504 = vmatpush2.msra.mxu0 0.0
  %10505 = vmatprep.subr.mxu0 0.0
  %10506 = vmatpush2.msra.mxu0 0.0
  %10507 = vmatprep.subr.mxu0 0.0
  %10508 = vmatpush2.msra.mxu0 0.0
  %10509 = vmatprep.subr.mxu0 0.0
  %10510 = vmatpush2.msra.mxu0 0.0
  %10511 = vmatprep.subr.mxu0 0.0
  %10512 = vmatpush2.msra.mxu0 0.0
  %10513 = vmatprep.mubr.f32.mxu0 0.0
  %10514 = vmatmul.mubr.f32.gmra.mxu0 %v10402
  %v10515 = vpop.f32.mrf.mxu0
  %v10516 = vadd.f32 %v10400, %v10515
  %v10517 = vpop.f32.mrf.mxu0
  %10518 = vmatprep.mubr.f32.mxu0 0.0
  %10519 = vmatmul.mubr.f32.gmra.mxu0 %v10405
  %v10520 = vpop.f32.mrf.mxu0
  %v10521 = vadd.f32 %v10400, %v10520
  %v10522 = vpop.f32.mrf.mxu0
  %10523 = vmatprep.mubr.f32.mxu0 0.0
  %10524 = vmatmul.mubr.f32.gmra.mxu0 %v10408
  %v10525 = vpop.f32.mrf.mxu0
  %v10526 = vadd.f32 %v10400, %v10525
  %v10527 = vpop.f32.mrf.mxu0
  %10528 = vmatprep.mubr.f32.mxu0 0.0
  %10529 = vmatmul.mubr.f32.gmra.mxu0 %v10411
  %v10530 = vpop.f32.mrf.mxu0
  %v10531 = vadd.f32 %v10400, %v10530
  %v10532 = vpop.f32.mrf.mxu0
  %10533 = vmatprep.mubr.f32.mxu0 0.0
  %10534 = vmatmul.mubr.f32.gmra.mxu0 %v10414
  %v10535 = vpop.f32.mrf.mxu0
  %v10536 = vadd.f32 %v10400, %v10535
  %v10537 = vpop.f32.mrf.mxu0
  %10538 = vmatprep.mubr.f32.mxu0 0.0
  %10539 = vmatmul.mubr.f32.gmra.mxu0 %v10417
  %v10540 = vpop.f32.mrf.mxu0
  %v10541 = vadd.f32 %v10400, %v10540
  %v10542 = vpop.f32.mrf.mxu0
  %10543 = vmatprep.mubr.f32.mxu0 0.0
  %10544 = vmatmul.mubr.f32.gmra.mxu0 %v10420
  %v10545 = vpop.f32.mrf.mxu0
  %v10546 = vadd.f32 %v10400, %v10545
  %v10547 = vpop.f32.mrf.mxu0
  %10548 = vmatprep.mubr.f32.mxu0 0.0
  %10549 = vmatmul.mubr.f32.gmra.mxu0 %v10423
  %v10550 = vpop.f32.mrf.mxu0
  %v10551 = vadd.f32 %v10400, %v10550
  %v10552 = vpop.f32.mrf.mxu0
  %10553 = vmatprep.mubr.f32.mxu0 0.0
  %10554 = vmatmul.mubr.f32.gmra.mxu0 %v10426
  %v10555 = vpop.f32.mrf.mxu0
  %v10556 = vadd.f32 %v10400, %v10555
  %v10557 = vpop.f32.mrf.mxu0
  %10558 = vmatprep.mubr.f32.mxu0 0.0
  %10559 = vmatmul.mubr.f32.gmra.mxu0 %v10429
  %v10560 = vpop.f32.mrf.mxu0
  %v10561 = vadd.f32 %v10400, %v10560
  %v10562 = vpop.f32.mrf.mxu0
  %10563 = vmatprep.mubr.f32.mxu0 0.0
  %10564 = vmatmul.mubr.f32.gmra.mxu0 %v10432
  %v10565 = vpop.f32.mrf.mxu0
  %v10566 = vadd.f32 %v10400, %v10565
  %v10567 = vpop.f32.mrf.mxu0
  %10568 = vmatprep.mubr.f32.mxu0 0.0
  %10569 = vmatmul.mubr.f32.gmra.mxu0 %v10435
  %v10570 = vpop.f32.mrf.mxu0
  %v10571 = vadd.f32 %v10400, %v10570
  %v10572 = vpop.f32.mrf.mxu0
  %10573 = vmatprep.mubr.f32.mxu0 0.0
  %10574 = vmatmul.mubr.f32.gmra.mxu0 %v10438
  %v10575 = vpop.f32.mrf.mxu0
  %v10576 = vadd.f32 %v10400, %v10575
  %v10577 = vpop.f32.mrf.mxu0
  %10578 = vmatprep.mubr.f32.mxu0 0.0
  %10579 = vmatmul.mubr.f32.gmra.mxu0 %v10441
  %v10580 = vpop.f32.mrf.mxu0
  %v10581 = vadd.f32 %v10400, %v10580
  %v10582 = vpop.f32.mrf.mxu0
  %10583 = vmatprep.mubr.f32.mxu0 0.0
  %10584 = vmatmul.mubr.f32.gmra.mxu0 %v10444
  %v10585 = vpop.f32.mrf.mxu0
  %v10586 = vadd.f32 %v10400, %v10585
  %v10587 = vpop.f32.mrf.mxu0
  %10588 = vmatprep.mubr.f32.mxu0 0.0
  %10589 = vmatmul.mubr.f32.gmra.mxu0 %v10447
  %v10590 = vpop.f32.mrf.mxu0
  %v10591 = vadd.f32 %v10400, %v10590
  %v10592 = vpop.f32.mrf.mxu0
  %10593 = vdwg.mxu0
  %vm10594 = vcmask 31744
  %10595 = vst.msk [vmem:[%s9] sm:$0xff] %vm10594, %v10516
  %10596 = vst.msk [vmem:[%s9 + $0x8] sm:$0xff] %vm10594, %v10521
  %10597 = vst.msk [vmem:[%s9 + $0x10] sm:$0xff] %vm10594, %v10526
  %10598 = vst.msk [vmem:[%s9 + $0x18] sm:$0xff] %vm10594, %v10531
  %10599 = vst.msk [vmem:[%s9 + $0x20] sm:$0xff] %vm10594, %v10536
  %10600 = vst.msk [vmem:[%s9 + $0x28] sm:$0xff] %vm10594, %v10541
  %10601 = vst.msk [vmem:[%s9 + $0x30] sm:$0xff] %vm10594, %v10546
  %10602 = vst.msk [vmem:[%s9 + $0x38] sm:$0xff] %vm10594, %v10551
  %10603 = vst.msk [vmem:[%s9 + $0x40] sm:$0xff] %vm10594, %v10556
  %10604 = vst.msk [vmem:[%s9 + $0x48] sm:$0xff] %vm10594, %v10561
  %10605 = vst.msk [vmem:[%s9 + $0x50] sm:$0xff] %vm10594, %v10566
  %10606 = vst.msk [vmem:[%s9 + $0x58] sm:$0xff] %vm10594, %v10571
  %10607 = vst.msk [vmem:[%s9 + $0x60] sm:$0xff] %vm10594, %v10576
  %10608 = vst.msk [vmem:[%s9 + $0x68] sm:$0xff] %vm10594, %v10581
  %10609 = vst.msk [vmem:[%s9 + $0x70] sm:$0xff] %vm10594, %v10586
  %10610 = vst.msk [vmem:[%s9 + $0x78] sm:$0xff] %vm10594, %v10591
  // Predicated region
  $region38: #{decoder_arvae_forward.1} parent=0 // pred_check
    _
  $region39: #{decoder_arvae_forward.1} parent=0 // pred_check_branch
    %10612 = sbr.rel (0) target = $region41
  $region40: #{decoder_arvae_forward.1} parent=0 // pred_region
    _
  $region41: #{decoder_arvae_forward.1} parent=0 // pred_fallthru
    _
  // Predicated region
  $region42: #{decoder_arvae_forward.1} parent=0 // pred_check
    _
  $region43: #{decoder_arvae_forward.1} parent=0 // pred_check_branch
    %10614 = sbr.rel (0) target = $region45
  $region44: #{decoder_arvae_forward.1} parent=0 // pred_region
    _
  $region45: #{decoder_arvae_forward.1} parent=0 // pred_fallthru
    _

</llo_original>
